<compile_context>
chip_gen: v7x
topology: tpu7x:2x2x1
jax: 0.10.0
libtpu: 0.0.40
codegen_flags: <defaults>
</compile_context>

<pallas_src>
import jax
import jax.numpy as jnp
from jax.experimental import pallas as pl
from jax.experimental.pallas import tpu as pltpu


def _full_block(arr):
    """Whole-array VMEM block with a constant index map (resident across the grid)."""
    nd = arr.ndim
    return pl.BlockSpec(arr.shape, lambda i, _nd=nd: (0,) * _nd)


def up_forward(x1, x2, params, *, eps=1e-5):
    """Forward of `Up`: x1 (N, C_in, H1, W1), x2 (N, C_skip, H2, W2) -> (N, C_out, H2, W2)."""
    N, C_in, H1, W1 = x1.shape
    _, C_skip, H2, W2 = x2.shape
    wt_up, b_up = params["up_w"], params["up_b"]          # (C_in, C_up, 2, 2), (C_up,)
    w1, b1 = params["conv1_w"], params["conv1_b"]          # (C_mid, C_cat, 3, 3)
    g1, be1 = params["bn1_g"], params["bn1_b"]
    w2, b2 = params["conv2_w"], params["conv2_b"]          # (C_out, C_mid, 3, 3)
    g2, be2 = params["bn2_g"], params["bn2_b"]

    C_up = wt_up.shape[1]
    C_mid, C_cat = w1.shape[0], w1.shape[1]
    C_out = w2.shape[0]
    assert C_cat == C_skip + C_up

    HW1, HW = H1 * W1, H2 * W2
    diffY, diffX = H2 - 2 * H1, W2 - 2 * W1
    padT, padL = diffY // 2, diffX // 2
    PB = W2 + 1                       # halo of the flattened line buffer (covers +-(W2+1))
    PADW = HW + 2 * PB
    f32 = jnp.float32

    # ---- host-side precomputation of tiny constant operands ------------------
    yy = jnp.arange(H2, dtype=jnp.int32)[:, None]
    xx = jnp.arange(W2, dtype=jnp.int32)[None, :]
    in_y = (yy >= padT) & (yy < padT + 2 * H1)
    in_x = (xx >= padL) & (xx < padL + 2 * W1)
    valid = (in_y & in_x).reshape(-1)                                    # (HW,)
    ph_y = jnp.where(in_y, (yy - padT) % 2, 0)
    ph_x = jnp.where(in_x, (xx - padL) % 2, 0)
    phase = (ph_y * 2 + ph_x).reshape(-1)                                # (HW,)
    src_h = jnp.where(in_y, (yy - padT) // 2, 0)
    src_w = jnp.where(in_x, (xx - padL) // 2, 0)
    src = jnp.where(valid, (src_h * W1 + src_w).reshape(-1), -1)         # (HW,)

    # 0/1 nearest-upsample / scatter matrix (F.pad folded in): lane-dense RHS.
    scat = (jnp.arange(HW1, dtype=jnp.int32)[:, None] == src[None, :]).astype(f32)

    # Per-destination-lane effective transposed-conv weights and masked bias.
    wt4 = wt_up.astype(f32).reshape(C_in, C_up, 4)
    vmask = valid.astype(f32)
    weff = jnp.take(wt4, phase, axis=2) * vmask[None, None, :]           # (C_in, C_up, HW)
    bmask = b_up.astype(f32)[:, None] * vmask[None, :]                   # (C_up, HW)

    # 3x3 conv weights per tap (tap = ky*3 + kx): (9, C_in_stage, C_out_stage, 1)
    w1k = jnp.transpose(w1, (2, 3, 1, 0)).reshape(9, C_cat, C_mid, 1).astype(f32)
    w2k = jnp.transpose(w2, (2, 3, 1, 0)).reshape(9, C_mid, C_out, 1).astype(f32)

    col = lambda v: jnp.asarray(v, f32).reshape(-1, 1)

    args = (
        x1.astype(f32).reshape(N * C_in, HW1),   # lane-dense (C, H*W) layout:
        x2.astype(f32).reshape(N, C_skip, HW),   # reshape only, never transpose.
        scat, weff, bmask,
        w1k, col(b1), col(g1), col(be1),
        w2k, col(b2), col(g2), col(be2),
    )

    def kernel(x1_ref, x2_ref, scat_ref, weff_ref, bmask_ref,
               w1_ref, b1_ref, g1_ref, be1_ref,
               w2_ref, b2_ref, g2_ref, be2_ref,
               o_ref, scr1_ref, scr2_ref):
        # Column masks for the horizontal 3x3 taps (handle row wrap in flat layout).
        lane_col = jax.lax.broadcasted_iota(jnp.int32, (1, HW), 1) % W2
        col_ok = {-1: lane_col >= 1, 1: lane_col < (W2 - 1)}

        # Zero the padded halos once; interiors are rewritten below.
        scr1_ref[...] = jnp.zeros_like(scr1_ref)
        scr2_ref[...] = jnp.zeros_like(scr2_ref)

        def conv3x3(src_ref, wk_ref, bias_ref, c_in, c_out):
            # 'same' 3x3 conv on the VPU: 9 static-offset window reads from the
            # zero-padded line buffer holding ALL images stacked along sublanes,
            # then unrolled broadcast-FMAs over input channels.
            bias = bias_ref[...]
            accs = [jnp.zeros((c_out, HW), f32) + bias for _ in range(N)]
            tap = 0
            for ky in range(3):
                for kx in range(3):
                    dyo, dxo = ky - 1, kx - 1
                    win = src_ref[:, pl.ds(PB + dyo * W2 + dxo, HW)]     # (N*c_in, HW)
                    if dxo != 0:
                        win = jnp.where(col_ok[dxo], win, 0.0)
                    for n in range(N):
                        base = n * c_in
                        for ci in range(c_in):
                            accs[n] = accs[n] + wk_ref[tap, ci] * win[base + ci:base + ci + 1, :]
                    tap += 1
            return accs

        # ---------------- ConvTranspose2d(k=2, s=2) + F.pad ---------------------
        # Two MXU matmuls cover all images/channels; hi/lo split keeps the 0/1
        # scatter exact even if the f32 matmul runs as truncated bf16 passes.
        x1v = x1_ref[...]                                   # (N*C_in, HW1)
        x1_hi = x1v.astype(jnp.bfloat16).astype(f32)
        x1_lo = x1v - x1_hi
        smat = scat_ref[...]
        x1u = (jnp.dot(x1_hi, smat, preferred_element_type=f32) +
               jnp.dot(x1_lo, smat, preferred_element_type=f32))        # (N*C_in, HW)

        bias_mask = bmask_ref[...]
        for n in range(N):
            up = bias_mask
            for ci in range(C_in):
                up = up + weff_ref[ci] * x1u[n * C_in + ci:n * C_in + ci + 1, :]
            # torch.cat([x2, x1_up], dim=1) == two dense stores into the line buffer.
            scr1_ref[pl.ds(n * C_cat, C_skip), pl.ds(PB, HW)] = x2_ref[n]
            scr1_ref[pl.ds(n * C_cat + C_skip, C_up), pl.ds(PB, HW)] = up

        # ---------------- conv1 + BatchNorm(training stats) + ReLU ---------------
        # TODO(synk): eval-mode (running-stats) BN would just swap in folded scale/shift.
        a1 = conv3x3(scr1_ref, w1_ref, b1_ref, C_cat, C_mid)
        cnt = float(N * HW)
        m1 = sum(jnp.sum(a, axis=1, keepdims=True) for a in a1) / cnt
        q1 = sum(jnp.sum(a * a, axis=1, keepdims=True) for a in a1) / cnt
        scale1 = g1_ref[...] * jax.lax.rsqrt(q1 - m1 * m1 + eps)
        shift1 = be1_ref[...] - m1 * scale1
        for n in range(N):
            h = jnp.maximum(a1[n] * scale1 + shift1, 0.0)
            scr2_ref[pl.ds(n * C_mid, C_mid), pl.ds(PB, HW)] = h

        # ---------------- conv2 + BatchNorm + ReLU, lane-dense stores ------------
        a2 = conv3x3(scr2_ref, w2_ref, b2_ref, C_mid, C_out)
        m2 = sum(jnp.sum(a, axis=1, keepdims=True) for a in a2) / cnt
        q2 = sum(jnp.sum(a * a, axis=1, keepdims=True) for a in a2) / cnt
        scale2 = g2_ref[...] * jax.lax.rsqrt(q2 - m2 * m2 + eps)
        shift2 = be2_ref[...] - m2 * scale2
        for n in range(N):
            o_ref[n] = jnp.maximum(a2[n] * scale2 + shift2, 0.0).astype(o_ref.dtype)

    total_bytes = int(sum(int(a.size) * a.dtype.itemsize for a in args)
                      + N * C_out * HW * 4)
    flops = int(2 * 2 * (N * C_in) * HW1 * HW        # upsample scatter matmuls
                + 2 * N * C_in * C_up * HW           # per-lane channel mix
                + 2 * N * 9 * C_mid * C_cat * HW     # conv1
                + 2 * N * 9 * C_out * C_mid * HW)    # conv2

    out = pl.pallas_call(
        kernel,
        out_shape=jax.ShapeDtypeStruct((N, C_out, HW), f32),
        grid_spec=pltpu.PrefetchScalarGridSpec(
            num_scalar_prefetch=0,
            grid=(1,),
            in_specs=[_full_block(a) for a in args],
            out_specs=pl.BlockSpec((N, C_out, HW), lambda i: (0, 0, 0)),
            scratch_shapes=[
                pltpu.VMEM((N * C_cat, PADW), f32),   # padded line buffer for conv1
                pltpu.VMEM((N * C_mid, PADW), f32),   # padded line buffer for conv2
            ],
        ),
        compiler_params=pltpu.CompilerParams(
            dimension_semantics=("arbitrary",),
            vmem_limit_bytes=32 * 1024 * 1024,
        ),
        cost_estimate=pl.CostEstimate(
            flops=flops,
            transcendentals=2 * (C_mid + C_out),
            bytes_accessed=total_bytes,
        ),
    )(*args)

    return out.reshape(N, C_out, H2, W2)


def up_reference(x1, x2, params, *, eps=1e-5):
    """Plain-JAX reference (high-precision convs, training-mode BatchNorm)."""
    x1 = x1.astype(jnp.float32)
    x2 = x2.astype(jnp.float32)
    hi = jax.lax.Precision.HIGHEST

    # ConvTranspose2d(kernel=2, stride=2) + bias.
    t = jnp.einsum("nihw,ioyx->nohywx", x1, params["up_w"].astype(jnp.float32),
                   precision=hi)
    n, co, h1, _, w1, _ = t.shape
    up = t.reshape(n, co, 2 * h1, 2 * w1) + params["up_b"][None, :, None, None]

    dY = x2.shape[2] - up.shape[2]
    dX = x2.shape[3] - up.shape[3]
    up = jnp.pad(up, ((0, 0), (0, 0), (dY // 2, dY - dY // 2),
                      (dX // 2, dX - dX // 2)))
    x = jnp.concatenate([x2, up], axis=1)

    def conv_bn_relu(x, w, b, g, beta):
        y = jax.lax.conv_general_dilated(
            x, w.astype(jnp.float32), window_strides=(1, 1),
            padding=((1, 1), (1, 1)),
            dimension_numbers=("NCHW", "OIHW", "NCHW"),
            precision=hi) + b[None, :, None, None]
        mu = jnp.mean(y, axis=(0, 2, 3), keepdims=True)
        var = jnp.mean((y - mu) ** 2, axis=(0, 2, 3), keepdims=True)
        y = (y - mu) * jax.lax.rsqrt(var + eps) * g[None, :, None, None] \
            + beta[None, :, None, None]
        return jnp.maximum(y, 0.0)

    h = conv_bn_relu(x, params["conv1_w"], params["conv1_b"],
                     params["bn1_g"], params["bn1_b"])
    return conv_bn_relu(h, params["conv2_w"], params["conv2_b"],
                        params["bn2_g"], params["bn2_b"])


if __name__ == "__main__":
    key = jax.random.PRNGKey(0)
    ks = jax.random.split(key, 12)

    N = 2
    C_in, C_out = 8, 4            # Up(in_channels=8, out_channels=4)
    H1 = W1 = 8                   # x1 spatial; x2 is 2x -> 16x16
    H2 = W2 = 16
    C_cat = 2 * C_out

    x1 = jax.random.normal(ks[0], (N, C_in, H1, W1), jnp.float32)
    x2 = jax.random.normal(ks[1], (N, C_out, H2, W2), jnp.float32)

    params = dict(
        up_w=0.2 * jax.random.normal(ks[2], (C_in, C_out, 2, 2), jnp.float32),
        up_b=0.1 * jax.random.normal(ks[3], (C_out,), jnp.float32),
        conv1_w=0.2 * jax.random.normal(ks[4], (C_out, C_cat, 3, 3), jnp.float32),
        conv1_b=0.1 * jax.random.normal(ks[5], (C_out,), jnp.float32),
        bn1_g=1.0 + 0.1 * jax.random.normal(ks[6], (C_out,), jnp.float32),
        bn1_b=0.1 * jax.random.normal(ks[7], (C_out,), jnp.float32),
        conv2_w=0.2 * jax.random.normal(ks[8], (C_out, C_out, 3, 3), jnp.float32),
        conv2_b=0.1 * jax.random.normal(ks[9], (C_out,), jnp.float32),
        bn2_g=1.0 + 0.1 * jax.random.normal(ks[10], (C_out,), jnp.float32),
        bn2_b=0.1 * jax.random.normal(ks[11], (C_out,), jnp.float32),
    )

    y = up_forward(x1, x2, params)
    y = jax.block_until_ready(y)

    ref = up_reference(x1, x2, params)
    assert y.shape == (N, C_out, H2, W2)
    assert jnp.allclose(y, ref, atol=2e-3, rtol=2e-3), float(jnp.max(jnp.abs(y - ref)))

    print("KERNEL_OK")
</pallas_src>

<mosaic_0001>
module attributes {stable_mosaic.version = 11 : i64} {
  func.func @kernel(%arg0: i32, %arg1: memref<16x64xf32, #tpu.memory_space<vmem>>, %arg2: memref<2x4x256xf32, #tpu.memory_space<vmem>>, %arg3: memref<64x256xf32, #tpu.memory_space<vmem>>, %arg4: memref<8x4x256xf32, #tpu.memory_space<vmem>>, %arg5: memref<4x256xf32, #tpu.memory_space<vmem>>, %arg6: memref<9x8x4x1xf32, #tpu.memory_space<vmem>>, %arg7: memref<4x1xf32, #tpu.memory_space<vmem>>, %arg8: memref<4x1xf32, #tpu.memory_space<vmem>>, %arg9: memref<4x1xf32, #tpu.memory_space<vmem>>, %arg10: memref<9x4x4x1xf32, #tpu.memory_space<vmem>>, %arg11: memref<4x1xf32, #tpu.memory_space<vmem>>, %arg12: memref<4x1xf32, #tpu.memory_space<vmem>>, %arg13: memref<4x1xf32, #tpu.memory_space<vmem>>, %arg14: memref<2x4x256xf32, #tpu.memory_space<vmem>>, %arg15: memref<16x290xf32, #tpu.memory_space<vmem>>, %arg16: memref<8x290xf32, #tpu.memory_space<vmem>>) attributes {dimension_semantics = [#tpu.dimension_semantics<arbitrary>], iteration_bounds = array<i64: 1>, scalar_prefetch = 0 : i64, scratch_operands = 2 : i64, tpu.core_type = #tpu.core_type<tc>, window_params = [{pipeline_mode = #tpu.pipeline_mode<synchronous>, transform_indices = @transform_0, window_bounds = array<i64: 16, 64>}, {pipeline_mode = #tpu.pipeline_mode<synchronous>, transform_indices = @transform_1, window_bounds = array<i64: 2, 4, 256>}, {pipeline_mode = #tpu.pipeline_mode<synchronous>, transform_indices = @transform_2, window_bounds = array<i64: 64, 256>}, {pipeline_mode = #tpu.pipeline_mode<synchronous>, transform_indices = @transform_3, window_bounds = array<i64: 8, 4, 256>}, {pipeline_mode = #tpu.pipeline_mode<synchronous>, transform_indices = @transform_4, window_bounds = array<i64: 4, 256>}, {pipeline_mode = #tpu.pipeline_mode<synchronous>, transform_indices = @transform_5, window_bounds = array<i64: 9, 8, 4, 1>}, {pipeline_mode = #tpu.pipeline_mode<synchronous>, transform_indices = @transform_6, window_bounds = array<i64: 4, 1>}, {pipeline_mode = #tpu.pipeline_mode<synchronous>, transform_indices = @transform_7, window_bounds = array<i64: 4, 1>}, {pipeline_mode = #tpu.pipeline_mode<synchronous>, transform_indices = @transform_8, window_bounds = array<i64: 4, 1>}, {pipeline_mode = #tpu.pipeline_mode<synchronous>, transform_indices = @transform_9, window_bounds = array<i64: 9, 4, 4, 1>}, {pipeline_mode = #tpu.pipeline_mode<synchronous>, transform_indices = @transform_10, window_bounds = array<i64: 4, 1>}, {pipeline_mode = #tpu.pipeline_mode<synchronous>, transform_indices = @transform_11, window_bounds = array<i64: 4, 1>}, {pipeline_mode = #tpu.pipeline_mode<synchronous>, transform_indices = @transform_12, window_bounds = array<i64: 4, 1>}, {pipeline_mode = #tpu.pipeline_mode<synchronous>, transform_indices = @transform_13, window_bounds = array<i64: 2, 4, 256>}]} {
    %0 = tpu.iota {dimensions = array<i32: 1>} : vector<1x256xi32>
    %c16_i32 = arith.constant 16 : i32
    %c0_i32 = arith.constant 0 : i32
    %1 = arith.cmpi eq, %c16_i32, %c0_i32 : i32
    %c1_i32 = arith.constant 1 : i32
    %2 = arith.select %1, %c1_i32, %c16_i32 : i32
    %3 = vector.broadcast %2 : i32 to vector<1x256xi32>
    %4 = arith.remsi %0, %3 : vector<1x256xi32>
    %c0_i32_0 = arith.constant 0 : i32
    %5 = vector.broadcast %c0_i32_0 : i32 to vector<1x256xi32>
    %6 = arith.cmpi ne, %4, %5 : vector<1x256xi32>
    %c0_i32_1 = arith.constant 0 : i32
    %7 = vector.broadcast %c0_i32_1 : i32 to vector<1x256xi32>
    %8 = arith.cmpi slt, %4, %7 : vector<1x256xi32>
    %c0_i32_2 = arith.constant 0 : i32
    %9 = arith.cmpi slt, %2, %c0_i32_2 : i32
    %10 = vector.broadcast %9 : i1 to vector<1x256xi1>
    %11 = vector.broadcast %10 : vector<1x256xi1> to vector<1x256xi1>
    %12 = arith.xori %8, %11 : vector<1x256xi1>
    %13 = arith.andi %12, %6 : vector<1x256xi1>
    %14 = vector.broadcast %2 : i32 to vector<1x256xi32>
    %15 = arith.addi %4, %14 : vector<1x256xi32>
    %16 = arith.select %13, %15, %4 : vector<1x256xi1>, vector<1x256xi32>
    %c1_i32_3 = arith.constant 1 : i32
    %17 = vector.broadcast %c1_i32_3 : i32 to vector<1x256xi32>
    %18 = arith.cmpi sge, %16, %17 : vector<1x256xi32>
    %c15_i32 = arith.constant 15 : i32
    %19 = vector.broadcast %c15_i32 : i32 to vector<1x256xi32>
    %20 = arith.cmpi slt, %16, %19 : vector<1x256xi32>
    %cst = arith.constant 0.000000e+00 : f32
    %21 = vector.broadcast %cst : f32 to vector<16x290xf32>
    %c0 = arith.constant 0 : index
    %c0_4 = arith.constant 0 : index
    %22 = vector.load %arg15[%c0, %c0_4] : memref<16x290xf32, #tpu.memory_space<vmem>>, vector<16x290xf32>
    tpu.vector_store %arg15[%c0, %c0_4], %21 {strides = array<i32>} : memref<16x290xf32, #tpu.memory_space<vmem>>, vector<16x290xf32>,
    %cst_5 = arith.constant 0.000000e+00 : f32
    %23 = vector.broadcast %cst_5 : f32 to vector<8x290xf32>
    %c0_6 = arith.constant 0 : index
    %c0_7 = arith.constant 0 : index
    %24 = vector.load %arg16[%c0_6, %c0_7] : memref<8x290xf32, #tpu.memory_space<vmem>>, vector<8x290xf32>
    tpu.vector_store %arg16[%c0_6, %c0_7], %23 {strides = array<i32>} : memref<8x290xf32, #tpu.memory_space<vmem>>, vector<8x290xf32>,
    %c0_8 = arith.constant 0 : index
    %c0_9 = arith.constant 0 : index
    %25 = vector.load %arg1[%c0_8, %c0_9] : memref<16x64xf32, #tpu.memory_space<vmem>>, vector<16x64xf32>
    %26 = arith.truncf %25 : vector<16x64xf32> to vector<16x64xbf16>
    %27 = arith.extf %26 : vector<16x64xbf16> to vector<16x64xf32>
    %28 = arith.subf %25, %27 : vector<16x64xf32>
    %c0_10 = arith.constant 0 : index
    %c0_11 = arith.constant 0 : index
    %29 = vector.load %arg3[%c0_10, %c0_11] : memref<64x256xf32, #tpu.memory_space<vmem>>, vector<64x256xf32>
    %cst_12 = arith.constant dense<0.000000e+00> : vector<16x256xf32>
    %30 = tpu.matmul %27, %29, %cst_12 {dimension_numbers = #tpu.dot_dimension_numbers<[1], [0], [0], [1], [0, 0, 1, 1], [], []>} : vector<16x64xf32>, vector<64x256xf32>, vector<16x256xf32> -> vector<16x256xf32>
    %cst_13 = arith.constant dense<0.000000e+00> : vector<16x256xf32>
    %31 = tpu.matmul %28, %29, %cst_13 {dimension_numbers = #tpu.dot_dimension_numbers<[1], [0], [0], [1], [0, 0, 1, 1], [], []>} : vector<16x64xf32>, vector<64x256xf32>, vector<16x256xf32> -> vector<16x256xf32>
    %32 = arith.addf %30, %31 : vector<16x256xf32>
    %c0_14 = arith.constant 0 : index
    %c0_15 = arith.constant 0 : index
    %33 = vector.load %arg5[%c0_14, %c0_15] : memref<4x256xf32, #tpu.memory_space<vmem>>, vector<4x256xf32>
    %c0_16 = arith.constant 0 : index
    %c0_17 = arith.constant 0 : index
    %c0_18 = arith.constant 0 : index
    %34 = vector.load %arg4[%c0_16, %c0_17, %c0_18] : memref<8x4x256xf32, #tpu.memory_space<vmem>>, vector<1x4x256xf32>
    %35 = vector.shape_cast %34 : vector<1x4x256xf32> to vector<4x256xf32>
    %36 = vector.extract_strided_slice %32 {offsets = [0, 0], sizes = [1, 256], strides = [1, 1]} : vector<16x256xf32> to vector<1x256xf32>
    %37 = vector.broadcast %36 : vector<1x256xf32> to vector<4x256xf32>
    %38 = arith.mulf %35, %37 : vector<4x256xf32>
    %39 = arith.addf %33, %38 : vector<4x256xf32>
    %c1 = arith.constant 1 : index
    %c0_19 = arith.constant 0 : index
    %c0_20 = arith.constant 0 : index
    %40 = vector.load %arg4[%c1, %c0_19, %c0_20] : memref<8x4x256xf32, #tpu.memory_space<vmem>>, vector<1x4x256xf32>
    %41 = vector.shape_cast %40 : vector<1x4x256xf32> to vector<4x256xf32>
    %42 = vector.extract_strided_slice %32 {offsets = [1, 0], sizes = [1, 256], strides = [1, 1]} : vector<16x256xf32> to vector<1x256xf32>
    %43 = vector.broadcast %42 : vector<1x256xf32> to vector<4x256xf32>
    %44 = arith.mulf %41, %43 : vector<4x256xf32>
    %45 = arith.addf %39, %44 : vector<4x256xf32>
    %c2 = arith.constant 2 : index
    %c0_21 = arith.constant 0 : index
    %c0_22 = arith.constant 0 : index
    %46 = vector.load %arg4[%c2, %c0_21, %c0_22] : memref<8x4x256xf32, #tpu.memory_space<vmem>>, vector<1x4x256xf32>
    %47 = vector.shape_cast %46 : vector<1x4x256xf32> to vector<4x256xf32>
    %48 = vector.extract_strided_slice %32 {offsets = [2, 0], sizes = [1, 256], strides = [1, 1]} : vector<16x256xf32> to vector<1x256xf32>
    %49 = vector.broadcast %48 : vector<1x256xf32> to vector<4x256xf32>
    %50 = arith.mulf %47, %49 : vector<4x256xf32>
    %51 = arith.addf %45, %50 : vector<4x256xf32>
    %c3 = arith.constant 3 : index
    %c0_23 = arith.constant 0 : index
    %c0_24 = arith.constant 0 : index
    %52 = vector.load %arg4[%c3, %c0_23, %c0_24] : memref<8x4x256xf32, #tpu.memory_space<vmem>>, vector<1x4x256xf32>
    %53 = vector.shape_cast %52 : vector<1x4x256xf32> to vector<4x256xf32>
    %54 = vector.extract_strided_slice %32 {offsets = [3, 0], sizes = [1, 256], strides = [1, 1]} : vector<16x256xf32> to vector<1x256xf32>
    %55 = vector.broadcast %54 : vector<1x256xf32> to vector<4x256xf32>
    %56 = arith.mulf %53, %55 : vector<4x256xf32>
    %57 = arith.addf %51, %56 : vector<4x256xf32>
    %c4 = arith.constant 4 : index
    %c0_25 = arith.constant 0 : index
    %c0_26 = arith.constant 0 : index
    %58 = vector.load %arg4[%c4, %c0_25, %c0_26] : memref<8x4x256xf32, #tpu.memory_space<vmem>>, vector<1x4x256xf32>
    %59 = vector.shape_cast %58 : vector<1x4x256xf32> to vector<4x256xf32>
    %60 = vector.extract_strided_slice %32 {offsets = [4, 0], sizes = [1, 256], strides = [1, 1]} : vector<16x256xf32> to vector<1x256xf32>
    %61 = vector.broadcast %60 : vector<1x256xf32> to vector<4x256xf32>
    %62 = arith.mulf %59, %61 : vector<4x256xf32>
    %63 = arith.addf %57, %62 : vector<4x256xf32>
    %c5 = arith.constant 5 : index
    %c0_27 = arith.constant 0 : index
    %c0_28 = arith.constant 0 : index
    %64 = vector.load %arg4[%c5, %c0_27, %c0_28] : memref<8x4x256xf32, #tpu.memory_space<vmem>>, vector<1x4x256xf32>
    %65 = vector.shape_cast %64 : vector<1x4x256xf32> to vector<4x256xf32>
    %66 = vector.extract_strided_slice %32 {offsets = [5, 0], sizes = [1, 256], strides = [1, 1]} : vector<16x256xf32> to vector<1x256xf32>
    %67 = vector.broadcast %66 : vector<1x256xf32> to vector<4x256xf32>
    %68 = arith.mulf %65, %67 : vector<4x256xf32>
    %69 = arith.addf %63, %68 : vector<4x256xf32>
    %c6 = arith.constant 6 : index
    %c0_29 = arith.constant 0 : index
    %c0_30 = arith.constant 0 : index
    %70 = vector.load %arg4[%c6, %c0_29, %c0_30] : memref<8x4x256xf32, #tpu.memory_space<vmem>>, vector<1x4x256xf32>
    %71 = vector.shape_cast %70 : vector<1x4x256xf32> to vector<4x256xf32>
    %72 = vector.extract_strided_slice %32 {offsets = [6, 0], sizes = [1, 256], strides = [1, 1]} : vector<16x256xf32> to vector<1x256xf32>
    %73 = vector.broadcast %72 : vector<1x256xf32> to vector<4x256xf32>
    %74 = arith.mulf %71, %73 : vector<4x256xf32>
    %75 = arith.addf %69, %74 : vector<4x256xf32>
    %c7 = arith.constant 7 : index
    %c0_31 = arith.constant 0 : index
    %c0_32 = arith.constant 0 : index
    %76 = vector.load %arg4[%c7, %c0_31, %c0_32] : memref<8x4x256xf32, #tpu.memory_space<vmem>>, vector<1x4x256xf32>
    %77 = vector.shape_cast %76 : vector<1x4x256xf32> to vector<4x256xf32>
    %78 = vector.extract_strided_slice %32 {offsets = [7, 0], sizes = [1, 256], strides = [1, 1]} : vector<16x256xf32> to vector<1x256xf32>
    %79 = vector.broadcast %78 : vector<1x256xf32> to vector<4x256xf32>
    %80 = arith.mulf %77, %79 : vector<4x256xf32>
    %81 = arith.addf %75, %80 : vector<4x256xf32>
    %c0_33 = arith.constant 0 : index
    %c0_34 = arith.constant 0 : index
    %c0_35 = arith.constant 0 : index
    %82 = vector.load %arg2[%c0_33, %c0_34, %c0_35] : memref<2x4x256xf32, #tpu.memory_space<vmem>>, vector<1x4x256xf32>
    %83 = vector.shape_cast %82 : vector<1x4x256xf32> to vector<4x256xf32>
    %c0_36 = arith.constant 0 : index
    %c17 = arith.constant 17 : index
    %84 = vector.load %arg15[%c0_36, %c17] : memref<16x290xf32, #tpu.memory_space<vmem>>, vector<4x256xf32>
    tpu.vector_store %arg15[%c0_36, %c17], %83 {strides = array<i32>} : memref<16x290xf32, #tpu.memory_space<vmem>>, vector<4x256xf32>,
    %c4_37 = arith.constant 4 : index
    %c17_38 = arith.constant 17 : index
    %85 = vector.load %arg15[%c4_37, %c17_38] : memref<16x290xf32, #tpu.memory_space<vmem>>, vector<4x256xf32>
    tpu.vector_store %arg15[%c4_37, %c17_38], %81 {strides = array<i32>} : memref<16x290xf32, #tpu.memory_space<vmem>>, vector<4x256xf32>,
    %c0_39 = arith.constant 0 : index
    %c0_40 = arith.constant 0 : index
    %c0_41 = arith.constant 0 : index
    %86 = vector.load %arg4[%c0_39, %c0_40, %c0_41] : memref<8x4x256xf32, #tpu.memory_space<vmem>>, vector<1x4x256xf32>
    %87 = vector.shape_cast %86 : vector<1x4x256xf32> to vector<4x256xf32>
    %88 = vector.extract_strided_slice %32 {offsets = [8, 0], sizes = [1, 256], strides = [1, 1]} : vector<16x256xf32> to vector<1x256xf32>
    %89 = vector.broadcast %88 : vector<1x256xf32> to vector<4x256xf32>
    %90 = arith.mulf %87, %89 : vector<4x256xf32>
    %91 = arith.addf %33, %90 : vector<4x256xf32>
    %c1_42 = arith.constant 1 : index
    %c0_43 = arith.constant 0 : index
    %c0_44 = arith.constant 0 : index
    %92 = vector.load %arg4[%c1_42, %c0_43, %c0_44] : memref<8x4x256xf32, #tpu.memory_space<vmem>>, vector<1x4x256xf32>
    %93 = vector.shape_cast %92 : vector<1x4x256xf32> to vector<4x256xf32>
    %94 = vector.extract_strided_slice %32 {offsets = [9, 0], sizes = [1, 256], strides = [1, 1]} : vector<16x256xf32> to vector<1x256xf32>
    %95 = vector.broadcast %94 : vector<1x256xf32> to vector<4x256xf32>
    %96 = arith.mulf %93, %95 : vector<4x256xf32>
    %97 = arith.addf %91, %96 : vector<4x256xf32>
    %c2_45 = arith.constant 2 : index
    %c0_46 = arith.constant 0 : index
    %c0_47 = arith.constant 0 : index
    %98 = vector.load %arg4[%c2_45, %c0_46, %c0_47] : memref<8x4x256xf32, #tpu.memory_space<vmem>>, vector<1x4x256xf32>
    %99 = vector.shape_cast %98 : vector<1x4x256xf32> to vector<4x256xf32>
    %100 = vector.extract_strided_slice %32 {offsets = [10, 0], sizes = [1, 256], strides = [1, 1]} : vector<16x256xf32> to vector<1x256xf32>
    %101 = vector.broadcast %100 : vector<1x256xf32> to vector<4x256xf32>
    %102 = arith.mulf %99, %101 : vector<4x256xf32>
    %103 = arith.addf %97, %102 : vector<4x256xf32>
    %c3_48 = arith.constant 3 : index
    %c0_49 = arith.constant 0 : index
    %c0_50 = arith.constant 0 : index
    %104 = vector.load %arg4[%c3_48, %c0_49, %c0_50] : memref<8x4x256xf32, #tpu.memory_space<vmem>>, vector<1x4x256xf32>
    %105 = vector.shape_cast %104 : vector<1x4x256xf32> to vector<4x256xf32>
    %106 = vector.extract_strided_slice %32 {offsets = [11, 0], sizes = [1, 256], strides = [1, 1]} : vector<16x256xf32> to vector<1x256xf32>
    %107 = vector.broadcast %106 : vector<1x256xf32> to vector<4x256xf32>
    %108 = arith.mulf %105, %107 : vector<4x256xf32>
    %109 = arith.addf %103, %108 : vector<4x256xf32>
    %c4_51 = arith.constant 4 : index
    %c0_52 = arith.constant 0 : index
    %c0_53 = arith.constant 0 : index
    %110 = vector.load %arg4[%c4_51, %c0_52, %c0_53] : memref<8x4x256xf32, #tpu.memory_space<vmem>>, vector<1x4x256xf32>
    %111 = vector.shape_cast %110 : vector<1x4x256xf32> to vector<4x256xf32>
    %112 = vector.extract_strided_slice %32 {offsets = [12, 0], sizes = [1, 256], strides = [1, 1]} : vector<16x256xf32> to vector<1x256xf32>
    %113 = vector.broadcast %112 : vector<1x256xf32> to vector<4x256xf32>
    %114 = arith.mulf %111, %113 : vector<4x256xf32>
    %115 = arith.addf %109, %114 : vector<4x256xf32>
    %c5_54 = arith.constant 5 : index
    %c0_55 = arith.constant 0 : index
    %c0_56 = arith.constant 0 : index
    %116 = vector.load %arg4[%c5_54, %c0_55, %c0_56] : memref<8x4x256xf32, #tpu.memory_space<vmem>>, vector<1x4x256xf32>
    %117 = vector.shape_cast %116 : vector<1x4x256xf32> to vector<4x256xf32>
    %118 = vector.extract_strided_slice %32 {offsets = [13, 0], sizes = [1, 256], strides = [1, 1]} : vector<16x256xf32> to vector<1x256xf32>
    %119 = vector.broadcast %118 : vector<1x256xf32> to vector<4x256xf32>
    %120 = arith.mulf %117, %119 : vector<4x256xf32>
    %121 = arith.addf %115, %120 : vector<4x256xf32>
    %c6_57 = arith.constant 6 : index
    %c0_58 = arith.constant 0 : index
    %c0_59 = arith.constant 0 : index
    %122 = vector.load %arg4[%c6_57, %c0_58, %c0_59] : memref<8x4x256xf32, #tpu.memory_space<vmem>>, vector<1x4x256xf32>
    %123 = vector.shape_cast %122 : vector<1x4x256xf32> to vector<4x256xf32>
    %124 = vector.extract_strided_slice %32 {offsets = [14, 0], sizes = [1, 256], strides = [1, 1]} : vector<16x256xf32> to vector<1x256xf32>
    %125 = vector.broadcast %124 : vector<1x256xf32> to vector<4x256xf32>
    %126 = arith.mulf %123, %125 : vector<4x256xf32>
    %127 = arith.addf %121, %126 : vector<4x256xf32>
    %c7_60 = arith.constant 7 : index
    %c0_61 = arith.constant 0 : index
    %c0_62 = arith.constant 0 : index
    %128 = vector.load %arg4[%c7_60, %c0_61, %c0_62] : memref<8x4x256xf32, #tpu.memory_space<vmem>>, vector<1x4x256xf32>
    %129 = vector.shape_cast %128 : vector<1x4x256xf32> to vector<4x256xf32>
    %130 = vector.extract_strided_slice %32 {offsets = [15, 0], sizes = [1, 256], strides = [1, 1]} : vector<16x256xf32> to vector<1x256xf32>
    %131 = vector.broadcast %130 : vector<1x256xf32> to vector<4x256xf32>
    %132 = arith.mulf %129, %131 : vector<4x256xf32>
    %133 = arith.addf %127, %132 : vector<4x256xf32>
    %c1_63 = arith.constant 1 : index
    %c0_64 = arith.constant 0 : index
    %c0_65 = arith.constant 0 : index
    %134 = vector.load %arg2[%c1_63, %c0_64, %c0_65] : memref<2x4x256xf32, #tpu.memory_space<vmem>>, vector<1x4x256xf32>
    %135 = vector.shape_cast %134 : vector<1x4x256xf32> to vector<4x256xf32>
    %c8 = arith.constant 8 : index
    %c17_66 = arith.constant 17 : index
    %136 = vector.load %arg15[%c8, %c17_66] : memref<16x290xf32, #tpu.memory_space<vmem>>, vector<4x256xf32>
    tpu.vector_store %arg15[%c8, %c17_66], %135 {strides = array<i32>} : memref<16x290xf32, #tpu.memory_space<vmem>>, vector<4x256xf32>,
    %c12 = arith.constant 12 : index
    %c17_67 = arith.constant 17 : index
    %137 = vector.load %arg15[%c12, %c17_67] : memref<16x290xf32, #tpu.memory_space<vmem>>, vector<4x256xf32>
    tpu.vector_store %arg15[%c12, %c17_67], %133 {strides = array<i32>} : memref<16x290xf32, #tpu.memory_space<vmem>>, vector<4x256xf32>,
    %c0_68 = arith.constant 0 : index
    %c0_69 = arith.constant 0 : index
    %138 = vector.load %arg7[%c0_68, %c0_69] : memref<4x1xf32, #tpu.memory_space<vmem>>, vector<4x1xf32>
    %cst_70 = arith.constant 0.000000e+00 : f32
    %139 = vector.broadcast %cst_70 : f32 to vector<4x256xf32>
    %140 = vector.broadcast %138 : vector<4x1xf32> to vector<4x256xf32>
    %141 = arith.addf %139, %140 : vector<4x256xf32>
    %cst_71 = arith.constant 0.000000e+00 : f32
    %142 = vector.broadcast %cst_71 : f32 to vector<4x256xf32>
    %143 = vector.broadcast %138 : vector<4x1xf32> to vector<4x256xf32>
    %144 = arith.addf %142, %143 : vector<4x256xf32>
    %c0_72 = arith.constant 0 : index
    %c0_73 = arith.constant 0 : index
    %145 = vector.load %arg15[%c0_72, %c0_73] : memref<16x290xf32, #tpu.memory_space<vmem>>, vector<16x256xf32>
    %cst_74 = arith.constant 0.000000e+00 : f32
    %146 = vector.shape_cast %18 : vector<1x256xi1> to vector<1x256xi1>
    %147 = vector.broadcast %146 : vector<1x256xi1> to vector<16x256xi1>
    %148 = vector.broadcast %cst_74 : f32 to vector<16x256xf32>
    %149 = arith.select %147, %145, %148 : vector<16x256xi1>, vector<16x256xf32>
    %c0_75 = arith.constant 0 : index
    %c0_76 = arith.constant 0 : index
    %c0_77 = arith.constant 0 : index
    %c0_78 = arith.constant 0 : index
    %150 = vector.load %arg6[%c0_75, %c0_76, %c0_77, %c0_78] : memref<9x8x4x1xf32, #tpu.memory_space<vmem>>, vector<1x1x4x1xf32>
    %151 = vector.shape_cast %150 : vector<1x1x4x1xf32> to vector<4x1xf32>
    %152 = vector.extract_strided_slice %149 {offsets = [0, 0], sizes = [1, 256], strides = [1, 1]} : vector<16x256xf32> to vector<1x256xf32>
    %153 = vector.broadcast %151 : vector<4x1xf32> to vector<4x256xf32>
    %154 = vector.broadcast %152 : vector<1x256xf32> to vector<4x256xf32>
    %155 = arith.mulf %153, %154 : vector<4x256xf32>
    %156 = arith.addf %141, %155 : vector<4x256xf32>
    %c0_79 = arith.constant 0 : index
    %c1_80 = arith.constant 1 : index
    %c0_81 = arith.constant 0 : index
    %c0_82 = arith.constant 0 : index
    %157 = vector.load %arg6[%c0_79, %c1_80, %c0_81, %c0_82] : memref<9x8x4x1xf32, #tpu.memory_space<vmem>>, vector<1x1x4x1xf32>
    %158 = vector.shape_cast %157 : vector<1x1x4x1xf32> to vector<4x1xf32>
    %159 = vector.extract_strided_slice %149 {offsets = [1, 0], sizes = [1, 256], strides = [1, 1]} : vector<16x256xf32> to vector<1x256xf32>
    %160 = vector.broadcast %158 : vector<4x1xf32> to vector<4x256xf32>
    %161 = vector.broadcast %159 : vector<1x256xf32> to vector<4x256xf32>
    %162 = arith.mulf %160, %161 : vector<4x256xf32>
    %163 = arith.addf %156, %162 : vector<4x256xf32>
    %c0_83 = arith.constant 0 : index
    %c2_84 = arith.constant 2 : index
    %c0_85 = arith.constant 0 : index
    %c0_86 = arith.constant 0 : index
    %164 = vector.load %arg6[%c0_83, %c2_84, %c0_85, %c0_86] : memref<9x8x4x1xf32, #tpu.memory_space<vmem>>, vector<1x1x4x1xf32>
    %165 = vector.shape_cast %164 : vector<1x1x4x1xf32> to vector<4x1xf32>
    %166 = vector.extract_strided_slice %149 {offsets = [2, 0], sizes = [1, 256], strides = [1, 1]} : vector<16x256xf32> to vector<1x256xf32>
    %167 = vector.broadcast %165 : vector<4x1xf32> to vector<4x256xf32>
    %168 = vector.broadcast %166 : vector<1x256xf32> to vector<4x256xf32>
    %169 = arith.mulf %167, %168 : vector<4x256xf32>
    %170 = arith.addf %163, %169 : vector<4x256xf32>
    %c0_87 = arith.constant 0 : index
    %c3_88 = arith.constant 3 : index
    %c0_89 = arith.constant 0 : index
    %c0_90 = arith.constant 0 : index
    %171 = vector.load %arg6[%c0_87, %c3_88, %c0_89, %c0_90] : memref<9x8x4x1xf32, #tpu.memory_space<vmem>>, vector<1x1x4x1xf32>
    %172 = vector.shape_cast %171 : vector<1x1x4x1xf32> to vector<4x1xf32>
    %173 = vector.extract_strided_slice %149 {offsets = [3, 0], sizes = [1, 256], strides = [1, 1]} : vector<16x256xf32> to vector<1x256xf32>
    %174 = vector.broadcast %172 : vector<4x1xf32> to vector<4x256xf32>
    %175 = vector.broadcast %173 : vector<1x256xf32> to vector<4x256xf32>
    %176 = arith.mulf %174, %175 : vector<4x256xf32>
    %177 = arith.addf %170, %176 : vector<4x256xf32>
    %c0_91 = arith.constant 0 : index
    %c4_92 = arith.constant 4 : index
    %c0_93 = arith.constant 0 : index
    %c0_94 = arith.constant 0 : index
    %178 = vector.load %arg6[%c0_91, %c4_92, %c0_93, %c0_94] : memref<9x8x4x1xf32, #tpu.memory_space<vmem>>, vector<1x1x4x1xf32>
    %179 = vector.shape_cast %178 : vector<1x1x4x1xf32> to vector<4x1xf32>
    %180 = vector.extract_strided_slice %149 {offsets = [4, 0], sizes = [1, 256], strides = [1, 1]} : vector<16x256xf32> to vector<1x256xf32>
    %181 = vector.broadcast %179 : vector<4x1xf32> to vector<4x256xf32>
    %182 = vector.broadcast %180 : vector<1x256xf32> to vector<4x256xf32>
    %183 = arith.mulf %181, %182 : vector<4x256xf32>
    %184 = arith.addf %177, %183 : vector<4x256xf32>
    %c0_95 = arith.constant 0 : index
    %c5_96 = arith.constant 5 : index
    %c0_97 = arith.constant 0 : index
    %c0_98 = arith.constant 0 : index
    %185 = vector.load %arg6[%c0_95, %c5_96, %c0_97, %c0_98] : memref<9x8x4x1xf32, #tpu.memory_space<vmem>>, vector<1x1x4x1xf32>
    %186 = vector.shape_cast %185 : vector<1x1x4x1xf32> to vector<4x1xf32>
    %187 = vector.extract_strided_slice %149 {offsets = [5, 0], sizes = [1, 256], strides = [1, 1]} : vector<16x256xf32> to vector<1x256xf32>
    %188 = vector.broadcast %186 : vector<4x1xf32> to vector<4x256xf32>
    %189 = vector.broadcast %187 : vector<1x256xf32> to vector<4x256xf32>
    %190 = arith.mulf %188, %189 : vector<4x256xf32>
    %191 = arith.addf %184, %190 : vector<4x256xf32>
    %c0_99 = arith.constant 0 : index
    %c6_100 = arith.constant 6 : index
    %c0_101 = arith.constant 0 : index
    %c0_102 = arith.constant 0 : index
    %192 = vector.load %arg6[%c0_99, %c6_100, %c0_101, %c0_102] : memref<9x8x4x1xf32, #tpu.memory_space<vmem>>, vector<1x1x4x1xf32>
    %193 = vector.shape_cast %192 : vector<1x1x4x1xf32> to vector<4x1xf32>
    %194 = vector.extract_strided_slice %149 {offsets = [6, 0], sizes = [1, 256], strides = [1, 1]} : vector<16x256xf32> to vector<1x256xf32>
    %195 = vector.broadcast %193 : vector<4x1xf32> to vector<4x256xf32>
    %196 = vector.broadcast %194 : vector<1x256xf32> to vector<4x256xf32>
    %197 = arith.mulf %195, %196 : vector<4x256xf32>
    %198 = arith.addf %191, %197 : vector<4x256xf32>
    %c0_103 = arith.constant 0 : index
    %c7_104 = arith.constant 7 : index
    %c0_105 = arith.constant 0 : index
    %c0_106 = arith.constant 0 : index
    %199 = vector.load %arg6[%c0_103, %c7_104, %c0_105, %c0_106] : memref<9x8x4x1xf32, #tpu.memory_space<vmem>>, vector<1x1x4x1xf32>
    %200 = vector.shape_cast %199 : vector<1x1x4x1xf32> to vector<4x1xf32>
    %201 = vector.extract_strided_slice %149 {offsets = [7, 0], sizes = [1, 256], strides = [1, 1]} : vector<16x256xf32> to vector<1x256xf32>
    %202 = vector.broadcast %200 : vector<4x1xf32> to vector<4x256xf32>
    %203 = vector.broadcast %201 : vector<1x256xf32> to vector<4x256xf32>
    %204 = arith.mulf %202, %203 : vector<4x256xf32>
    %205 = arith.addf %198, %204 : vector<4x256xf32>
    %c0_107 = arith.constant 0 : index
    %c0_108 = arith.constant 0 : index
    %c0_109 = arith.constant 0 : index
    %c0_110 = arith.constant 0 : index
    %206 = vector.load %arg6[%c0_107, %c0_108, %c0_109, %c0_110] : memref<9x8x4x1xf32, #tpu.memory_space<vmem>>, vector<1x1x4x1xf32>
    %207 = vector.shape_cast %206 : vector<1x1x4x1xf32> to vector<4x1xf32>
    %208 = vector.extract_strided_slice %149 {offsets = [8, 0], sizes = [1, 256], strides = [1, 1]} : vector<16x256xf32> to vector<1x256xf32>
    %209 = vector.broadcast %207 : vector<4x1xf32> to vector<4x256xf32>
    %210 = vector.broadcast %208 : vector<1x256xf32> to vector<4x256xf32>
    %211 = arith.mulf %209, %210 : vector<4x256xf32>
    %212 = arith.addf %144, %211 : vector<4x256xf32>
    %c0_111 = arith.constant 0 : index
    %c1_112 = arith.constant 1 : index
    %c0_113 = arith.constant 0 : index
    %c0_114 = arith.constant 0 : index
    %213 = vector.load %arg6[%c0_111, %c1_112, %c0_113, %c0_114] : memref<9x8x4x1xf32, #tpu.memory_space<vmem>>, vector<1x1x4x1xf32>
    %214 = vector.shape_cast %213 : vector<1x1x4x1xf32> to vector<4x1xf32>
    %215 = vector.extract_strided_slice %149 {offsets = [9, 0], sizes = [1, 256], strides = [1, 1]} : vector<16x256xf32> to vector<1x256xf32>
    %216 = vector.broadcast %214 : vector<4x1xf32> to vector<4x256xf32>
    %217 = vector.broadcast %215 : vector<1x256xf32> to vector<4x256xf32>
    %218 = arith.mulf %216, %217 : vector<4x256xf32>
    %219 = arith.addf %212, %218 : vector<4x256xf32>
    %c0_115 = arith.constant 0 : index
    %c2_116 = arith.constant 2 : index
    %c0_117 = arith.constant 0 : index
    %c0_118 = arith.constant 0 : index
    %220 = vector.load %arg6[%c0_115, %c2_116, %c0_117, %c0_118] : memref<9x8x4x1xf32, #tpu.memory_space<vmem>>, vector<1x1x4x1xf32>
    %221 = vector.shape_cast %220 : vector<1x1x4x1xf32> to vector<4x1xf32>
    %222 = vector.extract_strided_slice %149 {offsets = [10, 0], sizes = [1, 256], strides = [1, 1]} : vector<16x256xf32> to vector<1x256xf32>
    %223 = vector.broadcast %221 : vector<4x1xf32> to vector<4x256xf32>
    %224 = vector.broadcast %222 : vector<1x256xf32> to vector<4x256xf32>
    %225 = arith.mulf %223, %224 : vector<4x256xf32>
    %226 = arith.addf %219, %225 : vector<4x256xf32>
    %c0_119 = arith.constant 0 : index
    %c3_120 = arith.constant 3 : index
    %c0_121 = arith.constant 0 : index
    %c0_122 = arith.constant 0 : index
    %227 = vector.load %arg6[%c0_119, %c3_120, %c0_121, %c0_122] : memref<9x8x4x1xf32, #tpu.memory_space<vmem>>, vector<1x1x4x1xf32>
    %228 = vector.shape_cast %227 : vector<1x1x4x1xf32> to vector<4x1xf32>
    %229 = vector.extract_strided_slice %149 {offsets = [11, 0], sizes = [1, 256], strides = [1, 1]} : vector<16x256xf32> to vector<1x256xf32>
    %230 = vector.broadcast %228 : vector<4x1xf32> to vector<4x256xf32>
    %231 = vector.broadcast %229 : vector<1x256xf32> to vector<4x256xf32>
    %232 = arith.mulf %230, %231 : vector<4x256xf32>
    %233 = arith.addf %226, %232 : vector<4x256xf32>
    %c0_123 = arith.constant 0 : index
    %c4_124 = arith.constant 4 : index
    %c0_125 = arith.constant 0 : index
    %c0_126 = arith.constant 0 : index
    %234 = vector.load %arg6[%c0_123, %c4_124, %c0_125, %c0_126] : memref<9x8x4x1xf32, #tpu.memory_space<vmem>>, vector<1x1x4x1xf32>
    %235 = vector.shape_cast %234 : vector<1x1x4x1xf32> to vector<4x1xf32>
    %236 = vector.extract_strided_slice %149 {offsets = [12, 0], sizes = [1, 256], strides = [1, 1]} : vector<16x256xf32> to vector<1x256xf32>
    %237 = vector.broadcast %235 : vector<4x1xf32> to vector<4x256xf32>
    %238 = vector.broadcast %236 : vector<1x256xf32> to vector<4x256xf32>
    %239 = arith.mulf %237, %238 : vector<4x256xf32>
    %240 = arith.addf %233, %239 : vector<4x256xf32>
    %c0_127 = arith.constant 0 : index
    %c5_128 = arith.constant 5 : index
    %c0_129 = arith.constant 0 : index
    %c0_130 = arith.constant 0 : index
    %241 = vector.load %arg6[%c0_127, %c5_128, %c0_129, %c0_130] : memref<9x8x4x1xf32, #tpu.memory_space<vmem>>, vector<1x1x4x1xf32>
    %242 = vector.shape_cast %241 : vector<1x1x4x1xf32> to vector<4x1xf32>
    %243 = vector.extract_strided_slice %149 {offsets = [13, 0], sizes = [1, 256], strides = [1, 1]} : vector<16x256xf32> to vector<1x256xf32>
    %244 = vector.broadcast %242 : vector<4x1xf32> to vector<4x256xf32>
    %245 = vector.broadcast %243 : vector<1x256xf32> to vector<4x256xf32>
    %246 = arith.mulf %244, %245 : vector<4x256xf32>
    %247 = arith.addf %240, %246 : vector<4x256xf32>
    %c0_131 = arith.constant 0 : index
    %c6_132 = arith.constant 6 : index
    %c0_133 = arith.constant 0 : index
    %c0_134 = arith.constant 0 : index
    %248 = vector.load %arg6[%c0_131, %c6_132, %c0_133, %c0_134] : memref<9x8x4x1xf32, #tpu.memory_space<vmem>>, vector<1x1x4x1xf32>
    %249 = vector.shape_cast %248 : vector<1x1x4x1xf32> to vector<4x1xf32>
    %250 = vector.extract_strided_slice %149 {offsets = [14, 0], sizes = [1, 256], strides = [1, 1]} : vector<16x256xf32> to vector<1x256xf32>
    %251 = vector.broadcast %249 : vector<4x1xf32> to vector<4x256xf32>
    %252 = vector.broadcast %250 : vector<1x256xf32> to vector<4x256xf32>
    %253 = arith.mulf %251, %252 : vector<4x256xf32>
    %254 = arith.addf %247, %253 : vector<4x256xf32>
    %c0_135 = arith.constant 0 : index
    %c7_136 = arith.constant 7 : index
    %c0_137 = arith.constant 0 : index
    %c0_138 = arith.constant 0 : index
    %255 = vector.load %arg6[%c0_135, %c7_136, %c0_137, %c0_138] : memref<9x8x4x1xf32, #tpu.memory_space<vmem>>, vector<1x1x4x1xf32>
    %256 = vector.shape_cast %255 : vector<1x1x4x1xf32> to vector<4x1xf32>
    %257 = vector.extract_strided_slice %149 {offsets = [15, 0], sizes = [1, 256], strides = [1, 1]} : vector<16x256xf32> to vector<1x256xf32>
    %258 = vector.broadcast %256 : vector<4x1xf32> to vector<4x256xf32>
    %259 = vector.broadcast %257 : vector<1x256xf32> to vector<4x256xf32>
    %260 = arith.mulf %258, %259 : vector<4x256xf32>
    %261 = arith.addf %254, %260 : vector<4x256xf32>
    %c0_139 = arith.constant 0 : index
    %c1_140 = arith.constant 1 : index
    %262 = vector.load %arg15[%c0_139, %c1_140] : memref<16x290xf32, #tpu.memory_space<vmem>>, vector<16x256xf32>
    %c1_141 = arith.constant 1 : index
    %c0_142 = arith.constant 0 : index
    %c0_143 = arith.constant 0 : index
    %c0_144 = arith.constant 0 : index
    %263 = vector.load %arg6[%c1_141, %c0_142, %c0_143, %c0_144] : memref<9x8x4x1xf32, #tpu.memory_space<vmem>>, vector<1x1x4x1xf32>
    %264 = vector.shape_cast %263 : vector<1x1x4x1xf32> to vector<4x1xf32>
    %265 = vector.extract_strided_slice %262 {offsets = [0, 0], sizes = [1, 256], strides = [1, 1]} : vector<16x256xf32> to vector<1x256xf32>
    %266 = vector.broadcast %264 : vector<4x1xf32> to vector<4x256xf32>
    %267 = vector.broadcast %265 : vector<1x256xf32> to vector<4x256xf32>
    %268 = arith.mulf %266, %267 : vector<4x256xf32>
    %269 = arith.addf %205, %268 : vector<4x256xf32>
    %c1_145 = arith.constant 1 : index
    %c1_146 = arith.constant 1 : index
    %c0_147 = arith.constant 0 : index
    %c0_148 = arith.constant 0 : index
    %270 = vector.load %arg6[%c1_145, %c1_146, %c0_147, %c0_148] : memref<9x8x4x1xf32, #tpu.memory_space<vmem>>, vector<1x1x4x1xf32>
    %271 = vector.shape_cast %270 : vector<1x1x4x1xf32> to vector<4x1xf32>
    %272 = vector.extract_strided_slice %262 {offsets = [1, 0], sizes = [1, 256], strides = [1, 1]} : vector<16x256xf32> to vector<1x256xf32>
    %273 = vector.broadcast %271 : vector<4x1xf32> to vector<4x256xf32>
    %274 = vector.broadcast %272 : vector<1x256xf32> to vector<4x256xf32>
    %275 = arith.mulf %273, %274 : vector<4x256xf32>
    %276 = arith.addf %269, %275 : vector<4x256xf32>
    %c1_149 = arith.constant 1 : index
    %c2_150 = arith.constant 2 : index
    %c0_151 = arith.constant 0 : index
    %c0_152 = arith.constant 0 : index
    %277 = vector.load %arg6[%c1_149, %c2_150, %c0_151, %c0_152] : memref<9x8x4x1xf32, #tpu.memory_space<vmem>>, vector<1x1x4x1xf32>
    %278 = vector.shape_cast %277 : vector<1x1x4x1xf32> to vector<4x1xf32>
    %279 = vector.extract_strided_slice %262 {offsets = [2, 0], sizes = [1, 256], strides = [1, 1]} : vector<16x256xf32> to vector<1x256xf32>
    %280 = vector.broadcast %278 : vector<4x1xf32> to vector<4x256xf32>
    %281 = vector.broadcast %279 : vector<1x256xf32> to vector<4x256xf32>
    %282 = arith.mulf %280, %281 : vector<4x256xf32>
    %283 = arith.addf %276, %282 : vector<4x256xf32>
    %c1_153 = arith.constant 1 : index
    %c3_154 = arith.constant 3 : index
    %c0_155 = arith.constant 0 : index
    %c0_156 = arith.constant 0 : index
    %284 = vector.load %arg6[%c1_153, %c3_154, %c0_155, %c0_156] : memref<9x8x4x1xf32, #tpu.memory_space<vmem>>, vector<1x1x4x1xf32>
    %285 = vector.shape_cast %284 : vector<1x1x4x1xf32> to vector<4x1xf32>
    %286 = vector.extract_strided_slice %262 {offsets = [3, 0], sizes = [1, 256], strides = [1, 1]} : vector<16x256xf32> to vector<1x256xf32>
    %287 = vector.broadcast %285 : vector<4x1xf32> to vector<4x256xf32>
    %288 = vector.broadcast %286 : vector<1x256xf32> to vector<4x256xf32>
    %289 = arith.mulf %287, %288 : vector<4x256xf32>
    %290 = arith.addf %283, %289 : vector<4x256xf32>
    %c1_157 = arith.constant 1 : index
    %c4_158 = arith.constant 4 : index
    %c0_159 = arith.constant 0 : index
    %c0_160 = arith.constant 0 : index
    %291 = vector.load %arg6[%c1_157, %c4_158, %c0_159, %c0_160] : memref<9x8x4x1xf32, #tpu.memory_space<vmem>>, vector<1x1x4x1xf32>
    %292 = vector.shape_cast %291 : vector<1x1x4x1xf32> to vector<4x1xf32>
    %293 = vector.extract_strided_slice %262 {offsets = [4, 0], sizes = [1, 256], strides = [1, 1]} : vector<16x256xf32> to vector<1x256xf32>
    %294 = vector.broadcast %292 : vector<4x1xf32> to vector<4x256xf32>
    %295 = vector.broadcast %293 : vector<1x256xf32> to vector<4x256xf32>
    %296 = arith.mulf %294, %295 : vector<4x256xf32>
    %297 = arith.addf %290, %296 : vector<4x256xf32>
    %c1_161 = arith.constant 1 : index
    %c5_162 = arith.constant 5 : index
    %c0_163 = arith.constant 0 : index
    %c0_164 = arith.constant 0 : index
    %298 = vector.load %arg6[%c1_161, %c5_162, %c0_163, %c0_164] : memref<9x8x4x1xf32, #tpu.memory_space<vmem>>, vector<1x1x4x1xf32>
    %299 = vector.shape_cast %298 : vector<1x1x4x1xf32> to vector<4x1xf32>
    %300 = vector.extract_strided_slice %262 {offsets = [5, 0], sizes = [1, 256], strides = [1, 1]} : vector<16x256xf32> to vector<1x256xf32>
    %301 = vector.broadcast %299 : vector<4x1xf32> to vector<4x256xf32>
    %302 = vector.broadcast %300 : vector<1x256xf32> to vector<4x256xf32>
    %303 = arith.mulf %301, %302 : vector<4x256xf32>
    %304 = arith.addf %297, %303 : vector<4x256xf32>
    %c1_165 = arith.constant 1 : index
    %c6_166 = arith.constant 6 : index
    %c0_167 = arith.constant 0 : index
    %c0_168 = arith.constant 0 : index
    %305 = vector.load %arg6[%c1_165, %c6_166, %c0_167, %c0_168] : memref<9x8x4x1xf32, #tpu.memory_space<vmem>>, vector<1x1x4x1xf32>
    %306 = vector.shape_cast %305 : vector<1x1x4x1xf32> to vector<4x1xf32>
    %307 = vector.extract_strided_slice %262 {offsets = [6, 0], sizes = [1, 256], strides = [1, 1]} : vector<16x256xf32> to vector<1x256xf32>
    %308 = vector.broadcast %306 : vector<4x1xf32> to vector<4x256xf32>
    %309 = vector.broadcast %307 : vector<1x256xf32> to vector<4x256xf32>
    %310 = arith.mulf %308, %309 : vector<4x256xf32>
    %311 = arith.addf %304, %310 : vector<4x256xf32>
    %c1_169 = arith.constant 1 : index
    %c7_170 = arith.constant 7 : index
    %c0_171 = arith.constant 0 : index
    %c0_172 = arith.constant 0 : index
    %312 = vector.load %arg6[%c1_169, %c7_170, %c0_171, %c0_172] : memref<9x8x4x1xf32, #tpu.memory_space<vmem>>, vector<1x1x4x1xf32>
    %313 = vector.shape_cast %312 : vector<1x1x4x1xf32> to vector<4x1xf32>
    %314 = vector.extract_strided_slice %262 {offsets = [7, 0], sizes = [1, 256], strides = [1, 1]} : vector<16x256xf32> to vector<1x256xf32>
    %315 = vector.broadcast %313 : vector<4x1xf32> to vector<4x256xf32>
    %316 = vector.broadcast %314 : vector<1x256xf32> to vector<4x256xf32>
    %317 = arith.mulf %315, %316 : vector<4x256xf32>
    %318 = arith.addf %311, %317 : vector<4x256xf32>
    %c1_173 = arith.constant 1 : index
    %c0_174 = arith.constant 0 : index
    %c0_175 = arith.constant 0 : index
    %c0_176 = arith.constant 0 : index
    %319 = vector.load %arg6[%c1_173, %c0_174, %c0_175, %c0_176] : memref<9x8x4x1xf32, #tpu.memory_space<vmem>>, vector<1x1x4x1xf32>
    %320 = vector.shape_cast %319 : vector<1x1x4x1xf32> to vector<4x1xf32>
    %321 = vector.extract_strided_slice %262 {offsets = [8, 0], sizes = [1, 256], strides = [1, 1]} : vector<16x256xf32> to vector<1x256xf32>
    %322 = vector.broadcast %320 : vector<4x1xf32> to vector<4x256xf32>
    %323 = vector.broadcast %321 : vector<1x256xf32> to vector<4x256xf32>
    %324 = arith.mulf %322, %323 : vector<4x256xf32>
    %325 = arith.addf %261, %324 : vector<4x256xf32>
    %c1_177 = arith.constant 1 : index
    %c1_178 = arith.constant 1 : index
    %c0_179 = arith.constant 0 : index
    %c0_180 = arith.constant 0 : index
    %326 = vector.load %arg6[%c1_177, %c1_178, %c0_179, %c0_180] : memref<9x8x4x1xf32, #tpu.memory_space<vmem>>, vector<1x1x4x1xf32>
    %327 = vector.shape_cast %326 : vector<1x1x4x1xf32> to vector<4x1xf32>
    %328 = vector.extract_strided_slice %262 {offsets = [9, 0], sizes = [1, 256], strides = [1, 1]} : vector<16x256xf32> to vector<1x256xf32>
    %329 = vector.broadcast %327 : vector<4x1xf32> to vector<4x256xf32>
    %330 = vector.broadcast %328 : vector<1x256xf32> to vector<4x256xf32>
    %331 = arith.mulf %329, %330 : vector<4x256xf32>
    %332 = arith.addf %325, %331 : vector<4x256xf32>
    %c1_181 = arith.constant 1 : index
    %c2_182 = arith.constant 2 : index
    %c0_183 = arith.constant 0 : index
    %c0_184 = arith.constant 0 : index
    %333 = vector.load %arg6[%c1_181, %c2_182, %c0_183, %c0_184] : memref<9x8x4x1xf32, #tpu.memory_space<vmem>>, vector<1x1x4x1xf32>
    %334 = vector.shape_cast %333 : vector<1x1x4x1xf32> to vector<4x1xf32>
    %335 = vector.extract_strided_slice %262 {offsets = [10, 0], sizes = [1, 256], strides = [1, 1]} : vector<16x256xf32> to vector<1x256xf32>
    %336 = vector.broadcast %334 : vector<4x1xf32> to vector<4x256xf32>
    %337 = vector.broadcast %335 : vector<1x256xf32> to vector<4x256xf32>
    %338 = arith.mulf %336, %337 : vector<4x256xf32>
    %339 = arith.addf %332, %338 : vector<4x256xf32>
    %c1_185 = arith.constant 1 : index
    %c3_186 = arith.constant 3 : index
    %c0_187 = arith.constant 0 : index
    %c0_188 = arith.constant 0 : index
    %340 = vector.load %arg6[%c1_185, %c3_186, %c0_187, %c0_188] : memref<9x8x4x1xf32, #tpu.memory_space<vmem>>, vector<1x1x4x1xf32>
    %341 = vector.shape_cast %340 : vector<1x1x4x1xf32> to vector<4x1xf32>
    %342 = vector.extract_strided_slice %262 {offsets = [11, 0], sizes = [1, 256], strides = [1, 1]} : vector<16x256xf32> to vector<1x256xf32>
    %343 = vector.broadcast %341 : vector<4x1xf32> to vector<4x256xf32>
    %344 = vector.broadcast %342 : vector<1x256xf32> to vector<4x256xf32>
    %345 = arith.mulf %343, %344 : vector<4x256xf32>
    %346 = arith.addf %339, %345 : vector<4x256xf32>
    %c1_189 = arith.constant 1 : index
    %c4_190 = arith.constant 4 : index
    %c0_191 = arith.constant 0 : index
    %c0_192 = arith.constant 0 : index
    %347 = vector.load %arg6[%c1_189, %c4_190, %c0_191, %c0_192] : memref<9x8x4x1xf32, #tpu.memory_space<vmem>>, vector<1x1x4x1xf32>
    %348 = vector.shape_cast %347 : vector<1x1x4x1xf32> to vector<4x1xf32>
    %349 = vector.extract_strided_slice %262 {offsets = [12, 0], sizes = [1, 256], strides = [1, 1]} : vector<16x256xf32> to vector<1x256xf32>
    %350 = vector.broadcast %348 : vector<4x1xf32> to vector<4x256xf32>
    %351 = vector.broadcast %349 : vector<1x256xf32> to vector<4x256xf32>
    %352 = arith.mulf %350, %351 : vector<4x256xf32>
    %353 = arith.addf %346, %352 : vector<4x256xf32>
    %c1_193 = arith.constant 1 : index
    %c5_194 = arith.constant 5 : index
    %c0_195 = arith.constant 0 : index
    %c0_196 = arith.constant 0 : index
    %354 = vector.load %arg6[%c1_193, %c5_194, %c0_195, %c0_196] : memref<9x8x4x1xf32, #tpu.memory_space<vmem>>, vector<1x1x4x1xf32>
    %355 = vector.shape_cast %354 : vector<1x1x4x1xf32> to vector<4x1xf32>
    %356 = vector.extract_strided_slice %262 {offsets = [13, 0], sizes = [1, 256], strides = [1, 1]} : vector<16x256xf32> to vector<1x256xf32>
    %357 = vector.broadcast %355 : vector<4x1xf32> to vector<4x256xf32>
    %358 = vector.broadcast %356 : vector<1x256xf32> to vector<4x256xf32>
    %359 = arith.mulf %357, %358 : vector<4x256xf32>
    %360 = arith.addf %353, %359 : vector<4x256xf32>
    %c1_197 = arith.constant 1 : index
    %c6_198 = arith.constant 6 : index
    %c0_199 = arith.constant 0 : index
    %c0_200 = arith.constant 0 : index
    %361 = vector.load %arg6[%c1_197, %c6_198, %c0_199, %c0_200] : memref<9x8x4x1xf32, #tpu.memory_space<vmem>>, vector<1x1x4x1xf32>
    %362 = vector.shape_cast %361 : vector<1x1x4x1xf32> to vector<4x1xf32>
    %363 = vector.extract_strided_slice %262 {offsets = [14, 0], sizes = [1, 256], strides = [1, 1]} : vector<16x256xf32> to vector<1x256xf32>
    %364 = vector.broadcast %362 : vector<4x1xf32> to vector<4x256xf32>
    %365 = vector.broadcast %363 : vector<1x256xf32> to vector<4x256xf32>
    %366 = arith.mulf %364, %365 : vector<4x256xf32>
    %367 = arith.addf %360, %366 : vector<4x256xf32>
    %c1_201 = arith.constant 1 : index
    %c7_202 = arith.constant 7 : index
    %c0_203 = arith.constant 0 : index
    %c0_204 = arith.constant 0 : index
    %368 = vector.load %arg6[%c1_201, %c7_202, %c0_203, %c0_204] : memref<9x8x4x1xf32, #tpu.memory_space<vmem>>, vector<1x1x4x1xf32>
    %369 = vector.shape_cast %368 : vector<1x1x4x1xf32> to vector<4x1xf32>
    %370 = vector.extract_strided_slice %262 {offsets = [15, 0], sizes = [1, 256], strides = [1, 1]} : vector<16x256xf32> to vector<1x256xf32>
    %371 = vector.broadcast %369 : vector<4x1xf32> to vector<4x256xf32>
    %372 = vector.broadcast %370 : vector<1x256xf32> to vector<4x256xf32>
    %373 = arith.mulf %371, %372 : vector<4x256xf32>
    %374 = arith.addf %367, %373 : vector<4x256xf32>
    %c0_205 = arith.constant 0 : index
    %c2_206 = arith.constant 2 : index
    %375 = vector.load %arg15[%c0_205, %c2_206] : memref<16x290xf32, #tpu.memory_space<vmem>>, vector<16x256xf32>
    %cst_207 = arith.constant 0.000000e+00 : f32
    %376 = vector.shape_cast %20 : vector<1x256xi1> to vector<1x256xi1>
    %377 = vector.broadcast %376 : vector<1x256xi1> to vector<16x256xi1>
    %378 = vector.broadcast %cst_207 : f32 to vector<16x256xf32>
    %379 = arith.select %377, %375, %378 : vector<16x256xi1>, vector<16x256xf32>
    %c2_208 = arith.constant 2 : index
    %c0_209 = arith.constant 0 : index
    %c0_210 = arith.constant 0 : index
    %c0_211 = arith.constant 0 : index
    %380 = vector.load %arg6[%c2_208, %c0_209, %c0_210, %c0_211] : memref<9x8x4x1xf32, #tpu.memory_space<vmem>>, vector<1x1x4x1xf32>
    %381 = vector.shape_cast %380 : vector<1x1x4x1xf32> to vector<4x1xf32>
    %382 = vector.extract_strided_slice %379 {offsets = [0, 0], sizes = [1, 256], strides = [1, 1]} : vector<16x256xf32> to vector<1x256xf32>
    %383 = vector.broadcast %381 : vector<4x1xf32> to vector<4x256xf32>
    %384 = vector.broadcast %382 : vector<1x256xf32> to vector<4x256xf32>
    %385 = arith.mulf %383, %384 : vector<4x256xf32>
    %386 = arith.addf %318, %385 : vector<4x256xf32>
    %c2_212 = arith.constant 2 : index
    %c1_213 = arith.constant 1 : index
    %c0_214 = arith.constant 0 : index
    %c0_215 = arith.constant 0 : index
    %387 = vector.load %arg6[%c2_212, %c1_213, %c0_214, %c0_215] : memref<9x8x4x1xf32, #tpu.memory_space<vmem>>, vector<1x1x4x1xf32>
    %388 = vector.shape_cast %387 : vector<1x1x4x1xf32> to vector<4x1xf32>
    %389 = vector.extract_strided_slice %379 {offsets = [1, 0], sizes = [1, 256], strides = [1, 1]} : vector<16x256xf32> to vector<1x256xf32>
    %390 = vector.broadcast %388 : vector<4x1xf32> to vector<4x256xf32>
    %391 = vector.broadcast %389 : vector<1x256xf32> to vector<4x256xf32>
    %392 = arith.mulf %390, %391 : vector<4x256xf32>
    %393 = arith.addf %386, %392 : vector<4x256xf32>
    %c2_216 = arith.constant 2 : index
    %c2_217 = arith.constant 2 : index
    %c0_218 = arith.constant 0 : index
    %c0_219 = arith.constant 0 : index
    %394 = vector.load %arg6[%c2_216, %c2_217, %c0_218, %c0_219] : memref<9x8x4x1xf32, #tpu.memory_space<vmem>>, vector<1x1x4x1xf32>
    %395 = vector.shape_cast %394 : vector<1x1x4x1xf32> to vector<4x1xf32>
    %396 = vector.extract_strided_slice %379 {offsets = [2, 0], sizes = [1, 256], strides = [1, 1]} : vector<16x256xf32> to vector<1x256xf32>
    %397 = vector.broadcast %395 : vector<4x1xf32> to vector<4x256xf32>
    %398 = vector.broadcast %396 : vector<1x256xf32> to vector<4x256xf32>
    %399 = arith.mulf %397, %398 : vector<4x256xf32>
    %400 = arith.addf %393, %399 : vector<4x256xf32>
    %c2_220 = arith.constant 2 : index
    %c3_221 = arith.constant 3 : index
    %c0_222 = arith.constant 0 : index
    %c0_223 = arith.constant 0 : index
    %401 = vector.load %arg6[%c2_220, %c3_221, %c0_222, %c0_223] : memref<9x8x4x1xf32, #tpu.memory_space<vmem>>, vector<1x1x4x1xf32>
    %402 = vector.shape_cast %401 : vector<1x1x4x1xf32> to vector<4x1xf32>
    %403 = vector.extract_strided_slice %379 {offsets = [3, 0], sizes = [1, 256], strides = [1, 1]} : vector<16x256xf32> to vector<1x256xf32>
    %404 = vector.broadcast %402 : vector<4x1xf32> to vector<4x256xf32>
    %405 = vector.broadcast %403 : vector<1x256xf32> to vector<4x256xf32>
    %406 = arith.mulf %404, %405 : vector<4x256xf32>
    %407 = arith.addf %400, %406 : vector<4x256xf32>
    %c2_224 = arith.constant 2 : index
    %c4_225 = arith.constant 4 : index
    %c0_226 = arith.constant 0 : index
    %c0_227 = arith.constant 0 : index
    %408 = vector.load %arg6[%c2_224, %c4_225, %c0_226, %c0_227] : memref<9x8x4x1xf32, #tpu.memory_space<vmem>>, vector<1x1x4x1xf32>
    %409 = vector.shape_cast %408 : vector<1x1x4x1xf32> to vector<4x1xf32>
    %410 = vector.extract_strided_slice %379 {offsets = [4, 0], sizes = [1, 256], strides = [1, 1]} : vector<16x256xf32> to vector<1x256xf32>
    %411 = vector.broadcast %409 : vector<4x1xf32> to vector<4x256xf32>
    %412 = vector.broadcast %410 : vector<1x256xf32> to vector<4x256xf32>
    %413 = arith.mulf %411, %412 : vector<4x256xf32>
    %414 = arith.addf %407, %413 : vector<4x256xf32>
    %c2_228 = arith.constant 2 : index
    %c5_229 = arith.constant 5 : index
    %c0_230 = arith.constant 0 : index
    %c0_231 = arith.constant 0 : index
    %415 = vector.load %arg6[%c2_228, %c5_229, %c0_230, %c0_231] : memref<9x8x4x1xf32, #tpu.memory_space<vmem>>, vector<1x1x4x1xf32>
    %416 = vector.shape_cast %415 : vector<1x1x4x1xf32> to vector<4x1xf32>
    %417 = vector.extract_strided_slice %379 {offsets = [5, 0], sizes = [1, 256], strides = [1, 1]} : vector<16x256xf32> to vector<1x256xf32>
    %418 = vector.broadcast %416 : vector<4x1xf32> to vector<4x256xf32>
    %419 = vector.broadcast %417 : vector<1x256xf32> to vector<4x256xf32>
    %420 = arith.mulf %418, %419 : vector<4x256xf32>
    %421 = arith.addf %414, %420 : vector<4x256xf32>
    %c2_232 = arith.constant 2 : index
    %c6_233 = arith.constant 6 : index
    %c0_234 = arith.constant 0 : index
    %c0_235 = arith.constant 0 : index
    %422 = vector.load %arg6[%c2_232, %c6_233, %c0_234, %c0_235] : memref<9x8x4x1xf32, #tpu.memory_space<vmem>>, vector<1x1x4x1xf32>
    %423 = vector.shape_cast %422 : vector<1x1x4x1xf32> to vector<4x1xf32>
    %424 = vector.extract_strided_slice %379 {offsets = [6, 0], sizes = [1, 256], strides = [1, 1]} : vector<16x256xf32> to vector<1x256xf32>
    %425 = vector.broadcast %423 : vector<4x1xf32> to vector<4x256xf32>
    %426 = vector.broadcast %424 : vector<1x256xf32> to vector<4x256xf32>
    %427 = arith.mulf %425, %426 : vector<4x256xf32>
    %428 = arith.addf %421, %427 : vector<4x256xf32>
    %c2_236 = arith.constant 2 : index
    %c7_237 = arith.constant 7 : index
    %c0_238 = arith.constant 0 : index
    %c0_239 = arith.constant 0 : index
    %429 = vector.load %arg6[%c2_236, %c7_237, %c0_238, %c0_239] : memref<9x8x4x1xf32, #tpu.memory_space<vmem>>, vector<1x1x4x1xf32>
    %430 = vector.shape_cast %429 : vector<1x1x4x1xf32> to vector<4x1xf32>
    %431 = vector.extract_strided_slice %379 {offsets = [7, 0], sizes = [1, 256], strides = [1, 1]} : vector<16x256xf32> to vector<1x256xf32>
    %432 = vector.broadcast %430 : vector<4x1xf32> to vector<4x256xf32>
    %433 = vector.broadcast %431 : vector<1x256xf32> to vector<4x256xf32>
    %434 = arith.mulf %432, %433 : vector<4x256xf32>
    %435 = arith.addf %428, %434 : vector<4x256xf32>
    %c2_240 = arith.constant 2 : index
    %c0_241 = arith.constant 0 : index
    %c0_242 = arith.constant 0 : index
    %c0_243 = arith.constant 0 : index
    %436 = vector.load %arg6[%c2_240, %c0_241, %c0_242, %c0_243] : memref<9x8x4x1xf32, #tpu.memory_space<vmem>>, vector<1x1x4x1xf32>
    %437 = vector.shape_cast %436 : vector<1x1x4x1xf32> to vector<4x1xf32>
    %438 = vector.extract_strided_slice %379 {offsets = [8, 0], sizes = [1, 256], strides = [1, 1]} : vector<16x256xf32> to vector<1x256xf32>
    %439 = vector.broadcast %437 : vector<4x1xf32> to vector<4x256xf32>
    %440 = vector.broadcast %438 : vector<1x256xf32> to vector<4x256xf32>
    %441 = arith.mulf %439, %440 : vector<4x256xf32>
    %442 = arith.addf %374, %441 : vector<4x256xf32>
    %c2_244 = arith.constant 2 : index
    %c1_245 = arith.constant 1 : index
    %c0_246 = arith.constant 0 : index
    %c0_247 = arith.constant 0 : index
    %443 = vector.load %arg6[%c2_244, %c1_245, %c0_246, %c0_247] : memref<9x8x4x1xf32, #tpu.memory_space<vmem>>, vector<1x1x4x1xf32>
    %444 = vector.shape_cast %443 : vector<1x1x4x1xf32> to vector<4x1xf32>
    %445 = vector.extract_strided_slice %379 {offsets = [9, 0], sizes = [1, 256], strides = [1, 1]} : vector<16x256xf32> to vector<1x256xf32>
    %446 = vector.broadcast %444 : vector<4x1xf32> to vector<4x256xf32>
    %447 = vector.broadcast %445 : vector<1x256xf32> to vector<4x256xf32>
    %448 = arith.mulf %446, %447 : vector<4x256xf32>
    %449 = arith.addf %442, %448 : vector<4x256xf32>
    %c2_248 = arith.constant 2 : index
    %c2_249 = arith.constant 2 : index
    %c0_250 = arith.constant 0 : index
    %c0_251 = arith.constant 0 : index
    %450 = vector.load %arg6[%c2_248, %c2_249, %c0_250, %c0_251] : memref<9x8x4x1xf32, #tpu.memory_space<vmem>>, vector<1x1x4x1xf32>
    %451 = vector.shape_cast %450 : vector<1x1x4x1xf32> to vector<4x1xf32>
    %452 = vector.extract_strided_slice %379 {offsets = [10, 0], sizes = [1, 256], strides = [1, 1]} : vector<16x256xf32> to vector<1x256xf32>
    %453 = vector.broadcast %451 : vector<4x1xf32> to vector<4x256xf32>
    %454 = vector.broadcast %452 : vector<1x256xf32> to vector<4x256xf32>
    %455 = arith.mulf %453, %454 : vector<4x256xf32>
    %456 = arith.addf %449, %455 : vector<4x256xf32>
    %c2_252 = arith.constant 2 : index
    %c3_253 = arith.constant 3 : index
    %c0_254 = arith.constant 0 : index
    %c0_255 = arith.constant 0 : index
    %457 = vector.load %arg6[%c2_252, %c3_253, %c0_254, %c0_255] : memref<9x8x4x1xf32, #tpu.memory_space<vmem>>, vector<1x1x4x1xf32>
    %458 = vector.shape_cast %457 : vector<1x1x4x1xf32> to vector<4x1xf32>
    %459 = vector.extract_strided_slice %379 {offsets = [11, 0], sizes = [1, 256], strides = [1, 1]} : vector<16x256xf32> to vector<1x256xf32>
    %460 = vector.broadcast %458 : vector<4x1xf32> to vector<4x256xf32>
    %461 = vector.broadcast %459 : vector<1x256xf32> to vector<4x256xf32>
    %462 = arith.mulf %460, %461 : vector<4x256xf32>
    %463 = arith.addf %456, %462 : vector<4x256xf32>
    %c2_256 = arith.constant 2 : index
    %c4_257 = arith.constant 4 : index
    %c0_258 = arith.constant 0 : index
    %c0_259 = arith.constant 0 : index
    %464 = vector.load %arg6[%c2_256, %c4_257, %c0_258, %c0_259] : memref<9x8x4x1xf32, #tpu.memory_space<vmem>>, vector<1x1x4x1xf32>
    %465 = vector.shape_cast %464 : vector<1x1x4x1xf32> to vector<4x1xf32>
    %466 = vector.extract_strided_slice %379 {offsets = [12, 0], sizes = [1, 256], strides = [1, 1]} : vector<16x256xf32> to vector<1x256xf32>
    %467 = vector.broadcast %465 : vector<4x1xf32> to vector<4x256xf32>
    %468 = vector.broadcast %466 : vector<1x256xf32> to vector<4x256xf32>
    %469 = arith.mulf %467, %468 : vector<4x256xf32>
    %470 = arith.addf %463, %469 : vector<4x256xf32>
    %c2_260 = arith.constant 2 : index
    %c5_261 = arith.constant 5 : index
    %c0_262 = arith.constant 0 : index
    %c0_263 = arith.constant 0 : index
    %471 = vector.load %arg6[%c2_260, %c5_261, %c0_262, %c0_263] : memref<9x8x4x1xf32, #tpu.memory_space<vmem>>, vector<1x1x4x1xf32>
    %472 = vector.shape_cast %471 : vector<1x1x4x1xf32> to vector<4x1xf32>
    %473 = vector.extract_strided_slice %379 {offsets = [13, 0], sizes = [1, 256], strides = [1, 1]} : vector<16x256xf32> to vector<1x256xf32>
    %474 = vector.broadcast %472 : vector<4x1xf32> to vector<4x256xf32>
    %475 = vector.broadcast %473 : vector<1x256xf32> to vector<4x256xf32>
    %476 = arith.mulf %474, %475 : vector<4x256xf32>
    %477 = arith.addf %470, %476 : vector<4x256xf32>
    %c2_264 = arith.constant 2 : index
    %c6_265 = arith.constant 6 : index
    %c0_266 = arith.constant 0 : index
    %c0_267 = arith.constant 0 : index
    %478 = vector.load %arg6[%c2_264, %c6_265, %c0_266, %c0_267] : memref<9x8x4x1xf32, #tpu.memory_space<vmem>>, vector<1x1x4x1xf32>
    %479 = vector.shape_cast %478 : vector<1x1x4x1xf32> to vector<4x1xf32>
    %480 = vector.extract_strided_slice %379 {offsets = [14, 0], sizes = [1, 256], strides = [1, 1]} : vector<16x256xf32> to vector<1x256xf32>
    %481 = vector.broadcast %479 : vector<4x1xf32> to vector<4x256xf32>
    %482 = vector.broadcast %480 : vector<1x256xf32> to vector<4x256xf32>
    %483 = arith.mulf %481, %482 : vector<4x256xf32>
    %484 = arith.addf %477, %483 : vector<4x256xf32>
    %c2_268 = arith.constant 2 : index
    %c7_269 = arith.constant 7 : index
    %c0_270 = arith.constant 0 : index
    %c0_271 = arith.constant 0 : index
    %485 = vector.load %arg6[%c2_268, %c7_269, %c0_270, %c0_271] : memref<9x8x4x1xf32, #tpu.memory_space<vmem>>, vector<1x1x4x1xf32>
    %486 = vector.shape_cast %485 : vector<1x1x4x1xf32> to vector<4x1xf32>
    %487 = vector.extract_strided_slice %379 {offsets = [15, 0], sizes = [1, 256], strides = [1, 1]} : vector<16x256xf32> to vector<1x256xf32>
    %488 = vector.broadcast %486 : vector<4x1xf32> to vector<4x256xf32>
    %489 = vector.broadcast %487 : vector<1x256xf32> to vector<4x256xf32>
    %490 = arith.mulf %488, %489 : vector<4x256xf32>
    %491 = arith.addf %484, %490 : vector<4x256xf32>
    %c0_272 = arith.constant 0 : index
    %c16 = arith.constant 16 : index
    %492 = vector.load %arg15[%c0_272, %c16] : memref<16x290xf32, #tpu.memory_space<vmem>>, vector<16x256xf32>
    %cst_273 = arith.constant 0.000000e+00 : f32
    %493 = vector.shape_cast %18 : vector<1x256xi1> to vector<1x256xi1>
    %494 = vector.broadcast %493 : vector<1x256xi1> to vector<16x256xi1>
    %495 = vector.broadcast %cst_273 : f32 to vector<16x256xf32>
    %496 = arith.select %494, %492, %495 : vector<16x256xi1>, vector<16x256xf32>
    %c3_274 = arith.constant 3 : index
    %c0_275 = arith.constant 0 : index
    %c0_276 = arith.constant 0 : index
    %c0_277 = arith.constant 0 : index
    %497 = vector.load %arg6[%c3_274, %c0_275, %c0_276, %c0_277] : memref<9x8x4x1xf32, #tpu.memory_space<vmem>>, vector<1x1x4x1xf32>
    %498 = vector.shape_cast %497 : vector<1x1x4x1xf32> to vector<4x1xf32>
    %499 = vector.extract_strided_slice %496 {offsets = [0, 0], sizes = [1, 256], strides = [1, 1]} : vector<16x256xf32> to vector<1x256xf32>
    %500 = vector.broadcast %498 : vector<4x1xf32> to vector<4x256xf32>
    %501 = vector.broadcast %499 : vector<1x256xf32> to vector<4x256xf32>
    %502 = arith.mulf %500, %501 : vector<4x256xf32>
    %503 = arith.addf %435, %502 : vector<4x256xf32>
    %c3_278 = arith.constant 3 : index
    %c1_279 = arith.constant 1 : index
    %c0_280 = arith.constant 0 : index
    %c0_281 = arith.constant 0 : index
    %504 = vector.load %arg6[%c3_278, %c1_279, %c0_280, %c0_281] : memref<9x8x4x1xf32, #tpu.memory_space<vmem>>, vector<1x1x4x1xf32>
    %505 = vector.shape_cast %504 : vector<1x1x4x1xf32> to vector<4x1xf32>
    %506 = vector.extract_strided_slice %496 {offsets = [1, 0], sizes = [1, 256], strides = [1, 1]} : vector<16x256xf32> to vector<1x256xf32>
    %507 = vector.broadcast %505 : vector<4x1xf32> to vector<4x256xf32>
    %508 = vector.broadcast %506 : vector<1x256xf32> to vector<4x256xf32>
    %509 = arith.mulf %507, %508 : vector<4x256xf32>
    %510 = arith.addf %503, %509 : vector<4x256xf32>
    %c3_282 = arith.constant 3 : index
    %c2_283 = arith.constant 2 : index
    %c0_284 = arith.constant 0 : index
    %c0_285 = arith.constant 0 : index
    %511 = vector.load %arg6[%c3_282, %c2_283, %c0_284, %c0_285] : memref<9x8x4x1xf32, #tpu.memory_space<vmem>>, vector<1x1x4x1xf32>
    %512 = vector.shape_cast %511 : vector<1x1x4x1xf32> to vector<4x1xf32>
    %513 = vector.extract_strided_slice %496 {offsets = [2, 0], sizes = [1, 256], strides = [1, 1]} : vector<16x256xf32> to vector<1x256xf32>
    %514 = vector.broadcast %512 : vector<4x1xf32> to vector<4x256xf32>
    %515 = vector.broadcast %513 : vector<1x256xf32> to vector<4x256xf32>
    %516 = arith.mulf %514, %515 : vector<4x256xf32>
    %517 = arith.addf %510, %516 : vector<4x256xf32>
    %c3_286 = arith.constant 3 : index
    %c3_287 = arith.constant 3 : index
    %c0_288 = arith.constant 0 : index
    %c0_289 = arith.constant 0 : index
    %518 = vector.load %arg6[%c3_286, %c3_287, %c0_288, %c0_289] : memref<9x8x4x1xf32, #tpu.memory_space<vmem>>, vector<1x1x4x1xf32>
    %519 = vector.shape_cast %518 : vector<1x1x4x1xf32> to vector<4x1xf32>
    %520 = vector.extract_strided_slice %496 {offsets = [3, 0], sizes = [1, 256], strides = [1, 1]} : vector<16x256xf32> to vector<1x256xf32>
    %521 = vector.broadcast %519 : vector<4x1xf32> to vector<4x256xf32>
    %522 = vector.broadcast %520 : vector<1x256xf32> to vector<4x256xf32>
    %523 = arith.mulf %521, %522 : vector<4x256xf32>
    %524 = arith.addf %517, %523 : vector<4x256xf32>
    %c3_290 = arith.constant 3 : index
    %c4_291 = arith.constant 4 : index
    %c0_292 = arith.constant 0 : index
    %c0_293 = arith.constant 0 : index
    %525 = vector.load %arg6[%c3_290, %c4_291, %c0_292, %c0_293] : memref<9x8x4x1xf32, #tpu.memory_space<vmem>>, vector<1x1x4x1xf32>
    %526 = vector.shape_cast %525 : vector<1x1x4x1xf32> to vector<4x1xf32>
    %527 = vector.extract_strided_slice %496 {offsets = [4, 0], sizes = [1, 256], strides = [1, 1]} : vector<16x256xf32> to vector<1x256xf32>
    %528 = vector.broadcast %526 : vector<4x1xf32> to vector<4x256xf32>
    %529 = vector.broadcast %527 : vector<1x256xf32> to vector<4x256xf32>
    %530 = arith.mulf %528, %529 : vector<4x256xf32>
    %531 = arith.addf %524, %530 : vector<4x256xf32>
    %c3_294 = arith.constant 3 : index
    %c5_295 = arith.constant 5 : index
    %c0_296 = arith.constant 0 : index
    %c0_297 = arith.constant 0 : index
    %532 = vector.load %arg6[%c3_294, %c5_295, %c0_296, %c0_297] : memref<9x8x4x1xf32, #tpu.memory_space<vmem>>, vector<1x1x4x1xf32>
    %533 = vector.shape_cast %532 : vector<1x1x4x1xf32> to vector<4x1xf32>
    %534 = vector.extract_strided_slice %496 {offsets = [5, 0], sizes = [1, 256], strides = [1, 1]} : vector<16x256xf32> to vector<1x256xf32>
    %535 = vector.broadcast %533 : vector<4x1xf32> to vector<4x256xf32>
    %536 = vector.broadcast %534 : vector<1x256xf32> to vector<4x256xf32>
    %537 = arith.mulf %535, %536 : vector<4x256xf32>
    %538 = arith.addf %531, %537 : vector<4x256xf32>
    %c3_298 = arith.constant 3 : index
    %c6_299 = arith.constant 6 : index
    %c0_300 = arith.constant 0 : index
    %c0_301 = arith.constant 0 : index
    %539 = vector.load %arg6[%c3_298, %c6_299, %c0_300, %c0_301] : memref<9x8x4x1xf32, #tpu.memory_space<vmem>>, vector<1x1x4x1xf32>
    %540 = vector.shape_cast %539 : vector<1x1x4x1xf32> to vector<4x1xf32>
    %541 = vector.extract_strided_slice %496 {offsets = [6, 0], sizes = [1, 256], strides = [1, 1]} : vector<16x256xf32> to vector<1x256xf32>
    %542 = vector.broadcast %540 : vector<4x1xf32> to vector<4x256xf32>
    %543 = vector.broadcast %541 : vector<1x256xf32> to vector<4x256xf32>
    %544 = arith.mulf %542, %543 : vector<4x256xf32>
    %545 = arith.addf %538, %544 : vector<4x256xf32>
    %c3_302 = arith.constant 3 : index
    %c7_303 = arith.constant 7 : index
    %c0_304 = arith.constant 0 : index
    %c0_305 = arith.constant 0 : index
    %546 = vector.load %arg6[%c3_302, %c7_303, %c0_304, %c0_305] : memref<9x8x4x1xf32, #tpu.memory_space<vmem>>, vector<1x1x4x1xf32>
    %547 = vector.shape_cast %546 : vector<1x1x4x1xf32> to vector<4x1xf32>
    %548 = vector.extract_strided_slice %496 {offsets = [7, 0], sizes = [1, 256], strides = [1, 1]} : vector<16x256xf32> to vector<1x256xf32>
    %549 = vector.broadcast %547 : vector<4x1xf32> to vector<4x256xf32>
    %550 = vector.broadcast %548 : vector<1x256xf32> to vector<4x256xf32>
    %551 = arith.mulf %549, %550 : vector<4x256xf32>
    %552 = arith.addf %545, %551 : vector<4x256xf32>
    %c3_306 = arith.constant 3 : index
    %c0_307 = arith.constant 0 : index
    %c0_308 = arith.constant 0 : index
    %c0_309 = arith.constant 0 : index
    %553 = vector.load %arg6[%c3_306, %c0_307, %c0_308, %c0_309] : memref<9x8x4x1xf32, #tpu.memory_space<vmem>>, vector<1x1x4x1xf32>
    %554 = vector.shape_cast %553 : vector<1x1x4x1xf32> to vector<4x1xf32>
    %555 = vector.extract_strided_slice %496 {offsets = [8, 0], sizes = [1, 256], strides = [1, 1]} : vector<16x256xf32> to vector<1x256xf32>
    %556 = vector.broadcast %554 : vector<4x1xf32> to vector<4x256xf32>
    %557 = vector.broadcast %555 : vector<1x256xf32> to vector<4x256xf32>
    %558 = arith.mulf %556, %557 : vector<4x256xf32>
    %559 = arith.addf %491, %558 : vector<4x256xf32>
    %c3_310 = arith.constant 3 : index
    %c1_311 = arith.constant 1 : index
    %c0_312 = arith.constant 0 : index
    %c0_313 = arith.constant 0 : index
    %560 = vector.load %arg6[%c3_310, %c1_311, %c0_312, %c0_313] : memref<9x8x4x1xf32, #tpu.memory_space<vmem>>, vector<1x1x4x1xf32>
    %561 = vector.shape_cast %560 : vector<1x1x4x1xf32> to vector<4x1xf32>
    %562 = vector.extract_strided_slice %496 {offsets = [9, 0], sizes = [1, 256], strides = [1, 1]} : vector<16x256xf32> to vector<1x256xf32>
    %563 = vector.broadcast %561 : vector<4x1xf32> to vector<4x256xf32>
    %564 = vector.broadcast %562 : vector<1x256xf32> to vector<4x256xf32>
    %565 = arith.mulf %563, %564 : vector<4x256xf32>
    %566 = arith.addf %559, %565 : vector<4x256xf32>
    %c3_314 = arith.constant 3 : index
    %c2_315 = arith.constant 2 : index
    %c0_316 = arith.constant 0 : index
    %c0_317 = arith.constant 0 : index
    %567 = vector.load %arg6[%c3_314, %c2_315, %c0_316, %c0_317] : memref<9x8x4x1xf32, #tpu.memory_space<vmem>>, vector<1x1x4x1xf32>
    %568 = vector.shape_cast %567 : vector<1x1x4x1xf32> to vector<4x1xf32>
    %569 = vector.extract_strided_slice %496 {offsets = [10, 0], sizes = [1, 256], strides = [1, 1]} : vector<16x256xf32> to vector<1x256xf32>
    %570 = vector.broadcast %568 : vector<4x1xf32> to vector<4x256xf32>
    %571 = vector.broadcast %569 : vector<1x256xf32> to vector<4x256xf32>
    %572 = arith.mulf %570, %571 : vector<4x256xf32>
    %573 = arith.addf %566, %572 : vector<4x256xf32>
    %c3_318 = arith.constant 3 : index
    %c3_319 = arith.constant 3 : index
    %c0_320 = arith.constant 0 : index
    %c0_321 = arith.constant 0 : index
    %574 = vector.load %arg6[%c3_318, %c3_319, %c0_320, %c0_321] : memref<9x8x4x1xf32, #tpu.memory_space<vmem>>, vector<1x1x4x1xf32>
    %575 = vector.shape_cast %574 : vector<1x1x4x1xf32> to vector<4x1xf32>
    %576 = vector.extract_strided_slice %496 {offsets = [11, 0], sizes = [1, 256], strides = [1, 1]} : vector<16x256xf32> to vector<1x256xf32>
    %577 = vector.broadcast %575 : vector<4x1xf32> to vector<4x256xf32>
    %578 = vector.broadcast %576 : vector<1x256xf32> to vector<4x256xf32>
    %579 = arith.mulf %577, %578 : vector<4x256xf32>
    %580 = arith.addf %573, %579 : vector<4x256xf32>
    %c3_322 = arith.constant 3 : index
    %c4_323 = arith.constant 4 : index
    %c0_324 = arith.constant 0 : index
    %c0_325 = arith.constant 0 : index
    %581 = vector.load %arg6[%c3_322, %c4_323, %c0_324, %c0_325] : memref<9x8x4x1xf32, #tpu.memory_space<vmem>>, vector<1x1x4x1xf32>
    %582 = vector.shape_cast %581 : vector<1x1x4x1xf32> to vector<4x1xf32>
    %583 = vector.extract_strided_slice %496 {offsets = [12, 0], sizes = [1, 256], strides = [1, 1]} : vector<16x256xf32> to vector<1x256xf32>
    %584 = vector.broadcast %582 : vector<4x1xf32> to vector<4x256xf32>
    %585 = vector.broadcast %583 : vector<1x256xf32> to vector<4x256xf32>
    %586 = arith.mulf %584, %585 : vector<4x256xf32>
    %587 = arith.addf %580, %586 : vector<4x256xf32>
    %c3_326 = arith.constant 3 : index
    %c5_327 = arith.constant 5 : index
    %c0_328 = arith.constant 0 : index
    %c0_329 = arith.constant 0 : index
    %588 = vector.load %arg6[%c3_326, %c5_327, %c0_328, %c0_329] : memref<9x8x4x1xf32, #tpu.memory_space<vmem>>, vector<1x1x4x1xf32>
    %589 = vector.shape_cast %588 : vector<1x1x4x1xf32> to vector<4x1xf32>
    %590 = vector.extract_strided_slice %496 {offsets = [13, 0], sizes = [1, 256], strides = [1, 1]} : vector<16x256xf32> to vector<1x256xf32>
    %591 = vector.broadcast %589 : vector<4x1xf32> to vector<4x256xf32>
    %592 = vector.broadcast %590 : vector<1x256xf32> to vector<4x256xf32>
    %593 = arith.mulf %591, %592 : vector<4x256xf32>
    %594 = arith.addf %587, %593 : vector<4x256xf32>
    %c3_330 = arith.constant 3 : index
    %c6_331 = arith.constant 6 : index
    %c0_332 = arith.constant 0 : index
    %c0_333 = arith.constant 0 : index
    %595 = vector.load %arg6[%c3_330, %c6_331, %c0_332, %c0_333] : memref<9x8x4x1xf32, #tpu.memory_space<vmem>>, vector<1x1x4x1xf32>
    %596 = vector.shape_cast %595 : vector<1x1x4x1xf32> to vector<4x1xf32>
    %597 = vector.extract_strided_slice %496 {offsets = [14, 0], sizes = [1, 256], strides = [1, 1]} : vector<16x256xf32> to vector<1x256xf32>
    %598 = vector.broadcast %596 : vector<4x1xf32> to vector<4x256xf32>
    %599 = vector.broadcast %597 : vector<1x256xf32> to vector<4x256xf32>
    %600 = arith.mulf %598, %599 : vector<4x256xf32>
    %601 = arith.addf %594, %600 : vector<4x256xf32>
    %c3_334 = arith.constant 3 : index
    %c7_335 = arith.constant 7 : index
    %c0_336 = arith.constant 0 : index
    %c0_337 = arith.constant 0 : index
    %602 = vector.load %arg6[%c3_334, %c7_335, %c0_336, %c0_337] : memref<9x8x4x1xf32, #tpu.memory_space<vmem>>, vector<1x1x4x1xf32>
    %603 = vector.shape_cast %602 : vector<1x1x4x1xf32> to vector<4x1xf32>
    %604 = vector.extract_strided_slice %496 {offsets = [15, 0], sizes = [1, 256], strides = [1, 1]} : vector<16x256xf32> to vector<1x256xf32>
    %605 = vector.broadcast %603 : vector<4x1xf32> to vector<4x256xf32>
    %606 = vector.broadcast %604 : vector<1x256xf32> to vector<4x256xf32>
    %607 = arith.mulf %605, %606 : vector<4x256xf32>
    %608 = arith.addf %601, %607 : vector<4x256xf32>
    %c0_338 = arith.constant 0 : index
    %c17_339 = arith.constant 17 : index
    %609 = vector.load %arg15[%c0_338, %c17_339] : memref<16x290xf32, #tpu.memory_space<vmem>>, vector<16x256xf32>
    %c4_340 = arith.constant 4 : index
    %c0_341 = arith.constant 0 : index
    %c0_342 = arith.constant 0 : index
    %c0_343 = arith.constant 0 : index
    %610 = vector.load %arg6[%c4_340, %c0_341, %c0_342, %c0_343] : memref<9x8x4x1xf32, #tpu.memory_space<vmem>>, vector<1x1x4x1xf32>
    %611 = vector.shape_cast %610 : vector<1x1x4x1xf32> to vector<4x1xf32>
    %612 = vector.extract_strided_slice %609 {offsets = [0, 0], sizes = [1, 256], strides = [1, 1]} : vector<16x256xf32> to vector<1x256xf32>
    %613 = vector.broadcast %611 : vector<4x1xf32> to vector<4x256xf32>
    %614 = vector.broadcast %612 : vector<1x256xf32> to vector<4x256xf32>
    %615 = arith.mulf %613, %614 : vector<4x256xf32>
    %616 = arith.addf %552, %615 : vector<4x256xf32>
    %c4_344 = arith.constant 4 : index
    %c1_345 = arith.constant 1 : index
    %c0_346 = arith.constant 0 : index
    %c0_347 = arith.constant 0 : index
    %617 = vector.load %arg6[%c4_344, %c1_345, %c0_346, %c0_347] : memref<9x8x4x1xf32, #tpu.memory_space<vmem>>, vector<1x1x4x1xf32>
    %618 = vector.shape_cast %617 : vector<1x1x4x1xf32> to vector<4x1xf32>
    %619 = vector.extract_strided_slice %609 {offsets = [1, 0], sizes = [1, 256], strides = [1, 1]} : vector<16x256xf32> to vector<1x256xf32>
    %620 = vector.broadcast %618 : vector<4x1xf32> to vector<4x256xf32>
    %621 = vector.broadcast %619 : vector<1x256xf32> to vector<4x256xf32>
    %622 = arith.mulf %620, %621 : vector<4x256xf32>
    %623 = arith.addf %616, %622 : vector<4x256xf32>
    %c4_348 = arith.constant 4 : index
    %c2_349 = arith.constant 2 : index
    %c0_350 = arith.constant 0 : index
    %c0_351 = arith.constant 0 : index
    %624 = vector.load %arg6[%c4_348, %c2_349, %c0_350, %c0_351] : memref<9x8x4x1xf32, #tpu.memory_space<vmem>>, vector<1x1x4x1xf32>
    %625 = vector.shape_cast %624 : vector<1x1x4x1xf32> to vector<4x1xf32>
    %626 = vector.extract_strided_slice %609 {offsets = [2, 0], sizes = [1, 256], strides = [1, 1]} : vector<16x256xf32> to vector<1x256xf32>
    %627 = vector.broadcast %625 : vector<4x1xf32> to vector<4x256xf32>
    %628 = vector.broadcast %626 : vector<1x256xf32> to vector<4x256xf32>
    %629 = arith.mulf %627, %628 : vector<4x256xf32>
    %630 = arith.addf %623, %629 : vector<4x256xf32>
    %c4_352 = arith.constant 4 : index
    %c3_353 = arith.constant 3 : index
    %c0_354 = arith.constant 0 : index
    %c0_355 = arith.constant 0 : index
    %631 = vector.load %arg6[%c4_352, %c3_353, %c0_354, %c0_355] : memref<9x8x4x1xf32, #tpu.memory_space<vmem>>, vector<1x1x4x1xf32>
    %632 = vector.shape_cast %631 : vector<1x1x4x1xf32> to vector<4x1xf32>
    %633 = vector.extract_strided_slice %609 {offsets = [3, 0], sizes = [1, 256], strides = [1, 1]} : vector<16x256xf32> to vector<1x256xf32>
    %634 = vector.broadcast %632 : vector<4x1xf32> to vector<4x256xf32>
    %635 = vector.broadcast %633 : vector<1x256xf32> to vector<4x256xf32>
    %636 = arith.mulf %634, %635 : vector<4x256xf32>
    %637 = arith.addf %630, %636 : vector<4x256xf32>
    %c4_356 = arith.constant 4 : index
    %c4_357 = arith.constant 4 : index
    %c0_358 = arith.constant 0 : index
    %c0_359 = arith.constant 0 : index
    %638 = vector.load %arg6[%c4_356, %c4_357, %c0_358, %c0_359] : memref<9x8x4x1xf32, #tpu.memory_space<vmem>>, vector<1x1x4x1xf32>
    %639 = vector.shape_cast %638 : vector<1x1x4x1xf32> to vector<4x1xf32>
    %640 = vector.extract_strided_slice %609 {offsets = [4, 0], sizes = [1, 256], strides = [1, 1]} : vector<16x256xf32> to vector<1x256xf32>
    %641 = vector.broadcast %639 : vector<4x1xf32> to vector<4x256xf32>
    %642 = vector.broadcast %640 : vector<1x256xf32> to vector<4x256xf32>
    %643 = arith.mulf %641, %642 : vector<4x256xf32>
    %644 = arith.addf %637, %643 : vector<4x256xf32>
    %c4_360 = arith.constant 4 : index
    %c5_361 = arith.constant 5 : index
    %c0_362 = arith.constant 0 : index
    %c0_363 = arith.constant 0 : index
    %645 = vector.load %arg6[%c4_360, %c5_361, %c0_362, %c0_363] : memref<9x8x4x1xf32, #tpu.memory_space<vmem>>, vector<1x1x4x1xf32>
    %646 = vector.shape_cast %645 : vector<1x1x4x1xf32> to vector<4x1xf32>
    %647 = vector.extract_strided_slice %609 {offsets = [5, 0], sizes = [1, 256], strides = [1, 1]} : vector<16x256xf32> to vector<1x256xf32>
    %648 = vector.broadcast %646 : vector<4x1xf32> to vector<4x256xf32>
    %649 = vector.broadcast %647 : vector<1x256xf32> to vector<4x256xf32>
    %650 = arith.mulf %648, %649 : vector<4x256xf32>
    %651 = arith.addf %644, %650 : vector<4x256xf32>
    %c4_364 = arith.constant 4 : index
    %c6_365 = arith.constant 6 : index
    %c0_366 = arith.constant 0 : index
    %c0_367 = arith.constant 0 : index
    %652 = vector.load %arg6[%c4_364, %c6_365, %c0_366, %c0_367] : memref<9x8x4x1xf32, #tpu.memory_space<vmem>>, vector<1x1x4x1xf32>
    %653 = vector.shape_cast %652 : vector<1x1x4x1xf32> to vector<4x1xf32>
    %654 = vector.extract_strided_slice %609 {offsets = [6, 0], sizes = [1, 256], strides = [1, 1]} : vector<16x256xf32> to vector<1x256xf32>
    %655 = vector.broadcast %653 : vector<4x1xf32> to vector<4x256xf32>
    %656 = vector.broadcast %654 : vector<1x256xf32> to vector<4x256xf32>
    %657 = arith.mulf %655, %656 : vector<4x256xf32>
    %658 = arith.addf %651, %657 : vector<4x256xf32>
    %c4_368 = arith.constant 4 : index
    %c7_369 = arith.constant 7 : index
    %c0_370 = arith.constant 0 : index
    %c0_371 = arith.constant 0 : index
    %659 = vector.load %arg6[%c4_368, %c7_369, %c0_370, %c0_371] : memref<9x8x4x1xf32, #tpu.memory_space<vmem>>, vector<1x1x4x1xf32>
    %660 = vector.shape_cast %659 : vector<1x1x4x1xf32> to vector<4x1xf32>
    %661 = vector.extract_strided_slice %609 {offsets = [7, 0], sizes = [1, 256], strides = [1, 1]} : vector<16x256xf32> to vector<1x256xf32>
    %662 = vector.broadcast %660 : vector<4x1xf32> to vector<4x256xf32>
    %663 = vector.broadcast %661 : vector<1x256xf32> to vector<4x256xf32>
    %664 = arith.mulf %662, %663 : vector<4x256xf32>
    %665 = arith.addf %658, %664 : vector<4x256xf32>
    %c4_372 = arith.constant 4 : index
    %c0_373 = arith.constant 0 : index
    %c0_374 = arith.constant 0 : index
    %c0_375 = arith.constant 0 : index
    %666 = vector.load %arg6[%c4_372, %c0_373, %c0_374, %c0_375] : memref<9x8x4x1xf32, #tpu.memory_space<vmem>>, vector<1x1x4x1xf32>
    %667 = vector.shape_cast %666 : vector<1x1x4x1xf32> to vector<4x1xf32>
    %668 = vector.extract_strided_slice %609 {offsets = [8, 0], sizes = [1, 256], strides = [1, 1]} : vector<16x256xf32> to vector<1x256xf32>
    %669 = vector.broadcast %667 : vector<4x1xf32> to vector<4x256xf32>
    %670 = vector.broadcast %668 : vector<1x256xf32> to vector<4x256xf32>
    %671 = arith.mulf %669, %670 : vector<4x256xf32>
    %672 = arith.addf %608, %671 : vector<4x256xf32>
    %c4_376 = arith.constant 4 : index
    %c1_377 = arith.constant 1 : index
    %c0_378 = arith.constant 0 : index
    %c0_379 = arith.constant 0 : index
    %673 = vector.load %arg6[%c4_376, %c1_377, %c0_378, %c0_379] : memref<9x8x4x1xf32, #tpu.memory_space<vmem>>, vector<1x1x4x1xf32>
    %674 = vector.shape_cast %673 : vector<1x1x4x1xf32> to vector<4x1xf32>
    %675 = vector.extract_strided_slice %609 {offsets = [9, 0], sizes = [1, 256], strides = [1, 1]} : vector<16x256xf32> to vector<1x256xf32>
    %676 = vector.broadcast %674 : vector<4x1xf32> to vector<4x256xf32>
    %677 = vector.broadcast %675 : vector<1x256xf32> to vector<4x256xf32>
    %678 = arith.mulf %676, %677 : vector<4x256xf32>
    %679 = arith.addf %672, %678 : vector<4x256xf32>
    %c4_380 = arith.constant 4 : index
    %c2_381 = arith.constant 2 : index
    %c0_382 = arith.constant 0 : index
    %c0_383 = arith.constant 0 : index
    %680 = vector.load %arg6[%c4_380, %c2_381, %c0_382, %c0_383] : memref<9x8x4x1xf32, #tpu.memory_space<vmem>>, vector<1x1x4x1xf32>
    %681 = vector.shape_cast %680 : vector<1x1x4x1xf32> to vector<4x1xf32>
    %682 = vector.extract_strided_slice %609 {offsets = [10, 0], sizes = [1, 256], strides = [1, 1]} : vector<16x256xf32> to vector<1x256xf32>
    %683 = vector.broadcast %681 : vector<4x1xf32> to vector<4x256xf32>
    %684 = vector.broadcast %682 : vector<1x256xf32> to vector<4x256xf32>
    %685 = arith.mulf %683, %684 : vector<4x256xf32>
    %686 = arith.addf %679, %685 : vector<4x256xf32>
    %c4_384 = arith.constant 4 : index
    %c3_385 = arith.constant 3 : index
    %c0_386 = arith.constant 0 : index
    %c0_387 = arith.constant 0 : index
    %687 = vector.load %arg6[%c4_384, %c3_385, %c0_386, %c0_387] : memref<9x8x4x1xf32, #tpu.memory_space<vmem>>, vector<1x1x4x1xf32>
    %688 = vector.shape_cast %687 : vector<1x1x4x1xf32> to vector<4x1xf32>
    %689 = vector.extract_strided_slice %609 {offsets = [11, 0], sizes = [1, 256], strides = [1, 1]} : vector<16x256xf32> to vector<1x256xf32>
    %690 = vector.broadcast %688 : vector<4x1xf32> to vector<4x256xf32>
    %691 = vector.broadcast %689 : vector<1x256xf32> to vector<4x256xf32>
    %692 = arith.mulf %690, %691 : vector<4x256xf32>
    %693 = arith.addf %686, %692 : vector<4x256xf32>
    %c4_388 = arith.constant 4 : index
    %c4_389 = arith.constant 4 : index
    %c0_390 = arith.constant 0 : index
    %c0_391 = arith.constant 0 : index
    %694 = vector.load %arg6[%c4_388, %c4_389, %c0_390, %c0_391] : memref<9x8x4x1xf32, #tpu.memory_space<vmem>>, vector<1x1x4x1xf32>
    %695 = vector.shape_cast %694 : vector<1x1x4x1xf32> to vector<4x1xf32>
    %696 = vector.extract_strided_slice %609 {offsets = [12, 0], sizes = [1, 256], strides = [1, 1]} : vector<16x256xf32> to vector<1x256xf32>
    %697 = vector.broadcast %695 : vector<4x1xf32> to vector<4x256xf32>
    %698 = vector.broadcast %696 : vector<1x256xf32> to vector<4x256xf32>
    %699 = arith.mulf %697, %698 : vector<4x256xf32>
    %700 = arith.addf %693, %699 : vector<4x256xf32>
    %c4_392 = arith.constant 4 : index
    %c5_393 = arith.constant 5 : index
    %c0_394 = arith.constant 0 : index
    %c0_395 = arith.constant 0 : index
    %701 = vector.load %arg6[%c4_392, %c5_393, %c0_394, %c0_395] : memref<9x8x4x1xf32, #tpu.memory_space<vmem>>, vector<1x1x4x1xf32>
    %702 = vector.shape_cast %701 : vector<1x1x4x1xf32> to vector<4x1xf32>
    %703 = vector.extract_strided_slice %609 {offsets = [13, 0], sizes = [1, 256], strides = [1, 1]} : vector<16x256xf32> to vector<1x256xf32>
    %704 = vector.broadcast %702 : vector<4x1xf32> to vector<4x256xf32>
    %705 = vector.broadcast %703 : vector<1x256xf32> to vector<4x256xf32>
    %706 = arith.mulf %704, %705 : vector<4x256xf32>
    %707 = arith.addf %700, %706 : vector<4x256xf32>
    %c4_396 = arith.constant 4 : index
    %c6_397 = arith.constant 6 : index
    %c0_398 = arith.constant 0 : index
    %c0_399 = arith.constant 0 : index
    %708 = vector.load %arg6[%c4_396, %c6_397, %c0_398, %c0_399] : memref<9x8x4x1xf32, #tpu.memory_space<vmem>>, vector<1x1x4x1xf32>
    %709 = vector.shape_cast %708 : vector<1x1x4x1xf32> to vector<4x1xf32>
    %710 = vector.extract_strided_slice %609 {offsets = [14, 0], sizes = [1, 256], strides = [1, 1]} : vector<16x256xf32> to vector<1x256xf32>
    %711 = vector.broadcast %709 : vector<4x1xf32> to vector<4x256xf32>
    %712 = vector.broadcast %710 : vector<1x256xf32> to vector<4x256xf32>
    %713 = arith.mulf %711, %712 : vector<4x256xf32>
    %714 = arith.addf %707, %713 : vector<4x256xf32>
    %c4_400 = arith.constant 4 : index
    %c7_401 = arith.constant 7 : index
    %c0_402 = arith.constant 0 : index
    %c0_403 = arith.constant 0 : index
    %715 = vector.load %arg6[%c4_400, %c7_401, %c0_402, %c0_403] : memref<9x8x4x1xf32, #tpu.memory_space<vmem>>, vector<1x1x4x1xf32>
    %716 = vector.shape_cast %715 : vector<1x1x4x1xf32> to vector<4x1xf32>
    %717 = vector.extract_strided_slice %609 {offsets = [15, 0], sizes = [1, 256], strides = [1, 1]} : vector<16x256xf32> to vector<1x256xf32>
    %718 = vector.broadcast %716 : vector<4x1xf32> to vector<4x256xf32>
    %719 = vector.broadcast %717 : vector<1x256xf32> to vector<4x256xf32>
    %720 = arith.mulf %718, %719 : vector<4x256xf32>
    %721 = arith.addf %714, %720 : vector<4x256xf32>
    %c0_404 = arith.constant 0 : index
    %c18 = arith.constant 18 : index
    %722 = vector.load %arg15[%c0_404, %c18] : memref<16x290xf32, #tpu.memory_space<vmem>>, vector<16x256xf32>
    %cst_405 = arith.constant 0.000000e+00 : f32
    %723 = vector.shape_cast %20 : vector<1x256xi1> to vector<1x256xi1>
    %724 = vector.broadcast %723 : vector<1x256xi1> to vector<16x256xi1>
    %725 = vector.broadcast %cst_405 : f32 to vector<16x256xf32>
    %726 = arith.select %724, %722, %725 : vector<16x256xi1>, vector<16x256xf32>
    %c5_406 = arith.constant 5 : index
    %c0_407 = arith.constant 0 : index
    %c0_408 = arith.constant 0 : index
    %c0_409 = arith.constant 0 : index
    %727 = vector.load %arg6[%c5_406, %c0_407, %c0_408, %c0_409] : memref<9x8x4x1xf32, #tpu.memory_space<vmem>>, vector<1x1x4x1xf32>
    %728 = vector.shape_cast %727 : vector<1x1x4x1xf32> to vector<4x1xf32>
    %729 = vector.extract_strided_slice %726 {offsets = [0, 0], sizes = [1, 256], strides = [1, 1]} : vector<16x256xf32> to vector<1x256xf32>
    %730 = vector.broadcast %728 : vector<4x1xf32> to vector<4x256xf32>
    %731 = vector.broadcast %729 : vector<1x256xf32> to vector<4x256xf32>
    %732 = arith.mulf %730, %731 : vector<4x256xf32>
    %733 = arith.addf %665, %732 : vector<4x256xf32>
    %c5_410 = arith.constant 5 : index
    %c1_411 = arith.constant 1 : index
    %c0_412 = arith.constant 0 : index
    %c0_413 = arith.constant 0 : index
    %734 = vector.load %arg6[%c5_410, %c1_411, %c0_412, %c0_413] : memref<9x8x4x1xf32, #tpu.memory_space<vmem>>, vector<1x1x4x1xf32>
    %735 = vector.shape_cast %734 : vector<1x1x4x1xf32> to vector<4x1xf32>
    %736 = vector.extract_strided_slice %726 {offsets = [1, 0], sizes = [1, 256], strides = [1, 1]} : vector<16x256xf32> to vector<1x256xf32>
    %737 = vector.broadcast %735 : vector<4x1xf32> to vector<4x256xf32>
    %738 = vector.broadcast %736 : vector<1x256xf32> to vector<4x256xf32>
    %739 = arith.mulf %737, %738 : vector<4x256xf32>
    %740 = arith.addf %733, %739 : vector<4x256xf32>
    %c5_414 = arith.constant 5 : index
    %c2_415 = arith.constant 2 : index
    %c0_416 = arith.constant 0 : index
    %c0_417 = arith.constant 0 : index
    %741 = vector.load %arg6[%c5_414, %c2_415, %c0_416, %c0_417] : memref<9x8x4x1xf32, #tpu.memory_space<vmem>>, vector<1x1x4x1xf32>
    %742 = vector.shape_cast %741 : vector<1x1x4x1xf32> to vector<4x1xf32>
    %743 = vector.extract_strided_slice %726 {offsets = [2, 0], sizes = [1, 256], strides = [1, 1]} : vector<16x256xf32> to vector<1x256xf32>
    %744 = vector.broadcast %742 : vector<4x1xf32> to vector<4x256xf32>
    %745 = vector.broadcast %743 : vector<1x256xf32> to vector<4x256xf32>
    %746 = arith.mulf %744, %745 : vector<4x256xf32>
    %747 = arith.addf %740, %746 : vector<4x256xf32>
    %c5_418 = arith.constant 5 : index
    %c3_419 = arith.constant 3 : index
    %c0_420 = arith.constant 0 : index
    %c0_421 = arith.constant 0 : index
    %748 = vector.load %arg6[%c5_418, %c3_419, %c0_420, %c0_421] : memref<9x8x4x1xf32, #tpu.memory_space<vmem>>, vector<1x1x4x1xf32>
    %749 = vector.shape_cast %748 : vector<1x1x4x1xf32> to vector<4x1xf32>
    %750 = vector.extract_strided_slice %726 {offsets = [3, 0], sizes = [1, 256], strides = [1, 1]} : vector<16x256xf32> to vector<1x256xf32>
    %751 = vector.broadcast %749 : vector<4x1xf32> to vector<4x256xf32>
    %752 = vector.broadcast %750 : vector<1x256xf32> to vector<4x256xf32>
    %753 = arith.mulf %751, %752 : vector<4x256xf32>
    %754 = arith.addf %747, %753 : vector<4x256xf32>
    %c5_422 = arith.constant 5 : index
    %c4_423 = arith.constant 4 : index
    %c0_424 = arith.constant 0 : index
    %c0_425 = arith.constant 0 : index
    %755 = vector.load %arg6[%c5_422, %c4_423, %c0_424, %c0_425] : memref<9x8x4x1xf32, #tpu.memory_space<vmem>>, vector<1x1x4x1xf32>
    %756 = vector.shape_cast %755 : vector<1x1x4x1xf32> to vector<4x1xf32>
    %757 = vector.extract_strided_slice %726 {offsets = [4, 0], sizes = [1, 256], strides = [1, 1]} : vector<16x256xf32> to vector<1x256xf32>
    %758 = vector.broadcast %756 : vector<4x1xf32> to vector<4x256xf32>
    %759 = vector.broadcast %757 : vector<1x256xf32> to vector<4x256xf32>
    %760 = arith.mulf %758, %759 : vector<4x256xf32>
    %761 = arith.addf %754, %760 : vector<4x256xf32>
    %c5_426 = arith.constant 5 : index
    %c5_427 = arith.constant 5 : index
    %c0_428 = arith.constant 0 : index
    %c0_429 = arith.constant 0 : index
    %762 = vector.load %arg6[%c5_426, %c5_427, %c0_428, %c0_429] : memref<9x8x4x1xf32, #tpu.memory_space<vmem>>, vector<1x1x4x1xf32>
    %763 = vector.shape_cast %762 : vector<1x1x4x1xf32> to vector<4x1xf32>
    %764 = vector.extract_strided_slice %726 {offsets = [5, 0], sizes = [1, 256], strides = [1, 1]} : vector<16x256xf32> to vector<1x256xf32>
    %765 = vector.broadcast %763 : vector<4x1xf32> to vector<4x256xf32>
    %766 = vector.broadcast %764 : vector<1x256xf32> to vector<4x256xf32>
    %767 = arith.mulf %765, %766 : vector<4x256xf32>
    %768 = arith.addf %761, %767 : vector<4x256xf32>
    %c5_430 = arith.constant 5 : index
    %c6_431 = arith.constant 6 : index
    %c0_432 = arith.constant 0 : index
    %c0_433 = arith.constant 0 : index
    %769 = vector.load %arg6[%c5_430, %c6_431, %c0_432, %c0_433] : memref<9x8x4x1xf32, #tpu.memory_space<vmem>>, vector<1x1x4x1xf32>
    %770 = vector.shape_cast %769 : vector<1x1x4x1xf32> to vector<4x1xf32>
    %771 = vector.extract_strided_slice %726 {offsets = [6, 0], sizes = [1, 256], strides = [1, 1]} : vector<16x256xf32> to vector<1x256xf32>
    %772 = vector.broadcast %770 : vector<4x1xf32> to vector<4x256xf32>
    %773 = vector.broadcast %771 : vector<1x256xf32> to vector<4x256xf32>
    %774 = arith.mulf %772, %773 : vector<4x256xf32>
    %775 = arith.addf %768, %774 : vector<4x256xf32>
    %c5_434 = arith.constant 5 : index
    %c7_435 = arith.constant 7 : index
    %c0_436 = arith.constant 0 : index
    %c0_437 = arith.constant 0 : index
    %776 = vector.load %arg6[%c5_434, %c7_435, %c0_436, %c0_437] : memref<9x8x4x1xf32, #tpu.memory_space<vmem>>, vector<1x1x4x1xf32>
    %777 = vector.shape_cast %776 : vector<1x1x4x1xf32> to vector<4x1xf32>
    %778 = vector.extract_strided_slice %726 {offsets = [7, 0], sizes = [1, 256], strides = [1, 1]} : vector<16x256xf32> to vector<1x256xf32>
    %779 = vector.broadcast %777 : vector<4x1xf32> to vector<4x256xf32>
    %780 = vector.broadcast %778 : vector<1x256xf32> to vector<4x256xf32>
    %781 = arith.mulf %779, %780 : vector<4x256xf32>
    %782 = arith.addf %775, %781 : vector<4x256xf32>
    %c5_438 = arith.constant 5 : index
    %c0_439 = arith.constant 0 : index
    %c0_440 = arith.constant 0 : index
    %c0_441 = arith.constant 0 : index
    %783 = vector.load %arg6[%c5_438, %c0_439, %c0_440, %c0_441] : memref<9x8x4x1xf32, #tpu.memory_space<vmem>>, vector<1x1x4x1xf32>
    %784 = vector.shape_cast %783 : vector<1x1x4x1xf32> to vector<4x1xf32>
    %785 = vector.extract_strided_slice %726 {offsets = [8, 0], sizes = [1, 256], strides = [1, 1]} : vector<16x256xf32> to vector<1x256xf32>
    %786 = vector.broadcast %784 : vector<4x1xf32> to vector<4x256xf32>
    %787 = vector.broadcast %785 : vector<1x256xf32> to vector<4x256xf32>
    %788 = arith.mulf %786, %787 : vector<4x256xf32>
    %789 = arith.addf %721, %788 : vector<4x256xf32>
    %c5_442 = arith.constant 5 : index
    %c1_443 = arith.constant 1 : index
    %c0_444 = arith.constant 0 : index
    %c0_445 = arith.constant 0 : index
    %790 = vector.load %arg6[%c5_442, %c1_443, %c0_444, %c0_445] : memref<9x8x4x1xf32, #tpu.memory_space<vmem>>, vector<1x1x4x1xf32>
    %791 = vector.shape_cast %790 : vector<1x1x4x1xf32> to vector<4x1xf32>
    %792 = vector.extract_strided_slice %726 {offsets = [9, 0], sizes = [1, 256], strides = [1, 1]} : vector<16x256xf32> to vector<1x256xf32>
    %793 = vector.broadcast %791 : vector<4x1xf32> to vector<4x256xf32>
    %794 = vector.broadcast %792 : vector<1x256xf32> to vector<4x256xf32>
    %795 = arith.mulf %793, %794 : vector<4x256xf32>
    %796 = arith.addf %789, %795 : vector<4x256xf32>
    %c5_446 = arith.constant 5 : index
    %c2_447 = arith.constant 2 : index
    %c0_448 = arith.constant 0 : index
    %c0_449 = arith.constant 0 : index
    %797 = vector.load %arg6[%c5_446, %c2_447, %c0_448, %c0_449] : memref<9x8x4x1xf32, #tpu.memory_space<vmem>>, vector<1x1x4x1xf32>
    %798 = vector.shape_cast %797 : vector<1x1x4x1xf32> to vector<4x1xf32>
    %799 = vector.extract_strided_slice %726 {offsets = [10, 0], sizes = [1, 256], strides = [1, 1]} : vector<16x256xf32> to vector<1x256xf32>
    %800 = vector.broadcast %798 : vector<4x1xf32> to vector<4x256xf32>
    %801 = vector.broadcast %799 : vector<1x256xf32> to vector<4x256xf32>
    %802 = arith.mulf %800, %801 : vector<4x256xf32>
    %803 = arith.addf %796, %802 : vector<4x256xf32>
    %c5_450 = arith.constant 5 : index
    %c3_451 = arith.constant 3 : index
    %c0_452 = arith.constant 0 : index
    %c0_453 = arith.constant 0 : index
    %804 = vector.load %arg6[%c5_450, %c3_451, %c0_452, %c0_453] : memref<9x8x4x1xf32, #tpu.memory_space<vmem>>, vector<1x1x4x1xf32>
    %805 = vector.shape_cast %804 : vector<1x1x4x1xf32> to vector<4x1xf32>
    %806 = vector.extract_strided_slice %726 {offsets = [11, 0], sizes = [1, 256], strides = [1, 1]} : vector<16x256xf32> to vector<1x256xf32>
    %807 = vector.broadcast %805 : vector<4x1xf32> to vector<4x256xf32>
    %808 = vector.broadcast %806 : vector<1x256xf32> to vector<4x256xf32>
    %809 = arith.mulf %807, %808 : vector<4x256xf32>
    %810 = arith.addf %803, %809 : vector<4x256xf32>
    %c5_454 = arith.constant 5 : index
    %c4_455 = arith.constant 4 : index
    %c0_456 = arith.constant 0 : index
    %c0_457 = arith.constant 0 : index
    %811 = vector.load %arg6[%c5_454, %c4_455, %c0_456, %c0_457] : memref<9x8x4x1xf32, #tpu.memory_space<vmem>>, vector<1x1x4x1xf32>
    %812 = vector.shape_cast %811 : vector<1x1x4x1xf32> to vector<4x1xf32>
    %813 = vector.extract_strided_slice %726 {offsets = [12, 0], sizes = [1, 256], strides = [1, 1]} : vector<16x256xf32> to vector<1x256xf32>
    %814 = vector.broadcast %812 : vector<4x1xf32> to vector<4x256xf32>
    %815 = vector.broadcast %813 : vector<1x256xf32> to vector<4x256xf32>
    %816 = arith.mulf %814, %815 : vector<4x256xf32>
    %817 = arith.addf %810, %816 : vector<4x256xf32>
    %c5_458 = arith.constant 5 : index
    %c5_459 = arith.constant 5 : index
    %c0_460 = arith.constant 0 : index
    %c0_461 = arith.constant 0 : index
    %818 = vector.load %arg6[%c5_458, %c5_459, %c0_460, %c0_461] : memref<9x8x4x1xf32, #tpu.memory_space<vmem>>, vector<1x1x4x1xf32>
    %819 = vector.shape_cast %818 : vector<1x1x4x1xf32> to vector<4x1xf32>
    %820 = vector.extract_strided_slice %726 {offsets = [13, 0], sizes = [1, 256], strides = [1, 1]} : vector<16x256xf32> to vector<1x256xf32>
    %821 = vector.broadcast %819 : vector<4x1xf32> to vector<4x256xf32>
    %822 = vector.broadcast %820 : vector<1x256xf32> to vector<4x256xf32>
    %823 = arith.mulf %821, %822 : vector<4x256xf32>
    %824 = arith.addf %817, %823 : vector<4x256xf32>
    %c5_462 = arith.constant 5 : index
    %c6_463 = arith.constant 6 : index
    %c0_464 = arith.constant 0 : index
    %c0_465 = arith.constant 0 : index
    %825 = vector.load %arg6[%c5_462, %c6_463, %c0_464, %c0_465] : memref<9x8x4x1xf32, #tpu.memory_space<vmem>>, vector<1x1x4x1xf32>
    %826 = vector.shape_cast %825 : vector<1x1x4x1xf32> to vector<4x1xf32>
    %827 = vector.extract_strided_slice %726 {offsets = [14, 0], sizes = [1, 256], strides = [1, 1]} : vector<16x256xf32> to vector<1x256xf32>
    %828 = vector.broadcast %826 : vector<4x1xf32> to vector<4x256xf32>
    %829 = vector.broadcast %827 : vector<1x256xf32> to vector<4x256xf32>
    %830 = arith.mulf %828, %829 : vector<4x256xf32>
    %831 = arith.addf %824, %830 : vector<4x256xf32>
    %c5_466 = arith.constant 5 : index
    %c7_467 = arith.constant 7 : index
    %c0_468 = arith.constant 0 : index
    %c0_469 = arith.constant 0 : index
    %832 = vector.load %arg6[%c5_466, %c7_467, %c0_468, %c0_469] : memref<9x8x4x1xf32, #tpu.memory_space<vmem>>, vector<1x1x4x1xf32>
    %833 = vector.shape_cast %832 : vector<1x1x4x1xf32> to vector<4x1xf32>
    %834 = vector.extract_strided_slice %726 {offsets = [15, 0], sizes = [1, 256], strides = [1, 1]} : vector<16x256xf32> to vector<1x256xf32>
    %835 = vector.broadcast %833 : vector<4x1xf32> to vector<4x256xf32>
    %836 = vector.broadcast %834 : vector<1x256xf32> to vector<4x256xf32>
    %837 = arith.mulf %835, %836 : vector<4x256xf32>
    %838 = arith.addf %831, %837 : vector<4x256xf32>
    %c0_470 = arith.constant 0 : index
    %c32 = arith.constant 32 : index
    %839 = vector.load %arg15[%c0_470, %c32] : memref<16x290xf32, #tpu.memory_space<vmem>>, vector<16x256xf32>
    %cst_471 = arith.constant 0.000000e+00 : f32
    %840 = vector.shape_cast %18 : vector<1x256xi1> to vector<1x256xi1>
    %841 = vector.broadcast %840 : vector<1x256xi1> to vector<16x256xi1>
    %842 = vector.broadcast %cst_471 : f32 to vector<16x256xf32>
    %843 = arith.select %841, %839, %842 : vector<16x256xi1>, vector<16x256xf32>
    %c6_472 = arith.constant 6 : index
    %c0_473 = arith.constant 0 : index
    %c0_474 = arith.constant 0 : index
    %c0_475 = arith.constant 0 : index
    %844 = vector.load %arg6[%c6_472, %c0_473, %c0_474, %c0_475] : memref<9x8x4x1xf32, #tpu.memory_space<vmem>>, vector<1x1x4x1xf32>
    %845 = vector.shape_cast %844 : vector<1x1x4x1xf32> to vector<4x1xf32>
    %846 = vector.extract_strided_slice %843 {offsets = [0, 0], sizes = [1, 256], strides = [1, 1]} : vector<16x256xf32> to vector<1x256xf32>
    %847 = vector.broadcast %845 : vector<4x1xf32> to vector<4x256xf32>
    %848 = vector.broadcast %846 : vector<1x256xf32> to vector<4x256xf32>
    %849 = arith.mulf %847, %848 : vector<4x256xf32>
    %850 = arith.addf %782, %849 : vector<4x256xf32>
    %c6_476 = arith.constant 6 : index
    %c1_477 = arith.constant 1 : index
    %c0_478 = arith.constant 0 : index
    %c0_479 = arith.constant 0 : index
    %851 = vector.load %arg6[%c6_476, %c1_477, %c0_478, %c0_479] : memref<9x8x4x1xf32, #tpu.memory_space<vmem>>, vector<1x1x4x1xf32>
    %852 = vector.shape_cast %851 : vector<1x1x4x1xf32> to vector<4x1xf32>
    %853 = vector.extract_strided_slice %843 {offsets = [1, 0], sizes = [1, 256], strides = [1, 1]} : vector<16x256xf32> to vector<1x256xf32>
    %854 = vector.broadcast %852 : vector<4x1xf32> to vector<4x256xf32>
    %855 = vector.broadcast %853 : vector<1x256xf32> to vector<4x256xf32>
    %856 = arith.mulf %854, %855 : vector<4x256xf32>
    %857 = arith.addf %850, %856 : vector<4x256xf32>
    %c6_480 = arith.constant 6 : index
    %c2_481 = arith.constant 2 : index
    %c0_482 = arith.constant 0 : index
    %c0_483 = arith.constant 0 : index
    %858 = vector.load %arg6[%c6_480, %c2_481, %c0_482, %c0_483] : memref<9x8x4x1xf32, #tpu.memory_space<vmem>>, vector<1x1x4x1xf32>
    %859 = vector.shape_cast %858 : vector<1x1x4x1xf32> to vector<4x1xf32>
    %860 = vector.extract_strided_slice %843 {offsets = [2, 0], sizes = [1, 256], strides = [1, 1]} : vector<16x256xf32> to vector<1x256xf32>
    %861 = vector.broadcast %859 : vector<4x1xf32> to vector<4x256xf32>
    %862 = vector.broadcast %860 : vector<1x256xf32> to vector<4x256xf32>
    %863 = arith.mulf %861, %862 : vector<4x256xf32>
    %864 = arith.addf %857, %863 : vector<4x256xf32>
    %c6_484 = arith.constant 6 : index
    %c3_485 = arith.constant 3 : index
    %c0_486 = arith.constant 0 : index
    %c0_487 = arith.constant 0 : index
    %865 = vector.load %arg6[%c6_484, %c3_485, %c0_486, %c0_487] : memref<9x8x4x1xf32, #tpu.memory_space<vmem>>, vector<1x1x4x1xf32>
    %866 = vector.shape_cast %865 : vector<1x1x4x1xf32> to vector<4x1xf32>
    %867 = vector.extract_strided_slice %843 {offsets = [3, 0], sizes = [1, 256], strides = [1, 1]} : vector<16x256xf32> to vector<1x256xf32>
    %868 = vector.broadcast %866 : vector<4x1xf32> to vector<4x256xf32>
    %869 = vector.broadcast %867 : vector<1x256xf32> to vector<4x256xf32>
    %870 = arith.mulf %868, %869 : vector<4x256xf32>
    %871 = arith.addf %864, %870 : vector<4x256xf32>
    %c6_488 = arith.constant 6 : index
    %c4_489 = arith.constant 4 : index
    %c0_490 = arith.constant 0 : index
    %c0_491 = arith.constant 0 : index
    %872 = vector.load %arg6[%c6_488, %c4_489, %c0_490, %c0_491] : memref<9x8x4x1xf32, #tpu.memory_space<vmem>>, vector<1x1x4x1xf32>
    %873 = vector.shape_cast %872 : vector<1x1x4x1xf32> to vector<4x1xf32>
    %874 = vector.extract_strided_slice %843 {offsets = [4, 0], sizes = [1, 256], strides = [1, 1]} : vector<16x256xf32> to vector<1x256xf32>
    %875 = vector.broadcast %873 : vector<4x1xf32> to vector<4x256xf32>
    %876 = vector.broadcast %874 : vector<1x256xf32> to vector<4x256xf32>
    %877 = arith.mulf %875, %876 : vector<4x256xf32>
    %878 = arith.addf %871, %877 : vector<4x256xf32>
    %c6_492 = arith.constant 6 : index
    %c5_493 = arith.constant 5 : index
    %c0_494 = arith.constant 0 : index
    %c0_495 = arith.constant 0 : index
    %879 = vector.load %arg6[%c6_492, %c5_493, %c0_494, %c0_495] : memref<9x8x4x1xf32, #tpu.memory_space<vmem>>, vector<1x1x4x1xf32>
    %880 = vector.shape_cast %879 : vector<1x1x4x1xf32> to vector<4x1xf32>
    %881 = vector.extract_strided_slice %843 {offsets = [5, 0], sizes = [1, 256], strides = [1, 1]} : vector<16x256xf32> to vector<1x256xf32>
    %882 = vector.broadcast %880 : vector<4x1xf32> to vector<4x256xf32>
    %883 = vector.broadcast %881 : vector<1x256xf32> to vector<4x256xf32>
    %884 = arith.mulf %882, %883 : vector<4x256xf32>
    %885 = arith.addf %878, %884 : vector<4x256xf32>
    %c6_496 = arith.constant 6 : index
    %c6_497 = arith.constant 6 : index
    %c0_498 = arith.constant 0 : index
    %c0_499 = arith.constant 0 : index
    %886 = vector.load %arg6[%c6_496, %c6_497, %c0_498, %c0_499] : memref<9x8x4x1xf32, #tpu.memory_space<vmem>>, vector<1x1x4x1xf32>
    %887 = vector.shape_cast %886 : vector<1x1x4x1xf32> to vector<4x1xf32>
    %888 = vector.extract_strided_slice %843 {offsets = [6, 0], sizes = [1, 256], strides = [1, 1]} : vector<16x256xf32> to vector<1x256xf32>
    %889 = vector.broadcast %887 : vector<4x1xf32> to vector<4x256xf32>
    %890 = vector.broadcast %888 : vector<1x256xf32> to vector<4x256xf32>
    %891 = arith.mulf %889, %890 : vector<4x256xf32>
    %892 = arith.addf %885, %891 : vector<4x256xf32>
    %c6_500 = arith.constant 6 : index
    %c7_501 = arith.constant 7 : index
    %c0_502 = arith.constant 0 : index
    %c0_503 = arith.constant 0 : index
    %893 = vector.load %arg6[%c6_500, %c7_501, %c0_502, %c0_503] : memref<9x8x4x1xf32, #tpu.memory_space<vmem>>, vector<1x1x4x1xf32>
    %894 = vector.shape_cast %893 : vector<1x1x4x1xf32> to vector<4x1xf32>
    %895 = vector.extract_strided_slice %843 {offsets = [7, 0], sizes = [1, 256], strides = [1, 1]} : vector<16x256xf32> to vector<1x256xf32>
    %896 = vector.broadcast %894 : vector<4x1xf32> to vector<4x256xf32>
    %897 = vector.broadcast %895 : vector<1x256xf32> to vector<4x256xf32>
    %898 = arith.mulf %896, %897 : vector<4x256xf32>
    %899 = arith.addf %892, %898 : vector<4x256xf32>
    %c6_504 = arith.constant 6 : index
    %c0_505 = arith.constant 0 : index
    %c0_506 = arith.constant 0 : index
    %c0_507 = arith.constant 0 : index
    %900 = vector.load %arg6[%c6_504, %c0_505, %c0_506, %c0_507] : memref<9x8x4x1xf32, #tpu.memory_space<vmem>>, vector<1x1x4x1xf32>
    %901 = vector.shape_cast %900 : vector<1x1x4x1xf32> to vector<4x1xf32>
    %902 = vector.extract_strided_slice %843 {offsets = [8, 0], sizes = [1, 256], strides = [1, 1]} : vector<16x256xf32> to vector<1x256xf32>
    %903 = vector.broadcast %901 : vector<4x1xf32> to vector<4x256xf32>
    %904 = vector.broadcast %902 : vector<1x256xf32> to vector<4x256xf32>
    %905 = arith.mulf %903, %904 : vector<4x256xf32>
    %906 = arith.addf %838, %905 : vector<4x256xf32>
    %c6_508 = arith.constant 6 : index
    %c1_509 = arith.constant 1 : index
    %c0_510 = arith.constant 0 : index
    %c0_511 = arith.constant 0 : index
    %907 = vector.load %arg6[%c6_508, %c1_509, %c0_510, %c0_511] : memref<9x8x4x1xf32, #tpu.memory_space<vmem>>, vector<1x1x4x1xf32>
    %908 = vector.shape_cast %907 : vector<1x1x4x1xf32> to vector<4x1xf32>
    %909 = vector.extract_strided_slice %843 {offsets = [9, 0], sizes = [1, 256], strides = [1, 1]} : vector<16x256xf32> to vector<1x256xf32>
    %910 = vector.broadcast %908 : vector<4x1xf32> to vector<4x256xf32>
    %911 = vector.broadcast %909 : vector<1x256xf32> to vector<4x256xf32>
    %912 = arith.mulf %910, %911 : vector<4x256xf32>
    %913 = arith.addf %906, %912 : vector<4x256xf32>
    %c6_512 = arith.constant 6 : index
    %c2_513 = arith.constant 2 : index
    %c0_514 = arith.constant 0 : index
    %c0_515 = arith.constant 0 : index
    %914 = vector.load %arg6[%c6_512, %c2_513, %c0_514, %c0_515] : memref<9x8x4x1xf32, #tpu.memory_space<vmem>>, vector<1x1x4x1xf32>
    %915 = vector.shape_cast %914 : vector<1x1x4x1xf32> to vector<4x1xf32>
    %916 = vector.extract_strided_slice %843 {offsets = [10, 0], sizes = [1, 256], strides = [1, 1]} : vector<16x256xf32> to vector<1x256xf32>
    %917 = vector.broadcast %915 : vector<4x1xf32> to vector<4x256xf32>
    %918 = vector.broadcast %916 : vector<1x256xf32> to vector<4x256xf32>
    %919 = arith.mulf %917, %918 : vector<4x256xf32>
    %920 = arith.addf %913, %919 : vector<4x256xf32>
    %c6_516 = arith.constant 6 : index
    %c3_517 = arith.constant 3 : index
    %c0_518 = arith.constant 0 : index
    %c0_519 = arith.constant 0 : index
    %921 = vector.load %arg6[%c6_516, %c3_517, %c0_518, %c0_519] : memref<9x8x4x1xf32, #tpu.memory_space<vmem>>, vector<1x1x4x1xf32>
    %922 = vector.shape_cast %921 : vector<1x1x4x1xf32> to vector<4x1xf32>
    %923 = vector.extract_strided_slice %843 {offsets = [11, 0], sizes = [1, 256], strides = [1, 1]} : vector<16x256xf32> to vector<1x256xf32>
    %924 = vector.broadcast %922 : vector<4x1xf32> to vector<4x256xf32>
    %925 = vector.broadcast %923 : vector<1x256xf32> to vector<4x256xf32>
    %926 = arith.mulf %924, %925 : vector<4x256xf32>
    %927 = arith.addf %920, %926 : vector<4x256xf32>
    %c6_520 = arith.constant 6 : index
    %c4_521 = arith.constant 4 : index
    %c0_522 = arith.constant 0 : index
    %c0_523 = arith.constant 0 : index
    %928 = vector.load %arg6[%c6_520, %c4_521, %c0_522, %c0_523] : memref<9x8x4x1xf32, #tpu.memory_space<vmem>>, vector<1x1x4x1xf32>
    %929 = vector.shape_cast %928 : vector<1x1x4x1xf32> to vector<4x1xf32>
    %930 = vector.extract_strided_slice %843 {offsets = [12, 0], sizes = [1, 256], strides = [1, 1]} : vector<16x256xf32> to vector<1x256xf32>
    %931 = vector.broadcast %929 : vector<4x1xf32> to vector<4x256xf32>
    %932 = vector.broadcast %930 : vector<1x256xf32> to vector<4x256xf32>
    %933 = arith.mulf %931, %932 : vector<4x256xf32>
    %934 = arith.addf %927, %933 : vector<4x256xf32>
    %c6_524 = arith.constant 6 : index
    %c5_525 = arith.constant 5 : index
    %c0_526 = arith.constant 0 : index
    %c0_527 = arith.constant 0 : index
    %935 = vector.load %arg6[%c6_524, %c5_525, %c0_526, %c0_527] : memref<9x8x4x1xf32, #tpu.memory_space<vmem>>, vector<1x1x4x1xf32>
    %936 = vector.shape_cast %935 : vector<1x1x4x1xf32> to vector<4x1xf32>
    %937 = vector.extract_strided_slice %843 {offsets = [13, 0], sizes = [1, 256], strides = [1, 1]} : vector<16x256xf32> to vector<1x256xf32>
    %938 = vector.broadcast %936 : vector<4x1xf32> to vector<4x256xf32>
    %939 = vector.broadcast %937 : vector<1x256xf32> to vector<4x256xf32>
    %940 = arith.mulf %938, %939 : vector<4x256xf32>
    %941 = arith.addf %934, %940 : vector<4x256xf32>
    %c6_528 = arith.constant 6 : index
    %c6_529 = arith.constant 6 : index
    %c0_530 = arith.constant 0 : index
    %c0_531 = arith.constant 0 : index
    %942 = vector.load %arg6[%c6_528, %c6_529, %c0_530, %c0_531] : memref<9x8x4x1xf32, #tpu.memory_space<vmem>>, vector<1x1x4x1xf32>
    %943 = vector.shape_cast %942 : vector<1x1x4x1xf32> to vector<4x1xf32>
    %944 = vector.extract_strided_slice %843 {offsets = [14, 0], sizes = [1, 256], strides = [1, 1]} : vector<16x256xf32> to vector<1x256xf32>
    %945 = vector.broadcast %943 : vector<4x1xf32> to vector<4x256xf32>
    %946 = vector.broadcast %944 : vector<1x256xf32> to vector<4x256xf32>
    %947 = arith.mulf %945, %946 : vector<4x256xf32>
    %948 = arith.addf %941, %947 : vector<4x256xf32>
    %c6_532 = arith.constant 6 : index
    %c7_533 = arith.constant 7 : index
    %c0_534 = arith.constant 0 : index
    %c0_535 = arith.constant 0 : index
    %949 = vector.load %arg6[%c6_532, %c7_533, %c0_534, %c0_535] : memref<9x8x4x1xf32, #tpu.memory_space<vmem>>, vector<1x1x4x1xf32>
    %950 = vector.shape_cast %949 : vector<1x1x4x1xf32> to vector<4x1xf32>
    %951 = vector.extract_strided_slice %843 {offsets = [15, 0], sizes = [1, 256], strides = [1, 1]} : vector<16x256xf32> to vector<1x256xf32>
    %952 = vector.broadcast %950 : vector<4x1xf32> to vector<4x256xf32>
    %953 = vector.broadcast %951 : vector<1x256xf32> to vector<4x256xf32>
    %954 = arith.mulf %952, %953 : vector<4x256xf32>
    %955 = arith.addf %948, %954 : vector<4x256xf32>
    %c0_536 = arith.constant 0 : index
    %c33 = arith.constant 33 : index
    %956 = vector.load %arg15[%c0_536, %c33] : memref<16x290xf32, #tpu.memory_space<vmem>>, vector<16x256xf32>
    %c7_537 = arith.constant 7 : index
    %c0_538 = arith.constant 0 : index
    %c0_539 = arith.constant 0 : index
    %c0_540 = arith.constant 0 : index
    %957 = vector.load %arg6[%c7_537, %c0_538, %c0_539, %c0_540] : memref<9x8x4x1xf32, #tpu.memory_space<vmem>>, vector<1x1x4x1xf32>
    %958 = vector.shape_cast %957 : vector<1x1x4x1xf32> to vector<4x1xf32>
    %959 = vector.extract_strided_slice %956 {offsets = [0, 0], sizes = [1, 256], strides = [1, 1]} : vector<16x256xf32> to vector<1x256xf32>
    %960 = vector.broadcast %958 : vector<4x1xf32> to vector<4x256xf32>
    %961 = vector.broadcast %959 : vector<1x256xf32> to vector<4x256xf32>
    %962 = arith.mulf %960, %961 : vector<4x256xf32>
    %963 = arith.addf %899, %962 : vector<4x256xf32>
    %c7_541 = arith.constant 7 : index
    %c1_542 = arith.constant 1 : index
    %c0_543 = arith.constant 0 : index
    %c0_544 = arith.constant 0 : index
    %964 = vector.load %arg6[%c7_541, %c1_542, %c0_543, %c0_544] : memref<9x8x4x1xf32, #tpu.memory_space<vmem>>, vector<1x1x4x1xf32>
    %965 = vector.shape_cast %964 : vector<1x1x4x1xf32> to vector<4x1xf32>
    %966 = vector.extract_strided_slice %956 {offsets = [1, 0], sizes = [1, 256], strides = [1, 1]} : vector<16x256xf32> to vector<1x256xf32>
    %967 = vector.broadcast %965 : vector<4x1xf32> to vector<4x256xf32>
    %968 = vector.broadcast %966 : vector<1x256xf32> to vector<4x256xf32>
    %969 = arith.mulf %967, %968 : vector<4x256xf32>
    %970 = arith.addf %963, %969 : vector<4x256xf32>
    %c7_545 = arith.constant 7 : index
    %c2_546 = arith.constant 2 : index
    %c0_547 = arith.constant 0 : index
    %c0_548 = arith.constant 0 : index
    %971 = vector.load %arg6[%c7_545, %c2_546, %c0_547, %c0_548] : memref<9x8x4x1xf32, #tpu.memory_space<vmem>>, vector<1x1x4x1xf32>
    %972 = vector.shape_cast %971 : vector<1x1x4x1xf32> to vector<4x1xf32>
    %973 = vector.extract_strided_slice %956 {offsets = [2, 0], sizes = [1, 256], strides = [1, 1]} : vector<16x256xf32> to vector<1x256xf32>
    %974 = vector.broadcast %972 : vector<4x1xf32> to vector<4x256xf32>
    %975 = vector.broadcast %973 : vector<1x256xf32> to vector<4x256xf32>
    %976 = arith.mulf %974, %975 : vector<4x256xf32>
    %977 = arith.addf %970, %976 : vector<4x256xf32>
    %c7_549 = arith.constant 7 : index
    %c3_550 = arith.constant 3 : index
    %c0_551 = arith.constant 0 : index
    %c0_552 = arith.constant 0 : index
    %978 = vector.load %arg6[%c7_549, %c3_550, %c0_551, %c0_552] : memref<9x8x4x1xf32, #tpu.memory_space<vmem>>, vector<1x1x4x1xf32>
    %979 = vector.shape_cast %978 : vector<1x1x4x1xf32> to vector<4x1xf32>
    %980 = vector.extract_strided_slice %956 {offsets = [3, 0], sizes = [1, 256], strides = [1, 1]} : vector<16x256xf32> to vector<1x256xf32>
    %981 = vector.broadcast %979 : vector<4x1xf32> to vector<4x256xf32>
    %982 = vector.broadcast %980 : vector<1x256xf32> to vector<4x256xf32>
    %983 = arith.mulf %981, %982 : vector<4x256xf32>
    %984 = arith.addf %977, %983 : vector<4x256xf32>
    %c7_553 = arith.constant 7 : index
    %c4_554 = arith.constant 4 : index
    %c0_555 = arith.constant 0 : index
    %c0_556 = arith.constant 0 : index
    %985 = vector.load %arg6[%c7_553, %c4_554, %c0_555, %c0_556] : memref<9x8x4x1xf32, #tpu.memory_space<vmem>>, vector<1x1x4x1xf32>
    %986 = vector.shape_cast %985 : vector<1x1x4x1xf32> to vector<4x1xf32>
    %987 = vector.extract_strided_slice %956 {offsets = [4, 0], sizes = [1, 256], strides = [1, 1]} : vector<16x256xf32> to vector<1x256xf32>
    %988 = vector.broadcast %986 : vector<4x1xf32> to vector<4x256xf32>
    %989 = vector.broadcast %987 : vector<1x256xf32> to vector<4x256xf32>
    %990 = arith.mulf %988, %989 : vector<4x256xf32>
    %991 = arith.addf %984, %990 : vector<4x256xf32>
    %c7_557 = arith.constant 7 : index
    %c5_558 = arith.constant 5 : index
    %c0_559 = arith.constant 0 : index
    %c0_560 = arith.constant 0 : index
    %992 = vector.load %arg6[%c7_557, %c5_558, %c0_559, %c0_560] : memref<9x8x4x1xf32, #tpu.memory_space<vmem>>, vector<1x1x4x1xf32>
    %993 = vector.shape_cast %992 : vector<1x1x4x1xf32> to vector<4x1xf32>
    %994 = vector.extract_strided_slice %956 {offsets = [5, 0], sizes = [1, 256], strides = [1, 1]} : vector<16x256xf32> to vector<1x256xf32>
    %995 = vector.broadcast %993 : vector<4x1xf32> to vector<4x256xf32>
    %996 = vector.broadcast %994 : vector<1x256xf32> to vector<4x256xf32>
    %997 = arith.mulf %995, %996 : vector<4x256xf32>
    %998 = arith.addf %991, %997 : vector<4x256xf32>
    %c7_561 = arith.constant 7 : index
    %c6_562 = arith.constant 6 : index
    %c0_563 = arith.constant 0 : index
    %c0_564 = arith.constant 0 : index
    %999 = vector.load %arg6[%c7_561, %c6_562, %c0_563, %c0_564] : memref<9x8x4x1xf32, #tpu.memory_space<vmem>>, vector<1x1x4x1xf32>
    %1000 = vector.shape_cast %999 : vector<1x1x4x1xf32> to vector<4x1xf32>
    %1001 = vector.extract_strided_slice %956 {offsets = [6, 0], sizes = [1, 256], strides = [1, 1]} : vector<16x256xf32> to vector<1x256xf32>
    %1002 = vector.broadcast %1000 : vector<4x1xf32> to vector<4x256xf32>
    %1003 = vector.broadcast %1001 : vector<1x256xf32> to vector<4x256xf32>
    %1004 = arith.mulf %1002, %1003 : vector<4x256xf32>
    %1005 = arith.addf %998, %1004 : vector<4x256xf32>
    %c7_565 = arith.constant 7 : index
    %c7_566 = arith.constant 7 : index
    %c0_567 = arith.constant 0 : index
    %c0_568 = arith.constant 0 : index
    %1006 = vector.load %arg6[%c7_565, %c7_566, %c0_567, %c0_568] : memref<9x8x4x1xf32, #tpu.memory_space<vmem>>, vector<1x1x4x1xf32>
    %1007 = vector.shape_cast %1006 : vector<1x1x4x1xf32> to vector<4x1xf32>
    %1008 = vector.extract_strided_slice %956 {offsets = [7, 0], sizes = [1, 256], strides = [1, 1]} : vector<16x256xf32> to vector<1x256xf32>
    %1009 = vector.broadcast %1007 : vector<4x1xf32> to vector<4x256xf32>
    %1010 = vector.broadcast %1008 : vector<1x256xf32> to vector<4x256xf32>
    %1011 = arith.mulf %1009, %1010 : vector<4x256xf32>
    %1012 = arith.addf %1005, %1011 : vector<4x256xf32>
    %c7_569 = arith.constant 7 : index
    %c0_570 = arith.constant 0 : index
    %c0_571 = arith.constant 0 : index
    %c0_572 = arith.constant 0 : index
    %1013 = vector.load %arg6[%c7_569, %c0_570, %c0_571, %c0_572] : memref<9x8x4x1xf32, #tpu.memory_space<vmem>>, vector<1x1x4x1xf32>
    %1014 = vector.shape_cast %1013 : vector<1x1x4x1xf32> to vector<4x1xf32>
    %1015 = vector.extract_strided_slice %956 {offsets = [8, 0], sizes = [1, 256], strides = [1, 1]} : vector<16x256xf32> to vector<1x256xf32>
    %1016 = vector.broadcast %1014 : vector<4x1xf32> to vector<4x256xf32>
    %1017 = vector.broadcast %1015 : vector<1x256xf32> to vector<4x256xf32>
    %1018 = arith.mulf %1016, %1017 : vector<4x256xf32>
    %1019 = arith.addf %955, %1018 : vector<4x256xf32>
    %c7_573 = arith.constant 7 : index
    %c1_574 = arith.constant 1 : index
    %c0_575 = arith.constant 0 : index
    %c0_576 = arith.constant 0 : index
    %1020 = vector.load %arg6[%c7_573, %c1_574, %c0_575, %c0_576] : memref<9x8x4x1xf32, #tpu.memory_space<vmem>>, vector<1x1x4x1xf32>
    %1021 = vector.shape_cast %1020 : vector<1x1x4x1xf32> to vector<4x1xf32>
    %1022 = vector.extract_strided_slice %956 {offsets = [9, 0], sizes = [1, 256], strides = [1, 1]} : vector<16x256xf32> to vector<1x256xf32>
    %1023 = vector.broadcast %1021 : vector<4x1xf32> to vector<4x256xf32>
    %1024 = vector.broadcast %1022 : vector<1x256xf32> to vector<4x256xf32>
    %1025 = arith.mulf %1023, %1024 : vector<4x256xf32>
    %1026 = arith.addf %1019, %1025 : vector<4x256xf32>
    %c7_577 = arith.constant 7 : index
    %c2_578 = arith.constant 2 : index
    %c0_579 = arith.constant 0 : index
    %c0_580 = arith.constant 0 : index
    %1027 = vector.load %arg6[%c7_577, %c2_578, %c0_579, %c0_580] : memref<9x8x4x1xf32, #tpu.memory_space<vmem>>, vector<1x1x4x1xf32>
    %1028 = vector.shape_cast %1027 : vector<1x1x4x1xf32> to vector<4x1xf32>
    %1029 = vector.extract_strided_slice %956 {offsets = [10, 0], sizes = [1, 256], strides = [1, 1]} : vector<16x256xf32> to vector<1x256xf32>
    %1030 = vector.broadcast %1028 : vector<4x1xf32> to vector<4x256xf32>
    %1031 = vector.broadcast %1029 : vector<1x256xf32> to vector<4x256xf32>
    %1032 = arith.mulf %1030, %1031 : vector<4x256xf32>
    %1033 = arith.addf %1026, %1032 : vector<4x256xf32>
    %c7_581 = arith.constant 7 : index
    %c3_582 = arith.constant 3 : index
    %c0_583 = arith.constant 0 : index
    %c0_584 = arith.constant 0 : index
    %1034 = vector.load %arg6[%c7_581, %c3_582, %c0_583, %c0_584] : memref<9x8x4x1xf32, #tpu.memory_space<vmem>>, vector<1x1x4x1xf32>
    %1035 = vector.shape_cast %1034 : vector<1x1x4x1xf32> to vector<4x1xf32>
    %1036 = vector.extract_strided_slice %956 {offsets = [11, 0], sizes = [1, 256], strides = [1, 1]} : vector<16x256xf32> to vector<1x256xf32>
    %1037 = vector.broadcast %1035 : vector<4x1xf32> to vector<4x256xf32>
    %1038 = vector.broadcast %1036 : vector<1x256xf32> to vector<4x256xf32>
    %1039 = arith.mulf %1037, %1038 : vector<4x256xf32>
    %1040 = arith.addf %1033, %1039 : vector<4x256xf32>
    %c7_585 = arith.constant 7 : index
    %c4_586 = arith.constant 4 : index
    %c0_587 = arith.constant 0 : index
    %c0_588 = arith.constant 0 : index
    %1041 = vector.load %arg6[%c7_585, %c4_586, %c0_587, %c0_588] : memref<9x8x4x1xf32, #tpu.memory_space<vmem>>, vector<1x1x4x1xf32>
    %1042 = vector.shape_cast %1041 : vector<1x1x4x1xf32> to vector<4x1xf32>
    %1043 = vector.extract_strided_slice %956 {offsets = [12, 0], sizes = [1, 256], strides = [1, 1]} : vector<16x256xf32> to vector<1x256xf32>
    %1044 = vector.broadcast %1042 : vector<4x1xf32> to vector<4x256xf32>
    %1045 = vector.broadcast %1043 : vector<1x256xf32> to vector<4x256xf32>
    %1046 = arith.mulf %1044, %1045 : vector<4x256xf32>
    %1047 = arith.addf %1040, %1046 : vector<4x256xf32>
    %c7_589 = arith.constant 7 : index
    %c5_590 = arith.constant 5 : index
    %c0_591 = arith.constant 0 : index
    %c0_592 = arith.constant 0 : index
    %1048 = vector.load %arg6[%c7_589, %c5_590, %c0_591, %c0_592] : memref<9x8x4x1xf32, #tpu.memory_space<vmem>>, vector<1x1x4x1xf32>
    %1049 = vector.shape_cast %1048 : vector<1x1x4x1xf32> to vector<4x1xf32>
    %1050 = vector.extract_strided_slice %956 {offsets = [13, 0], sizes = [1, 256], strides = [1, 1]} : vector<16x256xf32> to vector<1x256xf32>
    %1051 = vector.broadcast %1049 : vector<4x1xf32> to vector<4x256xf32>
    %1052 = vector.broadcast %1050 : vector<1x256xf32> to vector<4x256xf32>
    %1053 = arith.mulf %1051, %1052 : vector<4x256xf32>
    %1054 = arith.addf %1047, %1053 : vector<4x256xf32>
    %c7_593 = arith.constant 7 : index
    %c6_594 = arith.constant 6 : index
    %c0_595 = arith.constant 0 : index
    %c0_596 = arith.constant 0 : index
    %1055 = vector.load %arg6[%c7_593, %c6_594, %c0_595, %c0_596] : memref<9x8x4x1xf32, #tpu.memory_space<vmem>>, vector<1x1x4x1xf32>
    %1056 = vector.shape_cast %1055 : vector<1x1x4x1xf32> to vector<4x1xf32>
    %1057 = vector.extract_strided_slice %956 {offsets = [14, 0], sizes = [1, 256], strides = [1, 1]} : vector<16x256xf32> to vector<1x256xf32>
    %1058 = vector.broadcast %1056 : vector<4x1xf32> to vector<4x256xf32>
    %1059 = vector.broadcast %1057 : vector<1x256xf32> to vector<4x256xf32>
    %1060 = arith.mulf %1058, %1059 : vector<4x256xf32>
    %1061 = arith.addf %1054, %1060 : vector<4x256xf32>
    %c7_597 = arith.constant 7 : index
    %c7_598 = arith.constant 7 : index
    %c0_599 = arith.constant 0 : index
    %c0_600 = arith.constant 0 : index
    %1062 = vector.load %arg6[%c7_597, %c7_598, %c0_599, %c0_600] : memref<9x8x4x1xf32, #tpu.memory_space<vmem>>, vector<1x1x4x1xf32>
    %1063 = vector.shape_cast %1062 : vector<1x1x4x1xf32> to vector<4x1xf32>
    %1064 = vector.extract_strided_slice %956 {offsets = [15, 0], sizes = [1, 256], strides = [1, 1]} : vector<16x256xf32> to vector<1x256xf32>
    %1065 = vector.broadcast %1063 : vector<4x1xf32> to vector<4x256xf32>
    %1066 = vector.broadcast %1064 : vector<1x256xf32> to vector<4x256xf32>
    %1067 = arith.mulf %1065, %1066 : vector<4x256xf32>
    %1068 = arith.addf %1061, %1067 : vector<4x256xf32>
    %c0_601 = arith.constant 0 : index
    %c34 = arith.constant 34 : index
    %1069 = vector.load %arg15[%c0_601, %c34] : memref<16x290xf32, #tpu.memory_space<vmem>>, vector<16x256xf32>
    %cst_602 = arith.constant 0.000000e+00 : f32
    %1070 = vector.shape_cast %20 : vector<1x256xi1> to vector<1x256xi1>
    %1071 = vector.broadcast %1070 : vector<1x256xi1> to vector<16x256xi1>
    %1072 = vector.broadcast %cst_602 : f32 to vector<16x256xf32>
    %1073 = arith.select %1071, %1069, %1072 : vector<16x256xi1>, vector<16x256xf32>
    %c8_603 = arith.constant 8 : index
    %c0_604 = arith.constant 0 : index
    %c0_605 = arith.constant 0 : index
    %c0_606 = arith.constant 0 : index
    %1074 = vector.load %arg6[%c8_603, %c0_604, %c0_605, %c0_606] : memref<9x8x4x1xf32, #tpu.memory_space<vmem>>, vector<1x1x4x1xf32>
    %1075 = vector.shape_cast %1074 : vector<1x1x4x1xf32> to vector<4x1xf32>
    %1076 = vector.extract_strided_slice %1073 {offsets = [0, 0], sizes = [1, 256], strides = [1, 1]} : vector<16x256xf32> to vector<1x256xf32>
    %1077 = vector.broadcast %1075 : vector<4x1xf32> to vector<4x256xf32>
    %1078 = vector.broadcast %1076 : vector<1x256xf32> to vector<4x256xf32>
    %1079 = arith.mulf %1077, %1078 : vector<4x256xf32>
    %1080 = arith.addf %1012, %1079 : vector<4x256xf32>
    %c8_607 = arith.constant 8 : index
    %c1_608 = arith.constant 1 : index
    %c0_609 = arith.constant 0 : index
    %c0_610 = arith.constant 0 : index
    %1081 = vector.load %arg6[%c8_607, %c1_608, %c0_609, %c0_610] : memref<9x8x4x1xf32, #tpu.memory_space<vmem>>, vector<1x1x4x1xf32>
    %1082 = vector.shape_cast %1081 : vector<1x1x4x1xf32> to vector<4x1xf32>
    %1083 = vector.extract_strided_slice %1073 {offsets = [1, 0], sizes = [1, 256], strides = [1, 1]} : vector<16x256xf32> to vector<1x256xf32>
    %1084 = vector.broadcast %1082 : vector<4x1xf32> to vector<4x256xf32>
    %1085 = vector.broadcast %1083 : vector<1x256xf32> to vector<4x256xf32>
    %1086 = arith.mulf %1084, %1085 : vector<4x256xf32>
    %1087 = arith.addf %1080, %1086 : vector<4x256xf32>
    %c8_611 = arith.constant 8 : index
    %c2_612 = arith.constant 2 : index
    %c0_613 = arith.constant 0 : index
    %c0_614 = arith.constant 0 : index
    %1088 = vector.load %arg6[%c8_611, %c2_612, %c0_613, %c0_614] : memref<9x8x4x1xf32, #tpu.memory_space<vmem>>, vector<1x1x4x1xf32>
    %1089 = vector.shape_cast %1088 : vector<1x1x4x1xf32> to vector<4x1xf32>
    %1090 = vector.extract_strided_slice %1073 {offsets = [2, 0], sizes = [1, 256], strides = [1, 1]} : vector<16x256xf32> to vector<1x256xf32>
    %1091 = vector.broadcast %1089 : vector<4x1xf32> to vector<4x256xf32>
    %1092 = vector.broadcast %1090 : vector<1x256xf32> to vector<4x256xf32>
    %1093 = arith.mulf %1091, %1092 : vector<4x256xf32>
    %1094 = arith.addf %1087, %1093 : vector<4x256xf32>
    %c8_615 = arith.constant 8 : index
    %c3_616 = arith.constant 3 : index
    %c0_617 = arith.constant 0 : index
    %c0_618 = arith.constant 0 : index
    %1095 = vector.load %arg6[%c8_615, %c3_616, %c0_617, %c0_618] : memref<9x8x4x1xf32, #tpu.memory_space<vmem>>, vector<1x1x4x1xf32>
    %1096 = vector.shape_cast %1095 : vector<1x1x4x1xf32> to vector<4x1xf32>
    %1097 = vector.extract_strided_slice %1073 {offsets = [3, 0], sizes = [1, 256], strides = [1, 1]} : vector<16x256xf32> to vector<1x256xf32>
    %1098 = vector.broadcast %1096 : vector<4x1xf32> to vector<4x256xf32>
    %1099 = vector.broadcast %1097 : vector<1x256xf32> to vector<4x256xf32>
    %1100 = arith.mulf %1098, %1099 : vector<4x256xf32>
    %1101 = arith.addf %1094, %1100 : vector<4x256xf32>
    %c8_619 = arith.constant 8 : index
    %c4_620 = arith.constant 4 : index
    %c0_621 = arith.constant 0 : index
    %c0_622 = arith.constant 0 : index
    %1102 = vector.load %arg6[%c8_619, %c4_620, %c0_621, %c0_622] : memref<9x8x4x1xf32, #tpu.memory_space<vmem>>, vector<1x1x4x1xf32>
    %1103 = vector.shape_cast %1102 : vector<1x1x4x1xf32> to vector<4x1xf32>
    %1104 = vector.extract_strided_slice %1073 {offsets = [4, 0], sizes = [1, 256], strides = [1, 1]} : vector<16x256xf32> to vector<1x256xf32>
    %1105 = vector.broadcast %1103 : vector<4x1xf32> to vector<4x256xf32>
    %1106 = vector.broadcast %1104 : vector<1x256xf32> to vector<4x256xf32>
    %1107 = arith.mulf %1105, %1106 : vector<4x256xf32>
    %1108 = arith.addf %1101, %1107 : vector<4x256xf32>
    %c8_623 = arith.constant 8 : index
    %c5_624 = arith.constant 5 : index
    %c0_625 = arith.constant 0 : index
    %c0_626 = arith.constant 0 : index
    %1109 = vector.load %arg6[%c8_623, %c5_624, %c0_625, %c0_626] : memref<9x8x4x1xf32, #tpu.memory_space<vmem>>, vector<1x1x4x1xf32>
    %1110 = vector.shape_cast %1109 : vector<1x1x4x1xf32> to vector<4x1xf32>
    %1111 = vector.extract_strided_slice %1073 {offsets = [5, 0], sizes = [1, 256], strides = [1, 1]} : vector<16x256xf32> to vector<1x256xf32>
    %1112 = vector.broadcast %1110 : vector<4x1xf32> to vector<4x256xf32>
    %1113 = vector.broadcast %1111 : vector<1x256xf32> to vector<4x256xf32>
    %1114 = arith.mulf %1112, %1113 : vector<4x256xf32>
    %1115 = arith.addf %1108, %1114 : vector<4x256xf32>
    %c8_627 = arith.constant 8 : index
    %c6_628 = arith.constant 6 : index
    %c0_629 = arith.constant 0 : index
    %c0_630 = arith.constant 0 : index
    %1116 = vector.load %arg6[%c8_627, %c6_628, %c0_629, %c0_630] : memref<9x8x4x1xf32, #tpu.memory_space<vmem>>, vector<1x1x4x1xf32>
    %1117 = vector.shape_cast %1116 : vector<1x1x4x1xf32> to vector<4x1xf32>
    %1118 = vector.extract_strided_slice %1073 {offsets = [6, 0], sizes = [1, 256], strides = [1, 1]} : vector<16x256xf32> to vector<1x256xf32>
    %1119 = vector.broadcast %1117 : vector<4x1xf32> to vector<4x256xf32>
    %1120 = vector.broadcast %1118 : vector<1x256xf32> to vector<4x256xf32>
    %1121 = arith.mulf %1119, %1120 : vector<4x256xf32>
    %1122 = arith.addf %1115, %1121 : vector<4x256xf32>
    %c8_631 = arith.constant 8 : index
    %c7_632 = arith.constant 7 : index
    %c0_633 = arith.constant 0 : index
    %c0_634 = arith.constant 0 : index
    %1123 = vector.load %arg6[%c8_631, %c7_632, %c0_633, %c0_634] : memref<9x8x4x1xf32, #tpu.memory_space<vmem>>, vector<1x1x4x1xf32>
    %1124 = vector.shape_cast %1123 : vector<1x1x4x1xf32> to vector<4x1xf32>
    %1125 = vector.extract_strided_slice %1073 {offsets = [7, 0], sizes = [1, 256], strides = [1, 1]} : vector<16x256xf32> to vector<1x256xf32>
    %1126 = vector.broadcast %1124 : vector<4x1xf32> to vector<4x256xf32>
    %1127 = vector.broadcast %1125 : vector<1x256xf32> to vector<4x256xf32>
    %1128 = arith.mulf %1126, %1127 : vector<4x256xf32>
    %1129 = arith.addf %1122, %1128 : vector<4x256xf32>
    %c8_635 = arith.constant 8 : index
    %c0_636 = arith.constant 0 : index
    %c0_637 = arith.constant 0 : index
    %c0_638 = arith.constant 0 : index
    %1130 = vector.load %arg6[%c8_635, %c0_636, %c0_637, %c0_638] : memref<9x8x4x1xf32, #tpu.memory_space<vmem>>, vector<1x1x4x1xf32>
    %1131 = vector.shape_cast %1130 : vector<1x1x4x1xf32> to vector<4x1xf32>
    %1132 = vector.extract_strided_slice %1073 {offsets = [8, 0], sizes = [1, 256], strides = [1, 1]} : vector<16x256xf32> to vector<1x256xf32>
    %1133 = vector.broadcast %1131 : vector<4x1xf32> to vector<4x256xf32>
    %1134 = vector.broadcast %1132 : vector<1x256xf32> to vector<4x256xf32>
    %1135 = arith.mulf %1133, %1134 : vector<4x256xf32>
    %1136 = arith.addf %1068, %1135 : vector<4x256xf32>
    %c8_639 = arith.constant 8 : index
    %c1_640 = arith.constant 1 : index
    %c0_641 = arith.constant 0 : index
    %c0_642 = arith.constant 0 : index
    %1137 = vector.load %arg6[%c8_639, %c1_640, %c0_641, %c0_642] : memref<9x8x4x1xf32, #tpu.memory_space<vmem>>, vector<1x1x4x1xf32>
    %1138 = vector.shape_cast %1137 : vector<1x1x4x1xf32> to vector<4x1xf32>
    %1139 = vector.extract_strided_slice %1073 {offsets = [9, 0], sizes = [1, 256], strides = [1, 1]} : vector<16x256xf32> to vector<1x256xf32>
    %1140 = vector.broadcast %1138 : vector<4x1xf32> to vector<4x256xf32>
    %1141 = vector.broadcast %1139 : vector<1x256xf32> to vector<4x256xf32>
    %1142 = arith.mulf %1140, %1141 : vector<4x256xf32>
    %1143 = arith.addf %1136, %1142 : vector<4x256xf32>
    %c8_643 = arith.constant 8 : index
    %c2_644 = arith.constant 2 : index
    %c0_645 = arith.constant 0 : index
    %c0_646 = arith.constant 0 : index
    %1144 = vector.load %arg6[%c8_643, %c2_644, %c0_645, %c0_646] : memref<9x8x4x1xf32, #tpu.memory_space<vmem>>, vector<1x1x4x1xf32>
    %1145 = vector.shape_cast %1144 : vector<1x1x4x1xf32> to vector<4x1xf32>
    %1146 = vector.extract_strided_slice %1073 {offsets = [10, 0], sizes = [1, 256], strides = [1, 1]} : vector<16x256xf32> to vector<1x256xf32>
    %1147 = vector.broadcast %1145 : vector<4x1xf32> to vector<4x256xf32>
    %1148 = vector.broadcast %1146 : vector<1x256xf32> to vector<4x256xf32>
    %1149 = arith.mulf %1147, %1148 : vector<4x256xf32>
    %1150 = arith.addf %1143, %1149 : vector<4x256xf32>
    %c8_647 = arith.constant 8 : index
    %c3_648 = arith.constant 3 : index
    %c0_649 = arith.constant 0 : index
    %c0_650 = arith.constant 0 : index
    %1151 = vector.load %arg6[%c8_647, %c3_648, %c0_649, %c0_650] : memref<9x8x4x1xf32, #tpu.memory_space<vmem>>, vector<1x1x4x1xf32>
    %1152 = vector.shape_cast %1151 : vector<1x1x4x1xf32> to vector<4x1xf32>
    %1153 = vector.extract_strided_slice %1073 {offsets = [11, 0], sizes = [1, 256], strides = [1, 1]} : vector<16x256xf32> to vector<1x256xf32>
    %1154 = vector.broadcast %1152 : vector<4x1xf32> to vector<4x256xf32>
    %1155 = vector.broadcast %1153 : vector<1x256xf32> to vector<4x256xf32>
    %1156 = arith.mulf %1154, %1155 : vector<4x256xf32>
    %1157 = arith.addf %1150, %1156 : vector<4x256xf32>
    %c8_651 = arith.constant 8 : index
    %c4_652 = arith.constant 4 : index
    %c0_653 = arith.constant 0 : index
    %c0_654 = arith.constant 0 : index
    %1158 = vector.load %arg6[%c8_651, %c4_652, %c0_653, %c0_654] : memref<9x8x4x1xf32, #tpu.memory_space<vmem>>, vector<1x1x4x1xf32>
    %1159 = vector.shape_cast %1158 : vector<1x1x4x1xf32> to vector<4x1xf32>
    %1160 = vector.extract_strided_slice %1073 {offsets = [12, 0], sizes = [1, 256], strides = [1, 1]} : vector<16x256xf32> to vector<1x256xf32>
    %1161 = vector.broadcast %1159 : vector<4x1xf32> to vector<4x256xf32>
    %1162 = vector.broadcast %1160 : vector<1x256xf32> to vector<4x256xf32>
    %1163 = arith.mulf %1161, %1162 : vector<4x256xf32>
    %1164 = arith.addf %1157, %1163 : vector<4x256xf32>
    %c8_655 = arith.constant 8 : index
    %c5_656 = arith.constant 5 : index
    %c0_657 = arith.constant 0 : index
    %c0_658 = arith.constant 0 : index
    %1165 = vector.load %arg6[%c8_655, %c5_656, %c0_657, %c0_658] : memref<9x8x4x1xf32, #tpu.memory_space<vmem>>, vector<1x1x4x1xf32>
    %1166 = vector.shape_cast %1165 : vector<1x1x4x1xf32> to vector<4x1xf32>
    %1167 = vector.extract_strided_slice %1073 {offsets = [13, 0], sizes = [1, 256], strides = [1, 1]} : vector<16x256xf32> to vector<1x256xf32>
    %1168 = vector.broadcast %1166 : vector<4x1xf32> to vector<4x256xf32>
    %1169 = vector.broadcast %1167 : vector<1x256xf32> to vector<4x256xf32>
    %1170 = arith.mulf %1168, %1169 : vector<4x256xf32>
    %1171 = arith.addf %1164, %1170 : vector<4x256xf32>
    %c8_659 = arith.constant 8 : index
    %c6_660 = arith.constant 6 : index
    %c0_661 = arith.constant 0 : index
    %c0_662 = arith.constant 0 : index
    %1172 = vector.load %arg6[%c8_659, %c6_660, %c0_661, %c0_662] : memref<9x8x4x1xf32, #tpu.memory_space<vmem>>, vector<1x1x4x1xf32>
    %1173 = vector.shape_cast %1172 : vector<1x1x4x1xf32> to vector<4x1xf32>
    %1174 = vector.extract_strided_slice %1073 {offsets = [14, 0], sizes = [1, 256], strides = [1, 1]} : vector<16x256xf32> to vector<1x256xf32>
    %1175 = vector.broadcast %1173 : vector<4x1xf32> to vector<4x256xf32>
    %1176 = vector.broadcast %1174 : vector<1x256xf32> to vector<4x256xf32>
    %1177 = arith.mulf %1175, %1176 : vector<4x256xf32>
    %1178 = arith.addf %1171, %1177 : vector<4x256xf32>
    %c8_663 = arith.constant 8 : index
    %c7_664 = arith.constant 7 : index
    %c0_665 = arith.constant 0 : index
    %c0_666 = arith.constant 0 : index
    %1179 = vector.load %arg6[%c8_663, %c7_664, %c0_665, %c0_666] : memref<9x8x4x1xf32, #tpu.memory_space<vmem>>, vector<1x1x4x1xf32>
    %1180 = vector.shape_cast %1179 : vector<1x1x4x1xf32> to vector<4x1xf32>
    %1181 = vector.extract_strided_slice %1073 {offsets = [15, 0], sizes = [1, 256], strides = [1, 1]} : vector<16x256xf32> to vector<1x256xf32>
    %1182 = vector.broadcast %1180 : vector<4x1xf32> to vector<4x256xf32>
    %1183 = vector.broadcast %1181 : vector<1x256xf32> to vector<4x256xf32>
    %1184 = arith.mulf %1182, %1183 : vector<4x256xf32>
    %1185 = arith.addf %1178, %1184 : vector<4x256xf32>
    %cst_667 = arith.constant dense<0.000000e+00> : vector<4xf32>
    %1186 = vector.multi_reduction <add>, %1129, %cst_667 [1] : vector<4x256xf32> to vector<4xf32>
    %1187 = vector.shape_cast %1186 : vector<4xf32> to vector<4x1xf32>
    %cst_668 = arith.constant 0.000000e+00 : f32
    %1188 = vector.broadcast %cst_668 : f32 to vector<4x1xf32>
    %1189 = arith.addf %1188, %1187 : vector<4x1xf32>
    %cst_669 = arith.constant dense<0.000000e+00> : vector<4xf32>
    %1190 = vector.multi_reduction <add>, %1185, %cst_669 [1] : vector<4x256xf32> to vector<4xf32>
    %1191 = vector.shape_cast %1190 : vector<4xf32> to vector<4x1xf32>
    %1192 = arith.addf %1189, %1191 : vector<4x1xf32>
    %cst_670 = arith.constant 5.120000e+02 : f32
    %1193 = vector.broadcast %cst_670 : f32 to vector<4x1xf32>
    %1194 = arith.divf %1192, %1193 : vector<4x1xf32>
    %1195 = arith.mulf %1129, %1129 : vector<4x256xf32>
    %cst_671 = arith.constant dense<0.000000e+00> : vector<4xf32>
    %1196 = vector.multi_reduction <add>, %1195, %cst_671 [1] : vector<4x256xf32> to vector<4xf32>
    %1197 = vector.shape_cast %1196 : vector<4xf32> to vector<4x1xf32>
    %cst_672 = arith.constant 0.000000e+00 : f32
    %1198 = vector.broadcast %cst_672 : f32 to vector<4x1xf32>
    %1199 = arith.addf %1198, %1197 : vector<4x1xf32>
    %1200 = arith.mulf %1185, %1185 : vector<4x256xf32>
    %cst_673 = arith.constant dense<0.000000e+00> : vector<4xf32>
    %1201 = vector.multi_reduction <add>, %1200, %cst_673 [1] : vector<4x256xf32> to vector<4xf32>
    %1202 = vector.shape_cast %1201 : vector<4xf32> to vector<4x1xf32>
    %1203 = arith.addf %1199, %1202 : vector<4x1xf32>
    %cst_674 = arith.constant 5.120000e+02 : f32
    %1204 = vector.broadcast %cst_674 : f32 to vector<4x1xf32>
    %1205 = arith.divf %1203, %1204 : vector<4x1xf32>
    %c0_675 = arith.constant 0 : index
    %c0_676 = arith.constant 0 : index
    %1206 = vector.load %arg8[%c0_675, %c0_676] : memref<4x1xf32, #tpu.memory_space<vmem>>, vector<4x1xf32>
    %1207 = arith.mulf %1194, %1194 : vector<4x1xf32>
    %1208 = arith.subf %1205, %1207 : vector<4x1xf32>
    %cst_677 = arith.constant 9.99999974E-6 : f32
    %1209 = vector.broadcast %cst_677 : f32 to vector<4x1xf32>
    %1210 = arith.addf %1208, %1209 : vector<4x1xf32>
    %1211 = math.rsqrt %1210 : vector<4x1xf32>
    %1212 = arith.mulf %1206, %1211 : vector<4x1xf32>
    %c0_678 = arith.constant 0 : index
    %c0_679 = arith.constant 0 : index
    %1213 = vector.load %arg9[%c0_678, %c0_679] : memref<4x1xf32, #tpu.memory_space<vmem>>, vector<4x1xf32>
    %1214 = arith.mulf %1194, %1212 : vector<4x1xf32>
    %1215 = arith.subf %1213, %1214 : vector<4x1xf32>
    %1216 = vector.broadcast %1212 : vector<4x1xf32> to vector<4x256xf32>
    %1217 = arith.mulf %1129, %1216 : vector<4x256xf32>
    %1218 = vector.broadcast %1215 : vector<4x1xf32> to vector<4x256xf32>
    %1219 = arith.addf %1217, %1218 : vector<4x256xf32>
    %cst_680 = arith.constant 0.000000e+00 : f32
    %1220 = vector.broadcast %cst_680 : f32 to vector<4x256xf32>
    %1221 = arith.maximumf %1219, %1220 : vector<4x256xf32>
    %c0_681 = arith.constant 0 : index
    %c17_682 = arith.constant 17 : index
    %1222 = vector.load %arg16[%c0_681, %c17_682] : memref<8x290xf32, #tpu.memory_space<vmem>>, vector<4x256xf32>
    tpu.vector_store %arg16[%c0_681, %c17_682], %1221 {strides = array<i32>} : memref<8x290xf32, #tpu.memory_space<vmem>>, vector<4x256xf32>,
    %1223 = vector.broadcast %1212 : vector<4x1xf32> to vector<4x256xf32>
    %1224 = arith.mulf %1185, %1223 : vector<4x256xf32>
    %1225 = vector.broadcast %1215 : vector<4x1xf32> to vector<4x256xf32>
    %1226 = arith.addf %1224, %1225 : vector<4x256xf32>
    %cst_683 = arith.constant 0.000000e+00 : f32
    %1227 = vector.broadcast %cst_683 : f32 to vector<4x256xf32>
    %1228 = arith.maximumf %1226, %1227 : vector<4x256xf32>
    %c4_684 = arith.constant 4 : index
    %c17_685 = arith.constant 17 : index
    %1229 = vector.load %arg16[%c4_684, %c17_685] : memref<8x290xf32, #tpu.memory_space<vmem>>, vector<4x256xf32>
    tpu.vector_store %arg16[%c4_684, %c17_685], %1228 {strides = array<i32>} : memref<8x290xf32, #tpu.memory_space<vmem>>, vector<4x256xf32>,
    %c0_686 = arith.constant 0 : index
    %c0_687 = arith.constant 0 : index
    %1230 = vector.load %arg11[%c0_686, %c0_687] : memref<4x1xf32, #tpu.memory_space<vmem>>, vector<4x1xf32>
    %cst_688 = arith.constant 0.000000e+00 : f32
    %1231 = vector.broadcast %cst_688 : f32 to vector<4x256xf32>
    %1232 = vector.broadcast %1230 : vector<4x1xf32> to vector<4x256xf32>
    %1233 = arith.addf %1231, %1232 : vector<4x256xf32>
    %cst_689 = arith.constant 0.000000e+00 : f32
    %1234 = vector.broadcast %cst_689 : f32 to vector<4x256xf32>
    %1235 = vector.broadcast %1230 : vector<4x1xf32> to vector<4x256xf32>
    %1236 = arith.addf %1234, %1235 : vector<4x256xf32>
    %c0_690 = arith.constant 0 : index
    %c0_691 = arith.constant 0 : index
    %1237 = vector.load %arg16[%c0_690, %c0_691] : memref<8x290xf32, #tpu.memory_space<vmem>>, vector<8x256xf32>
    %cst_692 = arith.constant 0.000000e+00 : f32
    %1238 = vector.shape_cast %18 : vector<1x256xi1> to vector<1x256xi1>
    %1239 = vector.broadcast %1238 : vector<1x256xi1> to vector<8x256xi1>
    %1240 = vector.broadcast %cst_692 : f32 to vector<8x256xf32>
    %1241 = arith.select %1239, %1237, %1240 : vector<8x256xi1>, vector<8x256xf32>
    %c0_693 = arith.constant 0 : index
    %c0_694 = arith.constant 0 : index
    %c0_695 = arith.constant 0 : index
    %c0_696 = arith.constant 0 : index
    %1242 = vector.load %arg10[%c0_693, %c0_694, %c0_695, %c0_696] : memref<9x4x4x1xf32, #tpu.memory_space<vmem>>, vector<1x1x4x1xf32>
    %1243 = vector.shape_cast %1242 : vector<1x1x4x1xf32> to vector<4x1xf32>
    %1244 = vector.extract_strided_slice %1241 {offsets = [0, 0], sizes = [1, 256], strides = [1, 1]} : vector<8x256xf32> to vector<1x256xf32>
    %1245 = vector.broadcast %1243 : vector<4x1xf32> to vector<4x256xf32>
    %1246 = vector.broadcast %1244 : vector<1x256xf32> to vector<4x256xf32>
    %1247 = arith.mulf %1245, %1246 : vector<4x256xf32>
    %1248 = arith.addf %1233, %1247 : vector<4x256xf32>
    %c0_697 = arith.constant 0 : index
    %c1_698 = arith.constant 1 : index
    %c0_699 = arith.constant 0 : index
    %c0_700 = arith.constant 0 : index
    %1249 = vector.load %arg10[%c0_697, %c1_698, %c0_699, %c0_700] : memref<9x4x4x1xf32, #tpu.memory_space<vmem>>, vector<1x1x4x1xf32>
    %1250 = vector.shape_cast %1249 : vector<1x1x4x1xf32> to vector<4x1xf32>
    %1251 = vector.extract_strided_slice %1241 {offsets = [1, 0], sizes = [1, 256], strides = [1, 1]} : vector<8x256xf32> to vector<1x256xf32>
    %1252 = vector.broadcast %1250 : vector<4x1xf32> to vector<4x256xf32>
    %1253 = vector.broadcast %1251 : vector<1x256xf32> to vector<4x256xf32>
    %1254 = arith.mulf %1252, %1253 : vector<4x256xf32>
    %1255 = arith.addf %1248, %1254 : vector<4x256xf32>
    %c0_701 = arith.constant 0 : index
    %c2_702 = arith.constant 2 : index
    %c0_703 = arith.constant 0 : index
    %c0_704 = arith.constant 0 : index
    %1256 = vector.load %arg10[%c0_701, %c2_702, %c0_703, %c0_704] : memref<9x4x4x1xf32, #tpu.memory_space<vmem>>, vector<1x1x4x1xf32>
    %1257 = vector.shape_cast %1256 : vector<1x1x4x1xf32> to vector<4x1xf32>
    %1258 = vector.extract_strided_slice %1241 {offsets = [2, 0], sizes = [1, 256], strides = [1, 1]} : vector<8x256xf32> to vector<1x256xf32>
    %1259 = vector.broadcast %1257 : vector<4x1xf32> to vector<4x256xf32>
    %1260 = vector.broadcast %1258 : vector<1x256xf32> to vector<4x256xf32>
    %1261 = arith.mulf %1259, %1260 : vector<4x256xf32>
    %1262 = arith.addf %1255, %1261 : vector<4x256xf32>
    %c0_705 = arith.constant 0 : index
    %c3_706 = arith.constant 3 : index
    %c0_707 = arith.constant 0 : index
    %c0_708 = arith.constant 0 : index
    %1263 = vector.load %arg10[%c0_705, %c3_706, %c0_707, %c0_708] : memref<9x4x4x1xf32, #tpu.memory_space<vmem>>, vector<1x1x4x1xf32>
    %1264 = vector.shape_cast %1263 : vector<1x1x4x1xf32> to vector<4x1xf32>
    %1265 = vector.extract_strided_slice %1241 {offsets = [3, 0], sizes = [1, 256], strides = [1, 1]} : vector<8x256xf32> to vector<1x256xf32>
    %1266 = vector.broadcast %1264 : vector<4x1xf32> to vector<4x256xf32>
    %1267 = vector.broadcast %1265 : vector<1x256xf32> to vector<4x256xf32>
    %1268 = arith.mulf %1266, %1267 : vector<4x256xf32>
    %1269 = arith.addf %1262, %1268 : vector<4x256xf32>
    %c0_709 = arith.constant 0 : index
    %c0_710 = arith.constant 0 : index
    %c0_711 = arith.constant 0 : index
    %c0_712 = arith.constant 0 : index
    %1270 = vector.load %arg10[%c0_709, %c0_710, %c0_711, %c0_712] : memref<9x4x4x1xf32, #tpu.memory_space<vmem>>, vector<1x1x4x1xf32>
    %1271 = vector.shape_cast %1270 : vector<1x1x4x1xf32> to vector<4x1xf32>
    %1272 = vector.extract_strided_slice %1241 {offsets = [4, 0], sizes = [1, 256], strides = [1, 1]} : vector<8x256xf32> to vector<1x256xf32>
    %1273 = vector.broadcast %1271 : vector<4x1xf32> to vector<4x256xf32>
    %1274 = vector.broadcast %1272 : vector<1x256xf32> to vector<4x256xf32>
    %1275 = arith.mulf %1273, %1274 : vector<4x256xf32>
    %1276 = arith.addf %1236, %1275 : vector<4x256xf32>
    %c0_713 = arith.constant 0 : index
    %c1_714 = arith.constant 1 : index
    %c0_715 = arith.constant 0 : index
    %c0_716 = arith.constant 0 : index
    %1277 = vector.load %arg10[%c0_713, %c1_714, %c0_715, %c0_716] : memref<9x4x4x1xf32, #tpu.memory_space<vmem>>, vector<1x1x4x1xf32>
    %1278 = vector.shape_cast %1277 : vector<1x1x4x1xf32> to vector<4x1xf32>
    %1279 = vector.extract_strided_slice %1241 {offsets = [5, 0], sizes = [1, 256], strides = [1, 1]} : vector<8x256xf32> to vector<1x256xf32>
    %1280 = vector.broadcast %1278 : vector<4x1xf32> to vector<4x256xf32>
    %1281 = vector.broadcast %1279 : vector<1x256xf32> to vector<4x256xf32>
    %1282 = arith.mulf %1280, %1281 : vector<4x256xf32>
    %1283 = arith.addf %1276, %1282 : vector<4x256xf32>
    %c0_717 = arith.constant 0 : index
    %c2_718 = arith.constant 2 : index
    %c0_719 = arith.constant 0 : index
    %c0_720 = arith.constant 0 : index
    %1284 = vector.load %arg10[%c0_717, %c2_718, %c0_719, %c0_720] : memref<9x4x4x1xf32, #tpu.memory_space<vmem>>, vector<1x1x4x1xf32>
    %1285 = vector.shape_cast %1284 : vector<1x1x4x1xf32> to vector<4x1xf32>
    %1286 = vector.extract_strided_slice %1241 {offsets = [6, 0], sizes = [1, 256], strides = [1, 1]} : vector<8x256xf32> to vector<1x256xf32>
    %1287 = vector.broadcast %1285 : vector<4x1xf32> to vector<4x256xf32>
    %1288 = vector.broadcast %1286 : vector<1x256xf32> to vector<4x256xf32>
    %1289 = arith.mulf %1287, %1288 : vector<4x256xf32>
    %1290 = arith.addf %1283, %1289 : vector<4x256xf32>
    %c0_721 = arith.constant 0 : index
    %c3_722 = arith.constant 3 : index
    %c0_723 = arith.constant 0 : index
    %c0_724 = arith.constant 0 : index
    %1291 = vector.load %arg10[%c0_721, %c3_722, %c0_723, %c0_724] : memref<9x4x4x1xf32, #tpu.memory_space<vmem>>, vector<1x1x4x1xf32>
    %1292 = vector.shape_cast %1291 : vector<1x1x4x1xf32> to vector<4x1xf32>
    %1293 = vector.extract_strided_slice %1241 {offsets = [7, 0], sizes = [1, 256], strides = [1, 1]} : vector<8x256xf32> to vector<1x256xf32>
    %1294 = vector.broadcast %1292 : vector<4x1xf32> to vector<4x256xf32>
    %1295 = vector.broadcast %1293 : vector<1x256xf32> to vector<4x256xf32>
    %1296 = arith.mulf %1294, %1295 : vector<4x256xf32>
    %1297 = arith.addf %1290, %1296 : vector<4x256xf32>
    %c0_725 = arith.constant 0 : index
    %c1_726 = arith.constant 1 : index
    %1298 = vector.load %arg16[%c0_725, %c1_726] : memref<8x290xf32, #tpu.memory_space<vmem>>, vector<8x256xf32>
    %c1_727 = arith.constant 1 : index
    %c0_728 = arith.constant 0 : index
    %c0_729 = arith.constant 0 : index
    %c0_730 = arith.constant 0 : index
    %1299 = vector.load %arg10[%c1_727, %c0_728, %c0_729, %c0_730] : memref<9x4x4x1xf32, #tpu.memory_space<vmem>>, vector<1x1x4x1xf32>
    %1300 = vector.shape_cast %1299 : vector<1x1x4x1xf32> to vector<4x1xf32>
    %1301 = vector.extract_strided_slice %1298 {offsets = [0, 0], sizes = [1, 256], strides = [1, 1]} : vector<8x256xf32> to vector<1x256xf32>
    %1302 = vector.broadcast %1300 : vector<4x1xf32> to vector<4x256xf32>
    %1303 = vector.broadcast %1301 : vector<1x256xf32> to vector<4x256xf32>
    %1304 = arith.mulf %1302, %1303 : vector<4x256xf32>
    %1305 = arith.addf %1269, %1304 : vector<4x256xf32>
    %c1_731 = arith.constant 1 : index
    %c1_732 = arith.constant 1 : index
    %c0_733 = arith.constant 0 : index
    %c0_734 = arith.constant 0 : index
    %1306 = vector.load %arg10[%c1_731, %c1_732, %c0_733, %c0_734] : memref<9x4x4x1xf32, #tpu.memory_space<vmem>>, vector<1x1x4x1xf32>
    %1307 = vector.shape_cast %1306 : vector<1x1x4x1xf32> to vector<4x1xf32>
    %1308 = vector.extract_strided_slice %1298 {offsets = [1, 0], sizes = [1, 256], strides = [1, 1]} : vector<8x256xf32> to vector<1x256xf32>
    %1309 = vector.broadcast %1307 : vector<4x1xf32> to vector<4x256xf32>
    %1310 = vector.broadcast %1308 : vector<1x256xf32> to vector<4x256xf32>
    %1311 = arith.mulf %1309, %1310 : vector<4x256xf32>
    %1312 = arith.addf %1305, %1311 : vector<4x256xf32>
    %c1_735 = arith.constant 1 : index
    %c2_736 = arith.constant 2 : index
    %c0_737 = arith.constant 0 : index
    %c0_738 = arith.constant 0 : index
    %1313 = vector.load %arg10[%c1_735, %c2_736, %c0_737, %c0_738] : memref<9x4x4x1xf32, #tpu.memory_space<vmem>>, vector<1x1x4x1xf32>
    %1314 = vector.shape_cast %1313 : vector<1x1x4x1xf32> to vector<4x1xf32>
    %1315 = vector.extract_strided_slice %1298 {offsets = [2, 0], sizes = [1, 256], strides = [1, 1]} : vector<8x256xf32> to vector<1x256xf32>
    %1316 = vector.broadcast %1314 : vector<4x1xf32> to vector<4x256xf32>
    %1317 = vector.broadcast %1315 : vector<1x256xf32> to vector<4x256xf32>
    %1318 = arith.mulf %1316, %1317 : vector<4x256xf32>
    %1319 = arith.addf %1312, %1318 : vector<4x256xf32>
    %c1_739 = arith.constant 1 : index
    %c3_740 = arith.constant 3 : index
    %c0_741 = arith.constant 0 : index
    %c0_742 = arith.constant 0 : index
    %1320 = vector.load %arg10[%c1_739, %c3_740, %c0_741, %c0_742] : memref<9x4x4x1xf32, #tpu.memory_space<vmem>>, vector<1x1x4x1xf32>
    %1321 = vector.shape_cast %1320 : vector<1x1x4x1xf32> to vector<4x1xf32>
    %1322 = vector.extract_strided_slice %1298 {offsets = [3, 0], sizes = [1, 256], strides = [1, 1]} : vector<8x256xf32> to vector<1x256xf32>
    %1323 = vector.broadcast %1321 : vector<4x1xf32> to vector<4x256xf32>
    %1324 = vector.broadcast %1322 : vector<1x256xf32> to vector<4x256xf32>
    %1325 = arith.mulf %1323, %1324 : vector<4x256xf32>
    %1326 = arith.addf %1319, %1325 : vector<4x256xf32>
    %c1_743 = arith.constant 1 : index
    %c0_744 = arith.constant 0 : index
    %c0_745 = arith.constant 0 : index
    %c0_746 = arith.constant 0 : index
    %1327 = vector.load %arg10[%c1_743, %c0_744, %c0_745, %c0_746] : memref<9x4x4x1xf32, #tpu.memory_space<vmem>>, vector<1x1x4x1xf32>
    %1328 = vector.shape_cast %1327 : vector<1x1x4x1xf32> to vector<4x1xf32>
    %1329 = vector.extract_strided_slice %1298 {offsets = [4, 0], sizes = [1, 256], strides = [1, 1]} : vector<8x256xf32> to vector<1x256xf32>
    %1330 = vector.broadcast %1328 : vector<4x1xf32> to vector<4x256xf32>
    %1331 = vector.broadcast %1329 : vector<1x256xf32> to vector<4x256xf32>
    %1332 = arith.mulf %1330, %1331 : vector<4x256xf32>
    %1333 = arith.addf %1297, %1332 : vector<4x256xf32>
    %c1_747 = arith.constant 1 : index
    %c1_748 = arith.constant 1 : index
    %c0_749 = arith.constant 0 : index
    %c0_750 = arith.constant 0 : index
    %1334 = vector.load %arg10[%c1_747, %c1_748, %c0_749, %c0_750] : memref<9x4x4x1xf32, #tpu.memory_space<vmem>>, vector<1x1x4x1xf32>
    %1335 = vector.shape_cast %1334 : vector<1x1x4x1xf32> to vector<4x1xf32>
    %1336 = vector.extract_strided_slice %1298 {offsets = [5, 0], sizes = [1, 256], strides = [1, 1]} : vector<8x256xf32> to vector<1x256xf32>
    %1337 = vector.broadcast %1335 : vector<4x1xf32> to vector<4x256xf32>
    %1338 = vector.broadcast %1336 : vector<1x256xf32> to vector<4x256xf32>
    %1339 = arith.mulf %1337, %1338 : vector<4x256xf32>
    %1340 = arith.addf %1333, %1339 : vector<4x256xf32>
    %c1_751 = arith.constant 1 : index
    %c2_752 = arith.constant 2 : index
    %c0_753 = arith.constant 0 : index
    %c0_754 = arith.constant 0 : index
    %1341 = vector.load %arg10[%c1_751, %c2_752, %c0_753, %c0_754] : memref<9x4x4x1xf32, #tpu.memory_space<vmem>>, vector<1x1x4x1xf32>
    %1342 = vector.shape_cast %1341 : vector<1x1x4x1xf32> to vector<4x1xf32>
    %1343 = vector.extract_strided_slice %1298 {offsets = [6, 0], sizes = [1, 256], strides = [1, 1]} : vector<8x256xf32> to vector<1x256xf32>
    %1344 = vector.broadcast %1342 : vector<4x1xf32> to vector<4x256xf32>
    %1345 = vector.broadcast %1343 : vector<1x256xf32> to vector<4x256xf32>
    %1346 = arith.mulf %1344, %1345 : vector<4x256xf32>
    %1347 = arith.addf %1340, %1346 : vector<4x256xf32>
    %c1_755 = arith.constant 1 : index
    %c3_756 = arith.constant 3 : index
    %c0_757 = arith.constant 0 : index
    %c0_758 = arith.constant 0 : index
    %1348 = vector.load %arg10[%c1_755, %c3_756, %c0_757, %c0_758] : memref<9x4x4x1xf32, #tpu.memory_space<vmem>>, vector<1x1x4x1xf32>
    %1349 = vector.shape_cast %1348 : vector<1x1x4x1xf32> to vector<4x1xf32>
    %1350 = vector.extract_strided_slice %1298 {offsets = [7, 0], sizes = [1, 256], strides = [1, 1]} : vector<8x256xf32> to vector<1x256xf32>
    %1351 = vector.broadcast %1349 : vector<4x1xf32> to vector<4x256xf32>
    %1352 = vector.broadcast %1350 : vector<1x256xf32> to vector<4x256xf32>
    %1353 = arith.mulf %1351, %1352 : vector<4x256xf32>
    %1354 = arith.addf %1347, %1353 : vector<4x256xf32>
    %c0_759 = arith.constant 0 : index
    %c2_760 = arith.constant 2 : index
    %1355 = vector.load %arg16[%c0_759, %c2_760] : memref<8x290xf32, #tpu.memory_space<vmem>>, vector<8x256xf32>
    %cst_761 = arith.constant 0.000000e+00 : f32
    %1356 = vector.shape_cast %20 : vector<1x256xi1> to vector<1x256xi1>
    %1357 = vector.broadcast %1356 : vector<1x256xi1> to vector<8x256xi1>
    %1358 = vector.broadcast %cst_761 : f32 to vector<8x256xf32>
    %1359 = arith.select %1357, %1355, %1358 : vector<8x256xi1>, vector<8x256xf32>
    %c2_762 = arith.constant 2 : index
    %c0_763 = arith.constant 0 : index
    %c0_764 = arith.constant 0 : index
    %c0_765 = arith.constant 0 : index
    %1360 = vector.load %arg10[%c2_762, %c0_763, %c0_764, %c0_765] : memref<9x4x4x1xf32, #tpu.memory_space<vmem>>, vector<1x1x4x1xf32>
    %1361 = vector.shape_cast %1360 : vector<1x1x4x1xf32> to vector<4x1xf32>
    %1362 = vector.extract_strided_slice %1359 {offsets = [0, 0], sizes = [1, 256], strides = [1, 1]} : vector<8x256xf32> to vector<1x256xf32>
    %1363 = vector.broadcast %1361 : vector<4x1xf32> to vector<4x256xf32>
    %1364 = vector.broadcast %1362 : vector<1x256xf32> to vector<4x256xf32>
    %1365 = arith.mulf %1363, %1364 : vector<4x256xf32>
    %1366 = arith.addf %1326, %1365 : vector<4x256xf32>
    %c2_766 = arith.constant 2 : index
    %c1_767 = arith.constant 1 : index
    %c0_768 = arith.constant 0 : index
    %c0_769 = arith.constant 0 : index
    %1367 = vector.load %arg10[%c2_766, %c1_767, %c0_768, %c0_769] : memref<9x4x4x1xf32, #tpu.memory_space<vmem>>, vector<1x1x4x1xf32>
    %1368 = vector.shape_cast %1367 : vector<1x1x4x1xf32> to vector<4x1xf32>
    %1369 = vector.extract_strided_slice %1359 {offsets = [1, 0], sizes = [1, 256], strides = [1, 1]} : vector<8x256xf32> to vector<1x256xf32>
    %1370 = vector.broadcast %1368 : vector<4x1xf32> to vector<4x256xf32>
    %1371 = vector.broadcast %1369 : vector<1x256xf32> to vector<4x256xf32>
    %1372 = arith.mulf %1370, %1371 : vector<4x256xf32>
    %1373 = arith.addf %1366, %1372 : vector<4x256xf32>
    %c2_770 = arith.constant 2 : index
    %c2_771 = arith.constant 2 : index
    %c0_772 = arith.constant 0 : index
    %c0_773 = arith.constant 0 : index
    %1374 = vector.load %arg10[%c2_770, %c2_771, %c0_772, %c0_773] : memref<9x4x4x1xf32, #tpu.memory_space<vmem>>, vector<1x1x4x1xf32>
    %1375 = vector.shape_cast %1374 : vector<1x1x4x1xf32> to vector<4x1xf32>
    %1376 = vector.extract_strided_slice %1359 {offsets = [2, 0], sizes = [1, 256], strides = [1, 1]} : vector<8x256xf32> to vector<1x256xf32>
    %1377 = vector.broadcast %1375 : vector<4x1xf32> to vector<4x256xf32>
    %1378 = vector.broadcast %1376 : vector<1x256xf32> to vector<4x256xf32>
    %1379 = arith.mulf %1377, %1378 : vector<4x256xf32>
    %1380 = arith.addf %1373, %1379 : vector<4x256xf32>
    %c2_774 = arith.constant 2 : index
    %c3_775 = arith.constant 3 : index
    %c0_776 = arith.constant 0 : index
    %c0_777 = arith.constant 0 : index
    %1381 = vector.load %arg10[%c2_774, %c3_775, %c0_776, %c0_777] : memref<9x4x4x1xf32, #tpu.memory_space<vmem>>, vector<1x1x4x1xf32>
    %1382 = vector.shape_cast %1381 : vector<1x1x4x1xf32> to vector<4x1xf32>
    %1383 = vector.extract_strided_slice %1359 {offsets = [3, 0], sizes = [1, 256], strides = [1, 1]} : vector<8x256xf32> to vector<1x256xf32>
    %1384 = vector.broadcast %1382 : vector<4x1xf32> to vector<4x256xf32>
    %1385 = vector.broadcast %1383 : vector<1x256xf32> to vector<4x256xf32>
    %1386 = arith.mulf %1384, %1385 : vector<4x256xf32>
    %1387 = arith.addf %1380, %1386 : vector<4x256xf32>
    %c2_778 = arith.constant 2 : index
    %c0_779 = arith.constant 0 : index
    %c0_780 = arith.constant 0 : index
    %c0_781 = arith.constant 0 : index
    %1388 = vector.load %arg10[%c2_778, %c0_779, %c0_780, %c0_781] : memref<9x4x4x1xf32, #tpu.memory_space<vmem>>, vector<1x1x4x1xf32>
    %1389 = vector.shape_cast %1388 : vector<1x1x4x1xf32> to vector<4x1xf32>
    %1390 = vector.extract_strided_slice %1359 {offsets = [4, 0], sizes = [1, 256], strides = [1, 1]} : vector<8x256xf32> to vector<1x256xf32>
    %1391 = vector.broadcast %1389 : vector<4x1xf32> to vector<4x256xf32>
    %1392 = vector.broadcast %1390 : vector<1x256xf32> to vector<4x256xf32>
    %1393 = arith.mulf %1391, %1392 : vector<4x256xf32>
    %1394 = arith.addf %1354, %1393 : vector<4x256xf32>
    %c2_782 = arith.constant 2 : index
    %c1_783 = arith.constant 1 : index
    %c0_784 = arith.constant 0 : index
    %c0_785 = arith.constant 0 : index
    %1395 = vector.load %arg10[%c2_782, %c1_783, %c0_784, %c0_785] : memref<9x4x4x1xf32, #tpu.memory_space<vmem>>, vector<1x1x4x1xf32>
    %1396 = vector.shape_cast %1395 : vector<1x1x4x1xf32> to vector<4x1xf32>
    %1397 = vector.extract_strided_slice %1359 {offsets = [5, 0], sizes = [1, 256], strides = [1, 1]} : vector<8x256xf32> to vector<1x256xf32>
    %1398 = vector.broadcast %1396 : vector<4x1xf32> to vector<4x256xf32>
    %1399 = vector.broadcast %1397 : vector<1x256xf32> to vector<4x256xf32>
    %1400 = arith.mulf %1398, %1399 : vector<4x256xf32>
    %1401 = arith.addf %1394, %1400 : vector<4x256xf32>
    %c2_786 = arith.constant 2 : index
    %c2_787 = arith.constant 2 : index
    %c0_788 = arith.constant 0 : index
    %c0_789 = arith.constant 0 : index
    %1402 = vector.load %arg10[%c2_786, %c2_787, %c0_788, %c0_789] : memref<9x4x4x1xf32, #tpu.memory_space<vmem>>, vector<1x1x4x1xf32>
    %1403 = vector.shape_cast %1402 : vector<1x1x4x1xf32> to vector<4x1xf32>
    %1404 = vector.extract_strided_slice %1359 {offsets = [6, 0], sizes = [1, 256], strides = [1, 1]} : vector<8x256xf32> to vector<1x256xf32>
    %1405 = vector.broadcast %1403 : vector<4x1xf32> to vector<4x256xf32>
    %1406 = vector.broadcast %1404 : vector<1x256xf32> to vector<4x256xf32>
    %1407 = arith.mulf %1405, %1406 : vector<4x256xf32>
    %1408 = arith.addf %1401, %1407 : vector<4x256xf32>
    %c2_790 = arith.constant 2 : index
    %c3_791 = arith.constant 3 : index
    %c0_792 = arith.constant 0 : index
    %c0_793 = arith.constant 0 : index
    %1409 = vector.load %arg10[%c2_790, %c3_791, %c0_792, %c0_793] : memref<9x4x4x1xf32, #tpu.memory_space<vmem>>, vector<1x1x4x1xf32>
    %1410 = vector.shape_cast %1409 : vector<1x1x4x1xf32> to vector<4x1xf32>
    %1411 = vector.extract_strided_slice %1359 {offsets = [7, 0], sizes = [1, 256], strides = [1, 1]} : vector<8x256xf32> to vector<1x256xf32>
    %1412 = vector.broadcast %1410 : vector<4x1xf32> to vector<4x256xf32>
    %1413 = vector.broadcast %1411 : vector<1x256xf32> to vector<4x256xf32>
    %1414 = arith.mulf %1412, %1413 : vector<4x256xf32>
    %1415 = arith.addf %1408, %1414 : vector<4x256xf32>
    %c0_794 = arith.constant 0 : index
    %c16_795 = arith.constant 16 : index
    %1416 = vector.load %arg16[%c0_794, %c16_795] : memref<8x290xf32, #tpu.memory_space<vmem>>, vector<8x256xf32>
    %cst_796 = arith.constant 0.000000e+00 : f32
    %1417 = vector.shape_cast %18 : vector<1x256xi1> to vector<1x256xi1>
    %1418 = vector.broadcast %1417 : vector<1x256xi1> to vector<8x256xi1>
    %1419 = vector.broadcast %cst_796 : f32 to vector<8x256xf32>
    %1420 = arith.select %1418, %1416, %1419 : vector<8x256xi1>, vector<8x256xf32>
    %c3_797 = arith.constant 3 : index
    %c0_798 = arith.constant 0 : index
    %c0_799 = arith.constant 0 : index
    %c0_800 = arith.constant 0 : index
    %1421 = vector.load %arg10[%c3_797, %c0_798, %c0_799, %c0_800] : memref<9x4x4x1xf32, #tpu.memory_space<vmem>>, vector<1x1x4x1xf32>
    %1422 = vector.shape_cast %1421 : vector<1x1x4x1xf32> to vector<4x1xf32>
    %1423 = vector.extract_strided_slice %1420 {offsets = [0, 0], sizes = [1, 256], strides = [1, 1]} : vector<8x256xf32> to vector<1x256xf32>
    %1424 = vector.broadcast %1422 : vector<4x1xf32> to vector<4x256xf32>
    %1425 = vector.broadcast %1423 : vector<1x256xf32> to vector<4x256xf32>
    %1426 = arith.mulf %1424, %1425 : vector<4x256xf32>
    %1427 = arith.addf %1387, %1426 : vector<4x256xf32>
    %c3_801 = arith.constant 3 : index
    %c1_802 = arith.constant 1 : index
    %c0_803 = arith.constant 0 : index
    %c0_804 = arith.constant 0 : index
    %1428 = vector.load %arg10[%c3_801, %c1_802, %c0_803, %c0_804] : memref<9x4x4x1xf32, #tpu.memory_space<vmem>>, vector<1x1x4x1xf32>
    %1429 = vector.shape_cast %1428 : vector<1x1x4x1xf32> to vector<4x1xf32>
    %1430 = vector.extract_strided_slice %1420 {offsets = [1, 0], sizes = [1, 256], strides = [1, 1]} : vector<8x256xf32> to vector<1x256xf32>
    %1431 = vector.broadcast %1429 : vector<4x1xf32> to vector<4x256xf32>
    %1432 = vector.broadcast %1430 : vector<1x256xf32> to vector<4x256xf32>
    %1433 = arith.mulf %1431, %1432 : vector<4x256xf32>
    %1434 = arith.addf %1427, %1433 : vector<4x256xf32>
    %c3_805 = arith.constant 3 : index
    %c2_806 = arith.constant 2 : index
    %c0_807 = arith.constant 0 : index
    %c0_808 = arith.constant 0 : index
    %1435 = vector.load %arg10[%c3_805, %c2_806, %c0_807, %c0_808] : memref<9x4x4x1xf32, #tpu.memory_space<vmem>>, vector<1x1x4x1xf32>
    %1436 = vector.shape_cast %1435 : vector<1x1x4x1xf32> to vector<4x1xf32>
    %1437 = vector.extract_strided_slice %1420 {offsets = [2, 0], sizes = [1, 256], strides = [1, 1]} : vector<8x256xf32> to vector<1x256xf32>
    %1438 = vector.broadcast %1436 : vector<4x1xf32> to vector<4x256xf32>
    %1439 = vector.broadcast %1437 : vector<1x256xf32> to vector<4x256xf32>
    %1440 = arith.mulf %1438, %1439 : vector<4x256xf32>
    %1441 = arith.addf %1434, %1440 : vector<4x256xf32>
    %c3_809 = arith.constant 3 : index
    %c3_810 = arith.constant 3 : index
    %c0_811 = arith.constant 0 : index
    %c0_812 = arith.constant 0 : index
    %1442 = vector.load %arg10[%c3_809, %c3_810, %c0_811, %c0_812] : memref<9x4x4x1xf32, #tpu.memory_space<vmem>>, vector<1x1x4x1xf32>
    %1443 = vector.shape_cast %1442 : vector<1x1x4x1xf32> to vector<4x1xf32>
    %1444 = vector.extract_strided_slice %1420 {offsets = [3, 0], sizes = [1, 256], strides = [1, 1]} : vector<8x256xf32> to vector<1x256xf32>
    %1445 = vector.broadcast %1443 : vector<4x1xf32> to vector<4x256xf32>
    %1446 = vector.broadcast %1444 : vector<1x256xf32> to vector<4x256xf32>
    %1447 = arith.mulf %1445, %1446 : vector<4x256xf32>
    %1448 = arith.addf %1441, %1447 : vector<4x256xf32>
    %c3_813 = arith.constant 3 : index
    %c0_814 = arith.constant 0 : index
    %c0_815 = arith.constant 0 : index
    %c0_816 = arith.constant 0 : index
    %1449 = vector.load %arg10[%c3_813, %c0_814, %c0_815, %c0_816] : memref<9x4x4x1xf32, #tpu.memory_space<vmem>>, vector<1x1x4x1xf32>
    %1450 = vector.shape_cast %1449 : vector<1x1x4x1xf32> to vector<4x1xf32>
    %1451 = vector.extract_strided_slice %1420 {offsets = [4, 0], sizes = [1, 256], strides = [1, 1]} : vector<8x256xf32> to vector<1x256xf32>
    %1452 = vector.broadcast %1450 : vector<4x1xf32> to vector<4x256xf32>
    %1453 = vector.broadcast %1451 : vector<1x256xf32> to vector<4x256xf32>
    %1454 = arith.mulf %1452, %1453 : vector<4x256xf32>
    %1455 = arith.addf %1415, %1454 : vector<4x256xf32>
    %c3_817 = arith.constant 3 : index
    %c1_818 = arith.constant 1 : index
    %c0_819 = arith.constant 0 : index
    %c0_820 = arith.constant 0 : index
    %1456 = vector.load %arg10[%c3_817, %c1_818, %c0_819, %c0_820] : memref<9x4x4x1xf32, #tpu.memory_space<vmem>>, vector<1x1x4x1xf32>
    %1457 = vector.shape_cast %1456 : vector<1x1x4x1xf32> to vector<4x1xf32>
    %1458 = vector.extract_strided_slice %1420 {offsets = [5, 0], sizes = [1, 256], strides = [1, 1]} : vector<8x256xf32> to vector<1x256xf32>
    %1459 = vector.broadcast %1457 : vector<4x1xf32> to vector<4x256xf32>
    %1460 = vector.broadcast %1458 : vector<1x256xf32> to vector<4x256xf32>
    %1461 = arith.mulf %1459, %1460 : vector<4x256xf32>
    %1462 = arith.addf %1455, %1461 : vector<4x256xf32>
    %c3_821 = arith.constant 3 : index
    %c2_822 = arith.constant 2 : index
    %c0_823 = arith.constant 0 : index
    %c0_824 = arith.constant 0 : index
    %1463 = vector.load %arg10[%c3_821, %c2_822, %c0_823, %c0_824] : memref<9x4x4x1xf32, #tpu.memory_space<vmem>>, vector<1x1x4x1xf32>
    %1464 = vector.shape_cast %1463 : vector<1x1x4x1xf32> to vector<4x1xf32>
    %1465 = vector.extract_strided_slice %1420 {offsets = [6, 0], sizes = [1, 256], strides = [1, 1]} : vector<8x256xf32> to vector<1x256xf32>
    %1466 = vector.broadcast %1464 : vector<4x1xf32> to vector<4x256xf32>
    %1467 = vector.broadcast %1465 : vector<1x256xf32> to vector<4x256xf32>
    %1468 = arith.mulf %1466, %1467 : vector<4x256xf32>
    %1469 = arith.addf %1462, %1468 : vector<4x256xf32>
    %c3_825 = arith.constant 3 : index
    %c3_826 = arith.constant 3 : index
    %c0_827 = arith.constant 0 : index
    %c0_828 = arith.constant 0 : index
    %1470 = vector.load %arg10[%c3_825, %c3_826, %c0_827, %c0_828] : memref<9x4x4x1xf32, #tpu.memory_space<vmem>>, vector<1x1x4x1xf32>
    %1471 = vector.shape_cast %1470 : vector<1x1x4x1xf32> to vector<4x1xf32>
    %1472 = vector.extract_strided_slice %1420 {offsets = [7, 0], sizes = [1, 256], strides = [1, 1]} : vector<8x256xf32> to vector<1x256xf32>
    %1473 = vector.broadcast %1471 : vector<4x1xf32> to vector<4x256xf32>
    %1474 = vector.broadcast %1472 : vector<1x256xf32> to vector<4x256xf32>
    %1475 = arith.mulf %1473, %1474 : vector<4x256xf32>
    %1476 = arith.addf %1469, %1475 : vector<4x256xf32>
    %c0_829 = arith.constant 0 : index
    %c17_830 = arith.constant 17 : index
    %1477 = vector.load %arg16[%c0_829, %c17_830] : memref<8x290xf32, #tpu.memory_space<vmem>>, vector<8x256xf32>
    %c4_831 = arith.constant 4 : index
    %c0_832 = arith.constant 0 : index
    %c0_833 = arith.constant 0 : index
    %c0_834 = arith.constant 0 : index
    %1478 = vector.load %arg10[%c4_831, %c0_832, %c0_833, %c0_834] : memref<9x4x4x1xf32, #tpu.memory_space<vmem>>, vector<1x1x4x1xf32>
    %1479 = vector.shape_cast %1478 : vector<1x1x4x1xf32> to vector<4x1xf32>
    %1480 = vector.extract_strided_slice %1477 {offsets = [0, 0], sizes = [1, 256], strides = [1, 1]} : vector<8x256xf32> to vector<1x256xf32>
    %1481 = vector.broadcast %1479 : vector<4x1xf32> to vector<4x256xf32>
    %1482 = vector.broadcast %1480 : vector<1x256xf32> to vector<4x256xf32>
    %1483 = arith.mulf %1481, %1482 : vector<4x256xf32>
    %1484 = arith.addf %1448, %1483 : vector<4x256xf32>
    %c4_835 = arith.constant 4 : index
    %c1_836 = arith.constant 1 : index
    %c0_837 = arith.constant 0 : index
    %c0_838 = arith.constant 0 : index
    %1485 = vector.load %arg10[%c4_835, %c1_836, %c0_837, %c0_838] : memref<9x4x4x1xf32, #tpu.memory_space<vmem>>, vector<1x1x4x1xf32>
    %1486 = vector.shape_cast %1485 : vector<1x1x4x1xf32> to vector<4x1xf32>
    %1487 = vector.extract_strided_slice %1477 {offsets = [1, 0], sizes = [1, 256], strides = [1, 1]} : vector<8x256xf32> to vector<1x256xf32>
    %1488 = vector.broadcast %1486 : vector<4x1xf32> to vector<4x256xf32>
    %1489 = vector.broadcast %1487 : vector<1x256xf32> to vector<4x256xf32>
    %1490 = arith.mulf %1488, %1489 : vector<4x256xf32>
    %1491 = arith.addf %1484, %1490 : vector<4x256xf32>
    %c4_839 = arith.constant 4 : index
    %c2_840 = arith.constant 2 : index
    %c0_841 = arith.constant 0 : index
    %c0_842 = arith.constant 0 : index
    %1492 = vector.load %arg10[%c4_839, %c2_840, %c0_841, %c0_842] : memref<9x4x4x1xf32, #tpu.memory_space<vmem>>, vector<1x1x4x1xf32>
    %1493 = vector.shape_cast %1492 : vector<1x1x4x1xf32> to vector<4x1xf32>
    %1494 = vector.extract_strided_slice %1477 {offsets = [2, 0], sizes = [1, 256], strides = [1, 1]} : vector<8x256xf32> to vector<1x256xf32>
    %1495 = vector.broadcast %1493 : vector<4x1xf32> to vector<4x256xf32>
    %1496 = vector.broadcast %1494 : vector<1x256xf32> to vector<4x256xf32>
    %1497 = arith.mulf %1495, %1496 : vector<4x256xf32>
    %1498 = arith.addf %1491, %1497 : vector<4x256xf32>
    %c4_843 = arith.constant 4 : index
    %c3_844 = arith.constant 3 : index
    %c0_845 = arith.constant 0 : index
    %c0_846 = arith.constant 0 : index
    %1499 = vector.load %arg10[%c4_843, %c3_844, %c0_845, %c0_846] : memref<9x4x4x1xf32, #tpu.memory_space<vmem>>, vector<1x1x4x1xf32>
    %1500 = vector.shape_cast %1499 : vector<1x1x4x1xf32> to vector<4x1xf32>
    %1501 = vector.extract_strided_slice %1477 {offsets = [3, 0], sizes = [1, 256], strides = [1, 1]} : vector<8x256xf32> to vector<1x256xf32>
    %1502 = vector.broadcast %1500 : vector<4x1xf32> to vector<4x256xf32>
    %1503 = vector.broadcast %1501 : vector<1x256xf32> to vector<4x256xf32>
    %1504 = arith.mulf %1502, %1503 : vector<4x256xf32>
    %1505 = arith.addf %1498, %1504 : vector<4x256xf32>
    %c4_847 = arith.constant 4 : index
    %c0_848 = arith.constant 0 : index
    %c0_849 = arith.constant 0 : index
    %c0_850 = arith.constant 0 : index
    %1506 = vector.load %arg10[%c4_847, %c0_848, %c0_849, %c0_850] : memref<9x4x4x1xf32, #tpu.memory_space<vmem>>, vector<1x1x4x1xf32>
    %1507 = vector.shape_cast %1506 : vector<1x1x4x1xf32> to vector<4x1xf32>
    %1508 = vector.extract_strided_slice %1477 {offsets = [4, 0], sizes = [1, 256], strides = [1, 1]} : vector<8x256xf32> to vector<1x256xf32>
    %1509 = vector.broadcast %1507 : vector<4x1xf32> to vector<4x256xf32>
    %1510 = vector.broadcast %1508 : vector<1x256xf32> to vector<4x256xf32>
    %1511 = arith.mulf %1509, %1510 : vector<4x256xf32>
    %1512 = arith.addf %1476, %1511 : vector<4x256xf32>
    %c4_851 = arith.constant 4 : index
    %c1_852 = arith.constant 1 : index
    %c0_853 = arith.constant 0 : index
    %c0_854 = arith.constant 0 : index
    %1513 = vector.load %arg10[%c4_851, %c1_852, %c0_853, %c0_854] : memref<9x4x4x1xf32, #tpu.memory_space<vmem>>, vector<1x1x4x1xf32>
    %1514 = vector.shape_cast %1513 : vector<1x1x4x1xf32> to vector<4x1xf32>
    %1515 = vector.extract_strided_slice %1477 {offsets = [5, 0], sizes = [1, 256], strides = [1, 1]} : vector<8x256xf32> to vector<1x256xf32>
    %1516 = vector.broadcast %1514 : vector<4x1xf32> to vector<4x256xf32>
    %1517 = vector.broadcast %1515 : vector<1x256xf32> to vector<4x256xf32>
    %1518 = arith.mulf %1516, %1517 : vector<4x256xf32>
    %1519 = arith.addf %1512, %1518 : vector<4x256xf32>
    %c4_855 = arith.constant 4 : index
    %c2_856 = arith.constant 2 : index
    %c0_857 = arith.constant 0 : index
    %c0_858 = arith.constant 0 : index
    %1520 = vector.load %arg10[%c4_855, %c2_856, %c0_857, %c0_858] : memref<9x4x4x1xf32, #tpu.memory_space<vmem>>, vector<1x1x4x1xf32>
    %1521 = vector.shape_cast %1520 : vector<1x1x4x1xf32> to vector<4x1xf32>
    %1522 = vector.extract_strided_slice %1477 {offsets = [6, 0], sizes = [1, 256], strides = [1, 1]} : vector<8x256xf32> to vector<1x256xf32>
    %1523 = vector.broadcast %1521 : vector<4x1xf32> to vector<4x256xf32>
    %1524 = vector.broadcast %1522 : vector<1x256xf32> to vector<4x256xf32>
    %1525 = arith.mulf %1523, %1524 : vector<4x256xf32>
    %1526 = arith.addf %1519, %1525 : vector<4x256xf32>
    %c4_859 = arith.constant 4 : index
    %c3_860 = arith.constant 3 : index
    %c0_861 = arith.constant 0 : index
    %c0_862 = arith.constant 0 : index
    %1527 = vector.load %arg10[%c4_859, %c3_860, %c0_861, %c0_862] : memref<9x4x4x1xf32, #tpu.memory_space<vmem>>, vector<1x1x4x1xf32>
    %1528 = vector.shape_cast %1527 : vector<1x1x4x1xf32> to vector<4x1xf32>
    %1529 = vector.extract_strided_slice %1477 {offsets = [7, 0], sizes = [1, 256], strides = [1, 1]} : vector<8x256xf32> to vector<1x256xf32>
    %1530 = vector.broadcast %1528 : vector<4x1xf32> to vector<4x256xf32>
    %1531 = vector.broadcast %1529 : vector<1x256xf32> to vector<4x256xf32>
    %1532 = arith.mulf %1530, %1531 : vector<4x256xf32>
    %1533 = arith.addf %1526, %1532 : vector<4x256xf32>
    %c0_863 = arith.constant 0 : index
    %c18_864 = arith.constant 18 : index
    %1534 = vector.load %arg16[%c0_863, %c18_864] : memref<8x290xf32, #tpu.memory_space<vmem>>, vector<8x256xf32>
    %cst_865 = arith.constant 0.000000e+00 : f32
    %1535 = vector.shape_cast %20 : vector<1x256xi1> to vector<1x256xi1>
    %1536 = vector.broadcast %1535 : vector<1x256xi1> to vector<8x256xi1>
    %1537 = vector.broadcast %cst_865 : f32 to vector<8x256xf32>
    %1538 = arith.select %1536, %1534, %1537 : vector<8x256xi1>, vector<8x256xf32>
    %c5_866 = arith.constant 5 : index
    %c0_867 = arith.constant 0 : index
    %c0_868 = arith.constant 0 : index
    %c0_869 = arith.constant 0 : index
    %1539 = vector.load %arg10[%c5_866, %c0_867, %c0_868, %c0_869] : memref<9x4x4x1xf32, #tpu.memory_space<vmem>>, vector<1x1x4x1xf32>
    %1540 = vector.shape_cast %1539 : vector<1x1x4x1xf32> to vector<4x1xf32>
    %1541 = vector.extract_strided_slice %1538 {offsets = [0, 0], sizes = [1, 256], strides = [1, 1]} : vector<8x256xf32> to vector<1x256xf32>
    %1542 = vector.broadcast %1540 : vector<4x1xf32> to vector<4x256xf32>
    %1543 = vector.broadcast %1541 : vector<1x256xf32> to vector<4x256xf32>
    %1544 = arith.mulf %1542, %1543 : vector<4x256xf32>
    %1545 = arith.addf %1505, %1544 : vector<4x256xf32>
    %c5_870 = arith.constant 5 : index
    %c1_871 = arith.constant 1 : index
    %c0_872 = arith.constant 0 : index
    %c0_873 = arith.constant 0 : index
    %1546 = vector.load %arg10[%c5_870, %c1_871, %c0_872, %c0_873] : memref<9x4x4x1xf32, #tpu.memory_space<vmem>>, vector<1x1x4x1xf32>
    %1547 = vector.shape_cast %1546 : vector<1x1x4x1xf32> to vector<4x1xf32>
    %1548 = vector.extract_strided_slice %1538 {offsets = [1, 0], sizes = [1, 256], strides = [1, 1]} : vector<8x256xf32> to vector<1x256xf32>
    %1549 = vector.broadcast %1547 : vector<4x1xf32> to vector<4x256xf32>
    %1550 = vector.broadcast %1548 : vector<1x256xf32> to vector<4x256xf32>
    %1551 = arith.mulf %1549, %1550 : vector<4x256xf32>
    %1552 = arith.addf %1545, %1551 : vector<4x256xf32>
    %c5_874 = arith.constant 5 : index
    %c2_875 = arith.constant 2 : index
    %c0_876 = arith.constant 0 : index
    %c0_877 = arith.constant 0 : index
    %1553 = vector.load %arg10[%c5_874, %c2_875, %c0_876, %c0_877] : memref<9x4x4x1xf32, #tpu.memory_space<vmem>>, vector<1x1x4x1xf32>
    %1554 = vector.shape_cast %1553 : vector<1x1x4x1xf32> to vector<4x1xf32>
    %1555 = vector.extract_strided_slice %1538 {offsets = [2, 0], sizes = [1, 256], strides = [1, 1]} : vector<8x256xf32> to vector<1x256xf32>
    %1556 = vector.broadcast %1554 : vector<4x1xf32> to vector<4x256xf32>
    %1557 = vector.broadcast %1555 : vector<1x256xf32> to vector<4x256xf32>
    %1558 = arith.mulf %1556, %1557 : vector<4x256xf32>
    %1559 = arith.addf %1552, %1558 : vector<4x256xf32>
    %c5_878 = arith.constant 5 : index
    %c3_879 = arith.constant 3 : index
    %c0_880 = arith.constant 0 : index
    %c0_881 = arith.constant 0 : index
    %1560 = vector.load %arg10[%c5_878, %c3_879, %c0_880, %c0_881] : memref<9x4x4x1xf32, #tpu.memory_space<vmem>>, vector<1x1x4x1xf32>
    %1561 = vector.shape_cast %1560 : vector<1x1x4x1xf32> to vector<4x1xf32>
    %1562 = vector.extract_strided_slice %1538 {offsets = [3, 0], sizes = [1, 256], strides = [1, 1]} : vector<8x256xf32> to vector<1x256xf32>
    %1563 = vector.broadcast %1561 : vector<4x1xf32> to vector<4x256xf32>
    %1564 = vector.broadcast %1562 : vector<1x256xf32> to vector<4x256xf32>
    %1565 = arith.mulf %1563, %1564 : vector<4x256xf32>
    %1566 = arith.addf %1559, %1565 : vector<4x256xf32>
    %c5_882 = arith.constant 5 : index
    %c0_883 = arith.constant 0 : index
    %c0_884 = arith.constant 0 : index
    %c0_885 = arith.constant 0 : index
    %1567 = vector.load %arg10[%c5_882, %c0_883, %c0_884, %c0_885] : memref<9x4x4x1xf32, #tpu.memory_space<vmem>>, vector<1x1x4x1xf32>
    %1568 = vector.shape_cast %1567 : vector<1x1x4x1xf32> to vector<4x1xf32>
    %1569 = vector.extract_strided_slice %1538 {offsets = [4, 0], sizes = [1, 256], strides = [1, 1]} : vector<8x256xf32> to vector<1x256xf32>
    %1570 = vector.broadcast %1568 : vector<4x1xf32> to vector<4x256xf32>
    %1571 = vector.broadcast %1569 : vector<1x256xf32> to vector<4x256xf32>
    %1572 = arith.mulf %1570, %1571 : vector<4x256xf32>
    %1573 = arith.addf %1533, %1572 : vector<4x256xf32>
    %c5_886 = arith.constant 5 : index
    %c1_887 = arith.constant 1 : index
    %c0_888 = arith.constant 0 : index
    %c0_889 = arith.constant 0 : index
    %1574 = vector.load %arg10[%c5_886, %c1_887, %c0_888, %c0_889] : memref<9x4x4x1xf32, #tpu.memory_space<vmem>>, vector<1x1x4x1xf32>
    %1575 = vector.shape_cast %1574 : vector<1x1x4x1xf32> to vector<4x1xf32>
    %1576 = vector.extract_strided_slice %1538 {offsets = [5, 0], sizes = [1, 256], strides = [1, 1]} : vector<8x256xf32> to vector<1x256xf32>
    %1577 = vector.broadcast %1575 : vector<4x1xf32> to vector<4x256xf32>
    %1578 = vector.broadcast %1576 : vector<1x256xf32> to vector<4x256xf32>
    %1579 = arith.mulf %1577, %1578 : vector<4x256xf32>
    %1580 = arith.addf %1573, %1579 : vector<4x256xf32>
    %c5_890 = arith.constant 5 : index
    %c2_891 = arith.constant 2 : index
    %c0_892 = arith.constant 0 : index
    %c0_893 = arith.constant 0 : index
    %1581 = vector.load %arg10[%c5_890, %c2_891, %c0_892, %c0_893] : memref<9x4x4x1xf32, #tpu.memory_space<vmem>>, vector<1x1x4x1xf32>
    %1582 = vector.shape_cast %1581 : vector<1x1x4x1xf32> to vector<4x1xf32>
    %1583 = vector.extract_strided_slice %1538 {offsets = [6, 0], sizes = [1, 256], strides = [1, 1]} : vector<8x256xf32> to vector<1x256xf32>
    %1584 = vector.broadcast %1582 : vector<4x1xf32> to vector<4x256xf32>
    %1585 = vector.broadcast %1583 : vector<1x256xf32> to vector<4x256xf32>
    %1586 = arith.mulf %1584, %1585 : vector<4x256xf32>
    %1587 = arith.addf %1580, %1586 : vector<4x256xf32>
    %c5_894 = arith.constant 5 : index
    %c3_895 = arith.constant 3 : index
    %c0_896 = arith.constant 0 : index
    %c0_897 = arith.constant 0 : index
    %1588 = vector.load %arg10[%c5_894, %c3_895, %c0_896, %c0_897] : memref<9x4x4x1xf32, #tpu.memory_space<vmem>>, vector<1x1x4x1xf32>
    %1589 = vector.shape_cast %1588 : vector<1x1x4x1xf32> to vector<4x1xf32>
    %1590 = vector.extract_strided_slice %1538 {offsets = [7, 0], sizes = [1, 256], strides = [1, 1]} : vector<8x256xf32> to vector<1x256xf32>
    %1591 = vector.broadcast %1589 : vector<4x1xf32> to vector<4x256xf32>
    %1592 = vector.broadcast %1590 : vector<1x256xf32> to vector<4x256xf32>
    %1593 = arith.mulf %1591, %1592 : vector<4x256xf32>
    %1594 = arith.addf %1587, %1593 : vector<4x256xf32>
    %c0_898 = arith.constant 0 : index
    %c32_899 = arith.constant 32 : index
    %1595 = vector.load %arg16[%c0_898, %c32_899] : memref<8x290xf32, #tpu.memory_space<vmem>>, vector<8x256xf32>
    %cst_900 = arith.constant 0.000000e+00 : f32
    %1596 = vector.shape_cast %18 : vector<1x256xi1> to vector<1x256xi1>
    %1597 = vector.broadcast %1596 : vector<1x256xi1> to vector<8x256xi1>
    %1598 = vector.broadcast %cst_900 : f32 to vector<8x256xf32>
    %1599 = arith.select %1597, %1595, %1598 : vector<8x256xi1>, vector<8x256xf32>
    %c6_901 = arith.constant 6 : index
    %c0_902 = arith.constant 0 : index
    %c0_903 = arith.constant 0 : index
    %c0_904 = arith.constant 0 : index
    %1600 = vector.load %arg10[%c6_901, %c0_902, %c0_903, %c0_904] : memref<9x4x4x1xf32, #tpu.memory_space<vmem>>, vector<1x1x4x1xf32>
    %1601 = vector.shape_cast %1600 : vector<1x1x4x1xf32> to vector<4x1xf32>
    %1602 = vector.extract_strided_slice %1599 {offsets = [0, 0], sizes = [1, 256], strides = [1, 1]} : vector<8x256xf32> to vector<1x256xf32>
    %1603 = vector.broadcast %1601 : vector<4x1xf32> to vector<4x256xf32>
    %1604 = vector.broadcast %1602 : vector<1x256xf32> to vector<4x256xf32>
    %1605 = arith.mulf %1603, %1604 : vector<4x256xf32>
    %1606 = arith.addf %1566, %1605 : vector<4x256xf32>
    %c6_905 = arith.constant 6 : index
    %c1_906 = arith.constant 1 : index
    %c0_907 = arith.constant 0 : index
    %c0_908 = arith.constant 0 : index
    %1607 = vector.load %arg10[%c6_905, %c1_906, %c0_907, %c0_908] : memref<9x4x4x1xf32, #tpu.memory_space<vmem>>, vector<1x1x4x1xf32>
    %1608 = vector.shape_cast %1607 : vector<1x1x4x1xf32> to vector<4x1xf32>
    %1609 = vector.extract_strided_slice %1599 {offsets = [1, 0], sizes = [1, 256], strides = [1, 1]} : vector<8x256xf32> to vector<1x256xf32>
    %1610 = vector.broadcast %1608 : vector<4x1xf32> to vector<4x256xf32>
    %1611 = vector.broadcast %1609 : vector<1x256xf32> to vector<4x256xf32>
    %1612 = arith.mulf %1610, %1611 : vector<4x256xf32>
    %1613 = arith.addf %1606, %1612 : vector<4x256xf32>
    %c6_909 = arith.constant 6 : index
    %c2_910 = arith.constant 2 : index
    %c0_911 = arith.constant 0 : index
    %c0_912 = arith.constant 0 : index
    %1614 = vector.load %arg10[%c6_909, %c2_910, %c0_911, %c0_912] : memref<9x4x4x1xf32, #tpu.memory_space<vmem>>, vector<1x1x4x1xf32>
    %1615 = vector.shape_cast %1614 : vector<1x1x4x1xf32> to vector<4x1xf32>
    %1616 = vector.extract_strided_slice %1599 {offsets = [2, 0], sizes = [1, 256], strides = [1, 1]} : vector<8x256xf32> to vector<1x256xf32>
    %1617 = vector.broadcast %1615 : vector<4x1xf32> to vector<4x256xf32>
    %1618 = vector.broadcast %1616 : vector<1x256xf32> to vector<4x256xf32>
    %1619 = arith.mulf %1617, %1618 : vector<4x256xf32>
    %1620 = arith.addf %1613, %1619 : vector<4x256xf32>
    %c6_913 = arith.constant 6 : index
    %c3_914 = arith.constant 3 : index
    %c0_915 = arith.constant 0 : index
    %c0_916 = arith.constant 0 : index
    %1621 = vector.load %arg10[%c6_913, %c3_914, %c0_915, %c0_916] : memref<9x4x4x1xf32, #tpu.memory_space<vmem>>, vector<1x1x4x1xf32>
    %1622 = vector.shape_cast %1621 : vector<1x1x4x1xf32> to vector<4x1xf32>
    %1623 = vector.extract_strided_slice %1599 {offsets = [3, 0], sizes = [1, 256], strides = [1, 1]} : vector<8x256xf32> to vector<1x256xf32>
    %1624 = vector.broadcast %1622 : vector<4x1xf32> to vector<4x256xf32>
    %1625 = vector.broadcast %1623 : vector<1x256xf32> to vector<4x256xf32>
    %1626 = arith.mulf %1624, %1625 : vector<4x256xf32>
    %1627 = arith.addf %1620, %1626 : vector<4x256xf32>
    %c6_917 = arith.constant 6 : index
    %c0_918 = arith.constant 0 : index
    %c0_919 = arith.constant 0 : index
    %c0_920 = arith.constant 0 : index
    %1628 = vector.load %arg10[%c6_917, %c0_918, %c0_919, %c0_920] : memref<9x4x4x1xf32, #tpu.memory_space<vmem>>, vector<1x1x4x1xf32>
    %1629 = vector.shape_cast %1628 : vector<1x1x4x1xf32> to vector<4x1xf32>
    %1630 = vector.extract_strided_slice %1599 {offsets = [4, 0], sizes = [1, 256], strides = [1, 1]} : vector<8x256xf32> to vector<1x256xf32>
    %1631 = vector.broadcast %1629 : vector<4x1xf32> to vector<4x256xf32>
    %1632 = vector.broadcast %1630 : vector<1x256xf32> to vector<4x256xf32>
    %1633 = arith.mulf %1631, %1632 : vector<4x256xf32>
    %1634 = arith.addf %1594, %1633 : vector<4x256xf32>
    %c6_921 = arith.constant 6 : index
    %c1_922 = arith.constant 1 : index
    %c0_923 = arith.constant 0 : index
    %c0_924 = arith.constant 0 : index
    %1635 = vector.load %arg10[%c6_921, %c1_922, %c0_923, %c0_924] : memref<9x4x4x1xf32, #tpu.memory_space<vmem>>, vector<1x1x4x1xf32>
    %1636 = vector.shape_cast %1635 : vector<1x1x4x1xf32> to vector<4x1xf32>
    %1637 = vector.extract_strided_slice %1599 {offsets = [5, 0], sizes = [1, 256], strides = [1, 1]} : vector<8x256xf32> to vector<1x256xf32>
    %1638 = vector.broadcast %1636 : vector<4x1xf32> to vector<4x256xf32>
    %1639 = vector.broadcast %1637 : vector<1x256xf32> to vector<4x256xf32>
    %1640 = arith.mulf %1638, %1639 : vector<4x256xf32>
    %1641 = arith.addf %1634, %1640 : vector<4x256xf32>
    %c6_925 = arith.constant 6 : index
    %c2_926 = arith.constant 2 : index
    %c0_927 = arith.constant 0 : index
    %c0_928 = arith.constant 0 : index
    %1642 = vector.load %arg10[%c6_925, %c2_926, %c0_927, %c0_928] : memref<9x4x4x1xf32, #tpu.memory_space<vmem>>, vector<1x1x4x1xf32>
    %1643 = vector.shape_cast %1642 : vector<1x1x4x1xf32> to vector<4x1xf32>
    %1644 = vector.extract_strided_slice %1599 {offsets = [6, 0], sizes = [1, 256], strides = [1, 1]} : vector<8x256xf32> to vector<1x256xf32>
    %1645 = vector.broadcast %1643 : vector<4x1xf32> to vector<4x256xf32>
    %1646 = vector.broadcast %1644 : vector<1x256xf32> to vector<4x256xf32>
    %1647 = arith.mulf %1645, %1646 : vector<4x256xf32>
    %1648 = arith.addf %1641, %1647 : vector<4x256xf32>
    %c6_929 = arith.constant 6 : index
    %c3_930 = arith.constant 3 : index
    %c0_931 = arith.constant 0 : index
    %c0_932 = arith.constant 0 : index
    %1649 = vector.load %arg10[%c6_929, %c3_930, %c0_931, %c0_932] : memref<9x4x4x1xf32, #tpu.memory_space<vmem>>, vector<1x1x4x1xf32>
    %1650 = vector.shape_cast %1649 : vector<1x1x4x1xf32> to vector<4x1xf32>
    %1651 = vector.extract_strided_slice %1599 {offsets = [7, 0], sizes = [1, 256], strides = [1, 1]} : vector<8x256xf32> to vector<1x256xf32>
    %1652 = vector.broadcast %1650 : vector<4x1xf32> to vector<4x256xf32>
    %1653 = vector.broadcast %1651 : vector<1x256xf32> to vector<4x256xf32>
    %1654 = arith.mulf %1652, %1653 : vector<4x256xf32>
    %1655 = arith.addf %1648, %1654 : vector<4x256xf32>
    %c0_933 = arith.constant 0 : index
    %c33_934 = arith.constant 33 : index
    %1656 = vector.load %arg16[%c0_933, %c33_934] : memref<8x290xf32, #tpu.memory_space<vmem>>, vector<8x256xf32>
    %c7_935 = arith.constant 7 : index
    %c0_936 = arith.constant 0 : index
    %c0_937 = arith.constant 0 : index
    %c0_938 = arith.constant 0 : index
    %1657 = vector.load %arg10[%c7_935, %c0_936, %c0_937, %c0_938] : memref<9x4x4x1xf32, #tpu.memory_space<vmem>>, vector<1x1x4x1xf32>
    %1658 = vector.shape_cast %1657 : vector<1x1x4x1xf32> to vector<4x1xf32>
    %1659 = vector.extract_strided_slice %1656 {offsets = [0, 0], sizes = [1, 256], strides = [1, 1]} : vector<8x256xf32> to vector<1x256xf32>
    %1660 = vector.broadcast %1658 : vector<4x1xf32> to vector<4x256xf32>
    %1661 = vector.broadcast %1659 : vector<1x256xf32> to vector<4x256xf32>
    %1662 = arith.mulf %1660, %1661 : vector<4x256xf32>
    %1663 = arith.addf %1627, %1662 : vector<4x256xf32>
    %c7_939 = arith.constant 7 : index
    %c1_940 = arith.constant 1 : index
    %c0_941 = arith.constant 0 : index
    %c0_942 = arith.constant 0 : index
    %1664 = vector.load %arg10[%c7_939, %c1_940, %c0_941, %c0_942] : memref<9x4x4x1xf32, #tpu.memory_space<vmem>>, vector<1x1x4x1xf32>
    %1665 = vector.shape_cast %1664 : vector<1x1x4x1xf32> to vector<4x1xf32>
    %1666 = vector.extract_strided_slice %1656 {offsets = [1, 0], sizes = [1, 256], strides = [1, 1]} : vector<8x256xf32> to vector<1x256xf32>
    %1667 = vector.broadcast %1665 : vector<4x1xf32> to vector<4x256xf32>
    %1668 = vector.broadcast %1666 : vector<1x256xf32> to vector<4x256xf32>
    %1669 = arith.mulf %1667, %1668 : vector<4x256xf32>
    %1670 = arith.addf %1663, %1669 : vector<4x256xf32>
    %c7_943 = arith.constant 7 : index
    %c2_944 = arith.constant 2 : index
    %c0_945 = arith.constant 0 : index
    %c0_946 = arith.constant 0 : index
    %1671 = vector.load %arg10[%c7_943, %c2_944, %c0_945, %c0_946] : memref<9x4x4x1xf32, #tpu.memory_space<vmem>>, vector<1x1x4x1xf32>
    %1672 = vector.shape_cast %1671 : vector<1x1x4x1xf32> to vector<4x1xf32>
    %1673 = vector.extract_strided_slice %1656 {offsets = [2, 0], sizes = [1, 256], strides = [1, 1]} : vector<8x256xf32> to vector<1x256xf32>
    %1674 = vector.broadcast %1672 : vector<4x1xf32> to vector<4x256xf32>
    %1675 = vector.broadcast %1673 : vector<1x256xf32> to vector<4x256xf32>
    %1676 = arith.mulf %1674, %1675 : vector<4x256xf32>
    %1677 = arith.addf %1670, %1676 : vector<4x256xf32>
    %c7_947 = arith.constant 7 : index
    %c3_948 = arith.constant 3 : index
    %c0_949 = arith.constant 0 : index
    %c0_950 = arith.constant 0 : index
    %1678 = vector.load %arg10[%c7_947, %c3_948, %c0_949, %c0_950] : memref<9x4x4x1xf32, #tpu.memory_space<vmem>>, vector<1x1x4x1xf32>
    %1679 = vector.shape_cast %1678 : vector<1x1x4x1xf32> to vector<4x1xf32>
    %1680 = vector.extract_strided_slice %1656 {offsets = [3, 0], sizes = [1, 256], strides = [1, 1]} : vector<8x256xf32> to vector<1x256xf32>
    %1681 = vector.broadcast %1679 : vector<4x1xf32> to vector<4x256xf32>
    %1682 = vector.broadcast %1680 : vector<1x256xf32> to vector<4x256xf32>
    %1683 = arith.mulf %1681, %1682 : vector<4x256xf32>
    %1684 = arith.addf %1677, %1683 : vector<4x256xf32>
    %c7_951 = arith.constant 7 : index
    %c0_952 = arith.constant 0 : index
    %c0_953 = arith.constant 0 : index
    %c0_954 = arith.constant 0 : index
    %1685 = vector.load %arg10[%c7_951, %c0_952, %c0_953, %c0_954] : memref<9x4x4x1xf32, #tpu.memory_space<vmem>>, vector<1x1x4x1xf32>
    %1686 = vector.shape_cast %1685 : vector<1x1x4x1xf32> to vector<4x1xf32>
    %1687 = vector.extract_strided_slice %1656 {offsets = [4, 0], sizes = [1, 256], strides = [1, 1]} : vector<8x256xf32> to vector<1x256xf32>
    %1688 = vector.broadcast %1686 : vector<4x1xf32> to vector<4x256xf32>
    %1689 = vector.broadcast %1687 : vector<1x256xf32> to vector<4x256xf32>
    %1690 = arith.mulf %1688, %1689 : vector<4x256xf32>
    %1691 = arith.addf %1655, %1690 : vector<4x256xf32>
    %c7_955 = arith.constant 7 : index
    %c1_956 = arith.constant 1 : index
    %c0_957 = arith.constant 0 : index
    %c0_958 = arith.constant 0 : index
    %1692 = vector.load %arg10[%c7_955, %c1_956, %c0_957, %c0_958] : memref<9x4x4x1xf32, #tpu.memory_space<vmem>>, vector<1x1x4x1xf32>
    %1693 = vector.shape_cast %1692 : vector<1x1x4x1xf32> to vector<4x1xf32>
    %1694 = vector.extract_strided_slice %1656 {offsets = [5, 0], sizes = [1, 256], strides = [1, 1]} : vector<8x256xf32> to vector<1x256xf32>
    %1695 = vector.broadcast %1693 : vector<4x1xf32> to vector<4x256xf32>
    %1696 = vector.broadcast %1694 : vector<1x256xf32> to vector<4x256xf32>
    %1697 = arith.mulf %1695, %1696 : vector<4x256xf32>
    %1698 = arith.addf %1691, %1697 : vector<4x256xf32>
    %c7_959 = arith.constant 7 : index
    %c2_960 = arith.constant 2 : index
    %c0_961 = arith.constant 0 : index
    %c0_962 = arith.constant 0 : index
    %1699 = vector.load %arg10[%c7_959, %c2_960, %c0_961, %c0_962] : memref<9x4x4x1xf32, #tpu.memory_space<vmem>>, vector<1x1x4x1xf32>
    %1700 = vector.shape_cast %1699 : vector<1x1x4x1xf32> to vector<4x1xf32>
    %1701 = vector.extract_strided_slice %1656 {offsets = [6, 0], sizes = [1, 256], strides = [1, 1]} : vector<8x256xf32> to vector<1x256xf32>
    %1702 = vector.broadcast %1700 : vector<4x1xf32> to vector<4x256xf32>
    %1703 = vector.broadcast %1701 : vector<1x256xf32> to vector<4x256xf32>
    %1704 = arith.mulf %1702, %1703 : vector<4x256xf32>
    %1705 = arith.addf %1698, %1704 : vector<4x256xf32>
    %c7_963 = arith.constant 7 : index
    %c3_964 = arith.constant 3 : index
    %c0_965 = arith.constant 0 : index
    %c0_966 = arith.constant 0 : index
    %1706 = vector.load %arg10[%c7_963, %c3_964, %c0_965, %c0_966] : memref<9x4x4x1xf32, #tpu.memory_space<vmem>>, vector<1x1x4x1xf32>
    %1707 = vector.shape_cast %1706 : vector<1x1x4x1xf32> to vector<4x1xf32>
    %1708 = vector.extract_strided_slice %1656 {offsets = [7, 0], sizes = [1, 256], strides = [1, 1]} : vector<8x256xf32> to vector<1x256xf32>
    %1709 = vector.broadcast %1707 : vector<4x1xf32> to vector<4x256xf32>
    %1710 = vector.broadcast %1708 : vector<1x256xf32> to vector<4x256xf32>
    %1711 = arith.mulf %1709, %1710 : vector<4x256xf32>
    %1712 = arith.addf %1705, %1711 : vector<4x256xf32>
    %c0_967 = arith.constant 0 : index
    %c34_968 = arith.constant 34 : index
    %1713 = vector.load %arg16[%c0_967, %c34_968] : memref<8x290xf32, #tpu.memory_space<vmem>>, vector<8x256xf32>
    %cst_969 = arith.constant 0.000000e+00 : f32
    %1714 = vector.shape_cast %20 : vector<1x256xi1> to vector<1x256xi1>
    %1715 = vector.broadcast %1714 : vector<1x256xi1> to vector<8x256xi1>
    %1716 = vector.broadcast %cst_969 : f32 to vector<8x256xf32>
    %1717 = arith.select %1715, %1713, %1716 : vector<8x256xi1>, vector<8x256xf32>
    %c8_970 = arith.constant 8 : index
    %c0_971 = arith.constant 0 : index
    %c0_972 = arith.constant 0 : index
    %c0_973 = arith.constant 0 : index
    %1718 = vector.load %arg10[%c8_970, %c0_971, %c0_972, %c0_973] : memref<9x4x4x1xf32, #tpu.memory_space<vmem>>, vector<1x1x4x1xf32>
    %1719 = vector.shape_cast %1718 : vector<1x1x4x1xf32> to vector<4x1xf32>
    %1720 = vector.extract_strided_slice %1717 {offsets = [0, 0], sizes = [1, 256], strides = [1, 1]} : vector<8x256xf32> to vector<1x256xf32>
    %1721 = vector.broadcast %1719 : vector<4x1xf32> to vector<4x256xf32>
    %1722 = vector.broadcast %1720 : vector<1x256xf32> to vector<4x256xf32>
    %1723 = arith.mulf %1721, %1722 : vector<4x256xf32>
    %1724 = arith.addf %1684, %1723 : vector<4x256xf32>
    %c8_974 = arith.constant 8 : index
    %c1_975 = arith.constant 1 : index
    %c0_976 = arith.constant 0 : index
    %c0_977 = arith.constant 0 : index
    %1725 = vector.load %arg10[%c8_974, %c1_975, %c0_976, %c0_977] : memref<9x4x4x1xf32, #tpu.memory_space<vmem>>, vector<1x1x4x1xf32>
    %1726 = vector.shape_cast %1725 : vector<1x1x4x1xf32> to vector<4x1xf32>
    %1727 = vector.extract_strided_slice %1717 {offsets = [1, 0], sizes = [1, 256], strides = [1, 1]} : vector<8x256xf32> to vector<1x256xf32>
    %1728 = vector.broadcast %1726 : vector<4x1xf32> to vector<4x256xf32>
    %1729 = vector.broadcast %1727 : vector<1x256xf32> to vector<4x256xf32>
    %1730 = arith.mulf %1728, %1729 : vector<4x256xf32>
    %1731 = arith.addf %1724, %1730 : vector<4x256xf32>
    %c8_978 = arith.constant 8 : index
    %c2_979 = arith.constant 2 : index
    %c0_980 = arith.constant 0 : index
    %c0_981 = arith.constant 0 : index
    %1732 = vector.load %arg10[%c8_978, %c2_979, %c0_980, %c0_981] : memref<9x4x4x1xf32, #tpu.memory_space<vmem>>, vector<1x1x4x1xf32>
    %1733 = vector.shape_cast %1732 : vector<1x1x4x1xf32> to vector<4x1xf32>
    %1734 = vector.extract_strided_slice %1717 {offsets = [2, 0], sizes = [1, 256], strides = [1, 1]} : vector<8x256xf32> to vector<1x256xf32>
    %1735 = vector.broadcast %1733 : vector<4x1xf32> to vector<4x256xf32>
    %1736 = vector.broadcast %1734 : vector<1x256xf32> to vector<4x256xf32>
    %1737 = arith.mulf %1735, %1736 : vector<4x256xf32>
    %1738 = arith.addf %1731, %1737 : vector<4x256xf32>
    %c8_982 = arith.constant 8 : index
    %c3_983 = arith.constant 3 : index
    %c0_984 = arith.constant 0 : index
    %c0_985 = arith.constant 0 : index
    %1739 = vector.load %arg10[%c8_982, %c3_983, %c0_984, %c0_985] : memref<9x4x4x1xf32, #tpu.memory_space<vmem>>, vector<1x1x4x1xf32>
    %1740 = vector.shape_cast %1739 : vector<1x1x4x1xf32> to vector<4x1xf32>
    %1741 = vector.extract_strided_slice %1717 {offsets = [3, 0], sizes = [1, 256], strides = [1, 1]} : vector<8x256xf32> to vector<1x256xf32>
    %1742 = vector.broadcast %1740 : vector<4x1xf32> to vector<4x256xf32>
    %1743 = vector.broadcast %1741 : vector<1x256xf32> to vector<4x256xf32>
    %1744 = arith.mulf %1742, %1743 : vector<4x256xf32>
    %1745 = arith.addf %1738, %1744 : vector<4x256xf32>
    %c8_986 = arith.constant 8 : index
    %c0_987 = arith.constant 0 : index
    %c0_988 = arith.constant 0 : index
    %c0_989 = arith.constant 0 : index
    %1746 = vector.load %arg10[%c8_986, %c0_987, %c0_988, %c0_989] : memref<9x4x4x1xf32, #tpu.memory_space<vmem>>, vector<1x1x4x1xf32>
    %1747 = vector.shape_cast %1746 : vector<1x1x4x1xf32> to vector<4x1xf32>
    %1748 = vector.extract_strided_slice %1717 {offsets = [4, 0], sizes = [1, 256], strides = [1, 1]} : vector<8x256xf32> to vector<1x256xf32>
    %1749 = vector.broadcast %1747 : vector<4x1xf32> to vector<4x256xf32>
    %1750 = vector.broadcast %1748 : vector<1x256xf32> to vector<4x256xf32>
    %1751 = arith.mulf %1749, %1750 : vector<4x256xf32>
    %1752 = arith.addf %1712, %1751 : vector<4x256xf32>
    %c8_990 = arith.constant 8 : index
    %c1_991 = arith.constant 1 : index
    %c0_992 = arith.constant 0 : index
    %c0_993 = arith.constant 0 : index
    %1753 = vector.load %arg10[%c8_990, %c1_991, %c0_992, %c0_993] : memref<9x4x4x1xf32, #tpu.memory_space<vmem>>, vector<1x1x4x1xf32>
    %1754 = vector.shape_cast %1753 : vector<1x1x4x1xf32> to vector<4x1xf32>
    %1755 = vector.extract_strided_slice %1717 {offsets = [5, 0], sizes = [1, 256], strides = [1, 1]} : vector<8x256xf32> to vector<1x256xf32>
    %1756 = vector.broadcast %1754 : vector<4x1xf32> to vector<4x256xf32>
    %1757 = vector.broadcast %1755 : vector<1x256xf32> to vector<4x256xf32>
    %1758 = arith.mulf %1756, %1757 : vector<4x256xf32>
    %1759 = arith.addf %1752, %1758 : vector<4x256xf32>
    %c8_994 = arith.constant 8 : index
    %c2_995 = arith.constant 2 : index
    %c0_996 = arith.constant 0 : index
    %c0_997 = arith.constant 0 : index
    %1760 = vector.load %arg10[%c8_994, %c2_995, %c0_996, %c0_997] : memref<9x4x4x1xf32, #tpu.memory_space<vmem>>, vector<1x1x4x1xf32>
    %1761 = vector.shape_cast %1760 : vector<1x1x4x1xf32> to vector<4x1xf32>
    %1762 = vector.extract_strided_slice %1717 {offsets = [6, 0], sizes = [1, 256], strides = [1, 1]} : vector<8x256xf32> to vector<1x256xf32>
    %1763 = vector.broadcast %1761 : vector<4x1xf32> to vector<4x256xf32>
    %1764 = vector.broadcast %1762 : vector<1x256xf32> to vector<4x256xf32>
    %1765 = arith.mulf %1763, %1764 : vector<4x256xf32>
    %1766 = arith.addf %1759, %1765 : vector<4x256xf32>
    %c8_998 = arith.constant 8 : index
    %c3_999 = arith.constant 3 : index
    %c0_1000 = arith.constant 0 : index
    %c0_1001 = arith.constant 0 : index
    %1767 = vector.load %arg10[%c8_998, %c3_999, %c0_1000, %c0_1001] : memref<9x4x4x1xf32, #tpu.memory_space<vmem>>, vector<1x1x4x1xf32>
    %1768 = vector.shape_cast %1767 : vector<1x1x4x1xf32> to vector<4x1xf32>
    %1769 = vector.extract_strided_slice %1717 {offsets = [7, 0], sizes = [1, 256], strides = [1, 1]} : vector<8x256xf32> to vector<1x256xf32>
    %1770 = vector.broadcast %1768 : vector<4x1xf32> to vector<4x256xf32>
    %1771 = vector.broadcast %1769 : vector<1x256xf32> to vector<4x256xf32>
    %1772 = arith.mulf %1770, %1771 : vector<4x256xf32>
    %1773 = arith.addf %1766, %1772 : vector<4x256xf32>
    %cst_1002 = arith.constant dense<0.000000e+00> : vector<4xf32>
    %1774 = vector.multi_reduction <add>, %1745, %cst_1002 [1] : vector<4x256xf32> to vector<4xf32>
    %1775 = vector.shape_cast %1774 : vector<4xf32> to vector<4x1xf32>
    %cst_1003 = arith.constant 0.000000e+00 : f32
    %1776 = vector.broadcast %cst_1003 : f32 to vector<4x1xf32>
    %1777 = arith.addf %1776, %1775 : vector<4x1xf32>
    %cst_1004 = arith.constant dense<0.000000e+00> : vector<4xf32>
    %1778 = vector.multi_reduction <add>, %1773, %cst_1004 [1] : vector<4x256xf32> to vector<4xf32>
    %1779 = vector.shape_cast %1778 : vector<4xf32> to vector<4x1xf32>
    %1780 = arith.addf %1777, %1779 : vector<4x1xf32>
    %cst_1005 = arith.constant 5.120000e+02 : f32
    %1781 = vector.broadcast %cst_1005 : f32 to vector<4x1xf32>
    %1782 = arith.divf %1780, %1781 : vector<4x1xf32>
    %1783 = arith.mulf %1745, %1745 : vector<4x256xf32>
    %cst_1006 = arith.constant dense<0.000000e+00> : vector<4xf32>
    %1784 = vector.multi_reduction <add>, %1783, %cst_1006 [1] : vector<4x256xf32> to vector<4xf32>
    %1785 = vector.shape_cast %1784 : vector<4xf32> to vector<4x1xf32>
    %cst_1007 = arith.constant 0.000000e+00 : f32
    %1786 = vector.broadcast %cst_1007 : f32 to vector<4x1xf32>
    %1787 = arith.addf %1786, %1785 : vector<4x1xf32>
    %1788 = arith.mulf %1773, %1773 : vector<4x256xf32>
    %cst_1008 = arith.constant dense<0.000000e+00> : vector<4xf32>
    %1789 = vector.multi_reduction <add>, %1788, %cst_1008 [1] : vector<4x256xf32> to vector<4xf32>
    %1790 = vector.shape_cast %1789 : vector<4xf32> to vector<4x1xf32>
    %1791 = arith.addf %1787, %1790 : vector<4x1xf32>
    %cst_1009 = arith.constant 5.120000e+02 : f32
    %1792 = vector.broadcast %cst_1009 : f32 to vector<4x1xf32>
    %1793 = arith.divf %1791, %1792 : vector<4x1xf32>
    %c0_1010 = arith.constant 0 : index
    %c0_1011 = arith.constant 0 : index
    %1794 = vector.load %arg12[%c0_1010, %c0_1011] : memref<4x1xf32, #tpu.memory_space<vmem>>, vector<4x1xf32>
    %1795 = arith.mulf %1782, %1782 : vector<4x1xf32>
    %1796 = arith.subf %1793, %1795 : vector<4x1xf32>
    %cst_1012 = arith.constant 9.99999974E-6 : f32
    %1797 = vector.broadcast %cst_1012 : f32 to vector<4x1xf32>
    %1798 = arith.addf %1796, %1797 : vector<4x1xf32>
    %1799 = math.rsqrt %1798 : vector<4x1xf32>
    %1800 = arith.mulf %1794, %1799 : vector<4x1xf32>
    %c0_1013 = arith.constant 0 : index
    %c0_1014 = arith.constant 0 : index
    %1801 = vector.load %arg13[%c0_1013, %c0_1014] : memref<4x1xf32, #tpu.memory_space<vmem>>, vector<4x1xf32>
    %1802 = arith.mulf %1782, %1800 : vector<4x1xf32>
    %1803 = arith.subf %1801, %1802 : vector<4x1xf32>
    %1804 = vector.broadcast %1800 : vector<4x1xf32> to vector<4x256xf32>
    %1805 = arith.mulf %1745, %1804 : vector<4x256xf32>
    %1806 = vector.broadcast %1803 : vector<4x1xf32> to vector<4x256xf32>
    %1807 = arith.addf %1805, %1806 : vector<4x256xf32>
    %cst_1015 = arith.constant 0.000000e+00 : f32
    %1808 = vector.broadcast %cst_1015 : f32 to vector<4x256xf32>
    %1809 = arith.maximumf %1807, %1808 : vector<4x256xf32>
    %c0_1016 = arith.constant 0 : index
    %c0_1017 = arith.constant 0 : index
    %c0_1018 = arith.constant 0 : index
    %1810 = vector.load %arg14[%c0_1016, %c0_1017, %c0_1018] : memref<2x4x256xf32, #tpu.memory_space<vmem>>, vector<1x4x256xf32>
    %1811 = vector.shape_cast %1810 : vector<1x4x256xf32> to vector<4x256xf32>
    %1812 = vector.shape_cast %1809 : vector<4x256xf32> to vector<1x4x256xf32>
    tpu.vector_store %arg14[%c0_1016, %c0_1017, %c0_1018], %1812 {strides = array<i32>} : memref<2x4x256xf32, #tpu.memory_space<vmem>>, vector<1x4x256xf32>,
    %1813 = vector.broadcast %1800 : vector<4x1xf32> to vector<4x256xf32>
    %1814 = arith.mulf %1773, %1813 : vector<4x256xf32>
    %1815 = vector.broadcast %1803 : vector<4x1xf32> to vector<4x256xf32>
    %1816 = arith.addf %1814, %1815 : vector<4x256xf32>
    %cst_1019 = arith.constant 0.000000e+00 : f32
    %1817 = vector.broadcast %cst_1019 : f32 to vector<4x256xf32>
    %1818 = arith.maximumf %1816, %1817 : vector<4x256xf32>
    %c1_1020 = arith.constant 1 : index
    %c0_1021 = arith.constant 0 : index
    %c0_1022 = arith.constant 0 : index
    %1819 = vector.load %arg14[%c1_1020, %c0_1021, %c0_1022] : memref<2x4x256xf32, #tpu.memory_space<vmem>>, vector<1x4x256xf32>
    %1820 = vector.shape_cast %1819 : vector<1x4x256xf32> to vector<4x256xf32>
    %1821 = vector.shape_cast %1818 : vector<4x256xf32> to vector<1x4x256xf32>
    tpu.vector_store %arg14[%c1_1020, %c0_1021, %c0_1022], %1821 {strides = array<i32>} : memref<2x4x256xf32, #tpu.memory_space<vmem>>, vector<1x4x256xf32>,
    return
  }
  func.func @transform_0(%arg0: i32) -> (i32, i32) {
    %c0_i32 = arith.constant 0 : i32
    %c0_i32_0 = arith.constant 0 : i32
    %c0_i32_1 = arith.constant 0 : i32
    return %c0_i32, %c0_i32_0 : i32, i32
  }
  func.func @transform_1(%arg0: i32) -> (i32, i32, i32) {
    %c0_i32 = arith.constant 0 : i32
    %c0_i32_0 = arith.constant 0 : i32
    %c0_i32_1 = arith.constant 0 : i32
    %c0_i32_2 = arith.constant 0 : i32
    return %c0_i32, %c0_i32_0, %c0_i32_1 : i32, i32, i32
  }
  func.func @transform_2(%arg0: i32) -> (i32, i32) {
    %c0_i32 = arith.constant 0 : i32
    %c0_i32_0 = arith.constant 0 : i32
    %c0_i32_1 = arith.constant 0 : i32
    return %c0_i32, %c0_i32_0 : i32, i32
  }
  func.func @transform_3(%arg0: i32) -> (i32, i32, i32) {
    %c0_i32 = arith.constant 0 : i32
    %c0_i32_0 = arith.constant 0 : i32
    %c0_i32_1 = arith.constant 0 : i32
    %c0_i32_2 = arith.constant 0 : i32
    return %c0_i32, %c0_i32_0, %c0_i32_1 : i32, i32, i32
  }
  func.func @transform_4(%arg0: i32) -> (i32, i32) {
    %c0_i32 = arith.constant 0 : i32
    %c0_i32_0 = arith.constant 0 : i32
    %c0_i32_1 = arith.constant 0 : i32
    return %c0_i32, %c0_i32_0 : i32, i32
  }
  func.func @transform_5(%arg0: i32) -> (i32, i32, i32, i32) {
    %c0_i32 = arith.constant 0 : i32
    %c0_i32_0 = arith.constant 0 : i32
    %c0_i32_1 = arith.constant 0 : i32
    %c0_i32_2 = arith.constant 0 : i32
    %c0_i32_3 = arith.constant 0 : i32
    return %c0_i32, %c0_i32_0, %c0_i32_1, %c0_i32_2 : i32, i32, i32, i32
  }
  func.func @transform_6(%arg0: i32) -> (i32, i32) {
    %c0_i32 = arith.constant 0 : i32
    %c0_i32_0 = arith.constant 0 : i32
    %c0_i32_1 = arith.constant 0 : i32
    return %c0_i32, %c0_i32_0 : i32, i32
  }
  func.func @transform_7(%arg0: i32) -> (i32, i32) {
    %c0_i32 = arith.constant 0 : i32
    %c0_i32_0 = arith.constant 0 : i32
    %c0_i32_1 = arith.constant 0 : i32
    return %c0_i32, %c0_i32_0 : i32, i32
  }
  func.func @transform_8(%arg0: i32) -> (i32, i32) {
    %c0_i32 = arith.constant 0 : i32
    %c0_i32_0 = arith.constant 0 : i32
    %c0_i32_1 = arith.constant 0 : i32
    return %c0_i32, %c0_i32_0 : i32, i32
  }
  func.func @transform_9(%arg0: i32) -> (i32, i32, i32, i32) {
    %c0_i32 = arith.constant 0 : i32
    %c0_i32_0 = arith.constant 0 : i32
    %c0_i32_1 = arith.constant 0 : i32
    %c0_i32_2 = arith.constant 0 : i32
    %c0_i32_3 = arith.constant 0 : i32
    return %c0_i32, %c0_i32_0, %c0_i32_1, %c0_i32_2 : i32, i32, i32, i32
  }
  func.func @transform_10(%arg0: i32) -> (i32, i32) {
    %c0_i32 = arith.constant 0 : i32
    %c0_i32_0 = arith.constant 0 : i32
    %c0_i32_1 = arith.constant 0 : i32
    return %c0_i32, %c0_i32_0 : i32, i32
  }
  func.func @transform_11(%arg0: i32) -> (i32, i32) {
    %c0_i32 = arith.constant 0 : i32
    %c0_i32_0 = arith.constant 0 : i32
    %c0_i32_1 = arith.constant 0 : i32
    return %c0_i32, %c0_i32_0 : i32, i32
  }
  func.func @transform_12(%arg0: i32) -> (i32, i32) {
    %c0_i32 = arith.constant 0 : i32
    %c0_i32_0 = arith.constant 0 : i32
    %c0_i32_1 = arith.constant 0 : i32
    return %c0_i32, %c0_i32_0 : i32, i32
  }
  func.func @transform_13(%arg0: i32) -> (i32, i32, i32) {
    %c0_i32 = arith.constant 0 : i32
    %c0_i32_0 = arith.constant 0 : i32
    %c0_i32_1 = arith.constant 0 : i32
    %c0_i32_2 = arith.constant 0 : i32
    return %c0_i32, %c0_i32_0, %c0_i32_1 : i32, i32, i32
  }
}

</mosaic_0001>

<llo_original>
// kernel: tpu_custom_call.1
$region0: #{tpu_custom_call.1}
  #allocation0 [shape = 'u32[]', space=smem, size = 0x4, offset = 0x4, fixed_abs, tag = 'smem constant byte address 0x4 - core index']
  #allocation1 [shape = 'u32[144,128]{1,0:T(1,128)}', space=vmem, size = 0x12000, scoped, tag = 'internal scratch']
  #allocation2 [shape = 'f32[16,290]{1,0:T(8,128)}', space=vmem, size = 0x6000, scoped, tag = 'scratch operand']
  #allocation3 [shape = 'f32[8,290]{1,0:T(8,128)}', space=vmem, size = 0x3000, scoped, tag = 'scratch operand']
  %s0 = inlined_call_operand.vmem [shape: f32[16,64], index: 0, kind: input, shape index: {}]
  %s1 = inlined_call_operand.vmem [shape: f32[2,4,256], index: 1, kind: input, shape index: {}]
  %s2 = inlined_call_operand.vmem [shape: f32[64,256], index: 2, kind: input, shape index: {}]
  %s3 = inlined_call_operand.vmem [shape: f32[8,4,256], index: 3, kind: input, shape index: {}]
  %s4 = inlined_call_operand.vmem [shape: f32[4,256], index: 4, kind: input, shape index: {}]
  %s5 = inlined_call_operand.vmem [shape: f32[9,8,4,1], index: 5, kind: input, shape index: {}]
  %s6 = inlined_call_operand.vmem [shape: f32[4,1], index: 6, kind: input, shape index: {}]
  %s7 = inlined_call_operand.vmem [shape: f32[4,1], index: 7, kind: input, shape index: {}]
  %s8 = inlined_call_operand.vmem [shape: f32[4,1], index: 8, kind: input, shape index: {}]
  %s9 = inlined_call_operand.vmem [shape: f32[9,4,4,1], index: 9, kind: input, shape index: {}]
  %s10 = inlined_call_operand.vmem [shape: f32[4,1], index: 10, kind: input, shape index: {}]
  %s11 = inlined_call_operand.vmem [shape: f32[4,1], index: 11, kind: input, shape index: {}]
  %s12 = inlined_call_operand.vmem [shape: f32[4,1], index: 12, kind: input, shape index: {}]
  %s13 = inlined_call_operand.hbm [shape: f32[2,4,256], index: 13, kind: output, shape index: {}]
  %s14 = sld [smem:[#allocation0]]
  $region62: #{tpu_custom_call.1} parent=0
    _
  %s16 = ssub.s32 1, %s14
  %s17 = scalar_select 0, %s16, %s14
  $region1: #{tpu_custom_call.1} parent=0
    #allocation4 [shape = 'u8[8192]{0}', space=vmem, size = 0x2000, scoped, tag = 'output window, operand 0, single buffered']
    #allocation5 [shape = 's32[1]{0}', space=sflag, size = 0x4, scoped, tag = 'scoped memory for tpu_custom_call.1']
    %18 = vsyncpa [#allocation5], 0
    // Predicated region
    $region2: #{tpu_custom_call.1} parent=1 // pred_check
      _
    $region3: #{tpu_custom_call.1} parent=1 // pred_check_branch
      %20 = sbr.rel (0) target = $region5
    $region4: #{tpu_custom_call.1} parent=1 // pred_region
      _
    $region5: #{tpu_custom_call.1} parent=1 // pred_fallthru
      _
    // Predicated region
    $region6: #{tpu_custom_call.1} parent=1 // pred_check
      _
    $region7: #{tpu_custom_call.1} parent=1 // pred_check_branch
      %22 = sbr.rel (0) target = $region9
    $region8: #{tpu_custom_call.1} parent=1 // pred_region
      _
    $region9: #{tpu_custom_call.1} parent=1 // pred_fallthru
      _
    // Predicated region
    $region10: #{tpu_custom_call.1} parent=1 // pred_check
      _
    $region11: #{tpu_custom_call.1} parent=1 // pred_check_branch
      %24 = sbr.rel (0) target = $region13
    $region12: #{tpu_custom_call.1} parent=1 // pred_region
      _
    $region13: #{tpu_custom_call.1} parent=1 // pred_fallthru
      _
    // Predicated region
    $region14: #{tpu_custom_call.1} parent=1 // pred_check
      _
    $region15: #{tpu_custom_call.1} parent=1 // pred_check_branch
      %26 = sbr.rel (0) target = $region17
    $region16: #{tpu_custom_call.1} parent=1 // pred_region
      _
    $region17: #{tpu_custom_call.1} parent=1 // pred_fallthru
      _
    // Predicated region
    $region18: #{tpu_custom_call.1} parent=1 // pred_check
      _
    $region19: #{tpu_custom_call.1} parent=1 // pred_check_branch
      %28 = sbr.rel (0) target = $region21
    $region20: #{tpu_custom_call.1} parent=1 // pred_region
      _
    $region21: #{tpu_custom_call.1} parent=1 // pred_fallthru
      _
    // Predicated region
    $region22: #{tpu_custom_call.1} parent=1 // pred_check
      _
    $region23: #{tpu_custom_call.1} parent=1 // pred_check_branch
      %30 = sbr.rel (0) target = $region25
    $region24: #{tpu_custom_call.1} parent=1 // pred_region
      _
    $region25: #{tpu_custom_call.1} parent=1 // pred_fallthru
      _
    // Predicated region
    $region26: #{tpu_custom_call.1} parent=1 // pred_check
      _
    $region27: #{tpu_custom_call.1} parent=1 // pred_check_branch
      %32 = sbr.rel (0) target = $region29
    $region28: #{tpu_custom_call.1} parent=1 // pred_region
      _
    $region29: #{tpu_custom_call.1} parent=1 // pred_fallthru
      _
    // Predicated region
    $region30: #{tpu_custom_call.1} parent=1 // pred_check
      _
    $region31: #{tpu_custom_call.1} parent=1 // pred_check_branch
      %34 = sbr.rel (0) target = $region33
    $region32: #{tpu_custom_call.1} parent=1 // pred_region
      _
    $region33: #{tpu_custom_call.1} parent=1 // pred_fallthru
      _
    // Predicated region
    $region34: #{tpu_custom_call.1} parent=1 // pred_check
      _
    $region35: #{tpu_custom_call.1} parent=1 // pred_check_branch
      %36 = sbr.rel (0) target = $region37
    $region36: #{tpu_custom_call.1} parent=1 // pred_region
      _
    $region37: #{tpu_custom_call.1} parent=1 // pred_fallthru
      _
    // Predicated region
    $region38: #{tpu_custom_call.1} parent=1 // pred_check
      _
    $region39: #{tpu_custom_call.1} parent=1 // pred_check_branch
      %38 = sbr.rel (0) target = $region41
    $region40: #{tpu_custom_call.1} parent=1 // pred_region
      _
    $region41: #{tpu_custom_call.1} parent=1 // pred_fallthru
      _
    // Predicated region
    $region42: #{tpu_custom_call.1} parent=1 // pred_check
      _
    $region43: #{tpu_custom_call.1} parent=1 // pred_check_branch
      %40 = sbr.rel (0) target = $region45
    $region44: #{tpu_custom_call.1} parent=1 // pred_region
      _
    $region45: #{tpu_custom_call.1} parent=1 // pred_fallthru
      _
    // Predicated region
    $region46: #{tpu_custom_call.1} parent=1 // pred_check
      _
    $region47: #{tpu_custom_call.1} parent=1 // pred_check_branch
      %42 = sbr.rel (0) target = $region49
    $region48: #{tpu_custom_call.1} parent=1 // pred_region
      _
    $region49: #{tpu_custom_call.1} parent=1 // pred_fallthru
      _
    // Predicated region
    $region50: #{tpu_custom_call.1} parent=1 // pred_check
      _
    $region51: #{tpu_custom_call.1} parent=1 // pred_check_branch
      %44 = sbr.rel (0) target = $region53
    $region52: #{tpu_custom_call.1} parent=1 // pred_region
      _
    $region53: #{tpu_custom_call.1} parent=1 // pred_fallthru
      _
    %v45 = vlaneseq
    %v46 = vand.u32 %v45, 127
    %v47 = vadd.s32 %v46, 128
    %vm48 = vcmp.lt.s32.totalorder %v46, 0
    %v49 = vsub.s32 0, %v46
    %v50 = vsel %vm48, %v49, %v46
    %v51 = vshrl.u32 %v50, 4
    %v52 = vand.u32 %v50, 15
    %v53 = vsub.s32 0, %v52
    %v54 = vsel %vm48, %v53, %v52
    %vm55 = vcmp.lt.s32.totalorder %v47, 0
    %v56 = vsub.s32 0, %v47
    %v57 = vsel %vm55, %v56, %v47
    %v58 = vshrl.u32 %v57, 4
    %v59 = vand.u32 %v57, 15
    %v60 = vsub.s32 0, %v59
    %v61 = vsel %vm55, %v60, %v59
    %vm62 = vcmp.ne.s32.totalorder %v54, 0
    %vm63 = vcmp.ne.s32.totalorder %v61, 0
    %vm64 = vcmp.lt.s32.totalorder %v54, 0
    %vm65 = vcmp.lt.s32.totalorder %v61, 0
    %vm66 = vmand %vm64, %vm62
    %vm67 = vmand %vm65, %vm63
    %v68 = vadd.s32 %v54, 16
    %v69 = vadd.s32 %v61, 16
    %v70 = vsel %vm66, %v68, %v54
    %v71 = vsel %vm67, %v69, %v61
    %vm72 = vcmp.ge.s32.totalorder %v70, 1
    %vm73 = vcmp.ge.s32.totalorder %v71, 1
    %vm74 = vcmp.lt.s32.totalorder %v70, 15
    %vm75 = vcmp.lt.s32.totalorder %v71, 15
    %76 = vst [vmem:[#allocation2] sm:$0xff] 0.0
    %77 = vst [vmem:[#allocation2 + $0x8] sm:$0xff] 0.0
    %vm78 = vcmask 277504
    %79 = vst.msk [vmem:[#allocation2 + $0x10] sm:$0xff] %vm78, 0.0
    %80 = vst [vmem:[#allocation2 + $0x18] sm:$0xff] 0.0
    %81 = vst [vmem:[#allocation2 + $0x20] sm:$0xff] 0.0
    %82 = vst.msk [vmem:[#allocation2 + $0x28] sm:$0xff] %vm78, 0.0
    %83 = vst [vmem:[#allocation3] sm:$0xff] 0.0
    %84 = vst [vmem:[#allocation3 + $0x8] sm:$0xff] 0.0
    %85 = vst.msk [vmem:[#allocation3 + $0x10] sm:$0xff] %vm78, 0.0
    %v86 = vld [vmem:[%s0] sm:$0xff]
    %v87 = vld [vmem:[%s0 + $0x8] sm:$0xff]
    %v88 = vpack.c.bf16 %v87, %v86
    %v89 = vunpack.c.l.bf16 %v88
    %v90 = vunpack.c.h.bf16 %v88
    %v91 = vsub.f32 %v86, %v89
    %v92 = vsub.f32 %v87, %v90
    %v93 = vld [vmem:[%s2] sm:$0xff]
    %v94 = vld [vmem:[%s2 + $0x8] sm:$0xff]
    %v95 = vld [vmem:[%s2 + $0x10] sm:$0xff]
    %v96 = vld [vmem:[%s2 + $0x18] sm:$0xff]
    %v97 = vld [vmem:[%s2 + $0x20] sm:$0xff]
    %v98 = vld [vmem:[%s2 + $0x28] sm:$0xff]
    %v99 = vld [vmem:[%s2 + $0x30] sm:$0xff]
    %v100 = vld [vmem:[%s2 + $0x38] sm:$0xff]
    %v101 = vld [vmem:[%s2 + $0x40] sm:$0xff]
    %v102 = vld [vmem:[%s2 + $0x48] sm:$0xff]
    %v103 = vld [vmem:[%s2 + $0x50] sm:$0xff]
    %v104 = vld [vmem:[%s2 + $0x58] sm:$0xff]
    %v105 = vld [vmem:[%s2 + $0x60] sm:$0xff]
    %v106 = vld [vmem:[%s2 + $0x68] sm:$0xff]
    %v107 = vld [vmem:[%s2 + $0x70] sm:$0xff]
    %v108 = vld [vmem:[%s2 + $0x78] sm:$0xff]
    %vm109 = vcmask 523264
    %v111 = vsel %vm109, %v91, 0
    %v114 = vsel %vm109, %v92, 0
    %116 = vmatprep.subr.mxu0 %v94
    %117 = vmatpush1.msra.mxu0 %v93
    %118 = vmatprep.subr.mxu0 %v96
    %119 = vmatpush1.msra.mxu0 %v95
    %120 = vmatprep.subr.mxu0 %v98
    %121 = vmatpush1.msra.mxu0 %v97
    %122 = vmatprep.subr.mxu0 %v100
    %123 = vmatpush1.msra.mxu0 %v99
    %124 = vmatprep.subr.mxu0 %v102
    %125 = vmatpush1.msra.mxu0 %v101
    %126 = vmatprep.subr.mxu0 %v104
    %127 = vmatpush1.msra.mxu0 %v103
    %128 = vmatprep.subr.mxu0 %v106
    %129 = vmatpush1.msra.mxu0 %v105
    %130 = vmatprep.subr.mxu0 %v108
    %131 = vmatpush1.msra.mxu0 %v107
    %132 = vmatprep.subr.mxu0 0.0
    %133 = vmatpush1.msra.mxu0 0.0
    %134 = vmatprep.subr.mxu0 0.0
    %135 = vmatpush1.msra.mxu0 0.0
    %136 = vmatprep.subr.mxu0 0.0
    %137 = vmatpush1.msra.mxu0 0.0
    %138 = vmatprep.subr.mxu0 0.0
    %139 = vmatpush1.msra.mxu0 0.0
    %140 = vmatprep.subr.mxu0 0.0
    %141 = vmatpush1.msra.mxu0 0.0
    %142 = vmatprep.subr.mxu0 0.0
    %143 = vmatpush1.msra.mxu0 0.0
    %144 = vmatprep.subr.mxu0 0.0
    %145 = vmatpush1.msra.mxu0 0.0
    %146 = vmatprep.subr.mxu0 0.0
    %147 = vmatpush1.msra.mxu0 0.0
    %148 = vmatprep.subr.mxu0 0.0
    %149 = vmatpush1.msra.mxu0 0.0
    %150 = vmatprep.subr.mxu0 0.0
    %151 = vmatpush1.msra.mxu0 0.0
    %152 = vmatprep.subr.mxu0 0.0
    %153 = vmatpush1.msra.mxu0 0.0
    %154 = vmatprep.subr.mxu0 0.0
    %155 = vmatpush1.msra.mxu0 0.0
    %156 = vmatprep.subr.mxu0 0.0
    %157 = vmatpush1.msra.mxu0 0.0
    %158 = vmatprep.subr.mxu0 0.0
    %159 = vmatpush1.msra.mxu0 0.0
    %160 = vmatprep.subr.mxu0 0.0
    %161 = vmatpush1.msra.mxu0 0.0
    %162 = vmatprep.subr.mxu0 0.0
    %163 = vmatpush1.msra.mxu0 0.0
    %164 = vmatprep.subr.mxu0 0.0
    %165 = vmatpush1.msra.mxu0 0.0
    %166 = vmatprep.subr.mxu0 0.0
    %167 = vmatpush1.msra.mxu0 0.0
    %168 = vmatprep.subr.mxu0 0.0
    %169 = vmatpush1.msra.mxu0 0.0
    %170 = vmatprep.subr.mxu0 0.0
    %171 = vmatpush1.msra.mxu0 0.0
    %172 = vmatprep.subr.mxu0 0.0
    %173 = vmatpush1.msra.mxu0 0.0
    %174 = vmatprep.subr.mxu0 0.0
    %175 = vmatpush1.msra.mxu0 0.0
    %176 = vmatprep.subr.mxu0 0.0
    %177 = vmatpush1.msra.mxu0 0.0
    %178 = vmatprep.subr.mxu0 0.0
    %179 = vmatpush1.msra.mxu0 0.0
    %180 = vmatprep.mubr.f32.mxu0 0.0
    %181 = vmatmul.mubr.f32.gmra.mrb[0].mxu0 %v111
    %v182 = vpop.f32.mrb[0].mxu0
    %v183 = vadd.f32 0.0, %v182
    %v184 = vpop.f32.mrb[0].mxu0
    %v185 = vadd.f32 0.0, %v184
    %186 = vmatprep.mubr.f32.mxu0 0.0
    %187 = vmatmul.mubr.f32.gmra.mrb[0].mxu0 %v114
    %v188 = vpop.f32.mrb[0].mxu0
    %v189 = vadd.f32 0.0, %v188
    %v190 = vpop.f32.mrb[0].mxu0
    %v191 = vadd.f32 0.0, %v190
    %192 = vdwg.mxu0
    %v194 = vsel %vm109, %v89, 0
    %v197 = vsel %vm109, %v90, 0
    %199 = vmatprep.subr.mxu0 %v94
    %200 = vmatpush1.msra.mxu0 %v93
    %201 = vmatprep.subr.mxu0 %v96
    %202 = vmatpush1.msra.mxu0 %v95
    %203 = vmatprep.subr.mxu0 %v98
    %204 = vmatpush1.msra.mxu0 %v97
    %205 = vmatprep.subr.mxu0 %v100
    %206 = vmatpush1.msra.mxu0 %v99
    %207 = vmatprep.subr.mxu0 %v102
    %208 = vmatpush1.msra.mxu0 %v101
    %209 = vmatprep.subr.mxu0 %v104
    %210 = vmatpush1.msra.mxu0 %v103
    %211 = vmatprep.subr.mxu0 %v106
    %212 = vmatpush1.msra.mxu0 %v105
    %213 = vmatprep.subr.mxu0 %v108
    %214 = vmatpush1.msra.mxu0 %v107
    %215 = vmatprep.subr.mxu0 0.0
    %216 = vmatpush1.msra.mxu0 0.0
    %217 = vmatprep.subr.mxu0 0.0
    %218 = vmatpush1.msra.mxu0 0.0
    %219 = vmatprep.subr.mxu0 0.0
    %220 = vmatpush1.msra.mxu0 0.0
    %221 = vmatprep.subr.mxu0 0.0
    %222 = vmatpush1.msra.mxu0 0.0
    %223 = vmatprep.subr.mxu0 0.0
    %224 = vmatpush1.msra.mxu0 0.0
    %225 = vmatprep.subr.mxu0 0.0
    %226 = vmatpush1.msra.mxu0 0.0
    %227 = vmatprep.subr.mxu0 0.0
    %228 = vmatpush1.msra.mxu0 0.0
    %229 = vmatprep.subr.mxu0 0.0
    %230 = vmatpush1.msra.mxu0 0.0
    %231 = vmatprep.subr.mxu0 0.0
    %232 = vmatpush1.msra.mxu0 0.0
    %233 = vmatprep.subr.mxu0 0.0
    %234 = vmatpush1.msra.mxu0 0.0
    %235 = vmatprep.subr.mxu0 0.0
    %236 = vmatpush1.msra.mxu0 0.0
    %237 = vmatprep.subr.mxu0 0.0
    %238 = vmatpush1.msra.mxu0 0.0
    %239 = vmatprep.subr.mxu0 0.0
    %240 = vmatpush1.msra.mxu0 0.0
    %241 = vmatprep.subr.mxu0 0.0
    %242 = vmatpush1.msra.mxu0 0.0
    %243 = vmatprep.subr.mxu0 0.0
    %244 = vmatpush1.msra.mxu0 0.0
    %245 = vmatprep.subr.mxu0 0.0
    %246 = vmatpush1.msra.mxu0 0.0
    %247 = vmatprep.subr.mxu0 0.0
    %248 = vmatpush1.msra.mxu0 0.0
    %249 = vmatprep.subr.mxu0 0.0
    %250 = vmatpush1.msra.mxu0 0.0
    %251 = vmatprep.subr.mxu0 0.0
    %252 = vmatpush1.msra.mxu0 0.0
    %253 = vmatprep.subr.mxu0 0.0
    %254 = vmatpush1.msra.mxu0 0.0
    %255 = vmatprep.subr.mxu0 0.0
    %256 = vmatpush1.msra.mxu0 0.0
    %257 = vmatprep.subr.mxu0 0.0
    %258 = vmatpush1.msra.mxu0 0.0
    %259 = vmatprep.subr.mxu0 0.0
    %260 = vmatpush1.msra.mxu0 0.0
    %261 = vmatprep.subr.mxu0 0.0
    %262 = vmatpush1.msra.mxu0 0.0
    %263 = vmatprep.mubr.f32.mxu0 0.0
    %264 = vmatmul.mubr.f32.gmra.mrb[0].mxu0 %v194
    %v265 = vpop.f32.mrb[0].mxu0
    %v266 = vadd.f32 %v183, %v265
    %v267 = vpop.f32.mrb[0].mxu0
    %v268 = vadd.f32 %v185, %v267
    %269 = vmatprep.mubr.f32.mxu0 0.0
    %270 = vmatmul.mubr.f32.gmra.mrb[0].mxu0 %v197
    %v271 = vpop.f32.mrb[0].mxu0
    %v272 = vadd.f32 %v189, %v271
    %v273 = vpop.f32.mrb[0].mxu0
    %v274 = vadd.f32 %v191, %v273
    %275 = vdwg.mxu0
    %v276 = vld [vmem:[%s4] sm:$0xff]
    %v277 = vld [vmem:[%s3] sm:$0xff]
    %v278 = vlaneseq
    %v279 = vshrl.u32 %v278, 7
    %v280 = vsub.s32 0, %v279
    %v281 = vrot.slane %v266, %v280
    %v282 = vlaneseq
    %v283 = vshrl.u32 %v282, 7
    %v284 = vsub.s32 0, %v283
    %v285 = vrot.slane %v268, %v284
    %v288 = vcombine.low %v281, %v285
    %v290 = vmul.f32 %v277, %v288
    %v291 = vadd.f32 %v276, %v290
    %s292 = scalar_lea.vmem %s3, 8
    %v293 = vld [vmem:[%s292] sm:$0xff]
    %v294 = vlaneseq
    %v295 = vshrl.u32 %v294, 7
    %v296 = vsub.s32 1, %v295
    %v297 = vrot.slane %v266, %v296
    %v298 = vlaneseq
    %v299 = vshrl.u32 %v298, 7
    %v300 = vsub.s32 1, %v299
    %v301 = vrot.slane %v268, %v300
    %v304 = vcombine.low %v297, %v301
    %v306 = vmul.f32 %v293, %v304
    %v307 = vadd.f32 %v291, %v306
    %s308 = scalar_lea.vmem %s3, 16
    %v309 = vld [vmem:[%s308] sm:$0xff]
    %v310 = vlaneseq
    %v311 = vshrl.u32 %v310, 7
    %v312 = vsub.s32 2, %v311
    %v313 = vrot.slane %v266, %v312
    %v314 = vlaneseq
    %v315 = vshrl.u32 %v314, 7
    %v316 = vsub.s32 2, %v315
    %v317 = vrot.slane %v268, %v316
    %v320 = vcombine.low %v313, %v317
    %v322 = vmul.f32 %v309, %v320
    %v323 = vadd.f32 %v307, %v322
    %s324 = scalar_lea.vmem %s3, 24
    %v325 = vld [vmem:[%s324] sm:$0xff]
    %v326 = vlaneseq
    %v327 = vshrl.u32 %v326, 7
    %v328 = vsub.s32 3, %v327
    %v329 = vrot.slane %v266, %v328
    %v330 = vlaneseq
    %v331 = vshrl.u32 %v330, 7
    %v332 = vsub.s32 3, %v331
    %v333 = vrot.slane %v268, %v332
    %v336 = vcombine.low %v329, %v333
    %v338 = vmul.f32 %v325, %v336
    %v339 = vadd.f32 %v323, %v338
    %s340 = scalar_lea.vmem %s3, 32
    %v341 = vld [vmem:[%s340] sm:$0xff]
    %v342 = vlaneseq
    %v343 = vshrl.u32 %v342, 7
    %v344 = vsub.s32 4, %v343
    %v345 = vrot.slane %v266, %v344
    %v346 = vlaneseq
    %v347 = vshrl.u32 %v346, 7
    %v348 = vsub.s32 4, %v347
    %v349 = vrot.slane %v268, %v348
    %v352 = vcombine.low %v345, %v349
    %v354 = vmul.f32 %v341, %v352
    %v355 = vadd.f32 %v339, %v354
    %s356 = scalar_lea.vmem %s3, 40
    %v357 = vld [vmem:[%s356] sm:$0xff]
    %v358 = vlaneseq
    %v359 = vshrl.u32 %v358, 7
    %v360 = vsub.s32 5, %v359
    %v361 = vrot.slane %v266, %v360
    %v362 = vlaneseq
    %v363 = vshrl.u32 %v362, 7
    %v364 = vsub.s32 5, %v363
    %v365 = vrot.slane %v268, %v364
    %v368 = vcombine.low %v361, %v365
    %v370 = vmul.f32 %v357, %v368
    %v371 = vadd.f32 %v355, %v370
    %s372 = scalar_lea.vmem %s3, 48
    %v373 = vld [vmem:[%s372] sm:$0xff]
    %v374 = vlaneseq
    %v375 = vshrl.u32 %v374, 7
    %v376 = vsub.s32 6, %v375
    %v377 = vrot.slane %v266, %v376
    %v378 = vlaneseq
    %v379 = vshrl.u32 %v378, 7
    %v380 = vsub.s32 6, %v379
    %v381 = vrot.slane %v268, %v380
    %v384 = vcombine.low %v377, %v381
    %v386 = vmul.f32 %v373, %v384
    %v387 = vadd.f32 %v371, %v386
    %s388 = scalar_lea.vmem %s3, 56
    %v389 = vld [vmem:[%s388] sm:$0xff]
    %v390 = vlaneseq
    %v391 = vshrl.u32 %v390, 7
    %v392 = vsub.s32 7, %v391
    %v393 = vrot.slane %v266, %v392
    %v394 = vlaneseq
    %v395 = vshrl.u32 %v394, 7
    %v396 = vsub.s32 7, %v395
    %v397 = vrot.slane %v268, %v396
    %v400 = vcombine.low %v393, %v397
    %v402 = vmul.f32 %v389, %v400
    %v403 = vadd.f32 %v387, %v402
    %v404 = vld [vmem:[%s1] sm:$0xff]
    %v406 = vcombine.high %v404, %v404
    %407 = vrot.lane.b32.xlu0 %v404, 17
    %v408 = vpop.permute.xlu0 %407
    %409 = vrot.lane.b32.xlu0 %v406, 17
    %v410 = vpop.permute.xlu0 %409
    %vm411 = vcmask 138240
    %v412 = vsel %vm411, %v408, %v410
    %vm416 = vcmask 1043592
    %417 = vst.msk [vmem:[#allocation2] sm:$0xf] %vm416, %v408
    %418 = vst [vmem:[#allocation2 + $0x8] sm:$0xf] %v412
    %vm419 = vcmask 134144
    %420 = vst.msk [vmem:[#allocation2 + $0x10] sm:$0xf] %vm419, %v410
    %v422 = vcombine.low %v403, %v403
    %423 = vrot.lane.b32.xlu0 %v422, 17
    %v424 = vpop.permute.xlu0 %423
    %425 = vrot.lane.b32.xlu0 %v403, 17
    %v426 = vpop.permute.xlu0 %425
    %v427 = vsel %vm411, %v424, %v426
    %vm431 = vcmask 1047692
    %432 = vst.msk [vmem:[#allocation2] sm:$0xf0] %vm431, %v424
    %433 = vst [vmem:[#allocation2 + $0x8] sm:$0xf0] %v427
    %vm434 = vcmask 138244
    %435 = vst.msk [vmem:[#allocation2 + $0x10] sm:$0xf0] %vm434, %v426
    %v436 = vld [vmem:[%s3] sm:$0xff]
    %v437 = vlaneseq
    %v438 = vshrl.u32 %v437, 7
    %v439 = vsub.s32 0, %v438
    %v440 = vrot.slane %v272, %v439
    %v441 = vlaneseq
    %v442 = vshrl.u32 %v441, 7
    %v443 = vsub.s32 0, %v442
    %v444 = vrot.slane %v274, %v443
    %v447 = vcombine.low %v440, %v444
    %v449 = vmul.f32 %v436, %v447
    %v450 = vadd.f32 %v276, %v449
    %v451 = vld [vmem:[%s292] sm:$0xff]
    %v452 = vlaneseq
    %v453 = vshrl.u32 %v452, 7
    %v454 = vsub.s32 1, %v453
    %v455 = vrot.slane %v272, %v454
    %v456 = vlaneseq
    %v457 = vshrl.u32 %v456, 7
    %v458 = vsub.s32 1, %v457
    %v459 = vrot.slane %v274, %v458
    %v462 = vcombine.low %v455, %v459
    %v464 = vmul.f32 %v451, %v462
    %v465 = vadd.f32 %v450, %v464
    %v466 = vld [vmem:[%s308] sm:$0xff]
    %v467 = vlaneseq
    %v468 = vshrl.u32 %v467, 7
    %v469 = vsub.s32 2, %v468
    %v470 = vrot.slane %v272, %v469
    %v471 = vlaneseq
    %v472 = vshrl.u32 %v471, 7
    %v473 = vsub.s32 2, %v472
    %v474 = vrot.slane %v274, %v473
    %v477 = vcombine.low %v470, %v474
    %v479 = vmul.f32 %v466, %v477
    %v480 = vadd.f32 %v465, %v479
    %v481 = vld [vmem:[%s324] sm:$0xff]
    %v482 = vlaneseq
    %v483 = vshrl.u32 %v482, 7
    %v484 = vsub.s32 3, %v483
    %v485 = vrot.slane %v272, %v484
    %v486 = vlaneseq
    %v487 = vshrl.u32 %v486, 7
    %v488 = vsub.s32 3, %v487
    %v489 = vrot.slane %v274, %v488
    %v492 = vcombine.low %v485, %v489
    %v494 = vmul.f32 %v481, %v492
    %v495 = vadd.f32 %v480, %v494
    %v496 = vld [vmem:[%s340] sm:$0xff]
    %v497 = vlaneseq
    %v498 = vshrl.u32 %v497, 7
    %v499 = vsub.s32 4, %v498
    %v500 = vrot.slane %v272, %v499
    %v501 = vlaneseq
    %v502 = vshrl.u32 %v501, 7
    %v503 = vsub.s32 4, %v502
    %v504 = vrot.slane %v274, %v503
    %v507 = vcombine.low %v500, %v504
    %v509 = vmul.f32 %v496, %v507
    %v510 = vadd.f32 %v495, %v509
    %v511 = vld [vmem:[%s356] sm:$0xff]
    %v512 = vlaneseq
    %v513 = vshrl.u32 %v512, 7
    %v514 = vsub.s32 5, %v513
    %v515 = vrot.slane %v272, %v514
    %v516 = vlaneseq
    %v517 = vshrl.u32 %v516, 7
    %v518 = vsub.s32 5, %v517
    %v519 = vrot.slane %v274, %v518
    %v522 = vcombine.low %v515, %v519
    %v524 = vmul.f32 %v511, %v522
    %v525 = vadd.f32 %v510, %v524
    %v526 = vld [vmem:[%s372] sm:$0xff]
    %v527 = vlaneseq
    %v528 = vshrl.u32 %v527, 7
    %v529 = vsub.s32 6, %v528
    %v530 = vrot.slane %v272, %v529
    %v531 = vlaneseq
    %v532 = vshrl.u32 %v531, 7
    %v533 = vsub.s32 6, %v532
    %v534 = vrot.slane %v274, %v533
    %v537 = vcombine.low %v530, %v534
    %v539 = vmul.f32 %v526, %v537
    %v540 = vadd.f32 %v525, %v539
    %v541 = vld [vmem:[%s388] sm:$0xff]
    %v542 = vlaneseq
    %v543 = vshrl.u32 %v542, 7
    %v544 = vsub.s32 7, %v543
    %v545 = vrot.slane %v272, %v544
    %v546 = vlaneseq
    %v547 = vshrl.u32 %v546, 7
    %v548 = vsub.s32 7, %v547
    %v549 = vrot.slane %v274, %v548
    %v552 = vcombine.low %v545, %v549
    %v554 = vmul.f32 %v541, %v552
    %v555 = vadd.f32 %v540, %v554
    %s556 = scalar_lea.vmem %s1, 8
    %v557 = vld [vmem:[%s556] sm:$0xff]
    %v559 = vcombine.high %v557, %v557
    %560 = vrot.lane.b32.xlu0 %v557, 17
    %v561 = vpop.permute.xlu0 %560
    %562 = vrot.lane.b32.xlu0 %v559, 17
    %v563 = vpop.permute.xlu0 %562
    %v564 = vsel %vm411, %v561, %v563
    %568 = vst.msk [vmem:[#allocation2 + $0x18] sm:$0xf] %vm416, %v561
    %569 = vst [vmem:[#allocation2 + $0x20] sm:$0xf] %v564
    %570 = vst.msk [vmem:[#allocation2 + $0x28] sm:$0xf] %vm419, %v563
    %v572 = vcombine.low %v555, %v555
    %573 = vrot.lane.b32.xlu0 %v572, 17
    %v574 = vpop.permute.xlu0 %573
    %575 = vrot.lane.b32.xlu0 %v555, 17
    %v576 = vpop.permute.xlu0 %575
    %v577 = vsel %vm411, %v574, %v576
    %581 = vst.msk [vmem:[#allocation2 + $0x18] sm:$0xf0] %vm431, %v574
    %582 = vst [vmem:[#allocation2 + $0x20] sm:$0xf0] %v577
    %583 = vst.msk [vmem:[#allocation2 + $0x28] sm:$0xf0] %vm434, %v576
    %v584 = vld [vmem:[%s6] sm:$0xf]
    %586 = vset.pattern.permute.xlu0 0
    %587 = vperm.xlu0 %586, %v584
    %v588 = vpop.permute.xlu0 %587
    %v590 = vadd.f32 %v588, 0.0
    %v591 = vld [vmem:[#allocation2] sm:$0xff]
    %v592 = vld [vmem:[#allocation2 + $0x8] sm:$0xff]
    %v593 = vld [vmem:[#allocation2 + $0x18] sm:$0xff]
    %v594 = vld [vmem:[#allocation2 + $0x20] sm:$0xff]
    %v595 = vsel %vm72, 1, 0
    %v596 = vsel %vm73, 1, 0
    %vm597 = vcmp.eq.s32.totalorder %v595, 1
    %vm598 = vcmp.eq.s32.totalorder %v596, 1
    %v599 = vsel %vm597, %v591, 0.0
    %v600 = vsel %vm598, %v592, 0.0
    %v601 = vsel %vm597, %v593, 0.0
    %v602 = vsel %vm598, %v594, 0.0
    %v603 = vld [vmem:[%s5] sm:$0xf]
    %605 = vset.pattern.permute.xlu0 0
    %606 = vperm.xlu0 %605, %v603
    %v607 = vpop.permute.xlu0 %606
    %v609 = vlaneseq
    %v610 = vshrl.u32 %v609, 7
    %v611 = vsub.s32 0, %v610
    %v612 = vrot.slane %v599, %v611
    %v613 = vlaneseq
    %v614 = vshrl.u32 %v613, 7
    %v615 = vsub.s32 0, %v614
    %v616 = vrot.slane %v600, %v615
    %v617 = vmul.f32 %v607, %v612
    %v618 = vmul.f32 %v607, %v616
    %v619 = vadd.f32 %v590, %v617
    %v620 = vadd.f32 %v590, %v618
    %s621 = scalar_lea.vmem %s5, 4
    %v622 = vld [vmem:[%s621] sm:$0xf]
    %624 = vset.pattern.permute.xlu0 0
    %625 = vperm.xlu0 %624, %v622
    %v626 = vpop.permute.xlu0 %625
    %v628 = vlaneseq
    %v629 = vshrl.u32 %v628, 7
    %v630 = vsub.s32 1, %v629
    %v631 = vrot.slane %v599, %v630
    %v632 = vlaneseq
    %v633 = vshrl.u32 %v632, 7
    %v634 = vsub.s32 1, %v633
    %v635 = vrot.slane %v600, %v634
    %v636 = vmul.f32 %v626, %v631
    %v637 = vmul.f32 %v626, %v635
    %v638 = vadd.f32 %v619, %v636
    %v639 = vadd.f32 %v620, %v637
    %s640 = scalar_lea.vmem %s5, 8
    %v641 = vld [vmem:[%s640] sm:$0xf]
    %643 = vset.pattern.permute.xlu0 0
    %644 = vperm.xlu0 %643, %v641
    %v645 = vpop.permute.xlu0 %644
    %v647 = vlaneseq
    %v648 = vshrl.u32 %v647, 7
    %v649 = vsub.s32 2, %v648
    %v650 = vrot.slane %v599, %v649
    %v651 = vlaneseq
    %v652 = vshrl.u32 %v651, 7
    %v653 = vsub.s32 2, %v652
    %v654 = vrot.slane %v600, %v653
    %v655 = vmul.f32 %v645, %v650
    %v656 = vmul.f32 %v645, %v654
    %v657 = vadd.f32 %v638, %v655
    %v658 = vadd.f32 %v639, %v656
    %s659 = scalar_lea.vmem %s5, 12
    %v660 = vld [vmem:[%s659] sm:$0xf]
    %662 = vset.pattern.permute.xlu0 0
    %663 = vperm.xlu0 %662, %v660
    %v664 = vpop.permute.xlu0 %663
    %v666 = vlaneseq
    %v667 = vshrl.u32 %v666, 7
    %v668 = vsub.s32 3, %v667
    %v669 = vrot.slane %v599, %v668
    %v670 = vlaneseq
    %v671 = vshrl.u32 %v670, 7
    %v672 = vsub.s32 3, %v671
    %v673 = vrot.slane %v600, %v672
    %v674 = vmul.f32 %v664, %v669
    %v675 = vmul.f32 %v664, %v673
    %v676 = vadd.f32 %v657, %v674
    %v677 = vadd.f32 %v658, %v675
    %s678 = scalar_lea.vmem %s5, 16
    %v679 = vld [vmem:[%s678] sm:$0xf]
    %681 = vset.pattern.permute.xlu0 0
    %682 = vperm.xlu0 %681, %v679
    %v683 = vpop.permute.xlu0 %682
    %v685 = vlaneseq
    %v686 = vshrl.u32 %v685, 7
    %v687 = vsub.s32 4, %v686
    %v688 = vrot.slane %v599, %v687
    %v689 = vlaneseq
    %v690 = vshrl.u32 %v689, 7
    %v691 = vsub.s32 4, %v690
    %v692 = vrot.slane %v600, %v691
    %v693 = vmul.f32 %v683, %v688
    %v694 = vmul.f32 %v683, %v692
    %v695 = vadd.f32 %v676, %v693
    %v696 = vadd.f32 %v677, %v694
    %s697 = scalar_lea.vmem %s5, 20
    %v698 = vld [vmem:[%s697] sm:$0xf]
    %700 = vset.pattern.permute.xlu0 0
    %701 = vperm.xlu0 %700, %v698
    %v702 = vpop.permute.xlu0 %701
    %v704 = vlaneseq
    %v705 = vshrl.u32 %v704, 7
    %v706 = vsub.s32 5, %v705
    %v707 = vrot.slane %v599, %v706
    %v708 = vlaneseq
    %v709 = vshrl.u32 %v708, 7
    %v710 = vsub.s32 5, %v709
    %v711 = vrot.slane %v600, %v710
    %v712 = vmul.f32 %v702, %v707
    %v713 = vmul.f32 %v702, %v711
    %v714 = vadd.f32 %v695, %v712
    %v715 = vadd.f32 %v696, %v713
    %s716 = scalar_lea.vmem %s5, 24
    %v717 = vld [vmem:[%s716] sm:$0xf]
    %719 = vset.pattern.permute.xlu0 0
    %720 = vperm.xlu0 %719, %v717
    %v721 = vpop.permute.xlu0 %720
    %v723 = vlaneseq
    %v724 = vshrl.u32 %v723, 7
    %v725 = vsub.s32 6, %v724
    %v726 = vrot.slane %v599, %v725
    %v727 = vlaneseq
    %v728 = vshrl.u32 %v727, 7
    %v729 = vsub.s32 6, %v728
    %v730 = vrot.slane %v600, %v729
    %v731 = vmul.f32 %v721, %v726
    %v732 = vmul.f32 %v721, %v730
    %v733 = vadd.f32 %v714, %v731
    %v734 = vadd.f32 %v715, %v732
    %s735 = scalar_lea.vmem %s5, 28
    %v736 = vld [vmem:[%s735] sm:$0xf]
    %738 = vset.pattern.permute.xlu0 0
    %739 = vperm.xlu0 %738, %v736
    %v740 = vpop.permute.xlu0 %739
    %v742 = vlaneseq
    %v743 = vshrl.u32 %v742, 7
    %v744 = vsub.s32 7, %v743
    %v745 = vrot.slane %v599, %v744
    %v746 = vlaneseq
    %v747 = vshrl.u32 %v746, 7
    %v748 = vsub.s32 7, %v747
    %v749 = vrot.slane %v600, %v748
    %v750 = vmul.f32 %v740, %v745
    %v751 = vmul.f32 %v740, %v749
    %v752 = vadd.f32 %v733, %v750
    %v753 = vadd.f32 %v734, %v751
    %v754 = vlaneseq
    %v755 = vshrl.u32 %v754, 7
    %v756 = vsub.s32 0, %v755
    %v757 = vrot.slane %v601, %v756
    %v758 = vlaneseq
    %v759 = vshrl.u32 %v758, 7
    %v760 = vsub.s32 0, %v759
    %v761 = vrot.slane %v602, %v760
    %v762 = vmul.f32 %v607, %v757
    %v763 = vmul.f32 %v607, %v761
    %v764 = vadd.f32 %v590, %v762
    %v765 = vadd.f32 %v590, %v763
    %v766 = vlaneseq
    %v767 = vshrl.u32 %v766, 7
    %v768 = vsub.s32 1, %v767
    %v769 = vrot.slane %v601, %v768
    %v770 = vlaneseq
    %v771 = vshrl.u32 %v770, 7
    %v772 = vsub.s32 1, %v771
    %v773 = vrot.slane %v602, %v772
    %v774 = vmul.f32 %v626, %v769
    %v775 = vmul.f32 %v626, %v773
    %v776 = vadd.f32 %v764, %v774
    %v777 = vadd.f32 %v765, %v775
    %v778 = vlaneseq
    %v779 = vshrl.u32 %v778, 7
    %v780 = vsub.s32 2, %v779
    %v781 = vrot.slane %v601, %v780
    %v782 = vlaneseq
    %v783 = vshrl.u32 %v782, 7
    %v784 = vsub.s32 2, %v783
    %v785 = vrot.slane %v602, %v784
    %v786 = vmul.f32 %v645, %v781
    %v787 = vmul.f32 %v645, %v785
    %v788 = vadd.f32 %v776, %v786
    %v789 = vadd.f32 %v777, %v787
    %v790 = vlaneseq
    %v791 = vshrl.u32 %v790, 7
    %v792 = vsub.s32 3, %v791
    %v793 = vrot.slane %v601, %v792
    %v794 = vlaneseq
    %v795 = vshrl.u32 %v794, 7
    %v796 = vsub.s32 3, %v795
    %v797 = vrot.slane %v602, %v796
    %v798 = vmul.f32 %v664, %v793
    %v799 = vmul.f32 %v664, %v797
    %v800 = vadd.f32 %v788, %v798
    %v801 = vadd.f32 %v789, %v799
    %v802 = vlaneseq
    %v803 = vshrl.u32 %v802, 7
    %v804 = vsub.s32 4, %v803
    %v805 = vrot.slane %v601, %v804
    %v806 = vlaneseq
    %v807 = vshrl.u32 %v806, 7
    %v808 = vsub.s32 4, %v807
    %v809 = vrot.slane %v602, %v808
    %v810 = vmul.f32 %v683, %v805
    %v811 = vmul.f32 %v683, %v809
    %v812 = vadd.f32 %v800, %v810
    %v813 = vadd.f32 %v801, %v811
    %v814 = vlaneseq
    %v815 = vshrl.u32 %v814, 7
    %v816 = vsub.s32 5, %v815
    %v817 = vrot.slane %v601, %v816
    %v818 = vlaneseq
    %v819 = vshrl.u32 %v818, 7
    %v820 = vsub.s32 5, %v819
    %v821 = vrot.slane %v602, %v820
    %v822 = vmul.f32 %v702, %v817
    %v823 = vmul.f32 %v702, %v821
    %v824 = vadd.f32 %v812, %v822
    %v825 = vadd.f32 %v813, %v823
    %v826 = vlaneseq
    %v827 = vshrl.u32 %v826, 7
    %v828 = vsub.s32 6, %v827
    %v829 = vrot.slane %v601, %v828
    %v830 = vlaneseq
    %v831 = vshrl.u32 %v830, 7
    %v832 = vsub.s32 6, %v831
    %v833 = vrot.slane %v602, %v832
    %v834 = vmul.f32 %v721, %v829
    %v835 = vmul.f32 %v721, %v833
    %v836 = vadd.f32 %v824, %v834
    %v837 = vadd.f32 %v825, %v835
    %v838 = vlaneseq
    %v839 = vshrl.u32 %v838, 7
    %v840 = vsub.s32 7, %v839
    %v841 = vrot.slane %v601, %v840
    %v842 = vlaneseq
    %v843 = vshrl.u32 %v842, 7
    %v844 = vsub.s32 7, %v843
    %v845 = vrot.slane %v602, %v844
    %v846 = vmul.f32 %v740, %v841
    %v847 = vmul.f32 %v740, %v845
    %v848 = vadd.f32 %v836, %v846
    %v849 = vadd.f32 %v837, %v847
    %v850 = vld [vmem:[#allocation2] sm:$0xff]
    %v851 = vld [vmem:[#allocation2 + $0x8] sm:$0xff]
    %v852 = vld [vmem:[#allocation2 + $0x10] sm:$0xff]
    %v853 = vld [vmem:[#allocation2 + $0x18] sm:$0xff]
    %v854 = vld [vmem:[#allocation2 + $0x20] sm:$0xff]
    %v855 = vld [vmem:[#allocation2 + $0x28] sm:$0xff]
    %s856 = scalar_lea.vmem %s5, 32
    %v857 = vld [vmem:[%s856] sm:$0xf]
    %859 = vset.pattern.permute.xlu0 0
    %860 = vperm.xlu0 %859, %v857
    %v861 = vpop.permute.xlu0 %860
    %v863 = vlaneseq
    %v864 = vshrl.u32 %v863, 7
    %v865 = vsub.s32 0, %v864
    %v866 = vrot.slane %v850, %v865
    %v867 = vlaneseq
    %v868 = vshrl.u32 %v867, 7
    %v869 = vsub.s32 0, %v868
    %v870 = vrot.slane %v851, %v869
    %v871 = vlaneseq
    %v872 = vshrl.u32 %v871, 7
    %v873 = vsub.s32 0, %v872
    %v874 = vrot.slane %v852, %v873
    %v875 = vmul.f32 %v861, %v866
    %v876 = vmul.f32 %v861, %v870
    %v877 = vmul.f32 %v861, %v874
    %881 = vrot.lane.b32.xlu0 %v875, 127
    %v882 = vpop.permute.xlu0 %881
    %883 = vrot.lane.b32.xlu0 %v876, 127
    %v884 = vpop.permute.xlu0 %883
    %885 = vrot.lane.b32.xlu0 %v877, 127
    %v886 = vpop.permute.xlu0 %885
    %vm887 = vcmask 1039360
    %v888 = vsel %vm887, %v882, %v884
    %v889 = vsel %vm887, %v884, %v886
    %v892 = vadd.f32 %v752, %v888
    %v893 = vadd.f32 %v753, %v889
    %s894 = scalar_lea.vmem %s5, 36
    %v895 = vld [vmem:[%s894] sm:$0xf]
    %897 = vset.pattern.permute.xlu0 0
    %898 = vperm.xlu0 %897, %v895
    %v899 = vpop.permute.xlu0 %898
    %v901 = vlaneseq
    %v902 = vshrl.u32 %v901, 7
    %v903 = vsub.s32 1, %v902
    %v904 = vrot.slane %v850, %v903
    %v905 = vlaneseq
    %v906 = vshrl.u32 %v905, 7
    %v907 = vsub.s32 1, %v906
    %v908 = vrot.slane %v851, %v907
    %v909 = vlaneseq
    %v910 = vshrl.u32 %v909, 7
    %v911 = vsub.s32 1, %v910
    %v912 = vrot.slane %v852, %v911
    %v913 = vmul.f32 %v899, %v904
    %v914 = vmul.f32 %v899, %v908
    %v915 = vmul.f32 %v899, %v912
    %919 = vrot.lane.b32.xlu0 %v913, 127
    %v920 = vpop.permute.xlu0 %919
    %921 = vrot.lane.b32.xlu0 %v914, 127
    %v922 = vpop.permute.xlu0 %921
    %923 = vrot.lane.b32.xlu0 %v915, 127
    %v924 = vpop.permute.xlu0 %923
    %v925 = vsel %vm887, %v920, %v922
    %v926 = vsel %vm887, %v922, %v924
    %v929 = vadd.f32 %v892, %v925
    %v930 = vadd.f32 %v893, %v926
    %s931 = scalar_lea.vmem %s5, 40
    %v932 = vld [vmem:[%s931] sm:$0xf]
    %934 = vset.pattern.permute.xlu0 0
    %935 = vperm.xlu0 %934, %v932
    %v936 = vpop.permute.xlu0 %935
    %v938 = vlaneseq
    %v939 = vshrl.u32 %v938, 7
    %v940 = vsub.s32 2, %v939
    %v941 = vrot.slane %v850, %v940
    %v942 = vlaneseq
    %v943 = vshrl.u32 %v942, 7
    %v944 = vsub.s32 2, %v943
    %v945 = vrot.slane %v851, %v944
    %v946 = vlaneseq
    %v947 = vshrl.u32 %v946, 7
    %v948 = vsub.s32 2, %v947
    %v949 = vrot.slane %v852, %v948
    %v950 = vmul.f32 %v936, %v941
    %v951 = vmul.f32 %v936, %v945
    %v952 = vmul.f32 %v936, %v949
    %956 = vrot.lane.b32.xlu0 %v950, 127
    %v957 = vpop.permute.xlu0 %956
    %958 = vrot.lane.b32.xlu0 %v951, 127
    %v959 = vpop.permute.xlu0 %958
    %960 = vrot.lane.b32.xlu0 %v952, 127
    %v961 = vpop.permute.xlu0 %960
    %v962 = vsel %vm887, %v957, %v959
    %v963 = vsel %vm887, %v959, %v961
    %v966 = vadd.f32 %v929, %v962
    %v967 = vadd.f32 %v930, %v963
    %s968 = scalar_lea.vmem %s5, 44
    %v969 = vld [vmem:[%s968] sm:$0xf]
    %971 = vset.pattern.permute.xlu0 0
    %972 = vperm.xlu0 %971, %v969
    %v973 = vpop.permute.xlu0 %972
    %v975 = vlaneseq
    %v976 = vshrl.u32 %v975, 7
    %v977 = vsub.s32 3, %v976
    %v978 = vrot.slane %v850, %v977
    %v979 = vlaneseq
    %v980 = vshrl.u32 %v979, 7
    %v981 = vsub.s32 3, %v980
    %v982 = vrot.slane %v851, %v981
    %v983 = vlaneseq
    %v984 = vshrl.u32 %v983, 7
    %v985 = vsub.s32 3, %v984
    %v986 = vrot.slane %v852, %v985
    %v987 = vmul.f32 %v973, %v978
    %v988 = vmul.f32 %v973, %v982
    %v989 = vmul.f32 %v973, %v986
    %993 = vrot.lane.b32.xlu0 %v987, 127
    %v994 = vpop.permute.xlu0 %993
    %995 = vrot.lane.b32.xlu0 %v988, 127
    %v996 = vpop.permute.xlu0 %995
    %997 = vrot.lane.b32.xlu0 %v989, 127
    %v998 = vpop.permute.xlu0 %997
    %v999 = vsel %vm887, %v994, %v996
    %v1000 = vsel %vm887, %v996, %v998
    %v1003 = vadd.f32 %v966, %v999
    %v1004 = vadd.f32 %v967, %v1000
    %s1005 = scalar_lea.vmem %s5, 48
    %v1006 = vld [vmem:[%s1005] sm:$0xf]
    %1008 = vset.pattern.permute.xlu0 0
    %1009 = vperm.xlu0 %1008, %v1006
    %v1010 = vpop.permute.xlu0 %1009
    %v1012 = vlaneseq
    %v1013 = vshrl.u32 %v1012, 7
    %v1014 = vsub.s32 4, %v1013
    %v1015 = vrot.slane %v850, %v1014
    %v1016 = vlaneseq
    %v1017 = vshrl.u32 %v1016, 7
    %v1018 = vsub.s32 4, %v1017
    %v1019 = vrot.slane %v851, %v1018
    %v1020 = vlaneseq
    %v1021 = vshrl.u32 %v1020, 7
    %v1022 = vsub.s32 4, %v1021
    %v1023 = vrot.slane %v852, %v1022
    %v1024 = vmul.f32 %v1010, %v1015
    %v1025 = vmul.f32 %v1010, %v1019
    %v1026 = vmul.f32 %v1010, %v1023
    %1030 = vrot.lane.b32.xlu0 %v1024, 127
    %v1031 = vpop.permute.xlu0 %1030
    %1032 = vrot.lane.b32.xlu0 %v1025, 127
    %v1033 = vpop.permute.xlu0 %1032
    %1034 = vrot.lane.b32.xlu0 %v1026, 127
    %v1035 = vpop.permute.xlu0 %1034
    %v1036 = vsel %vm887, %v1031, %v1033
    %v1037 = vsel %vm887, %v1033, %v1035
    %v1040 = vadd.f32 %v1003, %v1036
    %v1041 = vadd.f32 %v1004, %v1037
    %s1042 = scalar_lea.vmem %s5, 52
    %v1043 = vld [vmem:[%s1042] sm:$0xf]
    %1045 = vset.pattern.permute.xlu0 0
    %1046 = vperm.xlu0 %1045, %v1043
    %v1047 = vpop.permute.xlu0 %1046
    %v1049 = vlaneseq
    %v1050 = vshrl.u32 %v1049, 7
    %v1051 = vsub.s32 5, %v1050
    %v1052 = vrot.slane %v850, %v1051
    %v1053 = vlaneseq
    %v1054 = vshrl.u32 %v1053, 7
    %v1055 = vsub.s32 5, %v1054
    %v1056 = vrot.slane %v851, %v1055
    %v1057 = vlaneseq
    %v1058 = vshrl.u32 %v1057, 7
    %v1059 = vsub.s32 5, %v1058
    %v1060 = vrot.slane %v852, %v1059
    %v1061 = vmul.f32 %v1047, %v1052
    %v1062 = vmul.f32 %v1047, %v1056
    %v1063 = vmul.f32 %v1047, %v1060
    %1067 = vrot.lane.b32.xlu0 %v1061, 127
    %v1068 = vpop.permute.xlu0 %1067
    %1069 = vrot.lane.b32.xlu0 %v1062, 127
    %v1070 = vpop.permute.xlu0 %1069
    %1071 = vrot.lane.b32.xlu0 %v1063, 127
    %v1072 = vpop.permute.xlu0 %1071
    %v1073 = vsel %vm887, %v1068, %v1070
    %v1074 = vsel %vm887, %v1070, %v1072
    %v1077 = vadd.f32 %v1040, %v1073
    %v1078 = vadd.f32 %v1041, %v1074
    %s1079 = scalar_lea.vmem %s5, 56
    %v1080 = vld [vmem:[%s1079] sm:$0xf]
    %1082 = vset.pattern.permute.xlu0 0
    %1083 = vperm.xlu0 %1082, %v1080
    %v1084 = vpop.permute.xlu0 %1083
    %v1086 = vlaneseq
    %v1087 = vshrl.u32 %v1086, 7
    %v1088 = vsub.s32 6, %v1087
    %v1089 = vrot.slane %v850, %v1088
    %v1090 = vlaneseq
    %v1091 = vshrl.u32 %v1090, 7
    %v1092 = vsub.s32 6, %v1091
    %v1093 = vrot.slane %v851, %v1092
    %v1094 = vlaneseq
    %v1095 = vshrl.u32 %v1094, 7
    %v1096 = vsub.s32 6, %v1095
    %v1097 = vrot.slane %v852, %v1096
    %v1098 = vmul.f32 %v1084, %v1089
    %v1099 = vmul.f32 %v1084, %v1093
    %v1100 = vmul.f32 %v1084, %v1097
    %1104 = vrot.lane.b32.xlu0 %v1098, 127
    %v1105 = vpop.permute.xlu0 %1104
    %1106 = vrot.lane.b32.xlu0 %v1099, 127
    %v1107 = vpop.permute.xlu0 %1106
    %1108 = vrot.lane.b32.xlu0 %v1100, 127
    %v1109 = vpop.permute.xlu0 %1108
    %v1110 = vsel %vm887, %v1105, %v1107
    %v1111 = vsel %vm887, %v1107, %v1109
    %v1114 = vadd.f32 %v1077, %v1110
    %v1115 = vadd.f32 %v1078, %v1111
    %s1116 = scalar_lea.vmem %s5, 60
    %v1117 = vld [vmem:[%s1116] sm:$0xf]
    %1119 = vset.pattern.permute.xlu0 0
    %1120 = vperm.xlu0 %1119, %v1117
    %v1121 = vpop.permute.xlu0 %1120
    %v1123 = vlaneseq
    %v1124 = vshrl.u32 %v1123, 7
    %v1125 = vsub.s32 7, %v1124
    %v1126 = vrot.slane %v850, %v1125
    %v1127 = vlaneseq
    %v1128 = vshrl.u32 %v1127, 7
    %v1129 = vsub.s32 7, %v1128
    %v1130 = vrot.slane %v851, %v1129
    %v1131 = vlaneseq
    %v1132 = vshrl.u32 %v1131, 7
    %v1133 = vsub.s32 7, %v1132
    %v1134 = vrot.slane %v852, %v1133
    %v1135 = vmul.f32 %v1121, %v1126
    %v1136 = vmul.f32 %v1121, %v1130
    %v1137 = vmul.f32 %v1121, %v1134
    %1141 = vrot.lane.b32.xlu0 %v1135, 127
    %v1142 = vpop.permute.xlu0 %1141
    %1143 = vrot.lane.b32.xlu0 %v1136, 127
    %v1144 = vpop.permute.xlu0 %1143
    %1145 = vrot.lane.b32.xlu0 %v1137, 127
    %v1146 = vpop.permute.xlu0 %1145
    %v1147 = vsel %vm887, %v1142, %v1144
    %v1148 = vsel %vm887, %v1144, %v1146
    %v1151 = vadd.f32 %v1114, %v1147
    %v1152 = vadd.f32 %v1115, %v1148
    %v1153 = vlaneseq
    %v1154 = vshrl.u32 %v1153, 7
    %v1155 = vsub.s32 0, %v1154
    %v1156 = vrot.slane %v853, %v1155
    %v1157 = vlaneseq
    %v1158 = vshrl.u32 %v1157, 7
    %v1159 = vsub.s32 0, %v1158
    %v1160 = vrot.slane %v854, %v1159
    %v1161 = vlaneseq
    %v1162 = vshrl.u32 %v1161, 7
    %v1163 = vsub.s32 0, %v1162
    %v1164 = vrot.slane %v855, %v1163
    %v1165 = vmul.f32 %v861, %v1156
    %v1166 = vmul.f32 %v861, %v1160
    %v1167 = vmul.f32 %v861, %v1164
    %1171 = vrot.lane.b32.xlu0 %v1165, 127
    %v1172 = vpop.permute.xlu0 %1171
    %1173 = vrot.lane.b32.xlu0 %v1166, 127
    %v1174 = vpop.permute.xlu0 %1173
    %1175 = vrot.lane.b32.xlu0 %v1167, 127
    %v1176 = vpop.permute.xlu0 %1175
    %v1177 = vsel %vm887, %v1172, %v1174
    %v1178 = vsel %vm887, %v1174, %v1176
    %v1181 = vadd.f32 %v848, %v1177
    %v1182 = vadd.f32 %v849, %v1178
    %v1183 = vlaneseq
    %v1184 = vshrl.u32 %v1183, 7
    %v1185 = vsub.s32 1, %v1184
    %v1186 = vrot.slane %v853, %v1185
    %v1187 = vlaneseq
    %v1188 = vshrl.u32 %v1187, 7
    %v1189 = vsub.s32 1, %v1188
    %v1190 = vrot.slane %v854, %v1189
    %v1191 = vlaneseq
    %v1192 = vshrl.u32 %v1191, 7
    %v1193 = vsub.s32 1, %v1192
    %v1194 = vrot.slane %v855, %v1193
    %v1195 = vmul.f32 %v899, %v1186
    %v1196 = vmul.f32 %v899, %v1190
    %v1197 = vmul.f32 %v899, %v1194
    %1201 = vrot.lane.b32.xlu0 %v1195, 127
    %v1202 = vpop.permute.xlu0 %1201
    %1203 = vrot.lane.b32.xlu0 %v1196, 127
    %v1204 = vpop.permute.xlu0 %1203
    %1205 = vrot.lane.b32.xlu0 %v1197, 127
    %v1206 = vpop.permute.xlu0 %1205
    %v1207 = vsel %vm887, %v1202, %v1204
    %v1208 = vsel %vm887, %v1204, %v1206
    %v1211 = vadd.f32 %v1181, %v1207
    %v1212 = vadd.f32 %v1182, %v1208
    %v1213 = vlaneseq
    %v1214 = vshrl.u32 %v1213, 7
    %v1215 = vsub.s32 2, %v1214
    %v1216 = vrot.slane %v853, %v1215
    %v1217 = vlaneseq
    %v1218 = vshrl.u32 %v1217, 7
    %v1219 = vsub.s32 2, %v1218
    %v1220 = vrot.slane %v854, %v1219
    %v1221 = vlaneseq
    %v1222 = vshrl.u32 %v1221, 7
    %v1223 = vsub.s32 2, %v1222
    %v1224 = vrot.slane %v855, %v1223
    %v1225 = vmul.f32 %v936, %v1216
    %v1226 = vmul.f32 %v936, %v1220
    %v1227 = vmul.f32 %v936, %v1224
    %1231 = vrot.lane.b32.xlu0 %v1225, 127
    %v1232 = vpop.permute.xlu0 %1231
    %1233 = vrot.lane.b32.xlu0 %v1226, 127
    %v1234 = vpop.permute.xlu0 %1233
    %1235 = vrot.lane.b32.xlu0 %v1227, 127
    %v1236 = vpop.permute.xlu0 %1235
    %v1237 = vsel %vm887, %v1232, %v1234
    %v1238 = vsel %vm887, %v1234, %v1236
    %v1241 = vadd.f32 %v1211, %v1237
    %v1242 = vadd.f32 %v1212, %v1238
    %v1243 = vlaneseq
    %v1244 = vshrl.u32 %v1243, 7
    %v1245 = vsub.s32 3, %v1244
    %v1246 = vrot.slane %v853, %v1245
    %v1247 = vlaneseq
    %v1248 = vshrl.u32 %v1247, 7
    %v1249 = vsub.s32 3, %v1248
    %v1250 = vrot.slane %v854, %v1249
    %v1251 = vlaneseq
    %v1252 = vshrl.u32 %v1251, 7
    %v1253 = vsub.s32 3, %v1252
    %v1254 = vrot.slane %v855, %v1253
    %v1255 = vmul.f32 %v973, %v1246
    %v1256 = vmul.f32 %v973, %v1250
    %v1257 = vmul.f32 %v973, %v1254
    %1261 = vrot.lane.b32.xlu0 %v1255, 127
    %v1262 = vpop.permute.xlu0 %1261
    %1263 = vrot.lane.b32.xlu0 %v1256, 127
    %v1264 = vpop.permute.xlu0 %1263
    %1265 = vrot.lane.b32.xlu0 %v1257, 127
    %v1266 = vpop.permute.xlu0 %1265
    %v1267 = vsel %vm887, %v1262, %v1264
    %v1268 = vsel %vm887, %v1264, %v1266
    %v1271 = vadd.f32 %v1241, %v1267
    %v1272 = vadd.f32 %v1242, %v1268
    %v1273 = vlaneseq
    %v1274 = vshrl.u32 %v1273, 7
    %v1275 = vsub.s32 4, %v1274
    %v1276 = vrot.slane %v853, %v1275
    %v1277 = vlaneseq
    %v1278 = vshrl.u32 %v1277, 7
    %v1279 = vsub.s32 4, %v1278
    %v1280 = vrot.slane %v854, %v1279
    %v1281 = vlaneseq
    %v1282 = vshrl.u32 %v1281, 7
    %v1283 = vsub.s32 4, %v1282
    %v1284 = vrot.slane %v855, %v1283
    %v1285 = vmul.f32 %v1010, %v1276
    %v1286 = vmul.f32 %v1010, %v1280
    %v1287 = vmul.f32 %v1010, %v1284
    %1291 = vrot.lane.b32.xlu0 %v1285, 127
    %v1292 = vpop.permute.xlu0 %1291
    %1293 = vrot.lane.b32.xlu0 %v1286, 127
    %v1294 = vpop.permute.xlu0 %1293
    %1295 = vrot.lane.b32.xlu0 %v1287, 127
    %v1296 = vpop.permute.xlu0 %1295
    %v1297 = vsel %vm887, %v1292, %v1294
    %v1298 = vsel %vm887, %v1294, %v1296
    %v1301 = vadd.f32 %v1271, %v1297
    %v1302 = vadd.f32 %v1272, %v1298
    %v1303 = vlaneseq
    %v1304 = vshrl.u32 %v1303, 7
    %v1305 = vsub.s32 5, %v1304
    %v1306 = vrot.slane %v853, %v1305
    %v1307 = vlaneseq
    %v1308 = vshrl.u32 %v1307, 7
    %v1309 = vsub.s32 5, %v1308
    %v1310 = vrot.slane %v854, %v1309
    %v1311 = vlaneseq
    %v1312 = vshrl.u32 %v1311, 7
    %v1313 = vsub.s32 5, %v1312
    %v1314 = vrot.slane %v855, %v1313
    %v1315 = vmul.f32 %v1047, %v1306
    %v1316 = vmul.f32 %v1047, %v1310
    %v1317 = vmul.f32 %v1047, %v1314
    %1321 = vrot.lane.b32.xlu0 %v1315, 127
    %v1322 = vpop.permute.xlu0 %1321
    %1323 = vrot.lane.b32.xlu0 %v1316, 127
    %v1324 = vpop.permute.xlu0 %1323
    %1325 = vrot.lane.b32.xlu0 %v1317, 127
    %v1326 = vpop.permute.xlu0 %1325
    %v1327 = vsel %vm887, %v1322, %v1324
    %v1328 = vsel %vm887, %v1324, %v1326
    %v1331 = vadd.f32 %v1301, %v1327
    %v1332 = vadd.f32 %v1302, %v1328
    %v1333 = vlaneseq
    %v1334 = vshrl.u32 %v1333, 7
    %v1335 = vsub.s32 6, %v1334
    %v1336 = vrot.slane %v853, %v1335
    %v1337 = vlaneseq
    %v1338 = vshrl.u32 %v1337, 7
    %v1339 = vsub.s32 6, %v1338
    %v1340 = vrot.slane %v854, %v1339
    %v1341 = vlaneseq
    %v1342 = vshrl.u32 %v1341, 7
    %v1343 = vsub.s32 6, %v1342
    %v1344 = vrot.slane %v855, %v1343
    %v1345 = vmul.f32 %v1084, %v1336
    %v1346 = vmul.f32 %v1084, %v1340
    %v1347 = vmul.f32 %v1084, %v1344
    %1351 = vrot.lane.b32.xlu0 %v1345, 127
    %v1352 = vpop.permute.xlu0 %1351
    %1353 = vrot.lane.b32.xlu0 %v1346, 127
    %v1354 = vpop.permute.xlu0 %1353
    %1355 = vrot.lane.b32.xlu0 %v1347, 127
    %v1356 = vpop.permute.xlu0 %1355
    %v1357 = vsel %vm887, %v1352, %v1354
    %v1358 = vsel %vm887, %v1354, %v1356
    %v1361 = vadd.f32 %v1331, %v1357
    %v1362 = vadd.f32 %v1332, %v1358
    %v1363 = vlaneseq
    %v1364 = vshrl.u32 %v1363, 7
    %v1365 = vsub.s32 7, %v1364
    %v1366 = vrot.slane %v853, %v1365
    %v1367 = vlaneseq
    %v1368 = vshrl.u32 %v1367, 7
    %v1369 = vsub.s32 7, %v1368
    %v1370 = vrot.slane %v854, %v1369
    %v1371 = vlaneseq
    %v1372 = vshrl.u32 %v1371, 7
    %v1373 = vsub.s32 7, %v1372
    %v1374 = vrot.slane %v855, %v1373
    %v1375 = vmul.f32 %v1121, %v1366
    %v1376 = vmul.f32 %v1121, %v1370
    %v1377 = vmul.f32 %v1121, %v1374
    %1381 = vrot.lane.b32.xlu0 %v1375, 127
    %v1382 = vpop.permute.xlu0 %1381
    %1383 = vrot.lane.b32.xlu0 %v1376, 127
    %v1384 = vpop.permute.xlu0 %1383
    %1385 = vrot.lane.b32.xlu0 %v1377, 127
    %v1386 = vpop.permute.xlu0 %1385
    %v1387 = vsel %vm887, %v1382, %v1384
    %v1388 = vsel %vm887, %v1384, %v1386
    %v1391 = vadd.f32 %v1361, %v1387
    %v1392 = vadd.f32 %v1362, %v1388
    %v1393 = vsel %vm74, 1, 0
    %v1394 = vsel %vm75, 1, 0
    %vm1395 = vcmp.eq.s32.totalorder %v1393, 1
    %vm1396 = vcmp.eq.s32.totalorder %v1394, 1
    %1403 = vrot.lane.b32.xlu0 %v850, 126
    %v1404 = vpop.permute.xlu0 %1403
    %1405 = vrot.lane.b32.xlu0 %v851, 126
    %v1406 = vpop.permute.xlu0 %1405
    %1407 = vrot.lane.b32.xlu0 %v852, 126
    %v1408 = vpop.permute.xlu0 %1407
    %1409 = vrot.lane.b32.xlu0 %v853, 126
    %v1410 = vpop.permute.xlu0 %1409
    %1411 = vrot.lane.b32.xlu0 %v854, 126
    %v1412 = vpop.permute.xlu0 %1411
    %1413 = vrot.lane.b32.xlu0 %v855, 126
    %v1414 = vpop.permute.xlu0 %1413
    %vm1415 = vcmask 1031168
    %v1416 = vsel %vm1415, %v1404, %v1406
    %v1417 = vsel %vm1415, %v1406, %v1408
    %v1418 = vsel %vm1415, %v1410, %v1412
    %v1419 = vsel %vm1415, %v1412, %v1414
    %v1424 = vsel %vm1395, %v1416, 0.0
    %v1425 = vsel %vm1396, %v1417, 0.0
    %v1426 = vsel %vm1395, %v1418, 0.0
    %v1427 = vsel %vm1396, %v1419, 0.0
    %s1428 = scalar_lea.vmem %s5, 64
    %v1429 = vld [vmem:[%s1428] sm:$0xf]
    %1431 = vset.pattern.permute.xlu0 0
    %1432 = vperm.xlu0 %1431, %v1429
    %v1433 = vpop.permute.xlu0 %1432
    %v1435 = vlaneseq
    %v1436 = vshrl.u32 %v1435, 7
    %v1437 = vsub.s32 0, %v1436
    %v1438 = vrot.slane %v1424, %v1437
    %v1439 = vlaneseq
    %v1440 = vshrl.u32 %v1439, 7
    %v1441 = vsub.s32 0, %v1440
    %v1442 = vrot.slane %v1425, %v1441
    %v1443 = vmul.f32 %v1433, %v1438
    %v1444 = vmul.f32 %v1433, %v1442
    %v1445 = vadd.f32 %v1151, %v1443
    %v1446 = vadd.f32 %v1152, %v1444
    %s1447 = scalar_lea.vmem %s5, 68
    %v1448 = vld [vmem:[%s1447] sm:$0xf]
    %1450 = vset.pattern.permute.xlu0 0
    %1451 = vperm.xlu0 %1450, %v1448
    %v1452 = vpop.permute.xlu0 %1451
    %v1454 = vlaneseq
    %v1455 = vshrl.u32 %v1454, 7
    %v1456 = vsub.s32 1, %v1455
    %v1457 = vrot.slane %v1424, %v1456
    %v1458 = vlaneseq
    %v1459 = vshrl.u32 %v1458, 7
    %v1460 = vsub.s32 1, %v1459
    %v1461 = vrot.slane %v1425, %v1460
    %v1462 = vmul.f32 %v1452, %v1457
    %v1463 = vmul.f32 %v1452, %v1461
    %v1464 = vadd.f32 %v1445, %v1462
    %v1465 = vadd.f32 %v1446, %v1463
    %s1466 = scalar_lea.vmem %s5, 72
    %v1467 = vld [vmem:[%s1466] sm:$0xf]
    %1469 = vset.pattern.permute.xlu0 0
    %1470 = vperm.xlu0 %1469, %v1467
    %v1471 = vpop.permute.xlu0 %1470
    %v1473 = vlaneseq
    %v1474 = vshrl.u32 %v1473, 7
    %v1475 = vsub.s32 2, %v1474
    %v1476 = vrot.slane %v1424, %v1475
    %v1477 = vlaneseq
    %v1478 = vshrl.u32 %v1477, 7
    %v1479 = vsub.s32 2, %v1478
    %v1480 = vrot.slane %v1425, %v1479
    %v1481 = vmul.f32 %v1471, %v1476
    %v1482 = vmul.f32 %v1471, %v1480
    %v1483 = vadd.f32 %v1464, %v1481
    %v1484 = vadd.f32 %v1465, %v1482
    %s1485 = scalar_lea.vmem %s5, 76
    %v1486 = vld [vmem:[%s1485] sm:$0xf]
    %1488 = vset.pattern.permute.xlu0 0
    %1489 = vperm.xlu0 %1488, %v1486
    %v1490 = vpop.permute.xlu0 %1489
    %v1492 = vlaneseq
    %v1493 = vshrl.u32 %v1492, 7
    %v1494 = vsub.s32 3, %v1493
    %v1495 = vrot.slane %v1424, %v1494
    %v1496 = vlaneseq
    %v1497 = vshrl.u32 %v1496, 7
    %v1498 = vsub.s32 3, %v1497
    %v1499 = vrot.slane %v1425, %v1498
    %v1500 = vmul.f32 %v1490, %v1495
    %v1501 = vmul.f32 %v1490, %v1499
    %v1502 = vadd.f32 %v1483, %v1500
    %v1503 = vadd.f32 %v1484, %v1501
    %s1504 = scalar_lea.vmem %s5, 80
    %v1505 = vld [vmem:[%s1504] sm:$0xf]
    %1507 = vset.pattern.permute.xlu0 0
    %1508 = vperm.xlu0 %1507, %v1505
    %v1509 = vpop.permute.xlu0 %1508
    %v1511 = vlaneseq
    %v1512 = vshrl.u32 %v1511, 7
    %v1513 = vsub.s32 4, %v1512
    %v1514 = vrot.slane %v1424, %v1513
    %v1515 = vlaneseq
    %v1516 = vshrl.u32 %v1515, 7
    %v1517 = vsub.s32 4, %v1516
    %v1518 = vrot.slane %v1425, %v1517
    %v1519 = vmul.f32 %v1509, %v1514
    %v1520 = vmul.f32 %v1509, %v1518
    %v1521 = vadd.f32 %v1502, %v1519
    %v1522 = vadd.f32 %v1503, %v1520
    %s1523 = scalar_lea.vmem %s5, 84
    %v1524 = vld [vmem:[%s1523] sm:$0xf]
    %1526 = vset.pattern.permute.xlu0 0
    %1527 = vperm.xlu0 %1526, %v1524
    %v1528 = vpop.permute.xlu0 %1527
    %v1530 = vlaneseq
    %v1531 = vshrl.u32 %v1530, 7
    %v1532 = vsub.s32 5, %v1531
    %v1533 = vrot.slane %v1424, %v1532
    %v1534 = vlaneseq
    %v1535 = vshrl.u32 %v1534, 7
    %v1536 = vsub.s32 5, %v1535
    %v1537 = vrot.slane %v1425, %v1536
    %v1538 = vmul.f32 %v1528, %v1533
    %v1539 = vmul.f32 %v1528, %v1537
    %v1540 = vadd.f32 %v1521, %v1538
    %v1541 = vadd.f32 %v1522, %v1539
    %s1542 = scalar_lea.vmem %s5, 88
    %v1543 = vld [vmem:[%s1542] sm:$0xf]
    %1545 = vset.pattern.permute.xlu0 0
    %1546 = vperm.xlu0 %1545, %v1543
    %v1547 = vpop.permute.xlu0 %1546
    %v1549 = vlaneseq
    %v1550 = vshrl.u32 %v1549, 7
    %v1551 = vsub.s32 6, %v1550
    %v1552 = vrot.slane %v1424, %v1551
    %v1553 = vlaneseq
    %v1554 = vshrl.u32 %v1553, 7
    %v1555 = vsub.s32 6, %v1554
    %v1556 = vrot.slane %v1425, %v1555
    %v1557 = vmul.f32 %v1547, %v1552
    %v1558 = vmul.f32 %v1547, %v1556
    %v1559 = vadd.f32 %v1540, %v1557
    %v1560 = vadd.f32 %v1541, %v1558
    %s1561 = scalar_lea.vmem %s5, 92
    %v1562 = vld [vmem:[%s1561] sm:$0xf]
    %1564 = vset.pattern.permute.xlu0 0
    %1565 = vperm.xlu0 %1564, %v1562
    %v1566 = vpop.permute.xlu0 %1565
    %v1568 = vlaneseq
    %v1569 = vshrl.u32 %v1568, 7
    %v1570 = vsub.s32 7, %v1569
    %v1571 = vrot.slane %v1424, %v1570
    %v1572 = vlaneseq
    %v1573 = vshrl.u32 %v1572, 7
    %v1574 = vsub.s32 7, %v1573
    %v1575 = vrot.slane %v1425, %v1574
    %v1576 = vmul.f32 %v1566, %v1571
    %v1577 = vmul.f32 %v1566, %v1575
    %v1578 = vadd.f32 %v1559, %v1576
    %v1579 = vadd.f32 %v1560, %v1577
    %v1580 = vlaneseq
    %v1581 = vshrl.u32 %v1580, 7
    %v1582 = vsub.s32 0, %v1581
    %v1583 = vrot.slane %v1426, %v1582
    %v1584 = vlaneseq
    %v1585 = vshrl.u32 %v1584, 7
    %v1586 = vsub.s32 0, %v1585
    %v1587 = vrot.slane %v1427, %v1586
    %v1588 = vmul.f32 %v1433, %v1583
    %v1589 = vmul.f32 %v1433, %v1587
    %v1590 = vadd.f32 %v1391, %v1588
    %v1591 = vadd.f32 %v1392, %v1589
    %v1592 = vlaneseq
    %v1593 = vshrl.u32 %v1592, 7
    %v1594 = vsub.s32 1, %v1593
    %v1595 = vrot.slane %v1426, %v1594
    %v1596 = vlaneseq
    %v1597 = vshrl.u32 %v1596, 7
    %v1598 = vsub.s32 1, %v1597
    %v1599 = vrot.slane %v1427, %v1598
    %v1600 = vmul.f32 %v1452, %v1595
    %v1601 = vmul.f32 %v1452, %v1599
    %v1602 = vadd.f32 %v1590, %v1600
    %v1603 = vadd.f32 %v1591, %v1601
    %v1604 = vlaneseq
    %v1605 = vshrl.u32 %v1604, 7
    %v1606 = vsub.s32 2, %v1605
    %v1607 = vrot.slane %v1426, %v1606
    %v1608 = vlaneseq
    %v1609 = vshrl.u32 %v1608, 7
    %v1610 = vsub.s32 2, %v1609
    %v1611 = vrot.slane %v1427, %v1610
    %v1612 = vmul.f32 %v1471, %v1607
    %v1613 = vmul.f32 %v1471, %v1611
    %v1614 = vadd.f32 %v1602, %v1612
    %v1615 = vadd.f32 %v1603, %v1613
    %v1616 = vlaneseq
    %v1617 = vshrl.u32 %v1616, 7
    %v1618 = vsub.s32 3, %v1617
    %v1619 = vrot.slane %v1426, %v1618
    %v1620 = vlaneseq
    %v1621 = vshrl.u32 %v1620, 7
    %v1622 = vsub.s32 3, %v1621
    %v1623 = vrot.slane %v1427, %v1622
    %v1624 = vmul.f32 %v1490, %v1619
    %v1625 = vmul.f32 %v1490, %v1623
    %v1626 = vadd.f32 %v1614, %v1624
    %v1627 = vadd.f32 %v1615, %v1625
    %v1628 = vlaneseq
    %v1629 = vshrl.u32 %v1628, 7
    %v1630 = vsub.s32 4, %v1629
    %v1631 = vrot.slane %v1426, %v1630
    %v1632 = vlaneseq
    %v1633 = vshrl.u32 %v1632, 7
    %v1634 = vsub.s32 4, %v1633
    %v1635 = vrot.slane %v1427, %v1634
    %v1636 = vmul.f32 %v1509, %v1631
    %v1637 = vmul.f32 %v1509, %v1635
    %v1638 = vadd.f32 %v1626, %v1636
    %v1639 = vadd.f32 %v1627, %v1637
    %v1640 = vlaneseq
    %v1641 = vshrl.u32 %v1640, 7
    %v1642 = vsub.s32 5, %v1641
    %v1643 = vrot.slane %v1426, %v1642
    %v1644 = vlaneseq
    %v1645 = vshrl.u32 %v1644, 7
    %v1646 = vsub.s32 5, %v1645
    %v1647 = vrot.slane %v1427, %v1646
    %v1648 = vmul.f32 %v1528, %v1643
    %v1649 = vmul.f32 %v1528, %v1647
    %v1650 = vadd.f32 %v1638, %v1648
    %v1651 = vadd.f32 %v1639, %v1649
    %v1652 = vlaneseq
    %v1653 = vshrl.u32 %v1652, 7
    %v1654 = vsub.s32 6, %v1653
    %v1655 = vrot.slane %v1426, %v1654
    %v1656 = vlaneseq
    %v1657 = vshrl.u32 %v1656, 7
    %v1658 = vsub.s32 6, %v1657
    %v1659 = vrot.slane %v1427, %v1658
    %v1660 = vmul.f32 %v1547, %v1655
    %v1661 = vmul.f32 %v1547, %v1659
    %v1662 = vadd.f32 %v1650, %v1660
    %v1663 = vadd.f32 %v1651, %v1661
    %v1664 = vlaneseq
    %v1665 = vshrl.u32 %v1664, 7
    %v1666 = vsub.s32 7, %v1665
    %v1667 = vrot.slane %v1426, %v1666
    %v1668 = vlaneseq
    %v1669 = vshrl.u32 %v1668, 7
    %v1670 = vsub.s32 7, %v1669
    %v1671 = vrot.slane %v1427, %v1670
    %v1672 = vmul.f32 %v1566, %v1667
    %v1673 = vmul.f32 %v1566, %v1671
    %v1674 = vadd.f32 %v1662, %v1672
    %v1675 = vadd.f32 %v1663, %v1673
    %1676 = vrot.lane.b32.xlu0 %v850, 112
    %v1677 = vpop.permute.xlu0 %1676
    %1678 = vrot.lane.b32.xlu0 %v851, 112
    %v1679 = vpop.permute.xlu0 %1678
    %1680 = vrot.lane.b32.xlu0 %v852, 112
    %v1681 = vpop.permute.xlu0 %1680
    %1682 = vrot.lane.b32.xlu0 %v853, 112
    %v1683 = vpop.permute.xlu0 %1682
    %1684 = vrot.lane.b32.xlu0 %v854, 112
    %v1685 = vpop.permute.xlu0 %1684
    %1686 = vrot.lane.b32.xlu0 %v855, 112
    %v1687 = vpop.permute.xlu0 %1686
    %vm1688 = vcmask 916480
    %v1689 = vsel %vm1688, %v1677, %v1679
    %v1690 = vsel %vm1688, %v1679, %v1681
    %v1691 = vsel %vm1688, %v1683, %v1685
    %v1692 = vsel %vm1688, %v1685, %v1687
    %v1697 = vsel %vm597, %v1689, 0.0
    %v1698 = vsel %vm598, %v1690, 0.0
    %v1699 = vsel %vm597, %v1691, 0.0
    %v1700 = vsel %vm598, %v1692, 0.0
    %s1701 = scalar_lea.vmem %s5, 96
    %v1702 = vld [vmem:[%s1701] sm:$0xf]
    %1704 = vset.pattern.permute.xlu0 0
    %1705 = vperm.xlu0 %1704, %v1702
    %v1706 = vpop.permute.xlu0 %1705
    %v1708 = vlaneseq
    %v1709 = vshrl.u32 %v1708, 7
    %v1710 = vsub.s32 0, %v1709
    %v1711 = vrot.slane %v1697, %v1710
    %v1712 = vlaneseq
    %v1713 = vshrl.u32 %v1712, 7
    %v1714 = vsub.s32 0, %v1713
    %v1715 = vrot.slane %v1698, %v1714
    %v1716 = vmul.f32 %v1706, %v1711
    %v1717 = vmul.f32 %v1706, %v1715
    %v1718 = vadd.f32 %v1578, %v1716
    %v1719 = vadd.f32 %v1579, %v1717
    %s1720 = scalar_lea.vmem %s5, 100
    %v1721 = vld [vmem:[%s1720] sm:$0xf]
    %1723 = vset.pattern.permute.xlu0 0
    %1724 = vperm.xlu0 %1723, %v1721
    %v1725 = vpop.permute.xlu0 %1724
    %v1727 = vlaneseq
    %v1728 = vshrl.u32 %v1727, 7
    %v1729 = vsub.s32 1, %v1728
    %v1730 = vrot.slane %v1697, %v1729
    %v1731 = vlaneseq
    %v1732 = vshrl.u32 %v1731, 7
    %v1733 = vsub.s32 1, %v1732
    %v1734 = vrot.slane %v1698, %v1733
    %v1735 = vmul.f32 %v1725, %v1730
    %v1736 = vmul.f32 %v1725, %v1734
    %v1737 = vadd.f32 %v1718, %v1735
    %v1738 = vadd.f32 %v1719, %v1736
    %s1739 = scalar_lea.vmem %s5, 104
    %v1740 = vld [vmem:[%s1739] sm:$0xf]
    %1742 = vset.pattern.permute.xlu0 0
    %1743 = vperm.xlu0 %1742, %v1740
    %v1744 = vpop.permute.xlu0 %1743
    %v1746 = vlaneseq
    %v1747 = vshrl.u32 %v1746, 7
    %v1748 = vsub.s32 2, %v1747
    %v1749 = vrot.slane %v1697, %v1748
    %v1750 = vlaneseq
    %v1751 = vshrl.u32 %v1750, 7
    %v1752 = vsub.s32 2, %v1751
    %v1753 = vrot.slane %v1698, %v1752
    %v1754 = vmul.f32 %v1744, %v1749
    %v1755 = vmul.f32 %v1744, %v1753
    %v1756 = vadd.f32 %v1737, %v1754
    %v1757 = vadd.f32 %v1738, %v1755
    %s1758 = scalar_lea.vmem %s5, 108
    %v1759 = vld [vmem:[%s1758] sm:$0xf]
    %1761 = vset.pattern.permute.xlu0 0
    %1762 = vperm.xlu0 %1761, %v1759
    %v1763 = vpop.permute.xlu0 %1762
    %v1765 = vlaneseq
    %v1766 = vshrl.u32 %v1765, 7
    %v1767 = vsub.s32 3, %v1766
    %v1768 = vrot.slane %v1697, %v1767
    %v1769 = vlaneseq
    %v1770 = vshrl.u32 %v1769, 7
    %v1771 = vsub.s32 3, %v1770
    %v1772 = vrot.slane %v1698, %v1771
    %v1773 = vmul.f32 %v1763, %v1768
    %v1774 = vmul.f32 %v1763, %v1772
    %v1775 = vadd.f32 %v1756, %v1773
    %v1776 = vadd.f32 %v1757, %v1774
    %s1777 = scalar_lea.vmem %s5, 112
    %v1778 = vld [vmem:[%s1777] sm:$0xf]
    %1780 = vset.pattern.permute.xlu0 0
    %1781 = vperm.xlu0 %1780, %v1778
    %v1782 = vpop.permute.xlu0 %1781
    %v1784 = vlaneseq
    %v1785 = vshrl.u32 %v1784, 7
    %v1786 = vsub.s32 4, %v1785
    %v1787 = vrot.slane %v1697, %v1786
    %v1788 = vlaneseq
    %v1789 = vshrl.u32 %v1788, 7
    %v1790 = vsub.s32 4, %v1789
    %v1791 = vrot.slane %v1698, %v1790
    %v1792 = vmul.f32 %v1782, %v1787
    %v1793 = vmul.f32 %v1782, %v1791
    %v1794 = vadd.f32 %v1775, %v1792
    %v1795 = vadd.f32 %v1776, %v1793
    %s1796 = scalar_lea.vmem %s5, 116
    %v1797 = vld [vmem:[%s1796] sm:$0xf]
    %1799 = vset.pattern.permute.xlu0 0
    %1800 = vperm.xlu0 %1799, %v1797
    %v1801 = vpop.permute.xlu0 %1800
    %v1803 = vlaneseq
    %v1804 = vshrl.u32 %v1803, 7
    %v1805 = vsub.s32 5, %v1804
    %v1806 = vrot.slane %v1697, %v1805
    %v1807 = vlaneseq
    %v1808 = vshrl.u32 %v1807, 7
    %v1809 = vsub.s32 5, %v1808
    %v1810 = vrot.slane %v1698, %v1809
    %v1811 = vmul.f32 %v1801, %v1806
    %v1812 = vmul.f32 %v1801, %v1810
    %v1813 = vadd.f32 %v1794, %v1811
    %v1814 = vadd.f32 %v1795, %v1812
    %s1815 = scalar_lea.vmem %s5, 120
    %v1816 = vld [vmem:[%s1815] sm:$0xf]
    %1818 = vset.pattern.permute.xlu0 0
    %1819 = vperm.xlu0 %1818, %v1816
    %v1820 = vpop.permute.xlu0 %1819
    %v1822 = vlaneseq
    %v1823 = vshrl.u32 %v1822, 7
    %v1824 = vsub.s32 6, %v1823
    %v1825 = vrot.slane %v1697, %v1824
    %v1826 = vlaneseq
    %v1827 = vshrl.u32 %v1826, 7
    %v1828 = vsub.s32 6, %v1827
    %v1829 = vrot.slane %v1698, %v1828
    %v1830 = vmul.f32 %v1820, %v1825
    %v1831 = vmul.f32 %v1820, %v1829
    %v1832 = vadd.f32 %v1813, %v1830
    %v1833 = vadd.f32 %v1814, %v1831
    %s1834 = scalar_lea.vmem %s5, 124
    %v1835 = vld [vmem:[%s1834] sm:$0xf]
    %1837 = vset.pattern.permute.xlu0 0
    %1838 = vperm.xlu0 %1837, %v1835
    %v1839 = vpop.permute.xlu0 %1838
    %v1841 = vlaneseq
    %v1842 = vshrl.u32 %v1841, 7
    %v1843 = vsub.s32 7, %v1842
    %v1844 = vrot.slane %v1697, %v1843
    %v1845 = vlaneseq
    %v1846 = vshrl.u32 %v1845, 7
    %v1847 = vsub.s32 7, %v1846
    %v1848 = vrot.slane %v1698, %v1847
    %v1849 = vmul.f32 %v1839, %v1844
    %v1850 = vmul.f32 %v1839, %v1848
    %v1851 = vadd.f32 %v1832, %v1849
    %v1852 = vadd.f32 %v1833, %v1850
    %v1853 = vlaneseq
    %v1854 = vshrl.u32 %v1853, 7
    %v1855 = vsub.s32 0, %v1854
    %v1856 = vrot.slane %v1699, %v1855
    %v1857 = vlaneseq
    %v1858 = vshrl.u32 %v1857, 7
    %v1859 = vsub.s32 0, %v1858
    %v1860 = vrot.slane %v1700, %v1859
    %v1861 = vmul.f32 %v1706, %v1856
    %v1862 = vmul.f32 %v1706, %v1860
    %v1863 = vadd.f32 %v1674, %v1861
    %v1864 = vadd.f32 %v1675, %v1862
    %v1865 = vlaneseq
    %v1866 = vshrl.u32 %v1865, 7
    %v1867 = vsub.s32 1, %v1866
    %v1868 = vrot.slane %v1699, %v1867
    %v1869 = vlaneseq
    %v1870 = vshrl.u32 %v1869, 7
    %v1871 = vsub.s32 1, %v1870
    %v1872 = vrot.slane %v1700, %v1871
    %v1873 = vmul.f32 %v1725, %v1868
    %v1874 = vmul.f32 %v1725, %v1872
    %v1875 = vadd.f32 %v1863, %v1873
    %v1876 = vadd.f32 %v1864, %v1874
    %v1877 = vlaneseq
    %v1878 = vshrl.u32 %v1877, 7
    %v1879 = vsub.s32 2, %v1878
    %v1880 = vrot.slane %v1699, %v1879
    %v1881 = vlaneseq
    %v1882 = vshrl.u32 %v1881, 7
    %v1883 = vsub.s32 2, %v1882
    %v1884 = vrot.slane %v1700, %v1883
    %v1885 = vmul.f32 %v1744, %v1880
    %v1886 = vmul.f32 %v1744, %v1884
    %v1887 = vadd.f32 %v1875, %v1885
    %v1888 = vadd.f32 %v1876, %v1886
    %v1889 = vlaneseq
    %v1890 = vshrl.u32 %v1889, 7
    %v1891 = vsub.s32 3, %v1890
    %v1892 = vrot.slane %v1699, %v1891
    %v1893 = vlaneseq
    %v1894 = vshrl.u32 %v1893, 7
    %v1895 = vsub.s32 3, %v1894
    %v1896 = vrot.slane %v1700, %v1895
    %v1897 = vmul.f32 %v1763, %v1892
    %v1898 = vmul.f32 %v1763, %v1896
    %v1899 = vadd.f32 %v1887, %v1897
    %v1900 = vadd.f32 %v1888, %v1898
    %v1901 = vlaneseq
    %v1902 = vshrl.u32 %v1901, 7
    %v1903 = vsub.s32 4, %v1902
    %v1904 = vrot.slane %v1699, %v1903
    %v1905 = vlaneseq
    %v1906 = vshrl.u32 %v1905, 7
    %v1907 = vsub.s32 4, %v1906
    %v1908 = vrot.slane %v1700, %v1907
    %v1909 = vmul.f32 %v1782, %v1904
    %v1910 = vmul.f32 %v1782, %v1908
    %v1911 = vadd.f32 %v1899, %v1909
    %v1912 = vadd.f32 %v1900, %v1910
    %v1913 = vlaneseq
    %v1914 = vshrl.u32 %v1913, 7
    %v1915 = vsub.s32 5, %v1914
    %v1916 = vrot.slane %v1699, %v1915
    %v1917 = vlaneseq
    %v1918 = vshrl.u32 %v1917, 7
    %v1919 = vsub.s32 5, %v1918
    %v1920 = vrot.slane %v1700, %v1919
    %v1921 = vmul.f32 %v1801, %v1916
    %v1922 = vmul.f32 %v1801, %v1920
    %v1923 = vadd.f32 %v1911, %v1921
    %v1924 = vadd.f32 %v1912, %v1922
    %v1925 = vlaneseq
    %v1926 = vshrl.u32 %v1925, 7
    %v1927 = vsub.s32 6, %v1926
    %v1928 = vrot.slane %v1699, %v1927
    %v1929 = vlaneseq
    %v1930 = vshrl.u32 %v1929, 7
    %v1931 = vsub.s32 6, %v1930
    %v1932 = vrot.slane %v1700, %v1931
    %v1933 = vmul.f32 %v1820, %v1928
    %v1934 = vmul.f32 %v1820, %v1932
    %v1935 = vadd.f32 %v1923, %v1933
    %v1936 = vadd.f32 %v1924, %v1934
    %v1937 = vlaneseq
    %v1938 = vshrl.u32 %v1937, 7
    %v1939 = vsub.s32 7, %v1938
    %v1940 = vrot.slane %v1699, %v1939
    %v1941 = vlaneseq
    %v1942 = vshrl.u32 %v1941, 7
    %v1943 = vsub.s32 7, %v1942
    %v1944 = vrot.slane %v1700, %v1943
    %v1945 = vmul.f32 %v1839, %v1940
    %v1946 = vmul.f32 %v1839, %v1944
    %v1947 = vadd.f32 %v1935, %v1945
    %v1948 = vadd.f32 %v1936, %v1946
    %s1949 = scalar_lea.vmem %s5, 128
    %v1950 = vld [vmem:[%s1949] sm:$0xf]
    %1952 = vset.pattern.permute.xlu0 0
    %1953 = vperm.xlu0 %1952, %v1950
    %v1954 = vpop.permute.xlu0 %1953
    %v1956 = vmul.f32 %v1954, %v866
    %v1957 = vmul.f32 %v1954, %v870
    %v1958 = vmul.f32 %v1954, %v874
    %1962 = vrot.lane.b32.xlu0 %v1956, 111
    %v1963 = vpop.permute.xlu0 %1962
    %1964 = vrot.lane.b32.xlu0 %v1957, 111
    %v1965 = vpop.permute.xlu0 %1964
    %1966 = vrot.lane.b32.xlu0 %v1958, 111
    %v1967 = vpop.permute.xlu0 %1966
    %vm1968 = vcmask 908288
    %v1969 = vsel %vm1968, %v1963, %v1965
    %v1970 = vsel %vm1968, %v1965, %v1967
    %v1973 = vadd.f32 %v1851, %v1969
    %v1974 = vadd.f32 %v1852, %v1970
    %s1975 = scalar_lea.vmem %s5, 132
    %v1976 = vld [vmem:[%s1975] sm:$0xf]
    %1978 = vset.pattern.permute.xlu0 0
    %1979 = vperm.xlu0 %1978, %v1976
    %v1980 = vpop.permute.xlu0 %1979
    %v1982 = vmul.f32 %v1980, %v904
    %v1983 = vmul.f32 %v1980, %v908
    %v1984 = vmul.f32 %v1980, %v912
    %1988 = vrot.lane.b32.xlu0 %v1982, 111
    %v1989 = vpop.permute.xlu0 %1988
    %1990 = vrot.lane.b32.xlu0 %v1983, 111
    %v1991 = vpop.permute.xlu0 %1990
    %1992 = vrot.lane.b32.xlu0 %v1984, 111
    %v1993 = vpop.permute.xlu0 %1992
    %v1994 = vsel %vm1968, %v1989, %v1991
    %v1995 = vsel %vm1968, %v1991, %v1993
    %v1998 = vadd.f32 %v1973, %v1994
    %v1999 = vadd.f32 %v1974, %v1995
    %s2000 = scalar_lea.vmem %s5, 136
    %v2001 = vld [vmem:[%s2000] sm:$0xf]
    %2003 = vset.pattern.permute.xlu0 0
    %2004 = vperm.xlu0 %2003, %v2001
    %v2005 = vpop.permute.xlu0 %2004
    %v2007 = vmul.f32 %v2005, %v941
    %v2008 = vmul.f32 %v2005, %v945
    %v2009 = vmul.f32 %v2005, %v949
    %2013 = vrot.lane.b32.xlu0 %v2007, 111
    %v2014 = vpop.permute.xlu0 %2013
    %2015 = vrot.lane.b32.xlu0 %v2008, 111
    %v2016 = vpop.permute.xlu0 %2015
    %2017 = vrot.lane.b32.xlu0 %v2009, 111
    %v2018 = vpop.permute.xlu0 %2017
    %v2019 = vsel %vm1968, %v2014, %v2016
    %v2020 = vsel %vm1968, %v2016, %v2018
    %v2023 = vadd.f32 %v1998, %v2019
    %v2024 = vadd.f32 %v1999, %v2020
    %s2025 = scalar_lea.vmem %s5, 140
    %v2026 = vld [vmem:[%s2025] sm:$0xf]
    %2028 = vset.pattern.permute.xlu0 0
    %2029 = vperm.xlu0 %2028, %v2026
    %v2030 = vpop.permute.xlu0 %2029
    %v2032 = vmul.f32 %v2030, %v978
    %v2033 = vmul.f32 %v2030, %v982
    %v2034 = vmul.f32 %v2030, %v986
    %2038 = vrot.lane.b32.xlu0 %v2032, 111
    %v2039 = vpop.permute.xlu0 %2038
    %2040 = vrot.lane.b32.xlu0 %v2033, 111
    %v2041 = vpop.permute.xlu0 %2040
    %2042 = vrot.lane.b32.xlu0 %v2034, 111
    %v2043 = vpop.permute.xlu0 %2042
    %v2044 = vsel %vm1968, %v2039, %v2041
    %v2045 = vsel %vm1968, %v2041, %v2043
    %v2048 = vadd.f32 %v2023, %v2044
    %v2049 = vadd.f32 %v2024, %v2045
    %s2050 = scalar_lea.vmem %s5, 144
    %v2051 = vld [vmem:[%s2050] sm:$0xf]
    %2053 = vset.pattern.permute.xlu0 0
    %2054 = vperm.xlu0 %2053, %v2051
    %v2055 = vpop.permute.xlu0 %2054
    %v2057 = vmul.f32 %v2055, %v1015
    %v2058 = vmul.f32 %v2055, %v1019
    %v2059 = vmul.f32 %v2055, %v1023
    %2063 = vrot.lane.b32.xlu0 %v2057, 111
    %v2064 = vpop.permute.xlu0 %2063
    %2065 = vrot.lane.b32.xlu0 %v2058, 111
    %v2066 = vpop.permute.xlu0 %2065
    %2067 = vrot.lane.b32.xlu0 %v2059, 111
    %v2068 = vpop.permute.xlu0 %2067
    %v2069 = vsel %vm1968, %v2064, %v2066
    %v2070 = vsel %vm1968, %v2066, %v2068
    %v2073 = vadd.f32 %v2048, %v2069
    %v2074 = vadd.f32 %v2049, %v2070
    %s2075 = scalar_lea.vmem %s5, 148
    %v2076 = vld [vmem:[%s2075] sm:$0xf]
    %2078 = vset.pattern.permute.xlu0 0
    %2079 = vperm.xlu0 %2078, %v2076
    %v2080 = vpop.permute.xlu0 %2079
    %v2082 = vmul.f32 %v2080, %v1052
    %v2083 = vmul.f32 %v2080, %v1056
    %v2084 = vmul.f32 %v2080, %v1060
    %2088 = vrot.lane.b32.xlu0 %v2082, 111
    %v2089 = vpop.permute.xlu0 %2088
    %2090 = vrot.lane.b32.xlu0 %v2083, 111
    %v2091 = vpop.permute.xlu0 %2090
    %2092 = vrot.lane.b32.xlu0 %v2084, 111
    %v2093 = vpop.permute.xlu0 %2092
    %v2094 = vsel %vm1968, %v2089, %v2091
    %v2095 = vsel %vm1968, %v2091, %v2093
    %v2098 = vadd.f32 %v2073, %v2094
    %v2099 = vadd.f32 %v2074, %v2095
    %s2100 = scalar_lea.vmem %s5, 152
    %v2101 = vld [vmem:[%s2100] sm:$0xf]
    %2103 = vset.pattern.permute.xlu0 0
    %2104 = vperm.xlu0 %2103, %v2101
    %v2105 = vpop.permute.xlu0 %2104
    %v2107 = vmul.f32 %v2105, %v1089
    %v2108 = vmul.f32 %v2105, %v1093
    %v2109 = vmul.f32 %v2105, %v1097
    %2113 = vrot.lane.b32.xlu0 %v2107, 111
    %v2114 = vpop.permute.xlu0 %2113
    %2115 = vrot.lane.b32.xlu0 %v2108, 111
    %v2116 = vpop.permute.xlu0 %2115
    %2117 = vrot.lane.b32.xlu0 %v2109, 111
    %v2118 = vpop.permute.xlu0 %2117
    %v2119 = vsel %vm1968, %v2114, %v2116
    %v2120 = vsel %vm1968, %v2116, %v2118
    %v2123 = vadd.f32 %v2098, %v2119
    %v2124 = vadd.f32 %v2099, %v2120
    %s2125 = scalar_lea.vmem %s5, 156
    %v2126 = vld [vmem:[%s2125] sm:$0xf]
    %2128 = vset.pattern.permute.xlu0 0
    %2129 = vperm.xlu0 %2128, %v2126
    %v2130 = vpop.permute.xlu0 %2129
    %v2132 = vmul.f32 %v2130, %v1126
    %v2133 = vmul.f32 %v2130, %v1130
    %v2134 = vmul.f32 %v2130, %v1134
    %2138 = vrot.lane.b32.xlu0 %v2132, 111
    %v2139 = vpop.permute.xlu0 %2138
    %2140 = vrot.lane.b32.xlu0 %v2133, 111
    %v2141 = vpop.permute.xlu0 %2140
    %2142 = vrot.lane.b32.xlu0 %v2134, 111
    %v2143 = vpop.permute.xlu0 %2142
    %v2144 = vsel %vm1968, %v2139, %v2141
    %v2145 = vsel %vm1968, %v2141, %v2143
    %v2148 = vadd.f32 %v2123, %v2144
    %v2149 = vadd.f32 %v2124, %v2145
    %v2150 = vmul.f32 %v1954, %v1156
    %v2151 = vmul.f32 %v1954, %v1160
    %v2152 = vmul.f32 %v1954, %v1164
    %2156 = vrot.lane.b32.xlu0 %v2150, 111
    %v2157 = vpop.permute.xlu0 %2156
    %2158 = vrot.lane.b32.xlu0 %v2151, 111
    %v2159 = vpop.permute.xlu0 %2158
    %2160 = vrot.lane.b32.xlu0 %v2152, 111
    %v2161 = vpop.permute.xlu0 %2160
    %v2162 = vsel %vm1968, %v2157, %v2159
    %v2163 = vsel %vm1968, %v2159, %v2161
    %v2166 = vadd.f32 %v1947, %v2162
    %v2167 = vadd.f32 %v1948, %v2163
    %v2168 = vmul.f32 %v1980, %v1186
    %v2169 = vmul.f32 %v1980, %v1190
    %v2170 = vmul.f32 %v1980, %v1194
    %2174 = vrot.lane.b32.xlu0 %v2168, 111
    %v2175 = vpop.permute.xlu0 %2174
    %2176 = vrot.lane.b32.xlu0 %v2169, 111
    %v2177 = vpop.permute.xlu0 %2176
    %2178 = vrot.lane.b32.xlu0 %v2170, 111
    %v2179 = vpop.permute.xlu0 %2178
    %v2180 = vsel %vm1968, %v2175, %v2177
    %v2181 = vsel %vm1968, %v2177, %v2179
    %v2184 = vadd.f32 %v2166, %v2180
    %v2185 = vadd.f32 %v2167, %v2181
    %v2186 = vmul.f32 %v2005, %v1216
    %v2187 = vmul.f32 %v2005, %v1220
    %v2188 = vmul.f32 %v2005, %v1224
    %2192 = vrot.lane.b32.xlu0 %v2186, 111
    %v2193 = vpop.permute.xlu0 %2192
    %2194 = vrot.lane.b32.xlu0 %v2187, 111
    %v2195 = vpop.permute.xlu0 %2194
    %2196 = vrot.lane.b32.xlu0 %v2188, 111
    %v2197 = vpop.permute.xlu0 %2196
    %v2198 = vsel %vm1968, %v2193, %v2195
    %v2199 = vsel %vm1968, %v2195, %v2197
    %v2202 = vadd.f32 %v2184, %v2198
    %v2203 = vadd.f32 %v2185, %v2199
    %v2204 = vmul.f32 %v2030, %v1246
    %v2205 = vmul.f32 %v2030, %v1250
    %v2206 = vmul.f32 %v2030, %v1254
    %2210 = vrot.lane.b32.xlu0 %v2204, 111
    %v2211 = vpop.permute.xlu0 %2210
    %2212 = vrot.lane.b32.xlu0 %v2205, 111
    %v2213 = vpop.permute.xlu0 %2212
    %2214 = vrot.lane.b32.xlu0 %v2206, 111
    %v2215 = vpop.permute.xlu0 %2214
    %v2216 = vsel %vm1968, %v2211, %v2213
    %v2217 = vsel %vm1968, %v2213, %v2215
    %v2220 = vadd.f32 %v2202, %v2216
    %v2221 = vadd.f32 %v2203, %v2217
    %v2222 = vmul.f32 %v2055, %v1276
    %v2223 = vmul.f32 %v2055, %v1280
    %v2224 = vmul.f32 %v2055, %v1284
    %2228 = vrot.lane.b32.xlu0 %v2222, 111
    %v2229 = vpop.permute.xlu0 %2228
    %2230 = vrot.lane.b32.xlu0 %v2223, 111
    %v2231 = vpop.permute.xlu0 %2230
    %2232 = vrot.lane.b32.xlu0 %v2224, 111
    %v2233 = vpop.permute.xlu0 %2232
    %v2234 = vsel %vm1968, %v2229, %v2231
    %v2235 = vsel %vm1968, %v2231, %v2233
    %v2238 = vadd.f32 %v2220, %v2234
    %v2239 = vadd.f32 %v2221, %v2235
    %v2240 = vmul.f32 %v2080, %v1306
    %v2241 = vmul.f32 %v2080, %v1310
    %v2242 = vmul.f32 %v2080, %v1314
    %2246 = vrot.lane.b32.xlu0 %v2240, 111
    %v2247 = vpop.permute.xlu0 %2246
    %2248 = vrot.lane.b32.xlu0 %v2241, 111
    %v2249 = vpop.permute.xlu0 %2248
    %2250 = vrot.lane.b32.xlu0 %v2242, 111
    %v2251 = vpop.permute.xlu0 %2250
    %v2252 = vsel %vm1968, %v2247, %v2249
    %v2253 = vsel %vm1968, %v2249, %v2251
    %v2256 = vadd.f32 %v2238, %v2252
    %v2257 = vadd.f32 %v2239, %v2253
    %v2258 = vmul.f32 %v2105, %v1336
    %v2259 = vmul.f32 %v2105, %v1340
    %v2260 = vmul.f32 %v2105, %v1344
    %2264 = vrot.lane.b32.xlu0 %v2258, 111
    %v2265 = vpop.permute.xlu0 %2264
    %2266 = vrot.lane.b32.xlu0 %v2259, 111
    %v2267 = vpop.permute.xlu0 %2266
    %2268 = vrot.lane.b32.xlu0 %v2260, 111
    %v2269 = vpop.permute.xlu0 %2268
    %v2270 = vsel %vm1968, %v2265, %v2267
    %v2271 = vsel %vm1968, %v2267, %v2269
    %v2274 = vadd.f32 %v2256, %v2270
    %v2275 = vadd.f32 %v2257, %v2271
    %v2276 = vmul.f32 %v2130, %v1366
    %v2277 = vmul.f32 %v2130, %v1370
    %v2278 = vmul.f32 %v2130, %v1374
    %2282 = vrot.lane.b32.xlu0 %v2276, 111
    %v2283 = vpop.permute.xlu0 %2282
    %2284 = vrot.lane.b32.xlu0 %v2277, 111
    %v2285 = vpop.permute.xlu0 %2284
    %2286 = vrot.lane.b32.xlu0 %v2278, 111
    %v2287 = vpop.permute.xlu0 %2286
    %v2288 = vsel %vm1968, %v2283, %v2285
    %v2289 = vsel %vm1968, %v2285, %v2287
    %v2292 = vadd.f32 %v2274, %v2288
    %v2293 = vadd.f32 %v2275, %v2289
    %2294 = vrot.lane.b32.xlu0 %v850, 110
    %v2295 = vpop.permute.xlu0 %2294
    %2296 = vrot.lane.b32.xlu0 %v851, 110
    %v2297 = vpop.permute.xlu0 %2296
    %2298 = vrot.lane.b32.xlu0 %v852, 110
    %v2299 = vpop.permute.xlu0 %2298
    %2300 = vrot.lane.b32.xlu0 %v853, 110
    %v2301 = vpop.permute.xlu0 %2300
    %2302 = vrot.lane.b32.xlu0 %v854, 110
    %v2303 = vpop.permute.xlu0 %2302
    %2304 = vrot.lane.b32.xlu0 %v855, 110
    %v2305 = vpop.permute.xlu0 %2304
    %vm2306 = vcmask 900096
    %v2307 = vsel %vm2306, %v2295, %v2297
    %v2308 = vsel %vm2306, %v2297, %v2299
    %v2309 = vsel %vm2306, %v2301, %v2303
    %v2310 = vsel %vm2306, %v2303, %v2305
    %v2315 = vsel %vm1395, %v2307, 0.0
    %v2316 = vsel %vm1396, %v2308, 0.0
    %v2317 = vsel %vm1395, %v2309, 0.0
    %v2318 = vsel %vm1396, %v2310, 0.0
    %s2319 = scalar_lea.vmem %s5, 160
    %v2320 = vld [vmem:[%s2319] sm:$0xf]
    %2322 = vset.pattern.permute.xlu0 0
    %2323 = vperm.xlu0 %2322, %v2320
    %v2324 = vpop.permute.xlu0 %2323
    %v2326 = vlaneseq
    %v2327 = vshrl.u32 %v2326, 7
    %v2328 = vsub.s32 0, %v2327
    %v2329 = vrot.slane %v2315, %v2328
    %v2330 = vlaneseq
    %v2331 = vshrl.u32 %v2330, 7
    %v2332 = vsub.s32 0, %v2331
    %v2333 = vrot.slane %v2316, %v2332
    %v2334 = vmul.f32 %v2324, %v2329
    %v2335 = vmul.f32 %v2324, %v2333
    %v2336 = vadd.f32 %v2148, %v2334
    %v2337 = vadd.f32 %v2149, %v2335
    %s2338 = scalar_lea.vmem %s5, 164
    %v2339 = vld [vmem:[%s2338] sm:$0xf]
    %2341 = vset.pattern.permute.xlu0 0
    %2342 = vperm.xlu0 %2341, %v2339
    %v2343 = vpop.permute.xlu0 %2342
    %v2345 = vlaneseq
    %v2346 = vshrl.u32 %v2345, 7
    %v2347 = vsub.s32 1, %v2346
    %v2348 = vrot.slane %v2315, %v2347
    %v2349 = vlaneseq
    %v2350 = vshrl.u32 %v2349, 7
    %v2351 = vsub.s32 1, %v2350
    %v2352 = vrot.slane %v2316, %v2351
    %v2353 = vmul.f32 %v2343, %v2348
    %v2354 = vmul.f32 %v2343, %v2352
    %v2355 = vadd.f32 %v2336, %v2353
    %v2356 = vadd.f32 %v2337, %v2354
    %s2357 = scalar_lea.vmem %s5, 168
    %v2358 = vld [vmem:[%s2357] sm:$0xf]
    %2360 = vset.pattern.permute.xlu0 0
    %2361 = vperm.xlu0 %2360, %v2358
    %v2362 = vpop.permute.xlu0 %2361
    %v2364 = vlaneseq
    %v2365 = vshrl.u32 %v2364, 7
    %v2366 = vsub.s32 2, %v2365
    %v2367 = vrot.slane %v2315, %v2366
    %v2368 = vlaneseq
    %v2369 = vshrl.u32 %v2368, 7
    %v2370 = vsub.s32 2, %v2369
    %v2371 = vrot.slane %v2316, %v2370
    %v2372 = vmul.f32 %v2362, %v2367
    %v2373 = vmul.f32 %v2362, %v2371
    %v2374 = vadd.f32 %v2355, %v2372
    %v2375 = vadd.f32 %v2356, %v2373
    %s2376 = scalar_lea.vmem %s5, 172
    %v2377 = vld [vmem:[%s2376] sm:$0xf]
    %2379 = vset.pattern.permute.xlu0 0
    %2380 = vperm.xlu0 %2379, %v2377
    %v2381 = vpop.permute.xlu0 %2380
    %v2383 = vlaneseq
    %v2384 = vshrl.u32 %v2383, 7
    %v2385 = vsub.s32 3, %v2384
    %v2386 = vrot.slane %v2315, %v2385
    %v2387 = vlaneseq
    %v2388 = vshrl.u32 %v2387, 7
    %v2389 = vsub.s32 3, %v2388
    %v2390 = vrot.slane %v2316, %v2389
    %v2391 = vmul.f32 %v2381, %v2386
    %v2392 = vmul.f32 %v2381, %v2390
    %v2393 = vadd.f32 %v2374, %v2391
    %v2394 = vadd.f32 %v2375, %v2392
    %s2395 = scalar_lea.vmem %s5, 176
    %v2396 = vld [vmem:[%s2395] sm:$0xf]
    %2398 = vset.pattern.permute.xlu0 0
    %2399 = vperm.xlu0 %2398, %v2396
    %v2400 = vpop.permute.xlu0 %2399
    %v2402 = vlaneseq
    %v2403 = vshrl.u32 %v2402, 7
    %v2404 = vsub.s32 4, %v2403
    %v2405 = vrot.slane %v2315, %v2404
    %v2406 = vlaneseq
    %v2407 = vshrl.u32 %v2406, 7
    %v2408 = vsub.s32 4, %v2407
    %v2409 = vrot.slane %v2316, %v2408
    %v2410 = vmul.f32 %v2400, %v2405
    %v2411 = vmul.f32 %v2400, %v2409
    %v2412 = vadd.f32 %v2393, %v2410
    %v2413 = vadd.f32 %v2394, %v2411
    %s2414 = scalar_lea.vmem %s5, 180
    %v2415 = vld [vmem:[%s2414] sm:$0xf]
    %2417 = vset.pattern.permute.xlu0 0
    %2418 = vperm.xlu0 %2417, %v2415
    %v2419 = vpop.permute.xlu0 %2418
    %v2421 = vlaneseq
    %v2422 = vshrl.u32 %v2421, 7
    %v2423 = vsub.s32 5, %v2422
    %v2424 = vrot.slane %v2315, %v2423
    %v2425 = vlaneseq
    %v2426 = vshrl.u32 %v2425, 7
    %v2427 = vsub.s32 5, %v2426
    %v2428 = vrot.slane %v2316, %v2427
    %v2429 = vmul.f32 %v2419, %v2424
    %v2430 = vmul.f32 %v2419, %v2428
    %v2431 = vadd.f32 %v2412, %v2429
    %v2432 = vadd.f32 %v2413, %v2430
    %s2433 = scalar_lea.vmem %s5, 184
    %v2434 = vld [vmem:[%s2433] sm:$0xf]
    %2436 = vset.pattern.permute.xlu0 0
    %2437 = vperm.xlu0 %2436, %v2434
    %v2438 = vpop.permute.xlu0 %2437
    %v2440 = vlaneseq
    %v2441 = vshrl.u32 %v2440, 7
    %v2442 = vsub.s32 6, %v2441
    %v2443 = vrot.slane %v2315, %v2442
    %v2444 = vlaneseq
    %v2445 = vshrl.u32 %v2444, 7
    %v2446 = vsub.s32 6, %v2445
    %v2447 = vrot.slane %v2316, %v2446
    %v2448 = vmul.f32 %v2438, %v2443
    %v2449 = vmul.f32 %v2438, %v2447
    %v2450 = vadd.f32 %v2431, %v2448
    %v2451 = vadd.f32 %v2432, %v2449
    %s2452 = scalar_lea.vmem %s5, 188
    %v2453 = vld [vmem:[%s2452] sm:$0xf]
    %2455 = vset.pattern.permute.xlu0 0
    %2456 = vperm.xlu0 %2455, %v2453
    %v2457 = vpop.permute.xlu0 %2456
    %v2459 = vlaneseq
    %v2460 = vshrl.u32 %v2459, 7
    %v2461 = vsub.s32 7, %v2460
    %v2462 = vrot.slane %v2315, %v2461
    %v2463 = vlaneseq
    %v2464 = vshrl.u32 %v2463, 7
    %v2465 = vsub.s32 7, %v2464
    %v2466 = vrot.slane %v2316, %v2465
    %v2467 = vmul.f32 %v2457, %v2462
    %v2468 = vmul.f32 %v2457, %v2466
    %v2469 = vadd.f32 %v2450, %v2467
    %v2470 = vadd.f32 %v2451, %v2468
    %v2471 = vlaneseq
    %v2472 = vshrl.u32 %v2471, 7
    %v2473 = vsub.s32 0, %v2472
    %v2474 = vrot.slane %v2317, %v2473
    %v2475 = vlaneseq
    %v2476 = vshrl.u32 %v2475, 7
    %v2477 = vsub.s32 0, %v2476
    %v2478 = vrot.slane %v2318, %v2477
    %v2479 = vmul.f32 %v2324, %v2474
    %v2480 = vmul.f32 %v2324, %v2478
    %v2481 = vadd.f32 %v2292, %v2479
    %v2482 = vadd.f32 %v2293, %v2480
    %v2483 = vlaneseq
    %v2484 = vshrl.u32 %v2483, 7
    %v2485 = vsub.s32 1, %v2484
    %v2486 = vrot.slane %v2317, %v2485
    %v2487 = vlaneseq
    %v2488 = vshrl.u32 %v2487, 7
    %v2489 = vsub.s32 1, %v2488
    %v2490 = vrot.slane %v2318, %v2489
    %v2491 = vmul.f32 %v2343, %v2486
    %v2492 = vmul.f32 %v2343, %v2490
    %v2493 = vadd.f32 %v2481, %v2491
    %v2494 = vadd.f32 %v2482, %v2492
    %v2495 = vlaneseq
    %v2496 = vshrl.u32 %v2495, 7
    %v2497 = vsub.s32 2, %v2496
    %v2498 = vrot.slane %v2317, %v2497
    %v2499 = vlaneseq
    %v2500 = vshrl.u32 %v2499, 7
    %v2501 = vsub.s32 2, %v2500
    %v2502 = vrot.slane %v2318, %v2501
    %v2503 = vmul.f32 %v2362, %v2498
    %v2504 = vmul.f32 %v2362, %v2502
    %v2505 = vadd.f32 %v2493, %v2503
    %v2506 = vadd.f32 %v2494, %v2504
    %v2507 = vlaneseq
    %v2508 = vshrl.u32 %v2507, 7
    %v2509 = vsub.s32 3, %v2508
    %v2510 = vrot.slane %v2317, %v2509
    %v2511 = vlaneseq
    %v2512 = vshrl.u32 %v2511, 7
    %v2513 = vsub.s32 3, %v2512
    %v2514 = vrot.slane %v2318, %v2513
    %v2515 = vmul.f32 %v2381, %v2510
    %v2516 = vmul.f32 %v2381, %v2514
    %v2517 = vadd.f32 %v2505, %v2515
    %v2518 = vadd.f32 %v2506, %v2516
    %v2519 = vlaneseq
    %v2520 = vshrl.u32 %v2519, 7
    %v2521 = vsub.s32 4, %v2520
    %v2522 = vrot.slane %v2317, %v2521
    %v2523 = vlaneseq
    %v2524 = vshrl.u32 %v2523, 7
    %v2525 = vsub.s32 4, %v2524
    %v2526 = vrot.slane %v2318, %v2525
    %v2527 = vmul.f32 %v2400, %v2522
    %v2528 = vmul.f32 %v2400, %v2526
    %v2529 = vadd.f32 %v2517, %v2527
    %v2530 = vadd.f32 %v2518, %v2528
    %v2531 = vlaneseq
    %v2532 = vshrl.u32 %v2531, 7
    %v2533 = vsub.s32 5, %v2532
    %v2534 = vrot.slane %v2317, %v2533
    %v2535 = vlaneseq
    %v2536 = vshrl.u32 %v2535, 7
    %v2537 = vsub.s32 5, %v2536
    %v2538 = vrot.slane %v2318, %v2537
    %v2539 = vmul.f32 %v2419, %v2534
    %v2540 = vmul.f32 %v2419, %v2538
    %v2541 = vadd.f32 %v2529, %v2539
    %v2542 = vadd.f32 %v2530, %v2540
    %v2543 = vlaneseq
    %v2544 = vshrl.u32 %v2543, 7
    %v2545 = vsub.s32 6, %v2544
    %v2546 = vrot.slane %v2317, %v2545
    %v2547 = vlaneseq
    %v2548 = vshrl.u32 %v2547, 7
    %v2549 = vsub.s32 6, %v2548
    %v2550 = vrot.slane %v2318, %v2549
    %v2551 = vmul.f32 %v2438, %v2546
    %v2552 = vmul.f32 %v2438, %v2550
    %v2553 = vadd.f32 %v2541, %v2551
    %v2554 = vadd.f32 %v2542, %v2552
    %v2555 = vlaneseq
    %v2556 = vshrl.u32 %v2555, 7
    %v2557 = vsub.s32 7, %v2556
    %v2558 = vrot.slane %v2317, %v2557
    %v2559 = vlaneseq
    %v2560 = vshrl.u32 %v2559, 7
    %v2561 = vsub.s32 7, %v2560
    %v2562 = vrot.slane %v2318, %v2561
    %v2563 = vmul.f32 %v2457, %v2558
    %v2564 = vmul.f32 %v2457, %v2562
    %v2565 = vadd.f32 %v2553, %v2563
    %v2566 = vadd.f32 %v2554, %v2564
    %2567 = vrot.lane.b32.xlu0 %v850, 96
    %v2568 = vpop.permute.xlu0 %2567
    %2569 = vrot.lane.b32.xlu0 %v851, 96
    %v2570 = vpop.permute.xlu0 %2569
    %2571 = vrot.lane.b32.xlu0 %v852, 96
    %v2572 = vpop.permute.xlu0 %2571
    %2573 = vrot.lane.b32.xlu0 %v853, 96
    %v2574 = vpop.permute.xlu0 %2573
    %2575 = vrot.lane.b32.xlu0 %v854, 96
    %v2576 = vpop.permute.xlu0 %2575
    %2577 = vrot.lane.b32.xlu0 %v855, 96
    %v2578 = vpop.permute.xlu0 %2577
    %vm2579 = vcmask 785408
    %v2580 = vsel %vm2579, %v2568, %v2570
    %v2581 = vsel %vm2579, %v2570, %v2572
    %v2582 = vsel %vm2579, %v2574, %v2576
    %v2583 = vsel %vm2579, %v2576, %v2578
    %v2588 = vsel %vm597, %v2580, 0.0
    %v2589 = vsel %vm598, %v2581, 0.0
    %v2590 = vsel %vm597, %v2582, 0.0
    %v2591 = vsel %vm598, %v2583, 0.0
    %s2592 = scalar_lea.vmem %s5, 192
    %v2593 = vld [vmem:[%s2592] sm:$0xf]
    %2595 = vset.pattern.permute.xlu0 0
    %2596 = vperm.xlu0 %2595, %v2593
    %v2597 = vpop.permute.xlu0 %2596
    %v2599 = vlaneseq
    %v2600 = vshrl.u32 %v2599, 7
    %v2601 = vsub.s32 0, %v2600
    %v2602 = vrot.slane %v2588, %v2601
    %v2603 = vlaneseq
    %v2604 = vshrl.u32 %v2603, 7
    %v2605 = vsub.s32 0, %v2604
    %v2606 = vrot.slane %v2589, %v2605
    %v2607 = vmul.f32 %v2597, %v2602
    %v2608 = vmul.f32 %v2597, %v2606
    %v2609 = vadd.f32 %v2469, %v2607
    %v2610 = vadd.f32 %v2470, %v2608
    %s2611 = scalar_lea.vmem %s5, 196
    %v2612 = vld [vmem:[%s2611] sm:$0xf]
    %2614 = vset.pattern.permute.xlu0 0
    %2615 = vperm.xlu0 %2614, %v2612
    %v2616 = vpop.permute.xlu0 %2615
    %v2618 = vlaneseq
    %v2619 = vshrl.u32 %v2618, 7
    %v2620 = vsub.s32 1, %v2619
    %v2621 = vrot.slane %v2588, %v2620
    %v2622 = vlaneseq
    %v2623 = vshrl.u32 %v2622, 7
    %v2624 = vsub.s32 1, %v2623
    %v2625 = vrot.slane %v2589, %v2624
    %v2626 = vmul.f32 %v2616, %v2621
    %v2627 = vmul.f32 %v2616, %v2625
    %v2628 = vadd.f32 %v2609, %v2626
    %v2629 = vadd.f32 %v2610, %v2627
    %s2630 = scalar_lea.vmem %s5, 200
    %v2631 = vld [vmem:[%s2630] sm:$0xf]
    %2633 = vset.pattern.permute.xlu0 0
    %2634 = vperm.xlu0 %2633, %v2631
    %v2635 = vpop.permute.xlu0 %2634
    %v2637 = vlaneseq
    %v2638 = vshrl.u32 %v2637, 7
    %v2639 = vsub.s32 2, %v2638
    %v2640 = vrot.slane %v2588, %v2639
    %v2641 = vlaneseq
    %v2642 = vshrl.u32 %v2641, 7
    %v2643 = vsub.s32 2, %v2642
    %v2644 = vrot.slane %v2589, %v2643
    %v2645 = vmul.f32 %v2635, %v2640
    %v2646 = vmul.f32 %v2635, %v2644
    %v2647 = vadd.f32 %v2628, %v2645
    %v2648 = vadd.f32 %v2629, %v2646
    %s2649 = scalar_lea.vmem %s5, 204
    %v2650 = vld [vmem:[%s2649] sm:$0xf]
    %2652 = vset.pattern.permute.xlu0 0
    %2653 = vperm.xlu0 %2652, %v2650
    %v2654 = vpop.permute.xlu0 %2653
    %v2656 = vlaneseq
    %v2657 = vshrl.u32 %v2656, 7
    %v2658 = vsub.s32 3, %v2657
    %v2659 = vrot.slane %v2588, %v2658
    %v2660 = vlaneseq
    %v2661 = vshrl.u32 %v2660, 7
    %v2662 = vsub.s32 3, %v2661
    %v2663 = vrot.slane %v2589, %v2662
    %v2664 = vmul.f32 %v2654, %v2659
    %v2665 = vmul.f32 %v2654, %v2663
    %v2666 = vadd.f32 %v2647, %v2664
    %v2667 = vadd.f32 %v2648, %v2665
    %s2668 = scalar_lea.vmem %s5, 208
    %v2669 = vld [vmem:[%s2668] sm:$0xf]
    %2671 = vset.pattern.permute.xlu0 0
    %2672 = vperm.xlu0 %2671, %v2669
    %v2673 = vpop.permute.xlu0 %2672
    %v2675 = vlaneseq
    %v2676 = vshrl.u32 %v2675, 7
    %v2677 = vsub.s32 4, %v2676
    %v2678 = vrot.slane %v2588, %v2677
    %v2679 = vlaneseq
    %v2680 = vshrl.u32 %v2679, 7
    %v2681 = vsub.s32 4, %v2680
    %v2682 = vrot.slane %v2589, %v2681
    %v2683 = vmul.f32 %v2673, %v2678
    %v2684 = vmul.f32 %v2673, %v2682
    %v2685 = vadd.f32 %v2666, %v2683
    %v2686 = vadd.f32 %v2667, %v2684
    %s2687 = scalar_lea.vmem %s5, 212
    %v2688 = vld [vmem:[%s2687] sm:$0xf]
    %2690 = vset.pattern.permute.xlu0 0
    %2691 = vperm.xlu0 %2690, %v2688
    %v2692 = vpop.permute.xlu0 %2691
    %v2694 = vlaneseq
    %v2695 = vshrl.u32 %v2694, 7
    %v2696 = vsub.s32 5, %v2695
    %v2697 = vrot.slane %v2588, %v2696
    %v2698 = vlaneseq
    %v2699 = vshrl.u32 %v2698, 7
    %v2700 = vsub.s32 5, %v2699
    %v2701 = vrot.slane %v2589, %v2700
    %v2702 = vmul.f32 %v2692, %v2697
    %v2703 = vmul.f32 %v2692, %v2701
    %v2704 = vadd.f32 %v2685, %v2702
    %v2705 = vadd.f32 %v2686, %v2703
    %s2706 = scalar_lea.vmem %s5, 216
    %v2707 = vld [vmem:[%s2706] sm:$0xf]
    %2709 = vset.pattern.permute.xlu0 0
    %2710 = vperm.xlu0 %2709, %v2707
    %v2711 = vpop.permute.xlu0 %2710
    %v2713 = vlaneseq
    %v2714 = vshrl.u32 %v2713, 7
    %v2715 = vsub.s32 6, %v2714
    %v2716 = vrot.slane %v2588, %v2715
    %v2717 = vlaneseq
    %v2718 = vshrl.u32 %v2717, 7
    %v2719 = vsub.s32 6, %v2718
    %v2720 = vrot.slane %v2589, %v2719
    %v2721 = vmul.f32 %v2711, %v2716
    %v2722 = vmul.f32 %v2711, %v2720
    %v2723 = vadd.f32 %v2704, %v2721
    %v2724 = vadd.f32 %v2705, %v2722
    %s2725 = scalar_lea.vmem %s5, 220
    %v2726 = vld [vmem:[%s2725] sm:$0xf]
    %2728 = vset.pattern.permute.xlu0 0
    %2729 = vperm.xlu0 %2728, %v2726
    %v2730 = vpop.permute.xlu0 %2729
    %v2732 = vlaneseq
    %v2733 = vshrl.u32 %v2732, 7
    %v2734 = vsub.s32 7, %v2733
    %v2735 = vrot.slane %v2588, %v2734
    %v2736 = vlaneseq
    %v2737 = vshrl.u32 %v2736, 7
    %v2738 = vsub.s32 7, %v2737
    %v2739 = vrot.slane %v2589, %v2738
    %v2740 = vmul.f32 %v2730, %v2735
    %v2741 = vmul.f32 %v2730, %v2739
    %v2742 = vadd.f32 %v2723, %v2740
    %v2743 = vadd.f32 %v2724, %v2741
    %v2744 = vlaneseq
    %v2745 = vshrl.u32 %v2744, 7
    %v2746 = vsub.s32 0, %v2745
    %v2747 = vrot.slane %v2590, %v2746
    %v2748 = vlaneseq
    %v2749 = vshrl.u32 %v2748, 7
    %v2750 = vsub.s32 0, %v2749
    %v2751 = vrot.slane %v2591, %v2750
    %v2752 = vmul.f32 %v2597, %v2747
    %v2753 = vmul.f32 %v2597, %v2751
    %v2754 = vadd.f32 %v2565, %v2752
    %v2755 = vadd.f32 %v2566, %v2753
    %v2756 = vlaneseq
    %v2757 = vshrl.u32 %v2756, 7
    %v2758 = vsub.s32 1, %v2757
    %v2759 = vrot.slane %v2590, %v2758
    %v2760 = vlaneseq
    %v2761 = vshrl.u32 %v2760, 7
    %v2762 = vsub.s32 1, %v2761
    %v2763 = vrot.slane %v2591, %v2762
    %v2764 = vmul.f32 %v2616, %v2759
    %v2765 = vmul.f32 %v2616, %v2763
    %v2766 = vadd.f32 %v2754, %v2764
    %v2767 = vadd.f32 %v2755, %v2765
    %v2768 = vlaneseq
    %v2769 = vshrl.u32 %v2768, 7
    %v2770 = vsub.s32 2, %v2769
    %v2771 = vrot.slane %v2590, %v2770
    %v2772 = vlaneseq
    %v2773 = vshrl.u32 %v2772, 7
    %v2774 = vsub.s32 2, %v2773
    %v2775 = vrot.slane %v2591, %v2774
    %v2776 = vmul.f32 %v2635, %v2771
    %v2777 = vmul.f32 %v2635, %v2775
    %v2778 = vadd.f32 %v2766, %v2776
    %v2779 = vadd.f32 %v2767, %v2777
    %v2780 = vlaneseq
    %v2781 = vshrl.u32 %v2780, 7
    %v2782 = vsub.s32 3, %v2781
    %v2783 = vrot.slane %v2590, %v2782
    %v2784 = vlaneseq
    %v2785 = vshrl.u32 %v2784, 7
    %v2786 = vsub.s32 3, %v2785
    %v2787 = vrot.slane %v2591, %v2786
    %v2788 = vmul.f32 %v2654, %v2783
    %v2789 = vmul.f32 %v2654, %v2787
    %v2790 = vadd.f32 %v2778, %v2788
    %v2791 = vadd.f32 %v2779, %v2789
    %v2792 = vlaneseq
    %v2793 = vshrl.u32 %v2792, 7
    %v2794 = vsub.s32 4, %v2793
    %v2795 = vrot.slane %v2590, %v2794
    %v2796 = vlaneseq
    %v2797 = vshrl.u32 %v2796, 7
    %v2798 = vsub.s32 4, %v2797
    %v2799 = vrot.slane %v2591, %v2798
    %v2800 = vmul.f32 %v2673, %v2795
    %v2801 = vmul.f32 %v2673, %v2799
    %v2802 = vadd.f32 %v2790, %v2800
    %v2803 = vadd.f32 %v2791, %v2801
    %v2804 = vlaneseq
    %v2805 = vshrl.u32 %v2804, 7
    %v2806 = vsub.s32 5, %v2805
    %v2807 = vrot.slane %v2590, %v2806
    %v2808 = vlaneseq
    %v2809 = vshrl.u32 %v2808, 7
    %v2810 = vsub.s32 5, %v2809
    %v2811 = vrot.slane %v2591, %v2810
    %v2812 = vmul.f32 %v2692, %v2807
    %v2813 = vmul.f32 %v2692, %v2811
    %v2814 = vadd.f32 %v2802, %v2812
    %v2815 = vadd.f32 %v2803, %v2813
    %v2816 = vlaneseq
    %v2817 = vshrl.u32 %v2816, 7
    %v2818 = vsub.s32 6, %v2817
    %v2819 = vrot.slane %v2590, %v2818
    %v2820 = vlaneseq
    %v2821 = vshrl.u32 %v2820, 7
    %v2822 = vsub.s32 6, %v2821
    %v2823 = vrot.slane %v2591, %v2822
    %v2824 = vmul.f32 %v2711, %v2819
    %v2825 = vmul.f32 %v2711, %v2823
    %v2826 = vadd.f32 %v2814, %v2824
    %v2827 = vadd.f32 %v2815, %v2825
    %v2828 = vlaneseq
    %v2829 = vshrl.u32 %v2828, 7
    %v2830 = vsub.s32 7, %v2829
    %v2831 = vrot.slane %v2590, %v2830
    %v2832 = vlaneseq
    %v2833 = vshrl.u32 %v2832, 7
    %v2834 = vsub.s32 7, %v2833
    %v2835 = vrot.slane %v2591, %v2834
    %v2836 = vmul.f32 %v2730, %v2831
    %v2837 = vmul.f32 %v2730, %v2835
    %v2838 = vadd.f32 %v2826, %v2836
    %v2839 = vadd.f32 %v2827, %v2837
    %s2840 = scalar_lea.vmem %s5, 224
    %v2841 = vld [vmem:[%s2840] sm:$0xf]
    %2843 = vset.pattern.permute.xlu0 0
    %2844 = vperm.xlu0 %2843, %v2841
    %v2845 = vpop.permute.xlu0 %2844
    %v2847 = vmul.f32 %v2845, %v866
    %v2848 = vmul.f32 %v2845, %v870
    %v2849 = vmul.f32 %v2845, %v874
    %2853 = vrot.lane.b32.xlu0 %v2847, 95
    %v2854 = vpop.permute.xlu0 %2853
    %2855 = vrot.lane.b32.xlu0 %v2848, 95
    %v2856 = vpop.permute.xlu0 %2855
    %2857 = vrot.lane.b32.xlu0 %v2849, 95
    %v2858 = vpop.permute.xlu0 %2857
    %vm2859 = vcmask 777216
    %v2860 = vsel %vm2859, %v2854, %v2856
    %v2861 = vsel %vm2859, %v2856, %v2858
    %v2864 = vadd.f32 %v2742, %v2860
    %v2865 = vadd.f32 %v2743, %v2861
    %s2866 = scalar_lea.vmem %s5, 228
    %v2867 = vld [vmem:[%s2866] sm:$0xf]
    %2869 = vset.pattern.permute.xlu0 0
    %2870 = vperm.xlu0 %2869, %v2867
    %v2871 = vpop.permute.xlu0 %2870
    %v2873 = vmul.f32 %v2871, %v904
    %v2874 = vmul.f32 %v2871, %v908
    %v2875 = vmul.f32 %v2871, %v912
    %2879 = vrot.lane.b32.xlu0 %v2873, 95
    %v2880 = vpop.permute.xlu0 %2879
    %2881 = vrot.lane.b32.xlu0 %v2874, 95
    %v2882 = vpop.permute.xlu0 %2881
    %2883 = vrot.lane.b32.xlu0 %v2875, 95
    %v2884 = vpop.permute.xlu0 %2883
    %v2885 = vsel %vm2859, %v2880, %v2882
    %v2886 = vsel %vm2859, %v2882, %v2884
    %v2889 = vadd.f32 %v2864, %v2885
    %v2890 = vadd.f32 %v2865, %v2886
    %s2891 = scalar_lea.vmem %s5, 232
    %v2892 = vld [vmem:[%s2891] sm:$0xf]
    %2894 = vset.pattern.permute.xlu0 0
    %2895 = vperm.xlu0 %2894, %v2892
    %v2896 = vpop.permute.xlu0 %2895
    %v2898 = vmul.f32 %v2896, %v941
    %v2899 = vmul.f32 %v2896, %v945
    %v2900 = vmul.f32 %v2896, %v949
    %2904 = vrot.lane.b32.xlu0 %v2898, 95
    %v2905 = vpop.permute.xlu0 %2904
    %2906 = vrot.lane.b32.xlu0 %v2899, 95
    %v2907 = vpop.permute.xlu0 %2906
    %2908 = vrot.lane.b32.xlu0 %v2900, 95
    %v2909 = vpop.permute.xlu0 %2908
    %v2910 = vsel %vm2859, %v2905, %v2907
    %v2911 = vsel %vm2859, %v2907, %v2909
    %v2914 = vadd.f32 %v2889, %v2910
    %v2915 = vadd.f32 %v2890, %v2911
    %s2916 = scalar_lea.vmem %s5, 236
    %v2917 = vld [vmem:[%s2916] sm:$0xf]
    %2919 = vset.pattern.permute.xlu0 0
    %2920 = vperm.xlu0 %2919, %v2917
    %v2921 = vpop.permute.xlu0 %2920
    %v2923 = vmul.f32 %v2921, %v978
    %v2924 = vmul.f32 %v2921, %v982
    %v2925 = vmul.f32 %v2921, %v986
    %2929 = vrot.lane.b32.xlu0 %v2923, 95
    %v2930 = vpop.permute.xlu0 %2929
    %2931 = vrot.lane.b32.xlu0 %v2924, 95
    %v2932 = vpop.permute.xlu0 %2931
    %2933 = vrot.lane.b32.xlu0 %v2925, 95
    %v2934 = vpop.permute.xlu0 %2933
    %v2935 = vsel %vm2859, %v2930, %v2932
    %v2936 = vsel %vm2859, %v2932, %v2934
    %v2939 = vadd.f32 %v2914, %v2935
    %v2940 = vadd.f32 %v2915, %v2936
    %s2941 = scalar_lea.vmem %s5, 240
    %v2942 = vld [vmem:[%s2941] sm:$0xf]
    %2944 = vset.pattern.permute.xlu0 0
    %2945 = vperm.xlu0 %2944, %v2942
    %v2946 = vpop.permute.xlu0 %2945
    %v2948 = vmul.f32 %v2946, %v1015
    %v2949 = vmul.f32 %v2946, %v1019
    %v2950 = vmul.f32 %v2946, %v1023
    %2954 = vrot.lane.b32.xlu0 %v2948, 95
    %v2955 = vpop.permute.xlu0 %2954
    %2956 = vrot.lane.b32.xlu0 %v2949, 95
    %v2957 = vpop.permute.xlu0 %2956
    %2958 = vrot.lane.b32.xlu0 %v2950, 95
    %v2959 = vpop.permute.xlu0 %2958
    %v2960 = vsel %vm2859, %v2955, %v2957
    %v2961 = vsel %vm2859, %v2957, %v2959
    %v2964 = vadd.f32 %v2939, %v2960
    %v2965 = vadd.f32 %v2940, %v2961
    %s2966 = scalar_lea.vmem %s5, 244
    %v2967 = vld [vmem:[%s2966] sm:$0xf]
    %2969 = vset.pattern.permute.xlu0 0
    %2970 = vperm.xlu0 %2969, %v2967
    %v2971 = vpop.permute.xlu0 %2970
    %v2973 = vmul.f32 %v2971, %v1052
    %v2974 = vmul.f32 %v2971, %v1056
    %v2975 = vmul.f32 %v2971, %v1060
    %2979 = vrot.lane.b32.xlu0 %v2973, 95
    %v2980 = vpop.permute.xlu0 %2979
    %2981 = vrot.lane.b32.xlu0 %v2974, 95
    %v2982 = vpop.permute.xlu0 %2981
    %2983 = vrot.lane.b32.xlu0 %v2975, 95
    %v2984 = vpop.permute.xlu0 %2983
    %v2985 = vsel %vm2859, %v2980, %v2982
    %v2986 = vsel %vm2859, %v2982, %v2984
    %v2989 = vadd.f32 %v2964, %v2985
    %v2990 = vadd.f32 %v2965, %v2986
    %s2991 = scalar_lea.vmem %s5, 248
    %v2992 = vld [vmem:[%s2991] sm:$0xf]
    %2994 = vset.pattern.permute.xlu0 0
    %2995 = vperm.xlu0 %2994, %v2992
    %v2996 = vpop.permute.xlu0 %2995
    %v2998 = vmul.f32 %v2996, %v1089
    %v2999 = vmul.f32 %v2996, %v1093
    %v3000 = vmul.f32 %v2996, %v1097
    %3004 = vrot.lane.b32.xlu0 %v2998, 95
    %v3005 = vpop.permute.xlu0 %3004
    %3006 = vrot.lane.b32.xlu0 %v2999, 95
    %v3007 = vpop.permute.xlu0 %3006
    %3008 = vrot.lane.b32.xlu0 %v3000, 95
    %v3009 = vpop.permute.xlu0 %3008
    %v3010 = vsel %vm2859, %v3005, %v3007
    %v3011 = vsel %vm2859, %v3007, %v3009
    %v3014 = vadd.f32 %v2989, %v3010
    %v3015 = vadd.f32 %v2990, %v3011
    %s3016 = scalar_lea.vmem %s5, 252
    %v3017 = vld [vmem:[%s3016] sm:$0xf]
    %3019 = vset.pattern.permute.xlu0 0
    %3020 = vperm.xlu0 %3019, %v3017
    %v3021 = vpop.permute.xlu0 %3020
    %v3023 = vmul.f32 %v3021, %v1126
    %v3024 = vmul.f32 %v3021, %v1130
    %v3025 = vmul.f32 %v3021, %v1134
    %3029 = vrot.lane.b32.xlu0 %v3023, 95
    %v3030 = vpop.permute.xlu0 %3029
    %3031 = vrot.lane.b32.xlu0 %v3024, 95
    %v3032 = vpop.permute.xlu0 %3031
    %3033 = vrot.lane.b32.xlu0 %v3025, 95
    %v3034 = vpop.permute.xlu0 %3033
    %v3035 = vsel %vm2859, %v3030, %v3032
    %v3036 = vsel %vm2859, %v3032, %v3034
    %v3039 = vadd.f32 %v3014, %v3035
    %v3040 = vadd.f32 %v3015, %v3036
    %v3041 = vmul.f32 %v2845, %v1156
    %v3042 = vmul.f32 %v2845, %v1160
    %v3043 = vmul.f32 %v2845, %v1164
    %3047 = vrot.lane.b32.xlu0 %v3041, 95
    %v3048 = vpop.permute.xlu0 %3047
    %3049 = vrot.lane.b32.xlu0 %v3042, 95
    %v3050 = vpop.permute.xlu0 %3049
    %3051 = vrot.lane.b32.xlu0 %v3043, 95
    %v3052 = vpop.permute.xlu0 %3051
    %v3053 = vsel %vm2859, %v3048, %v3050
    %v3054 = vsel %vm2859, %v3050, %v3052
    %v3057 = vadd.f32 %v2838, %v3053
    %v3058 = vadd.f32 %v2839, %v3054
    %v3059 = vmul.f32 %v2871, %v1186
    %v3060 = vmul.f32 %v2871, %v1190
    %v3061 = vmul.f32 %v2871, %v1194
    %3065 = vrot.lane.b32.xlu0 %v3059, 95
    %v3066 = vpop.permute.xlu0 %3065
    %3067 = vrot.lane.b32.xlu0 %v3060, 95
    %v3068 = vpop.permute.xlu0 %3067
    %3069 = vrot.lane.b32.xlu0 %v3061, 95
    %v3070 = vpop.permute.xlu0 %3069
    %v3071 = vsel %vm2859, %v3066, %v3068
    %v3072 = vsel %vm2859, %v3068, %v3070
    %v3075 = vadd.f32 %v3057, %v3071
    %v3076 = vadd.f32 %v3058, %v3072
    %v3077 = vmul.f32 %v2896, %v1216
    %v3078 = vmul.f32 %v2896, %v1220
    %v3079 = vmul.f32 %v2896, %v1224
    %3083 = vrot.lane.b32.xlu0 %v3077, 95
    %v3084 = vpop.permute.xlu0 %3083
    %3085 = vrot.lane.b32.xlu0 %v3078, 95
    %v3086 = vpop.permute.xlu0 %3085
    %3087 = vrot.lane.b32.xlu0 %v3079, 95
    %v3088 = vpop.permute.xlu0 %3087
    %v3089 = vsel %vm2859, %v3084, %v3086
    %v3090 = vsel %vm2859, %v3086, %v3088
    %v3093 = vadd.f32 %v3075, %v3089
    %v3094 = vadd.f32 %v3076, %v3090
    %v3095 = vmul.f32 %v2921, %v1246
    %v3096 = vmul.f32 %v2921, %v1250
    %v3097 = vmul.f32 %v2921, %v1254
    %3101 = vrot.lane.b32.xlu0 %v3095, 95
    %v3102 = vpop.permute.xlu0 %3101
    %3103 = vrot.lane.b32.xlu0 %v3096, 95
    %v3104 = vpop.permute.xlu0 %3103
    %3105 = vrot.lane.b32.xlu0 %v3097, 95
    %v3106 = vpop.permute.xlu0 %3105
    %v3107 = vsel %vm2859, %v3102, %v3104
    %v3108 = vsel %vm2859, %v3104, %v3106
    %v3111 = vadd.f32 %v3093, %v3107
    %v3112 = vadd.f32 %v3094, %v3108
    %v3113 = vmul.f32 %v2946, %v1276
    %v3114 = vmul.f32 %v2946, %v1280
    %v3115 = vmul.f32 %v2946, %v1284
    %3119 = vrot.lane.b32.xlu0 %v3113, 95
    %v3120 = vpop.permute.xlu0 %3119
    %3121 = vrot.lane.b32.xlu0 %v3114, 95
    %v3122 = vpop.permute.xlu0 %3121
    %3123 = vrot.lane.b32.xlu0 %v3115, 95
    %v3124 = vpop.permute.xlu0 %3123
    %v3125 = vsel %vm2859, %v3120, %v3122
    %v3126 = vsel %vm2859, %v3122, %v3124
    %v3129 = vadd.f32 %v3111, %v3125
    %v3130 = vadd.f32 %v3112, %v3126
    %v3131 = vmul.f32 %v2971, %v1306
    %v3132 = vmul.f32 %v2971, %v1310
    %v3133 = vmul.f32 %v2971, %v1314
    %3137 = vrot.lane.b32.xlu0 %v3131, 95
    %v3138 = vpop.permute.xlu0 %3137
    %3139 = vrot.lane.b32.xlu0 %v3132, 95
    %v3140 = vpop.permute.xlu0 %3139
    %3141 = vrot.lane.b32.xlu0 %v3133, 95
    %v3142 = vpop.permute.xlu0 %3141
    %v3143 = vsel %vm2859, %v3138, %v3140
    %v3144 = vsel %vm2859, %v3140, %v3142
    %v3147 = vadd.f32 %v3129, %v3143
    %v3148 = vadd.f32 %v3130, %v3144
    %v3149 = vmul.f32 %v2996, %v1336
    %v3150 = vmul.f32 %v2996, %v1340
    %v3151 = vmul.f32 %v2996, %v1344
    %3155 = vrot.lane.b32.xlu0 %v3149, 95
    %v3156 = vpop.permute.xlu0 %3155
    %3157 = vrot.lane.b32.xlu0 %v3150, 95
    %v3158 = vpop.permute.xlu0 %3157
    %3159 = vrot.lane.b32.xlu0 %v3151, 95
    %v3160 = vpop.permute.xlu0 %3159
    %v3161 = vsel %vm2859, %v3156, %v3158
    %v3162 = vsel %vm2859, %v3158, %v3160
    %v3165 = vadd.f32 %v3147, %v3161
    %v3166 = vadd.f32 %v3148, %v3162
    %v3167 = vmul.f32 %v3021, %v1366
    %v3168 = vmul.f32 %v3021, %v1370
    %v3169 = vmul.f32 %v3021, %v1374
    %3173 = vrot.lane.b32.xlu0 %v3167, 95
    %v3174 = vpop.permute.xlu0 %3173
    %3175 = vrot.lane.b32.xlu0 %v3168, 95
    %v3176 = vpop.permute.xlu0 %3175
    %3177 = vrot.lane.b32.xlu0 %v3169, 95
    %v3178 = vpop.permute.xlu0 %3177
    %v3179 = vsel %vm2859, %v3174, %v3176
    %v3180 = vsel %vm2859, %v3176, %v3178
    %v3183 = vadd.f32 %v3165, %v3179
    %v3184 = vadd.f32 %v3166, %v3180
    %3185 = vrot.lane.b32.xlu0 %v850, 94
    %v3186 = vpop.permute.xlu0 %3185
    %3187 = vrot.lane.b32.xlu0 %v851, 94
    %v3188 = vpop.permute.xlu0 %3187
    %3189 = vrot.lane.b32.xlu0 %v852, 94
    %v3190 = vpop.permute.xlu0 %3189
    %3191 = vrot.lane.b32.xlu0 %v853, 94
    %v3192 = vpop.permute.xlu0 %3191
    %3193 = vrot.lane.b32.xlu0 %v854, 94
    %v3194 = vpop.permute.xlu0 %3193
    %3195 = vrot.lane.b32.xlu0 %v855, 94
    %v3196 = vpop.permute.xlu0 %3195
    %vm3197 = vcmask 769024
    %v3198 = vsel %vm3197, %v3186, %v3188
    %v3199 = vsel %vm3197, %v3188, %v3190
    %v3200 = vsel %vm3197, %v3192, %v3194
    %v3201 = vsel %vm3197, %v3194, %v3196
    %v3206 = vsel %vm1395, %v3198, 0.0
    %v3207 = vsel %vm1396, %v3199, 0.0
    %v3208 = vsel %vm1395, %v3200, 0.0
    %v3209 = vsel %vm1396, %v3201, 0.0
    %s3210 = scalar_lea.vmem %s5, 256
    %v3211 = vld [vmem:[%s3210] sm:$0xf]
    %3213 = vset.pattern.permute.xlu0 0
    %3214 = vperm.xlu0 %3213, %v3211
    %v3215 = vpop.permute.xlu0 %3214
    %v3217 = vlaneseq
    %v3218 = vshrl.u32 %v3217, 7
    %v3219 = vsub.s32 0, %v3218
    %v3220 = vrot.slane %v3206, %v3219
    %v3221 = vlaneseq
    %v3222 = vshrl.u32 %v3221, 7
    %v3223 = vsub.s32 0, %v3222
    %v3224 = vrot.slane %v3207, %v3223
    %v3225 = vmul.f32 %v3215, %v3220
    %v3226 = vmul.f32 %v3215, %v3224
    %v3227 = vadd.f32 %v3039, %v3225
    %v3228 = vadd.f32 %v3040, %v3226
    %s3229 = scalar_lea.vmem %s5, 260
    %v3230 = vld [vmem:[%s3229] sm:$0xf]
    %3232 = vset.pattern.permute.xlu0 0
    %3233 = vperm.xlu0 %3232, %v3230
    %v3234 = vpop.permute.xlu0 %3233
    %v3236 = vlaneseq
    %v3237 = vshrl.u32 %v3236, 7
    %v3238 = vsub.s32 1, %v3237
    %v3239 = vrot.slane %v3206, %v3238
    %v3240 = vlaneseq
    %v3241 = vshrl.u32 %v3240, 7
    %v3242 = vsub.s32 1, %v3241
    %v3243 = vrot.slane %v3207, %v3242
    %v3244 = vmul.f32 %v3234, %v3239
    %v3245 = vmul.f32 %v3234, %v3243
    %v3246 = vadd.f32 %v3227, %v3244
    %v3247 = vadd.f32 %v3228, %v3245
    %s3248 = scalar_lea.vmem %s5, 264
    %v3249 = vld [vmem:[%s3248] sm:$0xf]
    %3251 = vset.pattern.permute.xlu0 0
    %3252 = vperm.xlu0 %3251, %v3249
    %v3253 = vpop.permute.xlu0 %3252
    %v3255 = vlaneseq
    %v3256 = vshrl.u32 %v3255, 7
    %v3257 = vsub.s32 2, %v3256
    %v3258 = vrot.slane %v3206, %v3257
    %v3259 = vlaneseq
    %v3260 = vshrl.u32 %v3259, 7
    %v3261 = vsub.s32 2, %v3260
    %v3262 = vrot.slane %v3207, %v3261
    %v3263 = vmul.f32 %v3253, %v3258
    %v3264 = vmul.f32 %v3253, %v3262
    %v3265 = vadd.f32 %v3246, %v3263
    %v3266 = vadd.f32 %v3247, %v3264
    %s3267 = scalar_lea.vmem %s5, 268
    %v3268 = vld [vmem:[%s3267] sm:$0xf]
    %3270 = vset.pattern.permute.xlu0 0
    %3271 = vperm.xlu0 %3270, %v3268
    %v3272 = vpop.permute.xlu0 %3271
    %v3274 = vlaneseq
    %v3275 = vshrl.u32 %v3274, 7
    %v3276 = vsub.s32 3, %v3275
    %v3277 = vrot.slane %v3206, %v3276
    %v3278 = vlaneseq
    %v3279 = vshrl.u32 %v3278, 7
    %v3280 = vsub.s32 3, %v3279
    %v3281 = vrot.slane %v3207, %v3280
    %v3282 = vmul.f32 %v3272, %v3277
    %v3283 = vmul.f32 %v3272, %v3281
    %v3284 = vadd.f32 %v3265, %v3282
    %v3285 = vadd.f32 %v3266, %v3283
    %s3286 = scalar_lea.vmem %s5, 272
    %v3287 = vld [vmem:[%s3286] sm:$0xf]
    %3289 = vset.pattern.permute.xlu0 0
    %3290 = vperm.xlu0 %3289, %v3287
    %v3291 = vpop.permute.xlu0 %3290
    %v3293 = vlaneseq
    %v3294 = vshrl.u32 %v3293, 7
    %v3295 = vsub.s32 4, %v3294
    %v3296 = vrot.slane %v3206, %v3295
    %v3297 = vlaneseq
    %v3298 = vshrl.u32 %v3297, 7
    %v3299 = vsub.s32 4, %v3298
    %v3300 = vrot.slane %v3207, %v3299
    %v3301 = vmul.f32 %v3291, %v3296
    %v3302 = vmul.f32 %v3291, %v3300
    %v3303 = vadd.f32 %v3284, %v3301
    %v3304 = vadd.f32 %v3285, %v3302
    %s3305 = scalar_lea.vmem %s5, 276
    %v3306 = vld [vmem:[%s3305] sm:$0xf]
    %3308 = vset.pattern.permute.xlu0 0
    %3309 = vperm.xlu0 %3308, %v3306
    %v3310 = vpop.permute.xlu0 %3309
    %v3312 = vlaneseq
    %v3313 = vshrl.u32 %v3312, 7
    %v3314 = vsub.s32 5, %v3313
    %v3315 = vrot.slane %v3206, %v3314
    %v3316 = vlaneseq
    %v3317 = vshrl.u32 %v3316, 7
    %v3318 = vsub.s32 5, %v3317
    %v3319 = vrot.slane %v3207, %v3318
    %v3320 = vmul.f32 %v3310, %v3315
    %v3321 = vmul.f32 %v3310, %v3319
    %v3322 = vadd.f32 %v3303, %v3320
    %v3323 = vadd.f32 %v3304, %v3321
    %s3324 = scalar_lea.vmem %s5, 280
    %v3325 = vld [vmem:[%s3324] sm:$0xf]
    %3327 = vset.pattern.permute.xlu0 0
    %3328 = vperm.xlu0 %3327, %v3325
    %v3329 = vpop.permute.xlu0 %3328
    %v3331 = vlaneseq
    %v3332 = vshrl.u32 %v3331, 7
    %v3333 = vsub.s32 6, %v3332
    %v3334 = vrot.slane %v3206, %v3333
    %v3335 = vlaneseq
    %v3336 = vshrl.u32 %v3335, 7
    %v3337 = vsub.s32 6, %v3336
    %v3338 = vrot.slane %v3207, %v3337
    %v3339 = vmul.f32 %v3329, %v3334
    %v3340 = vmul.f32 %v3329, %v3338
    %v3341 = vadd.f32 %v3322, %v3339
    %v3342 = vadd.f32 %v3323, %v3340
    %s3343 = scalar_lea.vmem %s5, 284
    %v3344 = vld [vmem:[%s3343] sm:$0xf]
    %3346 = vset.pattern.permute.xlu0 0
    %3347 = vperm.xlu0 %3346, %v3344
    %v3348 = vpop.permute.xlu0 %3347
    %v3350 = vlaneseq
    %v3351 = vshrl.u32 %v3350, 7
    %v3352 = vsub.s32 7, %v3351
    %v3353 = vrot.slane %v3206, %v3352
    %v3354 = vlaneseq
    %v3355 = vshrl.u32 %v3354, 7
    %v3356 = vsub.s32 7, %v3355
    %v3357 = vrot.slane %v3207, %v3356
    %v3358 = vmul.f32 %v3348, %v3353
    %v3359 = vmul.f32 %v3348, %v3357
    %v3360 = vadd.f32 %v3341, %v3358
    %v3361 = vadd.f32 %v3342, %v3359
    %v3362 = vlaneseq
    %v3363 = vshrl.u32 %v3362, 7
    %v3364 = vsub.s32 0, %v3363
    %v3365 = vrot.slane %v3208, %v3364
    %v3366 = vlaneseq
    %v3367 = vshrl.u32 %v3366, 7
    %v3368 = vsub.s32 0, %v3367
    %v3369 = vrot.slane %v3209, %v3368
    %v3370 = vmul.f32 %v3215, %v3365
    %v3371 = vmul.f32 %v3215, %v3369
    %v3372 = vadd.f32 %v3183, %v3370
    %v3373 = vadd.f32 %v3184, %v3371
    %v3374 = vlaneseq
    %v3375 = vshrl.u32 %v3374, 7
    %v3376 = vsub.s32 1, %v3375
    %v3377 = vrot.slane %v3208, %v3376
    %v3378 = vlaneseq
    %v3379 = vshrl.u32 %v3378, 7
    %v3380 = vsub.s32 1, %v3379
    %v3381 = vrot.slane %v3209, %v3380
    %v3382 = vmul.f32 %v3234, %v3377
    %v3383 = vmul.f32 %v3234, %v3381
    %v3384 = vadd.f32 %v3372, %v3382
    %v3385 = vadd.f32 %v3373, %v3383
    %v3386 = vlaneseq
    %v3387 = vshrl.u32 %v3386, 7
    %v3388 = vsub.s32 2, %v3387
    %v3389 = vrot.slane %v3208, %v3388
    %v3390 = vlaneseq
    %v3391 = vshrl.u32 %v3390, 7
    %v3392 = vsub.s32 2, %v3391
    %v3393 = vrot.slane %v3209, %v3392
    %v3394 = vmul.f32 %v3253, %v3389
    %v3395 = vmul.f32 %v3253, %v3393
    %v3396 = vadd.f32 %v3384, %v3394
    %v3397 = vadd.f32 %v3385, %v3395
    %v3398 = vlaneseq
    %v3399 = vshrl.u32 %v3398, 7
    %v3400 = vsub.s32 3, %v3399
    %v3401 = vrot.slane %v3208, %v3400
    %v3402 = vlaneseq
    %v3403 = vshrl.u32 %v3402, 7
    %v3404 = vsub.s32 3, %v3403
    %v3405 = vrot.slane %v3209, %v3404
    %v3406 = vmul.f32 %v3272, %v3401
    %v3407 = vmul.f32 %v3272, %v3405
    %v3408 = vadd.f32 %v3396, %v3406
    %v3409 = vadd.f32 %v3397, %v3407
    %v3410 = vlaneseq
    %v3411 = vshrl.u32 %v3410, 7
    %v3412 = vsub.s32 4, %v3411
    %v3413 = vrot.slane %v3208, %v3412
    %v3414 = vlaneseq
    %v3415 = vshrl.u32 %v3414, 7
    %v3416 = vsub.s32 4, %v3415
    %v3417 = vrot.slane %v3209, %v3416
    %v3418 = vmul.f32 %v3291, %v3413
    %v3419 = vmul.f32 %v3291, %v3417
    %v3420 = vadd.f32 %v3408, %v3418
    %v3421 = vadd.f32 %v3409, %v3419
    %v3422 = vlaneseq
    %v3423 = vshrl.u32 %v3422, 7
    %v3424 = vsub.s32 5, %v3423
    %v3425 = vrot.slane %v3208, %v3424
    %v3426 = vlaneseq
    %v3427 = vshrl.u32 %v3426, 7
    %v3428 = vsub.s32 5, %v3427
    %v3429 = vrot.slane %v3209, %v3428
    %v3430 = vmul.f32 %v3310, %v3425
    %v3431 = vmul.f32 %v3310, %v3429
    %v3432 = vadd.f32 %v3420, %v3430
    %v3433 = vadd.f32 %v3421, %v3431
    %v3434 = vlaneseq
    %v3435 = vshrl.u32 %v3434, 7
    %v3436 = vsub.s32 6, %v3435
    %v3437 = vrot.slane %v3208, %v3436
    %v3438 = vlaneseq
    %v3439 = vshrl.u32 %v3438, 7
    %v3440 = vsub.s32 6, %v3439
    %v3441 = vrot.slane %v3209, %v3440
    %v3442 = vmul.f32 %v3329, %v3437
    %v3443 = vmul.f32 %v3329, %v3441
    %v3444 = vadd.f32 %v3432, %v3442
    %v3445 = vadd.f32 %v3433, %v3443
    %v3446 = vlaneseq
    %v3447 = vshrl.u32 %v3446, 7
    %v3448 = vsub.s32 7, %v3447
    %v3449 = vrot.slane %v3208, %v3448
    %v3450 = vlaneseq
    %v3451 = vshrl.u32 %v3450, 7
    %v3452 = vsub.s32 7, %v3451
    %v3453 = vrot.slane %v3209, %v3452
    %v3454 = vmul.f32 %v3348, %v3449
    %v3455 = vmul.f32 %v3348, %v3453
    %v3456 = vadd.f32 %v3444, %v3454
    %v3457 = vadd.f32 %v3445, %v3455
    %vm3458 = vcmask 1043456
    %v3459 = vsel %vm3458, %v3360, 0.0
    %v3460 = vsel %vm3458, %v3361, 0.0
    %v3461 = vadd.f32 %v3459, %v3460
    %3462 = vadd.xlane.f32.xlu0 %v3461
    %v3463 = vpop.xlane.xlu0 %3462
    %v3464 = vadd.f32 %v3463, 0.0
    %v3465 = vsel %vm3458, %v3456, 0.0
    %v3466 = vsel %vm3458, %v3457, 0.0
    %v3467 = vadd.f32 %v3465, %v3466
    %3468 = vadd.xlane.f32.xlu0 %v3467
    %v3469 = vpop.xlane.xlu0 %3468
    %v3470 = vadd.f32 %v3464, %v3469
    %v3471 = vrcp.pop 512.0
    %v3472 = vmul.f32 %v3470, %v3471
    %v3473 = vmul.f32 %v3360, %v3360
    %v3474 = vmul.f32 %v3361, %v3361
    %v3475 = vsel %vm3458, %v3473, 0.0
    %v3476 = vsel %vm3458, %v3474, 0.0
    %v3477 = vadd.f32 %v3475, %v3476
    %3478 = vadd.xlane.f32.xlu0 %v3477
    %v3479 = vpop.xlane.xlu0 %3478
    %v3480 = vadd.f32 %v3479, 0.0
    %v3481 = vmul.f32 %v3456, %v3456
    %v3482 = vmul.f32 %v3457, %v3457
    %v3483 = vsel %vm3458, %v3481, 0.0
    %v3484 = vsel %vm3458, %v3482, 0.0
    %v3485 = vadd.f32 %v3483, %v3484
    %3486 = vadd.xlane.f32.xlu0 %v3485
    %v3487 = vpop.xlane.xlu0 %3486
    %v3488 = vadd.f32 %v3480, %v3487
    %v3489 = vmul.f32 %v3488, %v3471
    %v3490 = vld [vmem:[%s7] sm:$0xf]
    %v3491 = vmul.f32 %v3472, %v3472
    %v3492 = vsub.f32 %v3489, %v3491
    %v3493 = vadd.f32 %v3492, 1e-05
    %v3494 = vrsqrt.pop %v3493
    %v3495 = vmul.f32 %v3490, %v3494
    %v3496 = vld [vmem:[%s8] sm:$0xf]
    %v3497 = vmul.f32 %v3472, %v3495
    %v3498 = vsub.f32 %v3496, %v3497
    %3500 = vset.pattern.permute.xlu0 0
    %3501 = vperm.xlu0 %3500, %v3495
    %v3502 = vpop.permute.xlu0 %3501
    %v3504 = vmul.f32 %v3360, %v3502
    %v3505 = vmul.f32 %v3361, %v3502
    %3507 = vset.pattern.permute.xlu0 0
    %3508 = vperm.xlu0 %3507, %v3498
    %v3509 = vpop.permute.xlu0 %3508
    %v3511 = vadd.f32 %v3504, %v3509
    %v3512 = vadd.f32 %v3505, %v3509
    %v3513 = vmax.f32 %v3511, 0.0
    %v3514 = vmax.f32 %v3512, 0.0
    %3517 = vrot.lane.b32.xlu0 %v3513, 17
    %v3518 = vpop.permute.xlu0 %3517
    %3519 = vrot.lane.b32.xlu0 %v3514, 17
    %v3520 = vpop.permute.xlu0 %3519
    %v3521 = vsel %vm411, %v3518, %v3520
    %3525 = vst.msk [vmem:[#allocation3] sm:$0xf] %vm416, %v3518
    %3526 = vst [vmem:[#allocation3 + $0x8] sm:$0xf] %v3521
    %3527 = vst.msk [vmem:[#allocation3 + $0x10] sm:$0xf] %vm419, %v3520
    %v3528 = vmul.f32 %v3456, %v3502
    %v3529 = vmul.f32 %v3457, %v3502
    %v3530 = vadd.f32 %v3528, %v3509
    %v3531 = vadd.f32 %v3529, %v3509
    %v3532 = vmax.f32 %v3530, 0.0
    %v3533 = vmax.f32 %v3531, 0.0
    %v3536 = vrot.slane %v3532, 4
    %v3537 = vrot.slane %v3533, 4
    %3538 = vrot.lane.b32.xlu0 %v3536, 17
    %v3539 = vpop.permute.xlu0 %3538
    %3540 = vrot.lane.b32.xlu0 %v3537, 17
    %v3541 = vpop.permute.xlu0 %3540
    %v3542 = vsel %vm411, %v3539, %v3541
    %3546 = vst.msk [vmem:[#allocation3] sm:$0xf0] %vm431, %v3539
    %3547 = vst [vmem:[#allocation3 + $0x8] sm:$0xf0] %v3542
    %3548 = vst.msk [vmem:[#allocation3 + $0x10] sm:$0xf0] %vm434, %v3541
    %v3549 = vld [vmem:[%s10] sm:$0xf]
    %3551 = vset.pattern.permute.xlu0 0
    %3552 = vperm.xlu0 %3551, %v3549
    %v3553 = vpop.permute.xlu0 %3552
    %v3555 = vadd.f32 %v3553, 0.0
    %v3556 = vld [vmem:[#allocation3] sm:$0xff]
    %v3557 = vld [vmem:[#allocation3 + $0x8] sm:$0xff]
    %v3558 = vsel %vm597, %v3556, 0.0
    %v3559 = vsel %vm598, %v3557, 0.0
    %v3560 = vld [vmem:[%s9] sm:$0xf]
    %3562 = vset.pattern.permute.xlu0 0
    %3563 = vperm.xlu0 %3562, %v3560
    %v3564 = vpop.permute.xlu0 %3563
    %v3566 = vlaneseq
    %v3567 = vshrl.u32 %v3566, 7
    %v3568 = vsub.s32 0, %v3567
    %v3569 = vrot.slane %v3558, %v3568
    %v3570 = vlaneseq
    %v3571 = vshrl.u32 %v3570, 7
    %v3572 = vsub.s32 0, %v3571
    %v3573 = vrot.slane %v3559, %v3572
    %v3574 = vmul.f32 %v3564, %v3569
    %v3575 = vmul.f32 %v3564, %v3573
    %v3576 = vadd.f32 %v3555, %v3574
    %v3577 = vadd.f32 %v3555, %v3575
    %s3578 = scalar_lea.vmem %s9, 4
    %v3579 = vld [vmem:[%s3578] sm:$0xf]
    %3581 = vset.pattern.permute.xlu0 0
    %3582 = vperm.xlu0 %3581, %v3579
    %v3583 = vpop.permute.xlu0 %3582
    %v3585 = vlaneseq
    %v3586 = vshrl.u32 %v3585, 7
    %v3587 = vsub.s32 1, %v3586
    %v3588 = vrot.slane %v3558, %v3587
    %v3589 = vlaneseq
    %v3590 = vshrl.u32 %v3589, 7
    %v3591 = vsub.s32 1, %v3590
    %v3592 = vrot.slane %v3559, %v3591
    %v3593 = vmul.f32 %v3583, %v3588
    %v3594 = vmul.f32 %v3583, %v3592
    %v3595 = vadd.f32 %v3576, %v3593
    %v3596 = vadd.f32 %v3577, %v3594
    %s3597 = scalar_lea.vmem %s9, 8
    %v3598 = vld [vmem:[%s3597] sm:$0xf]
    %3600 = vset.pattern.permute.xlu0 0
    %3601 = vperm.xlu0 %3600, %v3598
    %v3602 = vpop.permute.xlu0 %3601
    %v3604 = vlaneseq
    %v3605 = vshrl.u32 %v3604, 7
    %v3606 = vsub.s32 2, %v3605
    %v3607 = vrot.slane %v3558, %v3606
    %v3608 = vlaneseq
    %v3609 = vshrl.u32 %v3608, 7
    %v3610 = vsub.s32 2, %v3609
    %v3611 = vrot.slane %v3559, %v3610
    %v3612 = vmul.f32 %v3602, %v3607
    %v3613 = vmul.f32 %v3602, %v3611
    %v3614 = vadd.f32 %v3595, %v3612
    %v3615 = vadd.f32 %v3596, %v3613
    %s3616 = scalar_lea.vmem %s9, 12
    %v3617 = vld [vmem:[%s3616] sm:$0xf]
    %3619 = vset.pattern.permute.xlu0 0
    %3620 = vperm.xlu0 %3619, %v3617
    %v3621 = vpop.permute.xlu0 %3620
    %v3623 = vlaneseq
    %v3624 = vshrl.u32 %v3623, 7
    %v3625 = vsub.s32 3, %v3624
    %v3626 = vrot.slane %v3558, %v3625
    %v3627 = vlaneseq
    %v3628 = vshrl.u32 %v3627, 7
    %v3629 = vsub.s32 3, %v3628
    %v3630 = vrot.slane %v3559, %v3629
    %v3631 = vmul.f32 %v3621, %v3626
    %v3632 = vmul.f32 %v3621, %v3630
    %v3633 = vadd.f32 %v3614, %v3631
    %v3634 = vadd.f32 %v3615, %v3632
    %v3635 = vlaneseq
    %v3636 = vshrl.u32 %v3635, 7
    %v3637 = vsub.s32 4, %v3636
    %v3638 = vrot.slane %v3558, %v3637
    %v3639 = vlaneseq
    %v3640 = vshrl.u32 %v3639, 7
    %v3641 = vsub.s32 4, %v3640
    %v3642 = vrot.slane %v3559, %v3641
    %v3643 = vmul.f32 %v3564, %v3638
    %v3644 = vmul.f32 %v3564, %v3642
    %v3645 = vadd.f32 %v3555, %v3643
    %v3646 = vadd.f32 %v3555, %v3644
    %v3647 = vlaneseq
    %v3648 = vshrl.u32 %v3647, 7
    %v3649 = vsub.s32 5, %v3648
    %v3650 = vrot.slane %v3558, %v3649
    %v3651 = vlaneseq
    %v3652 = vshrl.u32 %v3651, 7
    %v3653 = vsub.s32 5, %v3652
    %v3654 = vrot.slane %v3559, %v3653
    %v3655 = vmul.f32 %v3583, %v3650
    %v3656 = vmul.f32 %v3583, %v3654
    %v3657 = vadd.f32 %v3645, %v3655
    %v3658 = vadd.f32 %v3646, %v3656
    %v3659 = vlaneseq
    %v3660 = vshrl.u32 %v3659, 7
    %v3661 = vsub.s32 6, %v3660
    %v3662 = vrot.slane %v3558, %v3661
    %v3663 = vlaneseq
    %v3664 = vshrl.u32 %v3663, 7
    %v3665 = vsub.s32 6, %v3664
    %v3666 = vrot.slane %v3559, %v3665
    %v3667 = vmul.f32 %v3602, %v3662
    %v3668 = vmul.f32 %v3602, %v3666
    %v3669 = vadd.f32 %v3657, %v3667
    %v3670 = vadd.f32 %v3658, %v3668
    %v3671 = vlaneseq
    %v3672 = vshrl.u32 %v3671, 7
    %v3673 = vsub.s32 7, %v3672
    %v3674 = vrot.slane %v3558, %v3673
    %v3675 = vlaneseq
    %v3676 = vshrl.u32 %v3675, 7
    %v3677 = vsub.s32 7, %v3676
    %v3678 = vrot.slane %v3559, %v3677
    %v3679 = vmul.f32 %v3621, %v3674
    %v3680 = vmul.f32 %v3621, %v3678
    %v3681 = vadd.f32 %v3669, %v3679
    %v3682 = vadd.f32 %v3670, %v3680
    %v3683 = vld [vmem:[#allocation3] sm:$0xff]
    %v3684 = vld [vmem:[#allocation3 + $0x8] sm:$0xff]
    %v3685 = vld [vmem:[#allocation3 + $0x10] sm:$0xff]
    %s3686 = scalar_lea.vmem %s9, 16
    %v3687 = vld [vmem:[%s3686] sm:$0xf]
    %3689 = vset.pattern.permute.xlu0 0
    %3690 = vperm.xlu0 %3689, %v3687
    %v3691 = vpop.permute.xlu0 %3690
    %v3693 = vlaneseq
    %v3694 = vshrl.u32 %v3693, 7
    %v3695 = vsub.s32 0, %v3694
    %v3696 = vrot.slane %v3683, %v3695
    %v3697 = vlaneseq
    %v3698 = vshrl.u32 %v3697, 7
    %v3699 = vsub.s32 0, %v3698
    %v3700 = vrot.slane %v3684, %v3699
    %v3701 = vlaneseq
    %v3702 = vshrl.u32 %v3701, 7
    %v3703 = vsub.s32 0, %v3702
    %v3704 = vrot.slane %v3685, %v3703
    %v3705 = vmul.f32 %v3691, %v3696
    %v3706 = vmul.f32 %v3691, %v3700
    %v3707 = vmul.f32 %v3691, %v3704
    %3711 = vrot.lane.b32.xlu0 %v3705, 127
    %v3712 = vpop.permute.xlu0 %3711
    %3713 = vrot.lane.b32.xlu0 %v3706, 127
    %v3714 = vpop.permute.xlu0 %3713
    %3715 = vrot.lane.b32.xlu0 %v3707, 127
    %v3716 = vpop.permute.xlu0 %3715
    %v3717 = vsel %vm887, %v3712, %v3714
    %v3718 = vsel %vm887, %v3714, %v3716
    %v3721 = vadd.f32 %v3633, %v3717
    %v3722 = vadd.f32 %v3634, %v3718
    %s3723 = scalar_lea.vmem %s9, 20
    %v3724 = vld [vmem:[%s3723] sm:$0xf]
    %3726 = vset.pattern.permute.xlu0 0
    %3727 = vperm.xlu0 %3726, %v3724
    %v3728 = vpop.permute.xlu0 %3727
    %v3730 = vlaneseq
    %v3731 = vshrl.u32 %v3730, 7
    %v3732 = vsub.s32 1, %v3731
    %v3733 = vrot.slane %v3683, %v3732
    %v3734 = vlaneseq
    %v3735 = vshrl.u32 %v3734, 7
    %v3736 = vsub.s32 1, %v3735
    %v3737 = vrot.slane %v3684, %v3736
    %v3738 = vlaneseq
    %v3739 = vshrl.u32 %v3738, 7
    %v3740 = vsub.s32 1, %v3739
    %v3741 = vrot.slane %v3685, %v3740
    %v3742 = vmul.f32 %v3728, %v3733
    %v3743 = vmul.f32 %v3728, %v3737
    %v3744 = vmul.f32 %v3728, %v3741
    %3748 = vrot.lane.b32.xlu0 %v3742, 127
    %v3749 = vpop.permute.xlu0 %3748
    %3750 = vrot.lane.b32.xlu0 %v3743, 127
    %v3751 = vpop.permute.xlu0 %3750
    %3752 = vrot.lane.b32.xlu0 %v3744, 127
    %v3753 = vpop.permute.xlu0 %3752
    %v3754 = vsel %vm887, %v3749, %v3751
    %v3755 = vsel %vm887, %v3751, %v3753
    %v3758 = vadd.f32 %v3721, %v3754
    %v3759 = vadd.f32 %v3722, %v3755
    %s3760 = scalar_lea.vmem %s9, 24
    %v3761 = vld [vmem:[%s3760] sm:$0xf]
    %3763 = vset.pattern.permute.xlu0 0
    %3764 = vperm.xlu0 %3763, %v3761
    %v3765 = vpop.permute.xlu0 %3764
    %v3767 = vlaneseq
    %v3768 = vshrl.u32 %v3767, 7
    %v3769 = vsub.s32 2, %v3768
    %v3770 = vrot.slane %v3683, %v3769
    %v3771 = vlaneseq
    %v3772 = vshrl.u32 %v3771, 7
    %v3773 = vsub.s32 2, %v3772
    %v3774 = vrot.slane %v3684, %v3773
    %v3775 = vlaneseq
    %v3776 = vshrl.u32 %v3775, 7
    %v3777 = vsub.s32 2, %v3776
    %v3778 = vrot.slane %v3685, %v3777
    %v3779 = vmul.f32 %v3765, %v3770
    %v3780 = vmul.f32 %v3765, %v3774
    %v3781 = vmul.f32 %v3765, %v3778
    %3785 = vrot.lane.b32.xlu0 %v3779, 127
    %v3786 = vpop.permute.xlu0 %3785
    %3787 = vrot.lane.b32.xlu0 %v3780, 127
    %v3788 = vpop.permute.xlu0 %3787
    %3789 = vrot.lane.b32.xlu0 %v3781, 127
    %v3790 = vpop.permute.xlu0 %3789
    %v3791 = vsel %vm887, %v3786, %v3788
    %v3792 = vsel %vm887, %v3788, %v3790
    %v3795 = vadd.f32 %v3758, %v3791
    %v3796 = vadd.f32 %v3759, %v3792
    %s3797 = scalar_lea.vmem %s9, 28
    %v3798 = vld [vmem:[%s3797] sm:$0xf]
    %3800 = vset.pattern.permute.xlu0 0
    %3801 = vperm.xlu0 %3800, %v3798
    %v3802 = vpop.permute.xlu0 %3801
    %v3804 = vlaneseq
    %v3805 = vshrl.u32 %v3804, 7
    %v3806 = vsub.s32 3, %v3805
    %v3807 = vrot.slane %v3683, %v3806
    %v3808 = vlaneseq
    %v3809 = vshrl.u32 %v3808, 7
    %v3810 = vsub.s32 3, %v3809
    %v3811 = vrot.slane %v3684, %v3810
    %v3812 = vlaneseq
    %v3813 = vshrl.u32 %v3812, 7
    %v3814 = vsub.s32 3, %v3813
    %v3815 = vrot.slane %v3685, %v3814
    %v3816 = vmul.f32 %v3802, %v3807
    %v3817 = vmul.f32 %v3802, %v3811
    %v3818 = vmul.f32 %v3802, %v3815
    %3822 = vrot.lane.b32.xlu0 %v3816, 127
    %v3823 = vpop.permute.xlu0 %3822
    %3824 = vrot.lane.b32.xlu0 %v3817, 127
    %v3825 = vpop.permute.xlu0 %3824
    %3826 = vrot.lane.b32.xlu0 %v3818, 127
    %v3827 = vpop.permute.xlu0 %3826
    %v3828 = vsel %vm887, %v3823, %v3825
    %v3829 = vsel %vm887, %v3825, %v3827
    %v3832 = vadd.f32 %v3795, %v3828
    %v3833 = vadd.f32 %v3796, %v3829
    %v3834 = vlaneseq
    %v3835 = vshrl.u32 %v3834, 7
    %v3836 = vsub.s32 4, %v3835
    %v3837 = vrot.slane %v3683, %v3836
    %v3838 = vlaneseq
    %v3839 = vshrl.u32 %v3838, 7
    %v3840 = vsub.s32 4, %v3839
    %v3841 = vrot.slane %v3684, %v3840
    %v3842 = vlaneseq
    %v3843 = vshrl.u32 %v3842, 7
    %v3844 = vsub.s32 4, %v3843
    %v3845 = vrot.slane %v3685, %v3844
    %v3846 = vmul.f32 %v3691, %v3837
    %v3847 = vmul.f32 %v3691, %v3841
    %v3848 = vmul.f32 %v3691, %v3845
    %3852 = vrot.lane.b32.xlu0 %v3846, 127
    %v3853 = vpop.permute.xlu0 %3852
    %3854 = vrot.lane.b32.xlu0 %v3847, 127
    %v3855 = vpop.permute.xlu0 %3854
    %3856 = vrot.lane.b32.xlu0 %v3848, 127
    %v3857 = vpop.permute.xlu0 %3856
    %v3858 = vsel %vm887, %v3853, %v3855
    %v3859 = vsel %vm887, %v3855, %v3857
    %v3862 = vadd.f32 %v3681, %v3858
    %v3863 = vadd.f32 %v3682, %v3859
    %v3864 = vlaneseq
    %v3865 = vshrl.u32 %v3864, 7
    %v3866 = vsub.s32 5, %v3865
    %v3867 = vrot.slane %v3683, %v3866
    %v3868 = vlaneseq
    %v3869 = vshrl.u32 %v3868, 7
    %v3870 = vsub.s32 5, %v3869
    %v3871 = vrot.slane %v3684, %v3870
    %v3872 = vlaneseq
    %v3873 = vshrl.u32 %v3872, 7
    %v3874 = vsub.s32 5, %v3873
    %v3875 = vrot.slane %v3685, %v3874
    %v3876 = vmul.f32 %v3728, %v3867
    %v3877 = vmul.f32 %v3728, %v3871
    %v3878 = vmul.f32 %v3728, %v3875
    %3882 = vrot.lane.b32.xlu0 %v3876, 127
    %v3883 = vpop.permute.xlu0 %3882
    %3884 = vrot.lane.b32.xlu0 %v3877, 127
    %v3885 = vpop.permute.xlu0 %3884
    %3886 = vrot.lane.b32.xlu0 %v3878, 127
    %v3887 = vpop.permute.xlu0 %3886
    %v3888 = vsel %vm887, %v3883, %v3885
    %v3889 = vsel %vm887, %v3885, %v3887
    %v3892 = vadd.f32 %v3862, %v3888
    %v3893 = vadd.f32 %v3863, %v3889
    %v3894 = vlaneseq
    %v3895 = vshrl.u32 %v3894, 7
    %v3896 = vsub.s32 6, %v3895
    %v3897 = vrot.slane %v3683, %v3896
    %v3898 = vlaneseq
    %v3899 = vshrl.u32 %v3898, 7
    %v3900 = vsub.s32 6, %v3899
    %v3901 = vrot.slane %v3684, %v3900
    %v3902 = vlaneseq
    %v3903 = vshrl.u32 %v3902, 7
    %v3904 = vsub.s32 6, %v3903
    %v3905 = vrot.slane %v3685, %v3904
    %v3906 = vmul.f32 %v3765, %v3897
    %v3907 = vmul.f32 %v3765, %v3901
    %v3908 = vmul.f32 %v3765, %v3905
    %3912 = vrot.lane.b32.xlu0 %v3906, 127
    %v3913 = vpop.permute.xlu0 %3912
    %3914 = vrot.lane.b32.xlu0 %v3907, 127
    %v3915 = vpop.permute.xlu0 %3914
    %3916 = vrot.lane.b32.xlu0 %v3908, 127
    %v3917 = vpop.permute.xlu0 %3916
    %v3918 = vsel %vm887, %v3913, %v3915
    %v3919 = vsel %vm887, %v3915, %v3917
    %v3922 = vadd.f32 %v3892, %v3918
    %v3923 = vadd.f32 %v3893, %v3919
    %v3924 = vlaneseq
    %v3925 = vshrl.u32 %v3924, 7
    %v3926 = vsub.s32 7, %v3925
    %v3927 = vrot.slane %v3683, %v3926
    %v3928 = vlaneseq
    %v3929 = vshrl.u32 %v3928, 7
    %v3930 = vsub.s32 7, %v3929
    %v3931 = vrot.slane %v3684, %v3930
    %v3932 = vlaneseq
    %v3933 = vshrl.u32 %v3932, 7
    %v3934 = vsub.s32 7, %v3933
    %v3935 = vrot.slane %v3685, %v3934
    %v3936 = vmul.f32 %v3802, %v3927
    %v3937 = vmul.f32 %v3802, %v3931
    %v3938 = vmul.f32 %v3802, %v3935
    %3942 = vrot.lane.b32.xlu0 %v3936, 127
    %v3943 = vpop.permute.xlu0 %3942
    %3944 = vrot.lane.b32.xlu0 %v3937, 127
    %v3945 = vpop.permute.xlu0 %3944
    %3946 = vrot.lane.b32.xlu0 %v3938, 127
    %v3947 = vpop.permute.xlu0 %3946
    %v3948 = vsel %vm887, %v3943, %v3945
    %v3949 = vsel %vm887, %v3945, %v3947
    %v3952 = vadd.f32 %v3922, %v3948
    %v3953 = vadd.f32 %v3923, %v3949
    %3957 = vrot.lane.b32.xlu0 %v3683, 126
    %v3958 = vpop.permute.xlu0 %3957
    %3959 = vrot.lane.b32.xlu0 %v3684, 126
    %v3960 = vpop.permute.xlu0 %3959
    %3961 = vrot.lane.b32.xlu0 %v3685, 126
    %v3962 = vpop.permute.xlu0 %3961
    %v3963 = vsel %vm1415, %v3958, %v3960
    %v3964 = vsel %vm1415, %v3960, %v3962
    %v3967 = vsel %vm1395, %v3963, 0.0
    %v3968 = vsel %vm1396, %v3964, 0.0
    %s3969 = scalar_lea.vmem %s9, 32
    %v3970 = vld [vmem:[%s3969] sm:$0xf]
    %3972 = vset.pattern.permute.xlu0 0
    %3973 = vperm.xlu0 %3972, %v3970
    %v3974 = vpop.permute.xlu0 %3973
    %v3976 = vlaneseq
    %v3977 = vshrl.u32 %v3976, 7
    %v3978 = vsub.s32 0, %v3977
    %v3979 = vrot.slane %v3967, %v3978
    %v3980 = vlaneseq
    %v3981 = vshrl.u32 %v3980, 7
    %v3982 = vsub.s32 0, %v3981
    %v3983 = vrot.slane %v3968, %v3982
    %v3984 = vmul.f32 %v3974, %v3979
    %v3985 = vmul.f32 %v3974, %v3983
    %v3986 = vadd.f32 %v3832, %v3984
    %v3987 = vadd.f32 %v3833, %v3985
    %s3988 = scalar_lea.vmem %s9, 36
    %v3989 = vld [vmem:[%s3988] sm:$0xf]
    %3991 = vset.pattern.permute.xlu0 0
    %3992 = vperm.xlu0 %3991, %v3989
    %v3993 = vpop.permute.xlu0 %3992
    %v3995 = vlaneseq
    %v3996 = vshrl.u32 %v3995, 7
    %v3997 = vsub.s32 1, %v3996
    %v3998 = vrot.slane %v3967, %v3997
    %v3999 = vlaneseq
    %v4000 = vshrl.u32 %v3999, 7
    %v4001 = vsub.s32 1, %v4000
    %v4002 = vrot.slane %v3968, %v4001
    %v4003 = vmul.f32 %v3993, %v3998
    %v4004 = vmul.f32 %v3993, %v4002
    %v4005 = vadd.f32 %v3986, %v4003
    %v4006 = vadd.f32 %v3987, %v4004
    %s4007 = scalar_lea.vmem %s9, 40
    %v4008 = vld [vmem:[%s4007] sm:$0xf]
    %4010 = vset.pattern.permute.xlu0 0
    %4011 = vperm.xlu0 %4010, %v4008
    %v4012 = vpop.permute.xlu0 %4011
    %v4014 = vlaneseq
    %v4015 = vshrl.u32 %v4014, 7
    %v4016 = vsub.s32 2, %v4015
    %v4017 = vrot.slane %v3967, %v4016
    %v4018 = vlaneseq
    %v4019 = vshrl.u32 %v4018, 7
    %v4020 = vsub.s32 2, %v4019
    %v4021 = vrot.slane %v3968, %v4020
    %v4022 = vmul.f32 %v4012, %v4017
    %v4023 = vmul.f32 %v4012, %v4021
    %v4024 = vadd.f32 %v4005, %v4022
    %v4025 = vadd.f32 %v4006, %v4023
    %s4026 = scalar_lea.vmem %s9, 44
    %v4027 = vld [vmem:[%s4026] sm:$0xf]
    %4029 = vset.pattern.permute.xlu0 0
    %4030 = vperm.xlu0 %4029, %v4027
    %v4031 = vpop.permute.xlu0 %4030
    %v4033 = vlaneseq
    %v4034 = vshrl.u32 %v4033, 7
    %v4035 = vsub.s32 3, %v4034
    %v4036 = vrot.slane %v3967, %v4035
    %v4037 = vlaneseq
    %v4038 = vshrl.u32 %v4037, 7
    %v4039 = vsub.s32 3, %v4038
    %v4040 = vrot.slane %v3968, %v4039
    %v4041 = vmul.f32 %v4031, %v4036
    %v4042 = vmul.f32 %v4031, %v4040
    %v4043 = vadd.f32 %v4024, %v4041
    %v4044 = vadd.f32 %v4025, %v4042
    %v4045 = vlaneseq
    %v4046 = vshrl.u32 %v4045, 7
    %v4047 = vsub.s32 4, %v4046
    %v4048 = vrot.slane %v3967, %v4047
    %v4049 = vlaneseq
    %v4050 = vshrl.u32 %v4049, 7
    %v4051 = vsub.s32 4, %v4050
    %v4052 = vrot.slane %v3968, %v4051
    %v4053 = vmul.f32 %v3974, %v4048
    %v4054 = vmul.f32 %v3974, %v4052
    %v4055 = vadd.f32 %v3952, %v4053
    %v4056 = vadd.f32 %v3953, %v4054
    %v4057 = vlaneseq
    %v4058 = vshrl.u32 %v4057, 7
    %v4059 = vsub.s32 5, %v4058
    %v4060 = vrot.slane %v3967, %v4059
    %v4061 = vlaneseq
    %v4062 = vshrl.u32 %v4061, 7
    %v4063 = vsub.s32 5, %v4062
    %v4064 = vrot.slane %v3968, %v4063
    %v4065 = vmul.f32 %v3993, %v4060
    %v4066 = vmul.f32 %v3993, %v4064
    %v4067 = vadd.f32 %v4055, %v4065
    %v4068 = vadd.f32 %v4056, %v4066
    %v4069 = vlaneseq
    %v4070 = vshrl.u32 %v4069, 7
    %v4071 = vsub.s32 6, %v4070
    %v4072 = vrot.slane %v3967, %v4071
    %v4073 = vlaneseq
    %v4074 = vshrl.u32 %v4073, 7
    %v4075 = vsub.s32 6, %v4074
    %v4076 = vrot.slane %v3968, %v4075
    %v4077 = vmul.f32 %v4012, %v4072
    %v4078 = vmul.f32 %v4012, %v4076
    %v4079 = vadd.f32 %v4067, %v4077
    %v4080 = vadd.f32 %v4068, %v4078
    %v4081 = vlaneseq
    %v4082 = vshrl.u32 %v4081, 7
    %v4083 = vsub.s32 7, %v4082
    %v4084 = vrot.slane %v3967, %v4083
    %v4085 = vlaneseq
    %v4086 = vshrl.u32 %v4085, 7
    %v4087 = vsub.s32 7, %v4086
    %v4088 = vrot.slane %v3968, %v4087
    %v4089 = vmul.f32 %v4031, %v4084
    %v4090 = vmul.f32 %v4031, %v4088
    %v4091 = vadd.f32 %v4079, %v4089
    %v4092 = vadd.f32 %v4080, %v4090
    %4093 = vrot.lane.b32.xlu0 %v3683, 112
    %v4094 = vpop.permute.xlu0 %4093
    %4095 = vrot.lane.b32.xlu0 %v3684, 112
    %v4096 = vpop.permute.xlu0 %4095
    %4097 = vrot.lane.b32.xlu0 %v3685, 112
    %v4098 = vpop.permute.xlu0 %4097
    %v4099 = vsel %vm1688, %v4094, %v4096
    %v4100 = vsel %vm1688, %v4096, %v4098
    %v4103 = vsel %vm597, %v4099, 0.0
    %v4104 = vsel %vm598, %v4100, 0.0
    %s4105 = scalar_lea.vmem %s9, 48
    %v4106 = vld [vmem:[%s4105] sm:$0xf]
    %4108 = vset.pattern.permute.xlu0 0
    %4109 = vperm.xlu0 %4108, %v4106
    %v4110 = vpop.permute.xlu0 %4109
    %v4112 = vlaneseq
    %v4113 = vshrl.u32 %v4112, 7
    %v4114 = vsub.s32 0, %v4113
    %v4115 = vrot.slane %v4103, %v4114
    %v4116 = vlaneseq
    %v4117 = vshrl.u32 %v4116, 7
    %v4118 = vsub.s32 0, %v4117
    %v4119 = vrot.slane %v4104, %v4118
    %v4120 = vmul.f32 %v4110, %v4115
    %v4121 = vmul.f32 %v4110, %v4119
    %v4122 = vadd.f32 %v4043, %v4120
    %v4123 = vadd.f32 %v4044, %v4121
    %s4124 = scalar_lea.vmem %s9, 52
    %v4125 = vld [vmem:[%s4124] sm:$0xf]
    %4127 = vset.pattern.permute.xlu0 0
    %4128 = vperm.xlu0 %4127, %v4125
    %v4129 = vpop.permute.xlu0 %4128
    %v4131 = vlaneseq
    %v4132 = vshrl.u32 %v4131, 7
    %v4133 = vsub.s32 1, %v4132
    %v4134 = vrot.slane %v4103, %v4133
    %v4135 = vlaneseq
    %v4136 = vshrl.u32 %v4135, 7
    %v4137 = vsub.s32 1, %v4136
    %v4138 = vrot.slane %v4104, %v4137
    %v4139 = vmul.f32 %v4129, %v4134
    %v4140 = vmul.f32 %v4129, %v4138
    %v4141 = vadd.f32 %v4122, %v4139
    %v4142 = vadd.f32 %v4123, %v4140
    %s4143 = scalar_lea.vmem %s9, 56
    %v4144 = vld [vmem:[%s4143] sm:$0xf]
    %4146 = vset.pattern.permute.xlu0 0
    %4147 = vperm.xlu0 %4146, %v4144
    %v4148 = vpop.permute.xlu0 %4147
    %v4150 = vlaneseq
    %v4151 = vshrl.u32 %v4150, 7
    %v4152 = vsub.s32 2, %v4151
    %v4153 = vrot.slane %v4103, %v4152
    %v4154 = vlaneseq
    %v4155 = vshrl.u32 %v4154, 7
    %v4156 = vsub.s32 2, %v4155
    %v4157 = vrot.slane %v4104, %v4156
    %v4158 = vmul.f32 %v4148, %v4153
    %v4159 = vmul.f32 %v4148, %v4157
    %v4160 = vadd.f32 %v4141, %v4158
    %v4161 = vadd.f32 %v4142, %v4159
    %s4162 = scalar_lea.vmem %s9, 60
    %v4163 = vld [vmem:[%s4162] sm:$0xf]
    %4165 = vset.pattern.permute.xlu0 0
    %4166 = vperm.xlu0 %4165, %v4163
    %v4167 = vpop.permute.xlu0 %4166
    %v4169 = vlaneseq
    %v4170 = vshrl.u32 %v4169, 7
    %v4171 = vsub.s32 3, %v4170
    %v4172 = vrot.slane %v4103, %v4171
    %v4173 = vlaneseq
    %v4174 = vshrl.u32 %v4173, 7
    %v4175 = vsub.s32 3, %v4174
    %v4176 = vrot.slane %v4104, %v4175
    %v4177 = vmul.f32 %v4167, %v4172
    %v4178 = vmul.f32 %v4167, %v4176
    %v4179 = vadd.f32 %v4160, %v4177
    %v4180 = vadd.f32 %v4161, %v4178
    %v4181 = vlaneseq
    %v4182 = vshrl.u32 %v4181, 7
    %v4183 = vsub.s32 4, %v4182
    %v4184 = vrot.slane %v4103, %v4183
    %v4185 = vlaneseq
    %v4186 = vshrl.u32 %v4185, 7
    %v4187 = vsub.s32 4, %v4186
    %v4188 = vrot.slane %v4104, %v4187
    %v4189 = vmul.f32 %v4110, %v4184
    %v4190 = vmul.f32 %v4110, %v4188
    %v4191 = vadd.f32 %v4091, %v4189
    %v4192 = vadd.f32 %v4092, %v4190
    %v4193 = vlaneseq
    %v4194 = vshrl.u32 %v4193, 7
    %v4195 = vsub.s32 5, %v4194
    %v4196 = vrot.slane %v4103, %v4195
    %v4197 = vlaneseq
    %v4198 = vshrl.u32 %v4197, 7
    %v4199 = vsub.s32 5, %v4198
    %v4200 = vrot.slane %v4104, %v4199
    %v4201 = vmul.f32 %v4129, %v4196
    %v4202 = vmul.f32 %v4129, %v4200
    %v4203 = vadd.f32 %v4191, %v4201
    %v4204 = vadd.f32 %v4192, %v4202
    %v4205 = vlaneseq
    %v4206 = vshrl.u32 %v4205, 7
    %v4207 = vsub.s32 6, %v4206
    %v4208 = vrot.slane %v4103, %v4207
    %v4209 = vlaneseq
    %v4210 = vshrl.u32 %v4209, 7
    %v4211 = vsub.s32 6, %v4210
    %v4212 = vrot.slane %v4104, %v4211
    %v4213 = vmul.f32 %v4148, %v4208
    %v4214 = vmul.f32 %v4148, %v4212
    %v4215 = vadd.f32 %v4203, %v4213
    %v4216 = vadd.f32 %v4204, %v4214
    %v4217 = vlaneseq
    %v4218 = vshrl.u32 %v4217, 7
    %v4219 = vsub.s32 7, %v4218
    %v4220 = vrot.slane %v4103, %v4219
    %v4221 = vlaneseq
    %v4222 = vshrl.u32 %v4221, 7
    %v4223 = vsub.s32 7, %v4222
    %v4224 = vrot.slane %v4104, %v4223
    %v4225 = vmul.f32 %v4167, %v4220
    %v4226 = vmul.f32 %v4167, %v4224
    %v4227 = vadd.f32 %v4215, %v4225
    %v4228 = vadd.f32 %v4216, %v4226
    %s4229 = scalar_lea.vmem %s9, 64
    %v4230 = vld [vmem:[%s4229] sm:$0xf]
    %4232 = vset.pattern.permute.xlu0 0
    %4233 = vperm.xlu0 %4232, %v4230
    %v4234 = vpop.permute.xlu0 %4233
    %v4236 = vmul.f32 %v4234, %v3696
    %v4237 = vmul.f32 %v4234, %v3700
    %v4238 = vmul.f32 %v4234, %v3704
    %4242 = vrot.lane.b32.xlu0 %v4236, 111
    %v4243 = vpop.permute.xlu0 %4242
    %4244 = vrot.lane.b32.xlu0 %v4237, 111
    %v4245 = vpop.permute.xlu0 %4244
    %4246 = vrot.lane.b32.xlu0 %v4238, 111
    %v4247 = vpop.permute.xlu0 %4246
    %v4248 = vsel %vm1968, %v4243, %v4245
    %v4249 = vsel %vm1968, %v4245, %v4247
    %v4252 = vadd.f32 %v4179, %v4248
    %v4253 = vadd.f32 %v4180, %v4249
    %s4254 = scalar_lea.vmem %s9, 68
    %v4255 = vld [vmem:[%s4254] sm:$0xf]
    %4257 = vset.pattern.permute.xlu0 0
    %4258 = vperm.xlu0 %4257, %v4255
    %v4259 = vpop.permute.xlu0 %4258
    %v4261 = vmul.f32 %v4259, %v3733
    %v4262 = vmul.f32 %v4259, %v3737
    %v4263 = vmul.f32 %v4259, %v3741
    %4267 = vrot.lane.b32.xlu0 %v4261, 111
    %v4268 = vpop.permute.xlu0 %4267
    %4269 = vrot.lane.b32.xlu0 %v4262, 111
    %v4270 = vpop.permute.xlu0 %4269
    %4271 = vrot.lane.b32.xlu0 %v4263, 111
    %v4272 = vpop.permute.xlu0 %4271
    %v4273 = vsel %vm1968, %v4268, %v4270
    %v4274 = vsel %vm1968, %v4270, %v4272
    %v4277 = vadd.f32 %v4252, %v4273
    %v4278 = vadd.f32 %v4253, %v4274
    %s4279 = scalar_lea.vmem %s9, 72
    %v4280 = vld [vmem:[%s4279] sm:$0xf]
    %4282 = vset.pattern.permute.xlu0 0
    %4283 = vperm.xlu0 %4282, %v4280
    %v4284 = vpop.permute.xlu0 %4283
    %v4286 = vmul.f32 %v4284, %v3770
    %v4287 = vmul.f32 %v4284, %v3774
    %v4288 = vmul.f32 %v4284, %v3778
    %4292 = vrot.lane.b32.xlu0 %v4286, 111
    %v4293 = vpop.permute.xlu0 %4292
    %4294 = vrot.lane.b32.xlu0 %v4287, 111
    %v4295 = vpop.permute.xlu0 %4294
    %4296 = vrot.lane.b32.xlu0 %v4288, 111
    %v4297 = vpop.permute.xlu0 %4296
    %v4298 = vsel %vm1968, %v4293, %v4295
    %v4299 = vsel %vm1968, %v4295, %v4297
    %v4302 = vadd.f32 %v4277, %v4298
    %v4303 = vadd.f32 %v4278, %v4299
    %s4304 = scalar_lea.vmem %s9, 76
    %v4305 = vld [vmem:[%s4304] sm:$0xf]
    %4307 = vset.pattern.permute.xlu0 0
    %4308 = vperm.xlu0 %4307, %v4305
    %v4309 = vpop.permute.xlu0 %4308
    %v4311 = vmul.f32 %v4309, %v3807
    %v4312 = vmul.f32 %v4309, %v3811
    %v4313 = vmul.f32 %v4309, %v3815
    %4317 = vrot.lane.b32.xlu0 %v4311, 111
    %v4318 = vpop.permute.xlu0 %4317
    %4319 = vrot.lane.b32.xlu0 %v4312, 111
    %v4320 = vpop.permute.xlu0 %4319
    %4321 = vrot.lane.b32.xlu0 %v4313, 111
    %v4322 = vpop.permute.xlu0 %4321
    %v4323 = vsel %vm1968, %v4318, %v4320
    %v4324 = vsel %vm1968, %v4320, %v4322
    %v4327 = vadd.f32 %v4302, %v4323
    %v4328 = vadd.f32 %v4303, %v4324
    %v4329 = vmul.f32 %v4234, %v3837
    %v4330 = vmul.f32 %v4234, %v3841
    %v4331 = vmul.f32 %v4234, %v3845
    %4335 = vrot.lane.b32.xlu0 %v4329, 111
    %v4336 = vpop.permute.xlu0 %4335
    %4337 = vrot.lane.b32.xlu0 %v4330, 111
    %v4338 = vpop.permute.xlu0 %4337
    %4339 = vrot.lane.b32.xlu0 %v4331, 111
    %v4340 = vpop.permute.xlu0 %4339
    %v4341 = vsel %vm1968, %v4336, %v4338
    %v4342 = vsel %vm1968, %v4338, %v4340
    %v4345 = vadd.f32 %v4227, %v4341
    %v4346 = vadd.f32 %v4228, %v4342
    %v4347 = vmul.f32 %v4259, %v3867
    %v4348 = vmul.f32 %v4259, %v3871
    %v4349 = vmul.f32 %v4259, %v3875
    %4353 = vrot.lane.b32.xlu0 %v4347, 111
    %v4354 = vpop.permute.xlu0 %4353
    %4355 = vrot.lane.b32.xlu0 %v4348, 111
    %v4356 = vpop.permute.xlu0 %4355
    %4357 = vrot.lane.b32.xlu0 %v4349, 111
    %v4358 = vpop.permute.xlu0 %4357
    %v4359 = vsel %vm1968, %v4354, %v4356
    %v4360 = vsel %vm1968, %v4356, %v4358
    %v4363 = vadd.f32 %v4345, %v4359
    %v4364 = vadd.f32 %v4346, %v4360
    %v4365 = vmul.f32 %v4284, %v3897
    %v4366 = vmul.f32 %v4284, %v3901
    %v4367 = vmul.f32 %v4284, %v3905
    %4371 = vrot.lane.b32.xlu0 %v4365, 111
    %v4372 = vpop.permute.xlu0 %4371
    %4373 = vrot.lane.b32.xlu0 %v4366, 111
    %v4374 = vpop.permute.xlu0 %4373
    %4375 = vrot.lane.b32.xlu0 %v4367, 111
    %v4376 = vpop.permute.xlu0 %4375
    %v4377 = vsel %vm1968, %v4372, %v4374
    %v4378 = vsel %vm1968, %v4374, %v4376
    %v4381 = vadd.f32 %v4363, %v4377
    %v4382 = vadd.f32 %v4364, %v4378
    %v4383 = vmul.f32 %v4309, %v3927
    %v4384 = vmul.f32 %v4309, %v3931
    %v4385 = vmul.f32 %v4309, %v3935
    %4389 = vrot.lane.b32.xlu0 %v4383, 111
    %v4390 = vpop.permute.xlu0 %4389
    %4391 = vrot.lane.b32.xlu0 %v4384, 111
    %v4392 = vpop.permute.xlu0 %4391
    %4393 = vrot.lane.b32.xlu0 %v4385, 111
    %v4394 = vpop.permute.xlu0 %4393
    %v4395 = vsel %vm1968, %v4390, %v4392
    %v4396 = vsel %vm1968, %v4392, %v4394
    %v4399 = vadd.f32 %v4381, %v4395
    %v4400 = vadd.f32 %v4382, %v4396
    %4401 = vrot.lane.b32.xlu0 %v3683, 110
    %v4402 = vpop.permute.xlu0 %4401
    %4403 = vrot.lane.b32.xlu0 %v3684, 110
    %v4404 = vpop.permute.xlu0 %4403
    %4405 = vrot.lane.b32.xlu0 %v3685, 110
    %v4406 = vpop.permute.xlu0 %4405
    %v4407 = vsel %vm2306, %v4402, %v4404
    %v4408 = vsel %vm2306, %v4404, %v4406
    %v4411 = vsel %vm1395, %v4407, 0.0
    %v4412 = vsel %vm1396, %v4408, 0.0
    %s4413 = scalar_lea.vmem %s9, 80
    %v4414 = vld [vmem:[%s4413] sm:$0xf]
    %4416 = vset.pattern.permute.xlu0 0
    %4417 = vperm.xlu0 %4416, %v4414
    %v4418 = vpop.permute.xlu0 %4417
    %v4420 = vlaneseq
    %v4421 = vshrl.u32 %v4420, 7
    %v4422 = vsub.s32 0, %v4421
    %v4423 = vrot.slane %v4411, %v4422
    %v4424 = vlaneseq
    %v4425 = vshrl.u32 %v4424, 7
    %v4426 = vsub.s32 0, %v4425
    %v4427 = vrot.slane %v4412, %v4426
    %v4428 = vmul.f32 %v4418, %v4423
    %v4429 = vmul.f32 %v4418, %v4427
    %v4430 = vadd.f32 %v4327, %v4428
    %v4431 = vadd.f32 %v4328, %v4429
    %s4432 = scalar_lea.vmem %s9, 84
    %v4433 = vld [vmem:[%s4432] sm:$0xf]
    %4435 = vset.pattern.permute.xlu0 0
    %4436 = vperm.xlu0 %4435, %v4433
    %v4437 = vpop.permute.xlu0 %4436
    %v4439 = vlaneseq
    %v4440 = vshrl.u32 %v4439, 7
    %v4441 = vsub.s32 1, %v4440
    %v4442 = vrot.slane %v4411, %v4441
    %v4443 = vlaneseq
    %v4444 = vshrl.u32 %v4443, 7
    %v4445 = vsub.s32 1, %v4444
    %v4446 = vrot.slane %v4412, %v4445
    %v4447 = vmul.f32 %v4437, %v4442
    %v4448 = vmul.f32 %v4437, %v4446
    %v4449 = vadd.f32 %v4430, %v4447
    %v4450 = vadd.f32 %v4431, %v4448
    %s4451 = scalar_lea.vmem %s9, 88
    %v4452 = vld [vmem:[%s4451] sm:$0xf]
    %4454 = vset.pattern.permute.xlu0 0
    %4455 = vperm.xlu0 %4454, %v4452
    %v4456 = vpop.permute.xlu0 %4455
    %v4458 = vlaneseq
    %v4459 = vshrl.u32 %v4458, 7
    %v4460 = vsub.s32 2, %v4459
    %v4461 = vrot.slane %v4411, %v4460
    %v4462 = vlaneseq
    %v4463 = vshrl.u32 %v4462, 7
    %v4464 = vsub.s32 2, %v4463
    %v4465 = vrot.slane %v4412, %v4464
    %v4466 = vmul.f32 %v4456, %v4461
    %v4467 = vmul.f32 %v4456, %v4465
    %v4468 = vadd.f32 %v4449, %v4466
    %v4469 = vadd.f32 %v4450, %v4467
    %s4470 = scalar_lea.vmem %s9, 92
    %v4471 = vld [vmem:[%s4470] sm:$0xf]
    %4473 = vset.pattern.permute.xlu0 0
    %4474 = vperm.xlu0 %4473, %v4471
    %v4475 = vpop.permute.xlu0 %4474
    %v4477 = vlaneseq
    %v4478 = vshrl.u32 %v4477, 7
    %v4479 = vsub.s32 3, %v4478
    %v4480 = vrot.slane %v4411, %v4479
    %v4481 = vlaneseq
    %v4482 = vshrl.u32 %v4481, 7
    %v4483 = vsub.s32 3, %v4482
    %v4484 = vrot.slane %v4412, %v4483
    %v4485 = vmul.f32 %v4475, %v4480
    %v4486 = vmul.f32 %v4475, %v4484
    %v4487 = vadd.f32 %v4468, %v4485
    %v4488 = vadd.f32 %v4469, %v4486
    %v4489 = vlaneseq
    %v4490 = vshrl.u32 %v4489, 7
    %v4491 = vsub.s32 4, %v4490
    %v4492 = vrot.slane %v4411, %v4491
    %v4493 = vlaneseq
    %v4494 = vshrl.u32 %v4493, 7
    %v4495 = vsub.s32 4, %v4494
    %v4496 = vrot.slane %v4412, %v4495
    %v4497 = vmul.f32 %v4418, %v4492
    %v4498 = vmul.f32 %v4418, %v4496
    %v4499 = vadd.f32 %v4399, %v4497
    %v4500 = vadd.f32 %v4400, %v4498
    %v4501 = vlaneseq
    %v4502 = vshrl.u32 %v4501, 7
    %v4503 = vsub.s32 5, %v4502
    %v4504 = vrot.slane %v4411, %v4503
    %v4505 = vlaneseq
    %v4506 = vshrl.u32 %v4505, 7
    %v4507 = vsub.s32 5, %v4506
    %v4508 = vrot.slane %v4412, %v4507
    %v4509 = vmul.f32 %v4437, %v4504
    %v4510 = vmul.f32 %v4437, %v4508
    %v4511 = vadd.f32 %v4499, %v4509
    %v4512 = vadd.f32 %v4500, %v4510
    %v4513 = vlaneseq
    %v4514 = vshrl.u32 %v4513, 7
    %v4515 = vsub.s32 6, %v4514
    %v4516 = vrot.slane %v4411, %v4515
    %v4517 = vlaneseq
    %v4518 = vshrl.u32 %v4517, 7
    %v4519 = vsub.s32 6, %v4518
    %v4520 = vrot.slane %v4412, %v4519
    %v4521 = vmul.f32 %v4456, %v4516
    %v4522 = vmul.f32 %v4456, %v4520
    %v4523 = vadd.f32 %v4511, %v4521
    %v4524 = vadd.f32 %v4512, %v4522
    %v4525 = vlaneseq
    %v4526 = vshrl.u32 %v4525, 7
    %v4527 = vsub.s32 7, %v4526
    %v4528 = vrot.slane %v4411, %v4527
    %v4529 = vlaneseq
    %v4530 = vshrl.u32 %v4529, 7
    %v4531 = vsub.s32 7, %v4530
    %v4532 = vrot.slane %v4412, %v4531
    %v4533 = vmul.f32 %v4475, %v4528
    %v4534 = vmul.f32 %v4475, %v4532
    %v4535 = vadd.f32 %v4523, %v4533
    %v4536 = vadd.f32 %v4524, %v4534
    %4537 = vrot.lane.b32.xlu0 %v3683, 96
    %v4538 = vpop.permute.xlu0 %4537
    %4539 = vrot.lane.b32.xlu0 %v3684, 96
    %v4540 = vpop.permute.xlu0 %4539
    %4541 = vrot.lane.b32.xlu0 %v3685, 96
    %v4542 = vpop.permute.xlu0 %4541
    %v4543 = vsel %vm2579, %v4538, %v4540
    %v4544 = vsel %vm2579, %v4540, %v4542
    %v4547 = vsel %vm597, %v4543, 0.0
    %v4548 = vsel %vm598, %v4544, 0.0
    %s4549 = scalar_lea.vmem %s9, 96
    %v4550 = vld [vmem:[%s4549] sm:$0xf]
    %4552 = vset.pattern.permute.xlu0 0
    %4553 = vperm.xlu0 %4552, %v4550
    %v4554 = vpop.permute.xlu0 %4553
    %v4556 = vlaneseq
    %v4557 = vshrl.u32 %v4556, 7
    %v4558 = vsub.s32 0, %v4557
    %v4559 = vrot.slane %v4547, %v4558
    %v4560 = vlaneseq
    %v4561 = vshrl.u32 %v4560, 7
    %v4562 = vsub.s32 0, %v4561
    %v4563 = vrot.slane %v4548, %v4562
    %v4564 = vmul.f32 %v4554, %v4559
    %v4565 = vmul.f32 %v4554, %v4563
    %v4566 = vadd.f32 %v4487, %v4564
    %v4567 = vadd.f32 %v4488, %v4565
    %s4568 = scalar_lea.vmem %s9, 100
    %v4569 = vld [vmem:[%s4568] sm:$0xf]
    %4571 = vset.pattern.permute.xlu0 0
    %4572 = vperm.xlu0 %4571, %v4569
    %v4573 = vpop.permute.xlu0 %4572
    %v4575 = vlaneseq
    %v4576 = vshrl.u32 %v4575, 7
    %v4577 = vsub.s32 1, %v4576
    %v4578 = vrot.slane %v4547, %v4577
    %v4579 = vlaneseq
    %v4580 = vshrl.u32 %v4579, 7
    %v4581 = vsub.s32 1, %v4580
    %v4582 = vrot.slane %v4548, %v4581
    %v4583 = vmul.f32 %v4573, %v4578
    %v4584 = vmul.f32 %v4573, %v4582
    %v4585 = vadd.f32 %v4566, %v4583
    %v4586 = vadd.f32 %v4567, %v4584
    %s4587 = scalar_lea.vmem %s9, 104
    %v4588 = vld [vmem:[%s4587] sm:$0xf]
    %4590 = vset.pattern.permute.xlu0 0
    %4591 = vperm.xlu0 %4590, %v4588
    %v4592 = vpop.permute.xlu0 %4591
    %v4594 = vlaneseq
    %v4595 = vshrl.u32 %v4594, 7
    %v4596 = vsub.s32 2, %v4595
    %v4597 = vrot.slane %v4547, %v4596
    %v4598 = vlaneseq
    %v4599 = vshrl.u32 %v4598, 7
    %v4600 = vsub.s32 2, %v4599
    %v4601 = vrot.slane %v4548, %v4600
    %v4602 = vmul.f32 %v4592, %v4597
    %v4603 = vmul.f32 %v4592, %v4601
    %v4604 = vadd.f32 %v4585, %v4602
    %v4605 = vadd.f32 %v4586, %v4603
    %s4606 = scalar_lea.vmem %s9, 108
    %v4607 = vld [vmem:[%s4606] sm:$0xf]
    %4609 = vset.pattern.permute.xlu0 0
    %4610 = vperm.xlu0 %4609, %v4607
    %v4611 = vpop.permute.xlu0 %4610
    %v4613 = vlaneseq
    %v4614 = vshrl.u32 %v4613, 7
    %v4615 = vsub.s32 3, %v4614
    %v4616 = vrot.slane %v4547, %v4615
    %v4617 = vlaneseq
    %v4618 = vshrl.u32 %v4617, 7
    %v4619 = vsub.s32 3, %v4618
    %v4620 = vrot.slane %v4548, %v4619
    %v4621 = vmul.f32 %v4611, %v4616
    %v4622 = vmul.f32 %v4611, %v4620
    %v4623 = vadd.f32 %v4604, %v4621
    %v4624 = vadd.f32 %v4605, %v4622
    %v4625 = vlaneseq
    %v4626 = vshrl.u32 %v4625, 7
    %v4627 = vsub.s32 4, %v4626
    %v4628 = vrot.slane %v4547, %v4627
    %v4629 = vlaneseq
    %v4630 = vshrl.u32 %v4629, 7
    %v4631 = vsub.s32 4, %v4630
    %v4632 = vrot.slane %v4548, %v4631
    %v4633 = vmul.f32 %v4554, %v4628
    %v4634 = vmul.f32 %v4554, %v4632
    %v4635 = vadd.f32 %v4535, %v4633
    %v4636 = vadd.f32 %v4536, %v4634
    %v4637 = vlaneseq
    %v4638 = vshrl.u32 %v4637, 7
    %v4639 = vsub.s32 5, %v4638
    %v4640 = vrot.slane %v4547, %v4639
    %v4641 = vlaneseq
    %v4642 = vshrl.u32 %v4641, 7
    %v4643 = vsub.s32 5, %v4642
    %v4644 = vrot.slane %v4548, %v4643
    %v4645 = vmul.f32 %v4573, %v4640
    %v4646 = vmul.f32 %v4573, %v4644
    %v4647 = vadd.f32 %v4635, %v4645
    %v4648 = vadd.f32 %v4636, %v4646
    %v4649 = vlaneseq
    %v4650 = vshrl.u32 %v4649, 7
    %v4651 = vsub.s32 6, %v4650
    %v4652 = vrot.slane %v4547, %v4651
    %v4653 = vlaneseq
    %v4654 = vshrl.u32 %v4653, 7
    %v4655 = vsub.s32 6, %v4654
    %v4656 = vrot.slane %v4548, %v4655
    %v4657 = vmul.f32 %v4592, %v4652
    %v4658 = vmul.f32 %v4592, %v4656
    %v4659 = vadd.f32 %v4647, %v4657
    %v4660 = vadd.f32 %v4648, %v4658
    %v4661 = vlaneseq
    %v4662 = vshrl.u32 %v4661, 7
    %v4663 = vsub.s32 7, %v4662
    %v4664 = vrot.slane %v4547, %v4663
    %v4665 = vlaneseq
    %v4666 = vshrl.u32 %v4665, 7
    %v4667 = vsub.s32 7, %v4666
    %v4668 = vrot.slane %v4548, %v4667
    %v4669 = vmul.f32 %v4611, %v4664
    %v4670 = vmul.f32 %v4611, %v4668
    %v4671 = vadd.f32 %v4659, %v4669
    %v4672 = vadd.f32 %v4660, %v4670
    %s4673 = scalar_lea.vmem %s9, 112
    %v4674 = vld [vmem:[%s4673] sm:$0xf]
    %4676 = vset.pattern.permute.xlu0 0
    %4677 = vperm.xlu0 %4676, %v4674
    %v4678 = vpop.permute.xlu0 %4677
    %v4680 = vmul.f32 %v4678, %v3696
    %v4681 = vmul.f32 %v4678, %v3700
    %v4682 = vmul.f32 %v4678, %v3704
    %4686 = vrot.lane.b32.xlu0 %v4680, 95
    %v4687 = vpop.permute.xlu0 %4686
    %4688 = vrot.lane.b32.xlu0 %v4681, 95
    %v4689 = vpop.permute.xlu0 %4688
    %4690 = vrot.lane.b32.xlu0 %v4682, 95
    %v4691 = vpop.permute.xlu0 %4690
    %v4692 = vsel %vm2859, %v4687, %v4689
    %v4693 = vsel %vm2859, %v4689, %v4691
    %v4696 = vadd.f32 %v4623, %v4692
    %v4697 = vadd.f32 %v4624, %v4693
    %s4698 = scalar_lea.vmem %s9, 116
    %v4699 = vld [vmem:[%s4698] sm:$0xf]
    %4701 = vset.pattern.permute.xlu0 0
    %4702 = vperm.xlu0 %4701, %v4699
    %v4703 = vpop.permute.xlu0 %4702
    %v4705 = vmul.f32 %v4703, %v3733
    %v4706 = vmul.f32 %v4703, %v3737
    %v4707 = vmul.f32 %v4703, %v3741
    %4711 = vrot.lane.b32.xlu0 %v4705, 95
    %v4712 = vpop.permute.xlu0 %4711
    %4713 = vrot.lane.b32.xlu0 %v4706, 95
    %v4714 = vpop.permute.xlu0 %4713
    %4715 = vrot.lane.b32.xlu0 %v4707, 95
    %v4716 = vpop.permute.xlu0 %4715
    %v4717 = vsel %vm2859, %v4712, %v4714
    %v4718 = vsel %vm2859, %v4714, %v4716
    %v4721 = vadd.f32 %v4696, %v4717
    %v4722 = vadd.f32 %v4697, %v4718
    %s4723 = scalar_lea.vmem %s9, 120
    %v4724 = vld [vmem:[%s4723] sm:$0xf]
    %4726 = vset.pattern.permute.xlu0 0
    %4727 = vperm.xlu0 %4726, %v4724
    %v4728 = vpop.permute.xlu0 %4727
    %v4730 = vmul.f32 %v4728, %v3770
    %v4731 = vmul.f32 %v4728, %v3774
    %v4732 = vmul.f32 %v4728, %v3778
    %4736 = vrot.lane.b32.xlu0 %v4730, 95
    %v4737 = vpop.permute.xlu0 %4736
    %4738 = vrot.lane.b32.xlu0 %v4731, 95
    %v4739 = vpop.permute.xlu0 %4738
    %4740 = vrot.lane.b32.xlu0 %v4732, 95
    %v4741 = vpop.permute.xlu0 %4740
    %v4742 = vsel %vm2859, %v4737, %v4739
    %v4743 = vsel %vm2859, %v4739, %v4741
    %v4746 = vadd.f32 %v4721, %v4742
    %v4747 = vadd.f32 %v4722, %v4743
    %s4748 = scalar_lea.vmem %s9, 124
    %v4749 = vld [vmem:[%s4748] sm:$0xf]
    %4751 = vset.pattern.permute.xlu0 0
    %4752 = vperm.xlu0 %4751, %v4749
    %v4753 = vpop.permute.xlu0 %4752
    %v4755 = vmul.f32 %v4753, %v3807
    %v4756 = vmul.f32 %v4753, %v3811
    %v4757 = vmul.f32 %v4753, %v3815
    %4761 = vrot.lane.b32.xlu0 %v4755, 95
    %v4762 = vpop.permute.xlu0 %4761
    %4763 = vrot.lane.b32.xlu0 %v4756, 95
    %v4764 = vpop.permute.xlu0 %4763
    %4765 = vrot.lane.b32.xlu0 %v4757, 95
    %v4766 = vpop.permute.xlu0 %4765
    %v4767 = vsel %vm2859, %v4762, %v4764
    %v4768 = vsel %vm2859, %v4764, %v4766
    %v4771 = vadd.f32 %v4746, %v4767
    %v4772 = vadd.f32 %v4747, %v4768
    %v4773 = vmul.f32 %v4678, %v3837
    %v4774 = vmul.f32 %v4678, %v3841
    %v4775 = vmul.f32 %v4678, %v3845
    %4779 = vrot.lane.b32.xlu0 %v4773, 95
    %v4780 = vpop.permute.xlu0 %4779
    %4781 = vrot.lane.b32.xlu0 %v4774, 95
    %v4782 = vpop.permute.xlu0 %4781
    %4783 = vrot.lane.b32.xlu0 %v4775, 95
    %v4784 = vpop.permute.xlu0 %4783
    %v4785 = vsel %vm2859, %v4780, %v4782
    %v4786 = vsel %vm2859, %v4782, %v4784
    %v4789 = vadd.f32 %v4671, %v4785
    %v4790 = vadd.f32 %v4672, %v4786
    %v4791 = vmul.f32 %v4703, %v3867
    %v4792 = vmul.f32 %v4703, %v3871
    %v4793 = vmul.f32 %v4703, %v3875
    %4797 = vrot.lane.b32.xlu0 %v4791, 95
    %v4798 = vpop.permute.xlu0 %4797
    %4799 = vrot.lane.b32.xlu0 %v4792, 95
    %v4800 = vpop.permute.xlu0 %4799
    %4801 = vrot.lane.b32.xlu0 %v4793, 95
    %v4802 = vpop.permute.xlu0 %4801
    %v4803 = vsel %vm2859, %v4798, %v4800
    %v4804 = vsel %vm2859, %v4800, %v4802
    %v4807 = vadd.f32 %v4789, %v4803
    %v4808 = vadd.f32 %v4790, %v4804
    %v4809 = vmul.f32 %v4728, %v3897
    %v4810 = vmul.f32 %v4728, %v3901
    %v4811 = vmul.f32 %v4728, %v3905
    %4815 = vrot.lane.b32.xlu0 %v4809, 95
    %v4816 = vpop.permute.xlu0 %4815
    %4817 = vrot.lane.b32.xlu0 %v4810, 95
    %v4818 = vpop.permute.xlu0 %4817
    %4819 = vrot.lane.b32.xlu0 %v4811, 95
    %v4820 = vpop.permute.xlu0 %4819
    %v4821 = vsel %vm2859, %v4816, %v4818
    %v4822 = vsel %vm2859, %v4818, %v4820
    %v4825 = vadd.f32 %v4807, %v4821
    %v4826 = vadd.f32 %v4808, %v4822
    %v4827 = vmul.f32 %v4753, %v3927
    %v4828 = vmul.f32 %v4753, %v3931
    %v4829 = vmul.f32 %v4753, %v3935
    %4833 = vrot.lane.b32.xlu0 %v4827, 95
    %v4834 = vpop.permute.xlu0 %4833
    %4835 = vrot.lane.b32.xlu0 %v4828, 95
    %v4836 = vpop.permute.xlu0 %4835
    %4837 = vrot.lane.b32.xlu0 %v4829, 95
    %v4838 = vpop.permute.xlu0 %4837
    %v4839 = vsel %vm2859, %v4834, %v4836
    %v4840 = vsel %vm2859, %v4836, %v4838
    %v4843 = vadd.f32 %v4825, %v4839
    %v4844 = vadd.f32 %v4826, %v4840
    %4845 = vrot.lane.b32.xlu0 %v3683, 94
    %v4846 = vpop.permute.xlu0 %4845
    %4847 = vrot.lane.b32.xlu0 %v3684, 94
    %v4848 = vpop.permute.xlu0 %4847
    %4849 = vrot.lane.b32.xlu0 %v3685, 94
    %v4850 = vpop.permute.xlu0 %4849
    %v4851 = vsel %vm3197, %v4846, %v4848
    %v4852 = vsel %vm3197, %v4848, %v4850
    %v4855 = vsel %vm1395, %v4851, 0.0
    %v4856 = vsel %vm1396, %v4852, 0.0
    %s4857 = scalar_lea.vmem %s9, 128
    %v4858 = vld [vmem:[%s4857] sm:$0xf]
    %4860 = vset.pattern.permute.xlu0 0
    %4861 = vperm.xlu0 %4860, %v4858
    %v4862 = vpop.permute.xlu0 %4861
    %v4864 = vlaneseq
    %v4865 = vshrl.u32 %v4864, 7
    %v4866 = vsub.s32 0, %v4865
    %v4867 = vrot.slane %v4855, %v4866
    %v4868 = vlaneseq
    %v4869 = vshrl.u32 %v4868, 7
    %v4870 = vsub.s32 0, %v4869
    %v4871 = vrot.slane %v4856, %v4870
    %v4872 = vmul.f32 %v4862, %v4867
    %v4873 = vmul.f32 %v4862, %v4871
    %v4874 = vadd.f32 %v4771, %v4872
    %v4875 = vadd.f32 %v4772, %v4873
    %s4876 = scalar_lea.vmem %s9, 132
    %v4877 = vld [vmem:[%s4876] sm:$0xf]
    %4879 = vset.pattern.permute.xlu0 0
    %4880 = vperm.xlu0 %4879, %v4877
    %v4881 = vpop.permute.xlu0 %4880
    %v4883 = vlaneseq
    %v4884 = vshrl.u32 %v4883, 7
    %v4885 = vsub.s32 1, %v4884
    %v4886 = vrot.slane %v4855, %v4885
    %v4887 = vlaneseq
    %v4888 = vshrl.u32 %v4887, 7
    %v4889 = vsub.s32 1, %v4888
    %v4890 = vrot.slane %v4856, %v4889
    %v4891 = vmul.f32 %v4881, %v4886
    %v4892 = vmul.f32 %v4881, %v4890
    %v4893 = vadd.f32 %v4874, %v4891
    %v4894 = vadd.f32 %v4875, %v4892
    %s4895 = scalar_lea.vmem %s9, 136
    %v4896 = vld [vmem:[%s4895] sm:$0xf]
    %4898 = vset.pattern.permute.xlu0 0
    %4899 = vperm.xlu0 %4898, %v4896
    %v4900 = vpop.permute.xlu0 %4899
    %v4902 = vlaneseq
    %v4903 = vshrl.u32 %v4902, 7
    %v4904 = vsub.s32 2, %v4903
    %v4905 = vrot.slane %v4855, %v4904
    %v4906 = vlaneseq
    %v4907 = vshrl.u32 %v4906, 7
    %v4908 = vsub.s32 2, %v4907
    %v4909 = vrot.slane %v4856, %v4908
    %v4910 = vmul.f32 %v4900, %v4905
    %v4911 = vmul.f32 %v4900, %v4909
    %v4912 = vadd.f32 %v4893, %v4910
    %v4913 = vadd.f32 %v4894, %v4911
    %s4914 = scalar_lea.vmem %s9, 140
    %v4915 = vld [vmem:[%s4914] sm:$0xf]
    %4917 = vset.pattern.permute.xlu0 0
    %4918 = vperm.xlu0 %4917, %v4915
    %v4919 = vpop.permute.xlu0 %4918
    %v4921 = vlaneseq
    %v4922 = vshrl.u32 %v4921, 7
    %v4923 = vsub.s32 3, %v4922
    %v4924 = vrot.slane %v4855, %v4923
    %v4925 = vlaneseq
    %v4926 = vshrl.u32 %v4925, 7
    %v4927 = vsub.s32 3, %v4926
    %v4928 = vrot.slane %v4856, %v4927
    %v4929 = vmul.f32 %v4919, %v4924
    %v4930 = vmul.f32 %v4919, %v4928
    %v4931 = vadd.f32 %v4912, %v4929
    %v4932 = vadd.f32 %v4913, %v4930
    %v4933 = vlaneseq
    %v4934 = vshrl.u32 %v4933, 7
    %v4935 = vsub.s32 4, %v4934
    %v4936 = vrot.slane %v4855, %v4935
    %v4937 = vlaneseq
    %v4938 = vshrl.u32 %v4937, 7
    %v4939 = vsub.s32 4, %v4938
    %v4940 = vrot.slane %v4856, %v4939
    %v4941 = vmul.f32 %v4862, %v4936
    %v4942 = vmul.f32 %v4862, %v4940
    %v4943 = vadd.f32 %v4843, %v4941
    %v4944 = vadd.f32 %v4844, %v4942
    %v4945 = vlaneseq
    %v4946 = vshrl.u32 %v4945, 7
    %v4947 = vsub.s32 5, %v4946
    %v4948 = vrot.slane %v4855, %v4947
    %v4949 = vlaneseq
    %v4950 = vshrl.u32 %v4949, 7
    %v4951 = vsub.s32 5, %v4950
    %v4952 = vrot.slane %v4856, %v4951
    %v4953 = vmul.f32 %v4881, %v4948
    %v4954 = vmul.f32 %v4881, %v4952
    %v4955 = vadd.f32 %v4943, %v4953
    %v4956 = vadd.f32 %v4944, %v4954
    %v4957 = vlaneseq
    %v4958 = vshrl.u32 %v4957, 7
    %v4959 = vsub.s32 6, %v4958
    %v4960 = vrot.slane %v4855, %v4959
    %v4961 = vlaneseq
    %v4962 = vshrl.u32 %v4961, 7
    %v4963 = vsub.s32 6, %v4962
    %v4964 = vrot.slane %v4856, %v4963
    %v4965 = vmul.f32 %v4900, %v4960
    %v4966 = vmul.f32 %v4900, %v4964
    %v4967 = vadd.f32 %v4955, %v4965
    %v4968 = vadd.f32 %v4956, %v4966
    %v4969 = vlaneseq
    %v4970 = vshrl.u32 %v4969, 7
    %v4971 = vsub.s32 7, %v4970
    %v4972 = vrot.slane %v4855, %v4971
    %v4973 = vlaneseq
    %v4974 = vshrl.u32 %v4973, 7
    %v4975 = vsub.s32 7, %v4974
    %v4976 = vrot.slane %v4856, %v4975
    %v4977 = vmul.f32 %v4919, %v4972
    %v4978 = vmul.f32 %v4919, %v4976
    %v4979 = vadd.f32 %v4967, %v4977
    %v4980 = vadd.f32 %v4968, %v4978
    %v4981 = vsel %vm3458, %v4931, 0.0
    %v4982 = vsel %vm3458, %v4932, 0.0
    %v4983 = vadd.f32 %v4981, %v4982
    %4984 = vadd.xlane.f32.xlu0 %v4983
    %v4985 = vpop.xlane.xlu0 %4984
    %v4986 = vadd.f32 %v4985, 0.0
    %v4987 = vsel %vm3458, %v4979, 0.0
    %v4988 = vsel %vm3458, %v4980, 0.0
    %v4989 = vadd.f32 %v4987, %v4988
    %4990 = vadd.xlane.f32.xlu0 %v4989
    %v4991 = vpop.xlane.xlu0 %4990
    %v4992 = vadd.f32 %v4986, %v4991
    %v4993 = vmul.f32 %v4992, %v3471
    %v4994 = vmul.f32 %v4931, %v4931
    %v4995 = vmul.f32 %v4932, %v4932
    %v4996 = vsel %vm3458, %v4994, 0.0
    %v4997 = vsel %vm3458, %v4995, 0.0
    %v4998 = vadd.f32 %v4996, %v4997
    %4999 = vadd.xlane.f32.xlu0 %v4998
    %v5000 = vpop.xlane.xlu0 %4999
    %v5001 = vadd.f32 %v5000, 0.0
    %v5002 = vmul.f32 %v4979, %v4979
    %v5003 = vmul.f32 %v4980, %v4980
    %v5004 = vsel %vm3458, %v5002, 0.0
    %v5005 = vsel %vm3458, %v5003, 0.0
    %v5006 = vadd.f32 %v5004, %v5005
    %5007 = vadd.xlane.f32.xlu0 %v5006
    %v5008 = vpop.xlane.xlu0 %5007
    %v5009 = vadd.f32 %v5001, %v5008
    %v5010 = vmul.f32 %v5009, %v3471
    %v5011 = vld [vmem:[%s11] sm:$0xf]
    %v5012 = vmul.f32 %v4993, %v4993
    %v5013 = vsub.f32 %v5010, %v5012
    %v5014 = vadd.f32 %v5013, 1e-05
    %v5015 = vrsqrt.pop %v5014
    %v5016 = vmul.f32 %v5011, %v5015
    %v5017 = vld [vmem:[%s12] sm:$0xf]
    %v5018 = vmul.f32 %v4993, %v5016
    %v5019 = vsub.f32 %v5017, %v5018
    %5021 = vset.pattern.permute.xlu0 0
    %5022 = vperm.xlu0 %5021, %v5016
    %v5023 = vpop.permute.xlu0 %5022
    %v5025 = vmul.f32 %v4931, %v5023
    %v5026 = vmul.f32 %v4932, %v5023
    %5028 = vset.pattern.permute.xlu0 0
    %5029 = vperm.xlu0 %5028, %v5019
    %v5030 = vpop.permute.xlu0 %5029
    %v5032 = vadd.f32 %v5025, %v5030
    %v5033 = vadd.f32 %v5026, %v5030
    %v5034 = vmax.f32 %v5032, 0.0
    %v5035 = vmax.f32 %v5033, 0.0
    %v5038 = vcombine.low %v5034, %v5035
    %5040 = vst [vmem:[#allocation4] sm:$0xff] %v5038
    %v5041 = vmul.f32 %v4979, %v5023
    %v5042 = vmul.f32 %v4980, %v5023
    %v5043 = vadd.f32 %v5041, %v5030
    %v5044 = vadd.f32 %v5042, %v5030
    %v5045 = vmax.f32 %v5043, 0.0
    %v5046 = vmax.f32 %v5044, 0.0
    %v5049 = vcombine.low %v5045, %v5046
    %s5051 = scalar_lea.vmem [#allocation4], 8
    %5052 = vst [vmem:[%s5051] sm:$0xff] %v5049
    // Predicated region
    $region54: #{tpu_custom_call.1} parent=1 // pred_check
      _
    $region55: #{tpu_custom_call.1} parent=1 // pred_check_branch
      %5054 = sbr.rel (0) target = $region57
    $region56: #{tpu_custom_call.1} parent=1 // pred_region
      %s5056 = ssub.s32 256, 256
      %5057 = vsyncadd [#allocation5], %s5056
      %s5058 = sshll.u32 [#allocation4], 4
      %s5059 = int_to_ptr.vmem [resolvable:$true] %s5058
      %5064 = dma.vmem_to_hbm [thread:$0]  %s5059, 256, %s13, [#allocation5], 128, 128, 8
    $region57: #{tpu_custom_call.1} parent=1 // pred_fallthru
      _
    // Predicated region
    $region58: #{tpu_custom_call.1} parent=1 // pred_check
      _
    $region59: #{tpu_custom_call.1} parent=1 // pred_check_branch
      %5066 = sbr.rel (0) target = $region61
    $region60: #{tpu_custom_call.1} parent=1 // pred_region
      %5067 = dma.done [#allocation5], 256
    $region61: #{tpu_custom_call.1} parent=1 // pred_fallthru
      _
    %5068 = vsyncpa [#allocation5], 1

</llo_original>
